<compile_context>
chip_gen: v7x
topology: tpu7x:2x2x1
jax: 0.10.0
libtpu: 0.0.40
codegen_flags: <defaults>
</compile_context>

<pallas_src>
import math
from functools import partial

import jax
import jax.numpy as jnp
from jax.experimental import pallas as pl
from jax.experimental.pallas import tpu as pltpu

# ---------------------------------------------------------------------------
# Static model configuration (PyTorch module defaults).
# ---------------------------------------------------------------------------
P = 128          # padded lane width used for EVERY feature dimension
F = 256          # dim_feedforward
EPS = 1e-5       # LayerNorm eps
N_ENC = 2        # encoder layers
N_DEC = 2        # decoder layers

# --- wsq buffer: stacked [P, P] matmul weight slabs -------------------------
def _sq_enc(l):                      # encoder layer l: Wq, Wk, Wv, Wo
    b = 4 * l
    return b, b + 1, b + 2, b + 3

def _sq_dec_self(l):                 # decoder layer l self-attention
    b = 4 * N_ENC + 8 * l
    return b, b + 1, b + 2, b + 3

def _sq_dec_cross(l):                # decoder layer l cross-attention
    b = 4 * N_ENC + 8 * l + 4
    return b, b + 1, b + 2, b + 3

SQ_MEAN = 4 * N_ENC + 8 * N_DEC      # mean head
SQ_VAR = SQ_MEAN + 1                 # var head
SQ_OUT = SQ_MEAN + 2                 # final dense
N_SQ = SQ_OUT + 1

# --- FFN slabs (wff1 [P,F], wff2 [F,P], bff1 [F]) ---------------------------
def _ff_enc(l): return l
def _ff_dec(l): return N_ENC + l

# --- vec buffer rows: biases, LayerNorm params, positional encodings --------
_ENC_VROWS = 9    # bq, bk, bv, bo, b2, g1, beta1, g2, beta2
_DEC_VROWS = 15   # sbq..sbo, cbq..cbo, b2, g1, beta1, g2, beta2, g3, beta3

def _vec_enc(l): return _ENC_VROWS * l
def _vec_dec(l): return _ENC_VROWS * N_ENC + _DEC_VROWS * l

VEC_BMEAN = _ENC_VROWS * N_ENC + _DEC_VROWS * N_DEC
VEC_BVAR = VEC_BMEAN + 1
VEC_BOUT = VEC_BMEAN + 2

def _vec_layout(seq_len):
    """Row offsets of the positional encodings (sublane-8 aligned)."""
    pe_enc = ((VEC_BOUT + 1 + 7) // 8) * 8
    pe_dec = ((pe_enc + seq_len + 7) // 8) * 8
    n_rows = pe_dec + seq_len
    return pe_enc, pe_dec, n_rows


# ---------------------------------------------------------------------------
# Fused kernel: full TransformerVAE.forward
# ---------------------------------------------------------------------------
def _vae_kernel(x_ref, eps_ref, wsq_ref, wff1_ref, wff2_ref, bff1_ref, vec_ref,
                y_ref, mean_ref, std_ref, *, B, S, D, Z):
    DZ = D + Z
    BS = B * S
    pe_enc_off, pe_dec_off, _ = _vec_layout(S)

    lane = jax.lax.broadcasted_iota(jnp.int32, (1, P), 1)
    mask_d = (lane < D).astype(jnp.float32)
    mask_dz = (lane < DZ).astype(jnp.float32)

    def vrow(i):                     # one packed [1, P] bias / LN vector
        return vec_ref[pl.ds(i, 1), :]

    def matmul(h, w):                # bf16 MXU matmul, f32 accumulation
        return jnp.dot(h.astype(jnp.bfloat16), w,
                       preferred_element_type=jnp.float32)

    def layernorm(h, gamma, beta, mask, inv_n):
        mu = jnp.sum(h, axis=-1, keepdims=True) * inv_n
        c = (h - mu) * mask          # padded lanes stay exactly 0
        var = jnp.sum(c * c, axis=-1, keepdims=True) * inv_n
        return c * jax.lax.rsqrt(var + EPS) * gamma + beta

    def softmax(s):
        m = jnp.max(s, axis=-1, keepdims=True)
        e = jnp.exp(s - m)
        return e * pl.reciprocal(jnp.sum(e, axis=-1, keepdims=True), approx=True)

    def attention(hq, hkv, iq, ik, iv, io, vb, scale):
        q = matmul(hq, wsq_ref[iq]) + vrow(vb + 0)
        k = matmul(hkv, wsq_ref[ik]) + vrow(vb + 1)
        v = matmul(hkv, wsq_ref[iv]) + vrow(vb + 2)
        s = jnp.einsum("bqd,bkd->bqk", q.reshape(B, S, P), k.reshape(B, S, P),
                       preferred_element_type=jnp.float32) * scale
        o = jnp.einsum("bqk,bkd->bqd", softmax(s), v.reshape(B, S, P),
                       preferred_element_type=jnp.float32)
        return matmul(o.reshape(BS, P), wsq_ref[io]) + vrow(vb + 3)

    def ffn(h, fi, b2):
        f = jnp.maximum(matmul(h, wff1_ref[fi]) + bff1_ref[pl.ds(fi, 1), :], 0.0)
        return matmul(f, wff2_ref[fi]) + b2

    # ---------------- encoder ----------------
    pe_e = vec_ref[pl.ds(pe_enc_off, S), :]                          # [S, P]
    h = (x_ref[...].reshape(B, S, P) + pe_e[None, :, :]).reshape(BS, P)
    for l in range(N_ENC):
        vb = _vec_enc(l)
        sa = attention(h, h, *_sq_enc(l), vb, 1.0 / math.sqrt(D))
        h = layernorm(h + sa, vrow(vb + 5), vrow(vb + 6), mask_d, 1.0 / D)
        ff = ffn(h, _ff_enc(l), vrow(vb + 4))
        h = layernorm(h + ff, vrow(vb + 7), vrow(vb + 8), mask_d, 1.0 / D)

    # ----------- mean / std heads + reparameterization -----------
    h_last = h.reshape(B, S, P)[:, S - 1, :]                         # x[:, -1]
    # Head weights are packed so mean/std land directly on the decoder z lanes
    # [D, D+Z); every other lane is an exact zero (zero-padded weights and
    # tanh(0)=relu(0)=0), so no lane slices / shuffles are needed anywhere.
    mean = jnp.tanh(matmul(h_last, wsq_ref[SQ_MEAN]) + vrow(VEC_BMEAN))
    std = jnp.maximum(matmul(h_last, wsq_ref[SQ_VAR]) + vrow(VEC_BVAR), 0.0)
    mean_ref[...] = mean
    std_ref[...] = std
    z = mean + std * eps_ref[...]                # eps pre-placed at [D, D+Z)

    # ----------- decoder input -----------
    # Teacher-forcing shift cat([0, x[:, :-1]]) as one tiny MXU matmul with a
    # sub-diagonal selection matrix (no sublane concat / roll relayouts).
    rr = jax.lax.broadcasted_iota(jnp.int32, (BS, BS), 0)
    cc = jax.lax.broadcasted_iota(jnp.int32, (BS, BS), 1)
    shift = jnp.where((rr == cc + 1) & (rr % S != 0), 1.0, 0.0)
    x_shift = jnp.dot(shift, x_ref[...], preferred_element_type=jnp.float32)

    pe_d = vec_ref[pl.ds(pe_dec_off, S), :]                          # [S, P]
    hd = (x_shift.reshape(B, S, P) + z[:, None, :] + pe_d[None, :, :]
          ).reshape(BS, P)
    mem = hd                        # dec_transformer(x, x): memory == tgt input

    # ---------------- decoder ----------------
    for l in range(N_DEC):
        vb = _vec_dec(l)
        sa = attention(hd, hd, *_sq_dec_self(l), vb, 1.0 / math.sqrt(DZ))
        hd = layernorm(hd + sa, vrow(vb + 9), vrow(vb + 10), mask_dz, 1.0 / DZ)
        ca = attention(hd, mem, *_sq_dec_cross(l), vb + 4, 1.0 / math.sqrt(DZ))
        hd = layernorm(hd + ca, vrow(vb + 11), vrow(vb + 12), mask_dz, 1.0 / DZ)
        ff = ffn(hd, _ff_dec(l), vrow(vb + 8))
        hd = layernorm(hd + ff, vrow(vb + 13), vrow(vb + 14), mask_dz, 1.0 / DZ)

    y_ref[...] = matmul(hd, wsq_ref[SQ_OUT]) + vrow(VEC_BOUT)        # [BS, P]


# ---------------------------------------------------------------------------
# Wrapper
# ---------------------------------------------------------------------------
@jax.jit
def transformer_vae_forward(x, params, eps):
    """Mirrors TransformerVAE.forward: returns (y, mean, std)."""
    B, S, D = x.shape
    Z = eps.shape[-1]
    BS = B * S

    # Lane-pad the activations once at the kernel boundary.
    x_pad = jnp.zeros((BS, P), jnp.float32).at[:, :D].set(
        x.reshape(BS, D).astype(jnp.float32))
    eps_pad = jnp.zeros((B, P), jnp.float32).at[:, D:D + Z].set(
        eps.astype(jnp.float32))

    vmem = pl.BlockSpec(memory_space=pltpu.MemorySpace.VMEM)
    kernel = partial(_vae_kernel, B=B, S=S, D=D, Z=Z)
    y_flat, mean_slab, std_slab = pl.pallas_call(
        kernel,
        out_shape=(jax.ShapeDtypeStruct((BS, P), jnp.float32),
                   jax.ShapeDtypeStruct((B, P), jnp.float32),
                   jax.ShapeDtypeStruct((B, P), jnp.float32)),
        in_specs=[vmem] * 7,
        out_specs=(vmem, vmem, vmem),
        compiler_params=pltpu.CompilerParams(
            vmem_limit_bytes=32 * 1024 * 1024),
    )(x_pad, eps_pad, params["wsq"], params["wff1"], params["wff2"],
      params["bff1"], params["vec"])

    y = y_flat.reshape(B, S, P)[:, :, :D]
    return y, mean_slab[:, D:D + Z], std_slab[:, D:D + Z]


# ---------------------------------------------------------------------------
# Parameters / positional encoding (deterministic, in-script)
# ---------------------------------------------------------------------------
def positional_encoding(seq_len, d_model):
    pos = jnp.arange(seq_len, dtype=jnp.float32)[:, None]
    div = jnp.exp(jnp.arange(0, d_model, 2, dtype=jnp.float32)
                  * (-math.log(10000.0) / d_model))
    pe = jnp.zeros((seq_len, d_model), jnp.float32)
    pe = pe.at[:, 0::2].set(jnp.sin(pos * div))
    pe = pe.at[:, 1::2].set(jnp.cos(pos * div))
    return pe


def init_params(key, z_dim, input_dim, seq_len):
    """Packed, 128-lane zero-padded parameter buffers (x @ W convention)."""
    D, Z = input_dim, z_dim
    DZ = D + Z
    assert D <= P and DZ <= P
    kit = iter(jax.random.split(key, 512))

    def u(shape, fan_in):
        b = 1.0 / math.sqrt(fan_in)
        return jax.random.uniform(next(kit), shape, jnp.float32, -b, b)

    def sq(din, dout, r0=0, c0=0):       # [din,dout] linear inside a [P,P] slab
        return jnp.zeros((P, P), jnp.float32).at[
            r0:r0 + din, c0:c0 + dout].set(u((din, dout), din))

    def vec(dout, fan_in, c0=0):         # bias vector inside a [P] row
        return jnp.zeros((P,), jnp.float32).at[c0:c0 + dout].set(
            u((dout,), fan_in))

    def ones_vec(d):
        return jnp.zeros((P,), jnp.float32).at[:d].set(1.0)

    zeros_vec = jnp.zeros((P,), jnp.float32)

    wsq, wff1, wff2, bff1, rows = [], [], [], [], []

    # ----- encoder layers -----
    for _ in range(N_ENC):
        wsq += [sq(D, D) for _ in range(4)]                        # Wq,Wk,Wv,Wo
        wff1.append(jnp.zeros((P, F), jnp.float32).at[:D, :].set(u((D, F), D)))
        wff2.append(jnp.zeros((F, P), jnp.float32).at[:, :D].set(u((F, D), F)))
        bff1.append(u((F,), D))
        rows += [vec(D, D) for _ in range(4)]                      # bq,bk,bv,bo
        rows += [vec(D, F)]                                        # FFN out bias
        rows += [ones_vec(D), zeros_vec, ones_vec(D), zeros_vec]   # LN1, LN2

    # ----- decoder layers -----
    for _ in range(N_DEC):
        wsq += [sq(DZ, DZ) for _ in range(8)]          # self q,k,v,o|cross q,k,v,o
        wff1.append(jnp.zeros((P, F), jnp.float32).at[:DZ, :].set(u((DZ, F), DZ)))
        wff2.append(jnp.zeros((F, P), jnp.float32).at[:, :DZ].set(u((F, DZ), F)))
        bff1.append(u((F,), DZ))
        rows += [vec(DZ, DZ) for _ in range(8)]                    # attn biases
        rows += [vec(DZ, F)]                                       # FFN out bias
        rows += [ones_vec(DZ), zeros_vec] * 3                      # LN1, LN2, LN3

    # ----- heads + final dense (heads write onto the decoder z lanes) -----
    wsq += [sq(D, Z, c0=D), sq(D, Z, c0=D), sq(DZ, D)]
    rows += [vec(Z, D, c0=D), vec(Z, D, c0=D), vec(D, DZ)]

    # ----- positional encodings, packed into the same vector buffer -----
    pe_enc_off, pe_dec_off, n_rows = _vec_layout(seq_len)
    pe_e = jnp.zeros((seq_len, P), jnp.float32).at[:, :D].set(
        positional_encoding(seq_len, D))
    pe_d = jnp.zeros((seq_len, P), jnp.float32).at[:, :DZ].set(
        positional_encoding(seq_len, DZ))
    vec_buf = jnp.zeros((n_rows, P), jnp.float32)
    vec_buf = vec_buf.at[:len(rows)].set(jnp.stack(rows))
    vec_buf = vec_buf.at[pe_enc_off:pe_enc_off + seq_len].set(pe_e)
    vec_buf = vec_buf.at[pe_dec_off:pe_dec_off + seq_len].set(pe_d)

    return {
        "wsq": jnp.stack(wsq).astype(jnp.bfloat16),     # [27, 128, 128]
        "wff1": jnp.stack(wff1).astype(jnp.bfloat16),   # [4, 128, 256]
        "wff2": jnp.stack(wff2).astype(jnp.bfloat16),   # [4, 256, 128]
        "bff1": jnp.stack(bff1),                        # [4, 256]  f32
        "vec": vec_buf,                                 # [rows, 128] f32
    }


# ---------------------------------------------------------------------------
if __name__ == "__main__":
    B, S = 2, 8
    input_dim, z_dim = 32, 8

    key = jax.random.PRNGKey(0)
    kx, kp, ke = jax.random.split(key, 3)
    x = jax.random.normal(kx, (B, S, input_dim), jnp.float32)
    params = init_params(kp, z_dim, input_dim, S)
    eps = jax.random.normal(ke, (B, z_dim), jnp.float32)

    y, mean, std = transformer_vae_forward(x, params, eps)
    jax.block_until_ready((y, mean, std))

    assert y.shape == (B, S, input_dim)
    assert mean.shape == (B, z_dim)
    assert std.shape == (B, z_dim)
    assert bool(jnp.all(jnp.isfinite(y)))
    assert bool(jnp.all(jnp.isfinite(mean)))
    assert bool(jnp.all(jnp.isfinite(std)))
    print("KERNEL_OK")
</pallas_src>

<mosaic_0001>
module attributes {stable_mosaic.version = 11 : i64} {
  func.func @_vae_kernel(%arg0: memref<16x128xf32, #tpu.memory_space<vmem>>, %arg1: memref<2x128xf32, #tpu.memory_space<vmem>>, %arg2: memref<27x128x128xbf16, #tpu.memory_space<vmem>>, %arg3: memref<4x128x256xbf16, #tpu.memory_space<vmem>>, %arg4: memref<4x256x128xbf16, #tpu.memory_space<vmem>>, %arg5: memref<4x256xf32, #tpu.memory_space<vmem>>, %arg6: memref<72x128xf32, #tpu.memory_space<vmem>>, %arg7: memref<16x128xf32, #tpu.memory_space<vmem>>, %arg8: memref<2x128xf32, #tpu.memory_space<vmem>>, %arg9: memref<2x128xf32, #tpu.memory_space<vmem>>) attributes {dimension_semantics = [], scalar_prefetch = 0 : i64, scratch_operands = 0 : i64, tpu.core_type = #tpu.core_type<tc>} {
    %0 = tpu.iota {dimensions = array<i32: 1>} : vector<1x128xi32>
    %c32_i32 = arith.constant 32 : i32
    %1 = vector.broadcast %c32_i32 : i32 to vector<1x128xi32>
    %2 = arith.cmpi slt, %0, %1 : vector<1x128xi32>
    %3 = arith.extui %2 : vector<1x128xi1> to vector<1x128xi32>
    %4 = arith.sitofp %3 : vector<1x128xi32> to vector<1x128xf32>
    %c40_i32 = arith.constant 40 : i32
    %5 = vector.broadcast %c40_i32 : i32 to vector<1x128xi32>
    %6 = arith.cmpi slt, %0, %5 : vector<1x128xi32>
    %7 = arith.extui %6 : vector<1x128xi1> to vector<1x128xi32>
    %8 = arith.sitofp %7 : vector<1x128xi32> to vector<1x128xf32>
    %c56 = arith.constant 56 : index
    %c0 = arith.constant 0 : index
    %9 = vector.load %arg6[%c56, %c0] : memref<72x128xf32, #tpu.memory_space<vmem>>, vector<8x128xf32>
    %c0_0 = arith.constant 0 : index
    %c0_1 = arith.constant 0 : index
    %10 = vector.load %arg0[%c0_0, %c0_1] : memref<16x128xf32, #tpu.memory_space<vmem>>, vector<16x128xf32>
    %11 = vector.shape_cast %10 : vector<16x128xf32> to vector<2x8x128xf32>
    %12 = vector.shape_cast %9 : vector<8x128xf32> to vector<1x8x128xf32>
    %13 = vector.broadcast %12 : vector<1x8x128xf32> to vector<2x8x128xf32>
    %14 = arith.addf %11, %13 : vector<2x8x128xf32>
    %15 = vector.shape_cast %14 : vector<2x8x128xf32> to vector<16x128xf32>
    %c0_2 = arith.constant 0 : index
    %c0_3 = arith.constant 0 : index
    %c0_4 = arith.constant 0 : index
    %16 = vector.load %arg2[%c0_2, %c0_3, %c0_4] : memref<27x128x128xbf16, #tpu.memory_space<vmem>>, vector<1x128x128xbf16>
    %17 = vector.shape_cast %16 : vector<1x128x128xbf16> to vector<128x128xbf16>
    %18 = arith.truncf %15 : vector<16x128xf32> to vector<16x128xbf16>
    %cst = arith.constant dense<0.000000e+00> : vector<16x128xf32>
    %19 = tpu.matmul %18, %17, %cst {dimension_numbers = #tpu.dot_dimension_numbers<[1], [0], [0], [1], [0, 0, 1, 1], [], []>} : vector<16x128xbf16>, vector<128x128xbf16>, vector<16x128xf32> -> vector<16x128xf32>
    %c0_5 = arith.constant 0 : index
    %c0_6 = arith.constant 0 : index
    %20 = vector.load %arg6[%c0_5, %c0_6] : memref<72x128xf32, #tpu.memory_space<vmem>>, vector<1x128xf32>
    %21 = vector.broadcast %20 : vector<1x128xf32> to vector<16x128xf32>
    %22 = arith.addf %19, %21 : vector<16x128xf32>
    %c1 = arith.constant 1 : index
    %c0_7 = arith.constant 0 : index
    %c0_8 = arith.constant 0 : index
    %23 = vector.load %arg2[%c1, %c0_7, %c0_8] : memref<27x128x128xbf16, #tpu.memory_space<vmem>>, vector<1x128x128xbf16>
    %24 = vector.shape_cast %23 : vector<1x128x128xbf16> to vector<128x128xbf16>
    %25 = arith.truncf %15 : vector<16x128xf32> to vector<16x128xbf16>
    %cst_9 = arith.constant dense<0.000000e+00> : vector<16x128xf32>
    %26 = tpu.matmul %25, %24, %cst_9 {dimension_numbers = #tpu.dot_dimension_numbers<[1], [0], [0], [1], [0, 0, 1, 1], [], []>} : vector<16x128xbf16>, vector<128x128xbf16>, vector<16x128xf32> -> vector<16x128xf32>
    %c1_10 = arith.constant 1 : index
    %c0_11 = arith.constant 0 : index
    %27 = vector.load %arg6[%c1_10, %c0_11] : memref<72x128xf32, #tpu.memory_space<vmem>>, vector<1x128xf32>
    %28 = vector.broadcast %27 : vector<1x128xf32> to vector<16x128xf32>
    %29 = arith.addf %26, %28 : vector<16x128xf32>
    %c2 = arith.constant 2 : index
    %c0_12 = arith.constant 0 : index
    %c0_13 = arith.constant 0 : index
    %30 = vector.load %arg2[%c2, %c0_12, %c0_13] : memref<27x128x128xbf16, #tpu.memory_space<vmem>>, vector<1x128x128xbf16>
    %31 = vector.shape_cast %30 : vector<1x128x128xbf16> to vector<128x128xbf16>
    %32 = arith.truncf %15 : vector<16x128xf32> to vector<16x128xbf16>
    %cst_14 = arith.constant dense<0.000000e+00> : vector<16x128xf32>
    %33 = tpu.matmul %32, %31, %cst_14 {dimension_numbers = #tpu.dot_dimension_numbers<[1], [0], [0], [1], [0, 0, 1, 1], [], []>} : vector<16x128xbf16>, vector<128x128xbf16>, vector<16x128xf32> -> vector<16x128xf32>
    %c2_15 = arith.constant 2 : index
    %c0_16 = arith.constant 0 : index
    %34 = vector.load %arg6[%c2_15, %c0_16] : memref<72x128xf32, #tpu.memory_space<vmem>>, vector<1x128xf32>
    %35 = vector.broadcast %34 : vector<1x128xf32> to vector<16x128xf32>
    %36 = arith.addf %33, %35 : vector<16x128xf32>
    %37 = vector.shape_cast %22 : vector<16x128xf32> to vector<2x8x128xf32>
    %38 = vector.shape_cast %29 : vector<16x128xf32> to vector<2x8x128xf32>
    "tpu.trace_start"() <{level = 10 : i32, message = "bqd,bkd->bqk"}> : () -> ()
    %cst_17 = arith.constant dense<0.000000e+00> : vector<2x8x8xf32>
    %39 = tpu.matmul %37, %38, %cst_17 {dimension_numbers = #tpu.dot_dimension_numbers<[2], [2], [1], [1], [0, 0, 0, 1, 1, 1], [0], [0]>} : vector<2x8x128xf32>, vector<2x8x128xf32>, vector<2x8x8xf32> -> vector<2x8x8xf32>
    "tpu.trace_stop"() : () -> ()
    %cst_18 = arith.constant 0.176776692 : f32
    %40 = vector.broadcast %cst_18 : f32 to vector<2x8x8xf32>
    %41 = arith.mulf %39, %40 : vector<2x8x8xf32>
    %cst_19 = arith.constant dense<0xFF800000> : vector<2x8xf32>
    %42 = vector.multi_reduction <maximumf>, %41, %cst_19 [2] : vector<2x8x8xf32> to vector<2x8xf32>
    %43 = vector.shape_cast %42 : vector<2x8xf32> to vector<2x8x1xf32>
    %44 = vector.broadcast %43 : vector<2x8x1xf32> to vector<2x8x8xf32>
    %45 = arith.subf %41, %44 : vector<2x8x8xf32>
    %46 = math.exp %45 : vector<2x8x8xf32>
    %cst_20 = arith.constant dense<0.000000e+00> : vector<2x8xf32>
    %47 = vector.multi_reduction <add>, %46, %cst_20 [2] : vector<2x8x8xf32> to vector<2x8xf32>
    %48 = vector.shape_cast %47 : vector<2x8xf32> to vector<2x8x1xf32>
    %49 = tpu.reciprocal %48 {approx = true} : vector<2x8x1xf32> -> vector<2x8x1xf32>
    %50 = vector.broadcast %49 : vector<2x8x1xf32> to vector<2x8x8xf32>
    %51 = arith.mulf %46, %50 : vector<2x8x8xf32>
    %52 = vector.shape_cast %36 : vector<16x128xf32> to vector<2x8x128xf32>
    "tpu.trace_start"() <{level = 10 : i32, message = "bqk,bkd->bqd"}> : () -> ()
    %cst_21 = arith.constant dense<0.000000e+00> : vector<2x8x128xf32>
    %53 = tpu.matmul %51, %52, %cst_21 {dimension_numbers = #tpu.dot_dimension_numbers<[2], [1], [1], [2], [0, 0, 0, 1, 1, 2], [0], [0]>} : vector<2x8x8xf32>, vector<2x8x128xf32>, vector<2x8x128xf32> -> vector<2x8x128xf32>
    "tpu.trace_stop"() : () -> ()
    %54 = vector.shape_cast %53 : vector<2x8x128xf32> to vector<16x128xf32>
    %c3 = arith.constant 3 : index
    %c0_22 = arith.constant 0 : index
    %c0_23 = arith.constant 0 : index
    %55 = vector.load %arg2[%c3, %c0_22, %c0_23] : memref<27x128x128xbf16, #tpu.memory_space<vmem>>, vector<1x128x128xbf16>
    %56 = vector.shape_cast %55 : vector<1x128x128xbf16> to vector<128x128xbf16>
    %57 = arith.truncf %54 : vector<16x128xf32> to vector<16x128xbf16>
    %cst_24 = arith.constant dense<0.000000e+00> : vector<16x128xf32>
    %58 = tpu.matmul %57, %56, %cst_24 {dimension_numbers = #tpu.dot_dimension_numbers<[1], [0], [0], [1], [0, 0, 1, 1], [], []>} : vector<16x128xbf16>, vector<128x128xbf16>, vector<16x128xf32> -> vector<16x128xf32>
    %c3_25 = arith.constant 3 : index
    %c0_26 = arith.constant 0 : index
    %59 = vector.load %arg6[%c3_25, %c0_26] : memref<72x128xf32, #tpu.memory_space<vmem>>, vector<1x128xf32>
    %60 = vector.broadcast %59 : vector<1x128xf32> to vector<16x128xf32>
    %61 = arith.addf %58, %60 : vector<16x128xf32>
    %62 = arith.addf %15, %61 : vector<16x128xf32>
    %c5 = arith.constant 5 : index
    %c0_27 = arith.constant 0 : index
    %63 = vector.load %arg6[%c5, %c0_27] : memref<72x128xf32, #tpu.memory_space<vmem>>, vector<1x128xf32>
    %c6 = arith.constant 6 : index
    %c0_28 = arith.constant 0 : index
    %64 = vector.load %arg6[%c6, %c0_28] : memref<72x128xf32, #tpu.memory_space<vmem>>, vector<1x128xf32>
    %cst_29 = arith.constant dense<0.000000e+00> : vector<16xf32>
    %65 = vector.multi_reduction <add>, %62, %cst_29 [1] : vector<16x128xf32> to vector<16xf32>
    %66 = vector.shape_cast %65 : vector<16xf32> to vector<16x1xf32>
    %cst_30 = arith.constant 3.125000e-02 : f32
    %67 = vector.broadcast %cst_30 : f32 to vector<16x1xf32>
    %68 = arith.mulf %66, %67 : vector<16x1xf32>
    %69 = vector.broadcast %68 : vector<16x1xf32> to vector<16x128xf32>
    %70 = arith.subf %62, %69 : vector<16x128xf32>
    %71 = vector.broadcast %4 : vector<1x128xf32> to vector<16x128xf32>
    %72 = arith.mulf %70, %71 : vector<16x128xf32>
    %73 = arith.mulf %72, %72 : vector<16x128xf32>
    %cst_31 = arith.constant dense<0.000000e+00> : vector<16xf32>
    %74 = vector.multi_reduction <add>, %73, %cst_31 [1] : vector<16x128xf32> to vector<16xf32>
    %75 = vector.shape_cast %74 : vector<16xf32> to vector<16x1xf32>
    %cst_32 = arith.constant 3.125000e-02 : f32
    %76 = vector.broadcast %cst_32 : f32 to vector<16x1xf32>
    %77 = arith.mulf %75, %76 : vector<16x1xf32>
    %cst_33 = arith.constant 9.99999974E-6 : f32
    %78 = vector.broadcast %cst_33 : f32 to vector<16x1xf32>
    %79 = arith.addf %77, %78 : vector<16x1xf32>
    %80 = math.rsqrt %79 : vector<16x1xf32>
    %81 = vector.broadcast %80 : vector<16x1xf32> to vector<16x128xf32>
    %82 = arith.mulf %72, %81 : vector<16x128xf32>
    %83 = vector.broadcast %63 : vector<1x128xf32> to vector<16x128xf32>
    %84 = arith.mulf %82, %83 : vector<16x128xf32>
    %85 = vector.broadcast %64 : vector<1x128xf32> to vector<16x128xf32>
    %86 = arith.addf %84, %85 : vector<16x128xf32>
    %c4 = arith.constant 4 : index
    %c0_34 = arith.constant 0 : index
    %87 = vector.load %arg6[%c4, %c0_34] : memref<72x128xf32, #tpu.memory_space<vmem>>, vector<1x128xf32>
    %c0_35 = arith.constant 0 : index
    %c0_36 = arith.constant 0 : index
    %c0_37 = arith.constant 0 : index
    %88 = vector.load %arg3[%c0_35, %c0_36, %c0_37] : memref<4x128x256xbf16, #tpu.memory_space<vmem>>, vector<1x128x256xbf16>
    %89 = vector.shape_cast %88 : vector<1x128x256xbf16> to vector<128x256xbf16>
    %90 = arith.truncf %86 : vector<16x128xf32> to vector<16x128xbf16>
    %cst_38 = arith.constant dense<0.000000e+00> : vector<16x256xf32>
    %91 = tpu.matmul %90, %89, %cst_38 {dimension_numbers = #tpu.dot_dimension_numbers<[1], [0], [0], [1], [0, 0, 1, 1], [], []>} : vector<16x128xbf16>, vector<128x256xbf16>, vector<16x256xf32> -> vector<16x256xf32>
    %c0_39 = arith.constant 0 : index
    %c0_40 = arith.constant 0 : index
    %92 = vector.load %arg5[%c0_39, %c0_40] : memref<4x256xf32, #tpu.memory_space<vmem>>, vector<1x256xf32>
    %93 = vector.broadcast %92 : vector<1x256xf32> to vector<16x256xf32>
    %94 = arith.addf %91, %93 : vector<16x256xf32>
    %cst_41 = arith.constant 0.000000e+00 : f32
    %95 = vector.broadcast %cst_41 : f32 to vector<16x256xf32>
    %96 = arith.maximumf %94, %95 : vector<16x256xf32>
    %c0_42 = arith.constant 0 : index
    %c0_43 = arith.constant 0 : index
    %c0_44 = arith.constant 0 : index
    %97 = vector.load %arg4[%c0_42, %c0_43, %c0_44] : memref<4x256x128xbf16, #tpu.memory_space<vmem>>, vector<1x256x128xbf16>
    %98 = vector.shape_cast %97 : vector<1x256x128xbf16> to vector<256x128xbf16>
    %99 = arith.truncf %96 : vector<16x256xf32> to vector<16x256xbf16>
    %cst_45 = arith.constant dense<0.000000e+00> : vector<16x128xf32>
    %100 = tpu.matmul %99, %98, %cst_45 {dimension_numbers = #tpu.dot_dimension_numbers<[1], [0], [0], [1], [0, 0, 1, 1], [], []>} : vector<16x256xbf16>, vector<256x128xbf16>, vector<16x128xf32> -> vector<16x128xf32>
    %101 = vector.broadcast %87 : vector<1x128xf32> to vector<16x128xf32>
    %102 = arith.addf %100, %101 : vector<16x128xf32>
    %103 = arith.addf %86, %102 : vector<16x128xf32>
    %c7 = arith.constant 7 : index
    %c0_46 = arith.constant 0 : index
    %104 = vector.load %arg6[%c7, %c0_46] : memref<72x128xf32, #tpu.memory_space<vmem>>, vector<1x128xf32>
    %c8 = arith.constant 8 : index
    %c0_47 = arith.constant 0 : index
    %105 = vector.load %arg6[%c8, %c0_47] : memref<72x128xf32, #tpu.memory_space<vmem>>, vector<1x128xf32>
    %cst_48 = arith.constant dense<0.000000e+00> : vector<16xf32>
    %106 = vector.multi_reduction <add>, %103, %cst_48 [1] : vector<16x128xf32> to vector<16xf32>
    %107 = vector.shape_cast %106 : vector<16xf32> to vector<16x1xf32>
    %cst_49 = arith.constant 3.125000e-02 : f32
    %108 = vector.broadcast %cst_49 : f32 to vector<16x1xf32>
    %109 = arith.mulf %107, %108 : vector<16x1xf32>
    %110 = vector.broadcast %109 : vector<16x1xf32> to vector<16x128xf32>
    %111 = arith.subf %103, %110 : vector<16x128xf32>
    %112 = vector.broadcast %4 : vector<1x128xf32> to vector<16x128xf32>
    %113 = arith.mulf %111, %112 : vector<16x128xf32>
    %114 = arith.mulf %113, %113 : vector<16x128xf32>
    %cst_50 = arith.constant dense<0.000000e+00> : vector<16xf32>
    %115 = vector.multi_reduction <add>, %114, %cst_50 [1] : vector<16x128xf32> to vector<16xf32>
    %116 = vector.shape_cast %115 : vector<16xf32> to vector<16x1xf32>
    %cst_51 = arith.constant 3.125000e-02 : f32
    %117 = vector.broadcast %cst_51 : f32 to vector<16x1xf32>
    %118 = arith.mulf %116, %117 : vector<16x1xf32>
    %cst_52 = arith.constant 9.99999974E-6 : f32
    %119 = vector.broadcast %cst_52 : f32 to vector<16x1xf32>
    %120 = arith.addf %118, %119 : vector<16x1xf32>
    %121 = math.rsqrt %120 : vector<16x1xf32>
    %122 = vector.broadcast %121 : vector<16x1xf32> to vector<16x128xf32>
    %123 = arith.mulf %113, %122 : vector<16x128xf32>
    %124 = vector.broadcast %104 : vector<1x128xf32> to vector<16x128xf32>
    %125 = arith.mulf %123, %124 : vector<16x128xf32>
    %126 = vector.broadcast %105 : vector<1x128xf32> to vector<16x128xf32>
    %127 = arith.addf %125, %126 : vector<16x128xf32>
    %c4_53 = arith.constant 4 : index
    %c0_54 = arith.constant 0 : index
    %c0_55 = arith.constant 0 : index
    %128 = vector.load %arg2[%c4_53, %c0_54, %c0_55] : memref<27x128x128xbf16, #tpu.memory_space<vmem>>, vector<1x128x128xbf16>
    %129 = vector.shape_cast %128 : vector<1x128x128xbf16> to vector<128x128xbf16>
    %130 = arith.truncf %127 : vector<16x128xf32> to vector<16x128xbf16>
    %cst_56 = arith.constant dense<0.000000e+00> : vector<16x128xf32>
    %131 = tpu.matmul %130, %129, %cst_56 {dimension_numbers = #tpu.dot_dimension_numbers<[1], [0], [0], [1], [0, 0, 1, 1], [], []>} : vector<16x128xbf16>, vector<128x128xbf16>, vector<16x128xf32> -> vector<16x128xf32>
    %c9 = arith.constant 9 : index
    %c0_57 = arith.constant 0 : index
    %132 = vector.load %arg6[%c9, %c0_57] : memref<72x128xf32, #tpu.memory_space<vmem>>, vector<1x128xf32>
    %133 = vector.broadcast %132 : vector<1x128xf32> to vector<16x128xf32>
    %134 = arith.addf %131, %133 : vector<16x128xf32>
    %c5_58 = arith.constant 5 : index
    %c0_59 = arith.constant 0 : index
    %c0_60 = arith.constant 0 : index
    %135 = vector.load %arg2[%c5_58, %c0_59, %c0_60] : memref<27x128x128xbf16, #tpu.memory_space<vmem>>, vector<1x128x128xbf16>
    %136 = vector.shape_cast %135 : vector<1x128x128xbf16> to vector<128x128xbf16>
    %137 = arith.truncf %127 : vector<16x128xf32> to vector<16x128xbf16>
    %cst_61 = arith.constant dense<0.000000e+00> : vector<16x128xf32>
    %138 = tpu.matmul %137, %136, %cst_61 {dimension_numbers = #tpu.dot_dimension_numbers<[1], [0], [0], [1], [0, 0, 1, 1], [], []>} : vector<16x128xbf16>, vector<128x128xbf16>, vector<16x128xf32> -> vector<16x128xf32>
    %c10 = arith.constant 10 : index
    %c0_62 = arith.constant 0 : index
    %139 = vector.load %arg6[%c10, %c0_62] : memref<72x128xf32, #tpu.memory_space<vmem>>, vector<1x128xf32>
    %140 = vector.broadcast %139 : vector<1x128xf32> to vector<16x128xf32>
    %141 = arith.addf %138, %140 : vector<16x128xf32>
    %c6_63 = arith.constant 6 : index
    %c0_64 = arith.constant 0 : index
    %c0_65 = arith.constant 0 : index
    %142 = vector.load %arg2[%c6_63, %c0_64, %c0_65] : memref<27x128x128xbf16, #tpu.memory_space<vmem>>, vector<1x128x128xbf16>
    %143 = vector.shape_cast %142 : vector<1x128x128xbf16> to vector<128x128xbf16>
    %144 = arith.truncf %127 : vector<16x128xf32> to vector<16x128xbf16>
    %cst_66 = arith.constant dense<0.000000e+00> : vector<16x128xf32>
    %145 = tpu.matmul %144, %143, %cst_66 {dimension_numbers = #tpu.dot_dimension_numbers<[1], [0], [0], [1], [0, 0, 1, 1], [], []>} : vector<16x128xbf16>, vector<128x128xbf16>, vector<16x128xf32> -> vector<16x128xf32>
    %c11 = arith.constant 11 : index
    %c0_67 = arith.constant 0 : index
    %146 = vector.load %arg6[%c11, %c0_67] : memref<72x128xf32, #tpu.memory_space<vmem>>, vector<1x128xf32>
    %147 = vector.broadcast %146 : vector<1x128xf32> to vector<16x128xf32>
    %148 = arith.addf %145, %147 : vector<16x128xf32>
    %149 = vector.shape_cast %134 : vector<16x128xf32> to vector<2x8x128xf32>
    %150 = vector.shape_cast %141 : vector<16x128xf32> to vector<2x8x128xf32>
    "tpu.trace_start"() <{level = 10 : i32, message = "bqd,bkd->bqk"}> : () -> ()
    %cst_68 = arith.constant dense<0.000000e+00> : vector<2x8x8xf32>
    %151 = tpu.matmul %149, %150, %cst_68 {dimension_numbers = #tpu.dot_dimension_numbers<[2], [2], [1], [1], [0, 0, 0, 1, 1, 1], [0], [0]>} : vector<2x8x128xf32>, vector<2x8x128xf32>, vector<2x8x8xf32> -> vector<2x8x8xf32>
    "tpu.trace_stop"() : () -> ()
    %cst_69 = arith.constant 0.176776692 : f32
    %152 = vector.broadcast %cst_69 : f32 to vector<2x8x8xf32>
    %153 = arith.mulf %151, %152 : vector<2x8x8xf32>
    %cst_70 = arith.constant dense<0xFF800000> : vector<2x8xf32>
    %154 = vector.multi_reduction <maximumf>, %153, %cst_70 [2] : vector<2x8x8xf32> to vector<2x8xf32>
    %155 = vector.shape_cast %154 : vector<2x8xf32> to vector<2x8x1xf32>
    %156 = vector.broadcast %155 : vector<2x8x1xf32> to vector<2x8x8xf32>
    %157 = arith.subf %153, %156 : vector<2x8x8xf32>
    %158 = math.exp %157 : vector<2x8x8xf32>
    %cst_71 = arith.constant dense<0.000000e+00> : vector<2x8xf32>
    %159 = vector.multi_reduction <add>, %158, %cst_71 [2] : vector<2x8x8xf32> to vector<2x8xf32>
    %160 = vector.shape_cast %159 : vector<2x8xf32> to vector<2x8x1xf32>
    %161 = tpu.reciprocal %160 {approx = true} : vector<2x8x1xf32> -> vector<2x8x1xf32>
    %162 = vector.broadcast %161 : vector<2x8x1xf32> to vector<2x8x8xf32>
    %163 = arith.mulf %158, %162 : vector<2x8x8xf32>
    %164 = vector.shape_cast %148 : vector<16x128xf32> to vector<2x8x128xf32>
    "tpu.trace_start"() <{level = 10 : i32, message = "bqk,bkd->bqd"}> : () -> ()
    %cst_72 = arith.constant dense<0.000000e+00> : vector<2x8x128xf32>
    %165 = tpu.matmul %163, %164, %cst_72 {dimension_numbers = #tpu.dot_dimension_numbers<[2], [1], [1], [2], [0, 0, 0, 1, 1, 2], [0], [0]>} : vector<2x8x8xf32>, vector<2x8x128xf32>, vector<2x8x128xf32> -> vector<2x8x128xf32>
    "tpu.trace_stop"() : () -> ()
    %166 = vector.shape_cast %165 : vector<2x8x128xf32> to vector<16x128xf32>
    %c7_73 = arith.constant 7 : index
    %c0_74 = arith.constant 0 : index
    %c0_75 = arith.constant 0 : index
    %167 = vector.load %arg2[%c7_73, %c0_74, %c0_75] : memref<27x128x128xbf16, #tpu.memory_space<vmem>>, vector<1x128x128xbf16>
    %168 = vector.shape_cast %167 : vector<1x128x128xbf16> to vector<128x128xbf16>
    %169 = arith.truncf %166 : vector<16x128xf32> to vector<16x128xbf16>
    %cst_76 = arith.constant dense<0.000000e+00> : vector<16x128xf32>
    %170 = tpu.matmul %169, %168, %cst_76 {dimension_numbers = #tpu.dot_dimension_numbers<[1], [0], [0], [1], [0, 0, 1, 1], [], []>} : vector<16x128xbf16>, vector<128x128xbf16>, vector<16x128xf32> -> vector<16x128xf32>
    %c12 = arith.constant 12 : index
    %c0_77 = arith.constant 0 : index
    %171 = vector.load %arg6[%c12, %c0_77] : memref<72x128xf32, #tpu.memory_space<vmem>>, vector<1x128xf32>
    %172 = vector.broadcast %171 : vector<1x128xf32> to vector<16x128xf32>
    %173 = arith.addf %170, %172 : vector<16x128xf32>
    %174 = arith.addf %127, %173 : vector<16x128xf32>
    %c14 = arith.constant 14 : index
    %c0_78 = arith.constant 0 : index
    %175 = vector.load %arg6[%c14, %c0_78] : memref<72x128xf32, #tpu.memory_space<vmem>>, vector<1x128xf32>
    %c15 = arith.constant 15 : index
    %c0_79 = arith.constant 0 : index
    %176 = vector.load %arg6[%c15, %c0_79] : memref<72x128xf32, #tpu.memory_space<vmem>>, vector<1x128xf32>
    %cst_80 = arith.constant dense<0.000000e+00> : vector<16xf32>
    %177 = vector.multi_reduction <add>, %174, %cst_80 [1] : vector<16x128xf32> to vector<16xf32>
    %178 = vector.shape_cast %177 : vector<16xf32> to vector<16x1xf32>
    %cst_81 = arith.constant 3.125000e-02 : f32
    %179 = vector.broadcast %cst_81 : f32 to vector<16x1xf32>
    %180 = arith.mulf %178, %179 : vector<16x1xf32>
    %181 = vector.broadcast %180 : vector<16x1xf32> to vector<16x128xf32>
    %182 = arith.subf %174, %181 : vector<16x128xf32>
    %183 = vector.broadcast %4 : vector<1x128xf32> to vector<16x128xf32>
    %184 = arith.mulf %182, %183 : vector<16x128xf32>
    %185 = arith.mulf %184, %184 : vector<16x128xf32>
    %cst_82 = arith.constant dense<0.000000e+00> : vector<16xf32>
    %186 = vector.multi_reduction <add>, %185, %cst_82 [1] : vector<16x128xf32> to vector<16xf32>
    %187 = vector.shape_cast %186 : vector<16xf32> to vector<16x1xf32>
    %cst_83 = arith.constant 3.125000e-02 : f32
    %188 = vector.broadcast %cst_83 : f32 to vector<16x1xf32>
    %189 = arith.mulf %187, %188 : vector<16x1xf32>
    %cst_84 = arith.constant 9.99999974E-6 : f32
    %190 = vector.broadcast %cst_84 : f32 to vector<16x1xf32>
    %191 = arith.addf %189, %190 : vector<16x1xf32>
    %192 = math.rsqrt %191 : vector<16x1xf32>
    %193 = vector.broadcast %192 : vector<16x1xf32> to vector<16x128xf32>
    %194 = arith.mulf %184, %193 : vector<16x128xf32>
    %195 = vector.broadcast %175 : vector<1x128xf32> to vector<16x128xf32>
    %196 = arith.mulf %194, %195 : vector<16x128xf32>
    %197 = vector.broadcast %176 : vector<1x128xf32> to vector<16x128xf32>
    %198 = arith.addf %196, %197 : vector<16x128xf32>
    %c13 = arith.constant 13 : index
    %c0_85 = arith.constant 0 : index
    %199 = vector.load %arg6[%c13, %c0_85] : memref<72x128xf32, #tpu.memory_space<vmem>>, vector<1x128xf32>
    %c1_86 = arith.constant 1 : index
    %c0_87 = arith.constant 0 : index
    %c0_88 = arith.constant 0 : index
    %200 = vector.load %arg3[%c1_86, %c0_87, %c0_88] : memref<4x128x256xbf16, #tpu.memory_space<vmem>>, vector<1x128x256xbf16>
    %201 = vector.shape_cast %200 : vector<1x128x256xbf16> to vector<128x256xbf16>
    %202 = arith.truncf %198 : vector<16x128xf32> to vector<16x128xbf16>
    %cst_89 = arith.constant dense<0.000000e+00> : vector<16x256xf32>
    %203 = tpu.matmul %202, %201, %cst_89 {dimension_numbers = #tpu.dot_dimension_numbers<[1], [0], [0], [1], [0, 0, 1, 1], [], []>} : vector<16x128xbf16>, vector<128x256xbf16>, vector<16x256xf32> -> vector<16x256xf32>
    %c1_90 = arith.constant 1 : index
    %c0_91 = arith.constant 0 : index
    %204 = vector.load %arg5[%c1_90, %c0_91] : memref<4x256xf32, #tpu.memory_space<vmem>>, vector<1x256xf32>
    %205 = vector.broadcast %204 : vector<1x256xf32> to vector<16x256xf32>
    %206 = arith.addf %203, %205 : vector<16x256xf32>
    %cst_92 = arith.constant 0.000000e+00 : f32
    %207 = vector.broadcast %cst_92 : f32 to vector<16x256xf32>
    %208 = arith.maximumf %206, %207 : vector<16x256xf32>
    %c1_93 = arith.constant 1 : index
    %c0_94 = arith.constant 0 : index
    %c0_95 = arith.constant 0 : index
    %209 = vector.load %arg4[%c1_93, %c0_94, %c0_95] : memref<4x256x128xbf16, #tpu.memory_space<vmem>>, vector<1x256x128xbf16>
    %210 = vector.shape_cast %209 : vector<1x256x128xbf16> to vector<256x128xbf16>
    %211 = arith.truncf %208 : vector<16x256xf32> to vector<16x256xbf16>
    %cst_96 = arith.constant dense<0.000000e+00> : vector<16x128xf32>
    %212 = tpu.matmul %211, %210, %cst_96 {dimension_numbers = #tpu.dot_dimension_numbers<[1], [0], [0], [1], [0, 0, 1, 1], [], []>} : vector<16x256xbf16>, vector<256x128xbf16>, vector<16x128xf32> -> vector<16x128xf32>
    %213 = vector.broadcast %199 : vector<1x128xf32> to vector<16x128xf32>
    %214 = arith.addf %212, %213 : vector<16x128xf32>
    %215 = arith.addf %198, %214 : vector<16x128xf32>
    %c16 = arith.constant 16 : index
    %c0_97 = arith.constant 0 : index
    %216 = vector.load %arg6[%c16, %c0_97] : memref<72x128xf32, #tpu.memory_space<vmem>>, vector<1x128xf32>
    %c17 = arith.constant 17 : index
    %c0_98 = arith.constant 0 : index
    %217 = vector.load %arg6[%c17, %c0_98] : memref<72x128xf32, #tpu.memory_space<vmem>>, vector<1x128xf32>
    %cst_99 = arith.constant dense<0.000000e+00> : vector<16xf32>
    %218 = vector.multi_reduction <add>, %215, %cst_99 [1] : vector<16x128xf32> to vector<16xf32>
    %219 = vector.shape_cast %218 : vector<16xf32> to vector<16x1xf32>
    %cst_100 = arith.constant 3.125000e-02 : f32
    %220 = vector.broadcast %cst_100 : f32 to vector<16x1xf32>
    %221 = arith.mulf %219, %220 : vector<16x1xf32>
    %222 = vector.broadcast %221 : vector<16x1xf32> to vector<16x128xf32>
    %223 = arith.subf %215, %222 : vector<16x128xf32>
    %224 = vector.broadcast %4 : vector<1x128xf32> to vector<16x128xf32>
    %225 = arith.mulf %223, %224 : vector<16x128xf32>
    %226 = arith.mulf %225, %225 : vector<16x128xf32>
    %cst_101 = arith.constant dense<0.000000e+00> : vector<16xf32>
    %227 = vector.multi_reduction <add>, %226, %cst_101 [1] : vector<16x128xf32> to vector<16xf32>
    %228 = vector.shape_cast %227 : vector<16xf32> to vector<16x1xf32>
    %cst_102 = arith.constant 3.125000e-02 : f32
    %229 = vector.broadcast %cst_102 : f32 to vector<16x1xf32>
    %230 = arith.mulf %228, %229 : vector<16x1xf32>
    %cst_103 = arith.constant 9.99999974E-6 : f32
    %231 = vector.broadcast %cst_103 : f32 to vector<16x1xf32>
    %232 = arith.addf %230, %231 : vector<16x1xf32>
    %233 = math.rsqrt %232 : vector<16x1xf32>
    %234 = vector.broadcast %233 : vector<16x1xf32> to vector<16x128xf32>
    %235 = arith.mulf %225, %234 : vector<16x128xf32>
    %236 = vector.broadcast %216 : vector<1x128xf32> to vector<16x128xf32>
    %237 = arith.mulf %235, %236 : vector<16x128xf32>
    %238 = vector.broadcast %217 : vector<1x128xf32> to vector<16x128xf32>
    %239 = arith.addf %237, %238 : vector<16x128xf32>
    %240 = vector.shape_cast %239 : vector<16x128xf32> to vector<2x8x128xf32>
    %241 = vector.extract_strided_slice %240 {offsets = [0, 7, 0], sizes = [2, 1, 128], strides = [1, 1, 1]} : vector<2x8x128xf32> to vector<2x1x128xf32>
    %242 = vector.shape_cast %241 : vector<2x1x128xf32> to vector<2x128xf32>
    %c24 = arith.constant 24 : index
    %c0_104 = arith.constant 0 : index
    %c0_105 = arith.constant 0 : index
    %243 = vector.load %arg2[%c24, %c0_104, %c0_105] : memref<27x128x128xbf16, #tpu.memory_space<vmem>>, vector<1x128x128xbf16>
    %244 = vector.shape_cast %243 : vector<1x128x128xbf16> to vector<128x128xbf16>
    %245 = arith.truncf %242 : vector<2x128xf32> to vector<2x128xbf16>
    %cst_106 = arith.constant dense<0.000000e+00> : vector<2x128xf32>
    %246 = tpu.matmul %245, %244, %cst_106 {dimension_numbers = #tpu.dot_dimension_numbers<[1], [0], [0], [1], [0, 0, 1, 1], [], []>} : vector<2x128xbf16>, vector<128x128xbf16>, vector<2x128xf32> -> vector<2x128xf32>
    %c48 = arith.constant 48 : index
    %c0_107 = arith.constant 0 : index
    %247 = vector.load %arg6[%c48, %c0_107] : memref<72x128xf32, #tpu.memory_space<vmem>>, vector<1x128xf32>
    %248 = vector.broadcast %247 : vector<1x128xf32> to vector<2x128xf32>
    %249 = arith.addf %246, %248 : vector<2x128xf32>
    %250 = math.tanh %249 : vector<2x128xf32>
    %c25 = arith.constant 25 : index
    %c0_108 = arith.constant 0 : index
    %c0_109 = arith.constant 0 : index
    %251 = vector.load %arg2[%c25, %c0_108, %c0_109] : memref<27x128x128xbf16, #tpu.memory_space<vmem>>, vector<1x128x128xbf16>
    %252 = vector.shape_cast %251 : vector<1x128x128xbf16> to vector<128x128xbf16>
    %253 = arith.truncf %242 : vector<2x128xf32> to vector<2x128xbf16>
    %cst_110 = arith.constant dense<0.000000e+00> : vector<2x128xf32>
    %254 = tpu.matmul %253, %252, %cst_110 {dimension_numbers = #tpu.dot_dimension_numbers<[1], [0], [0], [1], [0, 0, 1, 1], [], []>} : vector<2x128xbf16>, vector<128x128xbf16>, vector<2x128xf32> -> vector<2x128xf32>
    %c49 = arith.constant 49 : index
    %c0_111 = arith.constant 0 : index
    %255 = vector.load %arg6[%c49, %c0_111] : memref<72x128xf32, #tpu.memory_space<vmem>>, vector<1x128xf32>
    %256 = vector.broadcast %255 : vector<1x128xf32> to vector<2x128xf32>
    %257 = arith.addf %254, %256 : vector<2x128xf32>
    %cst_112 = arith.constant 0.000000e+00 : f32
    %258 = vector.broadcast %cst_112 : f32 to vector<2x128xf32>
    %259 = arith.maximumf %257, %258 : vector<2x128xf32>
    %c0_113 = arith.constant 0 : index
    %c0_114 = arith.constant 0 : index
    %260 = vector.load %arg8[%c0_113, %c0_114] : memref<2x128xf32, #tpu.memory_space<vmem>>, vector<2x128xf32>
    tpu.vector_store %arg8[%c0_113, %c0_114], %250 {strides = array<i32>} : memref<2x128xf32, #tpu.memory_space<vmem>>, vector<2x128xf32>,
    %c0_115 = arith.constant 0 : index
    %c0_116 = arith.constant 0 : index
    %261 = vector.load %arg9[%c0_115, %c0_116] : memref<2x128xf32, #tpu.memory_space<vmem>>, vector<2x128xf32>
    tpu.vector_store %arg9[%c0_115, %c0_116], %259 {strides = array<i32>} : memref<2x128xf32, #tpu.memory_space<vmem>>, vector<2x128xf32>,
    %c0_117 = arith.constant 0 : index
    %c0_118 = arith.constant 0 : index
    %262 = vector.load %arg1[%c0_117, %c0_118] : memref<2x128xf32, #tpu.memory_space<vmem>>, vector<2x128xf32>
    %263 = arith.mulf %259, %262 : vector<2x128xf32>
    %264 = arith.addf %250, %263 : vector<2x128xf32>
    %265 = tpu.iota {dimensions = array<i32: 0>} : vector<16x16xi32>
    %266 = tpu.iota {dimensions = array<i32: 1>} : vector<16x16xi32>
    %c1_i32 = arith.constant 1 : i32
    %267 = vector.broadcast %c1_i32 : i32 to vector<16x16xi32>
    %268 = arith.addi %266, %267 : vector<16x16xi32>
    %269 = arith.cmpi eq, %265, %268 : vector<16x16xi32>
    %c8_i32 = arith.constant 8 : i32
    %c0_i32 = arith.constant 0 : i32
    %270 = arith.cmpi eq, %c8_i32, %c0_i32 : i32
    %c1_i32_119 = arith.constant 1 : i32
    %271 = arith.select %270, %c1_i32_119, %c8_i32 : i32
    %272 = vector.broadcast %271 : i32 to vector<16x16xi32>
    %273 = arith.remsi %265, %272 : vector<16x16xi32>
    %c0_i32_120 = arith.constant 0 : i32
    %274 = vector.broadcast %c0_i32_120 : i32 to vector<16x16xi32>
    %275 = arith.cmpi ne, %273, %274 : vector<16x16xi32>
    %c0_i32_121 = arith.constant 0 : i32
    %276 = vector.broadcast %c0_i32_121 : i32 to vector<16x16xi32>
    %277 = arith.cmpi slt, %273, %276 : vector<16x16xi32>
    %c0_i32_122 = arith.constant 0 : i32
    %278 = arith.cmpi slt, %271, %c0_i32_122 : i32
    %279 = vector.broadcast %278 : i1 to vector<16x16xi1>
    %280 = vector.broadcast %279 : vector<16x16xi1> to vector<16x16xi1>
    %281 = arith.xori %277, %280 : vector<16x16xi1>
    %282 = arith.andi %281, %275 : vector<16x16xi1>
    %283 = vector.broadcast %271 : i32 to vector<16x16xi32>
    %284 = arith.addi %273, %283 : vector<16x16xi32>
    %285 = arith.select %282, %284, %273 : vector<16x16xi1>, vector<16x16xi32>
    %c0_i32_123 = arith.constant 0 : i32
    %286 = vector.broadcast %c0_i32_123 : i32 to vector<16x16xi32>
    %287 = arith.cmpi ne, %285, %286 : vector<16x16xi32>
    %288 = arith.andi %269, %287 : vector<16x16xi1>
    %cst_124 = arith.constant 1.000000e+00 : f32
    %cst_125 = arith.constant 0.000000e+00 : f32
    %289 = vector.broadcast %cst_124 : f32 to vector<16x16xf32>
    %290 = vector.broadcast %cst_125 : f32 to vector<16x16xf32>
    %291 = arith.select %288, %289, %290 : vector<16x16xi1>, vector<16x16xf32>
    %c0_126 = arith.constant 0 : index
    %c0_127 = arith.constant 0 : index
    %292 = vector.load %arg0[%c0_126, %c0_127] : memref<16x128xf32, #tpu.memory_space<vmem>>, vector<16x128xf32>
    %cst_128 = arith.constant dense<0.000000e+00> : vector<16x128xf32>
    %293 = tpu.matmul %291, %292, %cst_128 {dimension_numbers = #tpu.dot_dimension_numbers<[1], [0], [0], [1], [0, 0, 1, 1], [], []>} : vector<16x16xf32>, vector<16x128xf32>, vector<16x128xf32> -> vector<16x128xf32>
    %c64 = arith.constant 64 : index
    %c0_129 = arith.constant 0 : index
    %294 = vector.load %arg6[%c64, %c0_129] : memref<72x128xf32, #tpu.memory_space<vmem>>, vector<8x128xf32>
    %295 = vector.shape_cast %293 : vector<16x128xf32> to vector<2x8x128xf32>
    %296 = vector.shape_cast %264 : vector<2x128xf32> to vector<2x1x128xf32>
    %297 = vector.broadcast %296 : vector<2x1x128xf32> to vector<2x8x128xf32>
    %298 = arith.addf %295, %297 : vector<2x8x128xf32>
    %299 = vector.shape_cast %294 : vector<8x128xf32> to vector<1x8x128xf32>
    %300 = vector.broadcast %299 : vector<1x8x128xf32> to vector<2x8x128xf32>
    %301 = arith.addf %298, %300 : vector<2x8x128xf32>
    %302 = vector.shape_cast %301 : vector<2x8x128xf32> to vector<16x128xf32>
    %c8_130 = arith.constant 8 : index
    %c0_131 = arith.constant 0 : index
    %c0_132 = arith.constant 0 : index
    %303 = vector.load %arg2[%c8_130, %c0_131, %c0_132] : memref<27x128x128xbf16, #tpu.memory_space<vmem>>, vector<1x128x128xbf16>
    %304 = vector.shape_cast %303 : vector<1x128x128xbf16> to vector<128x128xbf16>
    %305 = arith.truncf %302 : vector<16x128xf32> to vector<16x128xbf16>
    %cst_133 = arith.constant dense<0.000000e+00> : vector<16x128xf32>
    %306 = tpu.matmul %305, %304, %cst_133 {dimension_numbers = #tpu.dot_dimension_numbers<[1], [0], [0], [1], [0, 0, 1, 1], [], []>} : vector<16x128xbf16>, vector<128x128xbf16>, vector<16x128xf32> -> vector<16x128xf32>
    %c18 = arith.constant 18 : index
    %c0_134 = arith.constant 0 : index
    %307 = vector.load %arg6[%c18, %c0_134] : memref<72x128xf32, #tpu.memory_space<vmem>>, vector<1x128xf32>
    %308 = vector.broadcast %307 : vector<1x128xf32> to vector<16x128xf32>
    %309 = arith.addf %306, %308 : vector<16x128xf32>
    %c9_135 = arith.constant 9 : index
    %c0_136 = arith.constant 0 : index
    %c0_137 = arith.constant 0 : index
    %310 = vector.load %arg2[%c9_135, %c0_136, %c0_137] : memref<27x128x128xbf16, #tpu.memory_space<vmem>>, vector<1x128x128xbf16>
    %311 = vector.shape_cast %310 : vector<1x128x128xbf16> to vector<128x128xbf16>
    %312 = arith.truncf %302 : vector<16x128xf32> to vector<16x128xbf16>
    %cst_138 = arith.constant dense<0.000000e+00> : vector<16x128xf32>
    %313 = tpu.matmul %312, %311, %cst_138 {dimension_numbers = #tpu.dot_dimension_numbers<[1], [0], [0], [1], [0, 0, 1, 1], [], []>} : vector<16x128xbf16>, vector<128x128xbf16>, vector<16x128xf32> -> vector<16x128xf32>
    %c19 = arith.constant 19 : index
    %c0_139 = arith.constant 0 : index
    %314 = vector.load %arg6[%c19, %c0_139] : memref<72x128xf32, #tpu.memory_space<vmem>>, vector<1x128xf32>
    %315 = vector.broadcast %314 : vector<1x128xf32> to vector<16x128xf32>
    %316 = arith.addf %313, %315 : vector<16x128xf32>
    %c10_140 = arith.constant 10 : index
    %c0_141 = arith.constant 0 : index
    %c0_142 = arith.constant 0 : index
    %317 = vector.load %arg2[%c10_140, %c0_141, %c0_142] : memref<27x128x128xbf16, #tpu.memory_space<vmem>>, vector<1x128x128xbf16>
    %318 = vector.shape_cast %317 : vector<1x128x128xbf16> to vector<128x128xbf16>
    %319 = arith.truncf %302 : vector<16x128xf32> to vector<16x128xbf16>
    %cst_143 = arith.constant dense<0.000000e+00> : vector<16x128xf32>
    %320 = tpu.matmul %319, %318, %cst_143 {dimension_numbers = #tpu.dot_dimension_numbers<[1], [0], [0], [1], [0, 0, 1, 1], [], []>} : vector<16x128xbf16>, vector<128x128xbf16>, vector<16x128xf32> -> vector<16x128xf32>
    %c20 = arith.constant 20 : index
    %c0_144 = arith.constant 0 : index
    %321 = vector.load %arg6[%c20, %c0_144] : memref<72x128xf32, #tpu.memory_space<vmem>>, vector<1x128xf32>
    %322 = vector.broadcast %321 : vector<1x128xf32> to vector<16x128xf32>
    %323 = arith.addf %320, %322 : vector<16x128xf32>
    %324 = vector.shape_cast %309 : vector<16x128xf32> to vector<2x8x128xf32>
    %325 = vector.shape_cast %316 : vector<16x128xf32> to vector<2x8x128xf32>
    "tpu.trace_start"() <{level = 10 : i32, message = "bqd,bkd->bqk"}> : () -> ()
    %cst_145 = arith.constant dense<0.000000e+00> : vector<2x8x8xf32>
    %326 = tpu.matmul %324, %325, %cst_145 {dimension_numbers = #tpu.dot_dimension_numbers<[2], [2], [1], [1], [0, 0, 0, 1, 1, 1], [0], [0]>} : vector<2x8x128xf32>, vector<2x8x128xf32>, vector<2x8x8xf32> -> vector<2x8x8xf32>
    "tpu.trace_stop"() : () -> ()
    %cst_146 = arith.constant 0.158113882 : f32
    %327 = vector.broadcast %cst_146 : f32 to vector<2x8x8xf32>
    %328 = arith.mulf %326, %327 : vector<2x8x8xf32>
    %cst_147 = arith.constant dense<0xFF800000> : vector<2x8xf32>
    %329 = vector.multi_reduction <maximumf>, %328, %cst_147 [2] : vector<2x8x8xf32> to vector<2x8xf32>
    %330 = vector.shape_cast %329 : vector<2x8xf32> to vector<2x8x1xf32>
    %331 = vector.broadcast %330 : vector<2x8x1xf32> to vector<2x8x8xf32>
    %332 = arith.subf %328, %331 : vector<2x8x8xf32>
    %333 = math.exp %332 : vector<2x8x8xf32>
    %cst_148 = arith.constant dense<0.000000e+00> : vector<2x8xf32>
    %334 = vector.multi_reduction <add>, %333, %cst_148 [2] : vector<2x8x8xf32> to vector<2x8xf32>
    %335 = vector.shape_cast %334 : vector<2x8xf32> to vector<2x8x1xf32>
    %336 = tpu.reciprocal %335 {approx = true} : vector<2x8x1xf32> -> vector<2x8x1xf32>
    %337 = vector.broadcast %336 : vector<2x8x1xf32> to vector<2x8x8xf32>
    %338 = arith.mulf %333, %337 : vector<2x8x8xf32>
    %339 = vector.shape_cast %323 : vector<16x128xf32> to vector<2x8x128xf32>
    "tpu.trace_start"() <{level = 10 : i32, message = "bqk,bkd->bqd"}> : () -> ()
    %cst_149 = arith.constant dense<0.000000e+00> : vector<2x8x128xf32>
    %340 = tpu.matmul %338, %339, %cst_149 {dimension_numbers = #tpu.dot_dimension_numbers<[2], [1], [1], [2], [0, 0, 0, 1, 1, 2], [0], [0]>} : vector<2x8x8xf32>, vector<2x8x128xf32>, vector<2x8x128xf32> -> vector<2x8x128xf32>
    "tpu.trace_stop"() : () -> ()
    %341 = vector.shape_cast %340 : vector<2x8x128xf32> to vector<16x128xf32>
    %c11_150 = arith.constant 11 : index
    %c0_151 = arith.constant 0 : index
    %c0_152 = arith.constant 0 : index
    %342 = vector.load %arg2[%c11_150, %c0_151, %c0_152] : memref<27x128x128xbf16, #tpu.memory_space<vmem>>, vector<1x128x128xbf16>
    %343 = vector.shape_cast %342 : vector<1x128x128xbf16> to vector<128x128xbf16>
    %344 = arith.truncf %341 : vector<16x128xf32> to vector<16x128xbf16>
    %cst_153 = arith.constant dense<0.000000e+00> : vector<16x128xf32>
    %345 = tpu.matmul %344, %343, %cst_153 {dimension_numbers = #tpu.dot_dimension_numbers<[1], [0], [0], [1], [0, 0, 1, 1], [], []>} : vector<16x128xbf16>, vector<128x128xbf16>, vector<16x128xf32> -> vector<16x128xf32>
    %c21 = arith.constant 21 : index
    %c0_154 = arith.constant 0 : index
    %346 = vector.load %arg6[%c21, %c0_154] : memref<72x128xf32, #tpu.memory_space<vmem>>, vector<1x128xf32>
    %347 = vector.broadcast %346 : vector<1x128xf32> to vector<16x128xf32>
    %348 = arith.addf %345, %347 : vector<16x128xf32>
    %349 = arith.addf %302, %348 : vector<16x128xf32>
    %c27 = arith.constant 27 : index
    %c0_155 = arith.constant 0 : index
    %350 = vector.load %arg6[%c27, %c0_155] : memref<72x128xf32, #tpu.memory_space<vmem>>, vector<1x128xf32>
    %c28 = arith.constant 28 : index
    %c0_156 = arith.constant 0 : index
    %351 = vector.load %arg6[%c28, %c0_156] : memref<72x128xf32, #tpu.memory_space<vmem>>, vector<1x128xf32>
    %cst_157 = arith.constant dense<0.000000e+00> : vector<16xf32>
    %352 = vector.multi_reduction <add>, %349, %cst_157 [1] : vector<16x128xf32> to vector<16xf32>
    %353 = vector.shape_cast %352 : vector<16xf32> to vector<16x1xf32>
    %cst_158 = arith.constant 2.500000e-02 : f32
    %354 = vector.broadcast %cst_158 : f32 to vector<16x1xf32>
    %355 = arith.mulf %353, %354 : vector<16x1xf32>
    %356 = vector.broadcast %355 : vector<16x1xf32> to vector<16x128xf32>
    %357 = arith.subf %349, %356 : vector<16x128xf32>
    %358 = vector.broadcast %8 : vector<1x128xf32> to vector<16x128xf32>
    %359 = arith.mulf %357, %358 : vector<16x128xf32>
    %360 = arith.mulf %359, %359 : vector<16x128xf32>
    %cst_159 = arith.constant dense<0.000000e+00> : vector<16xf32>
    %361 = vector.multi_reduction <add>, %360, %cst_159 [1] : vector<16x128xf32> to vector<16xf32>
    %362 = vector.shape_cast %361 : vector<16xf32> to vector<16x1xf32>
    %cst_160 = arith.constant 2.500000e-02 : f32
    %363 = vector.broadcast %cst_160 : f32 to vector<16x1xf32>
    %364 = arith.mulf %362, %363 : vector<16x1xf32>
    %cst_161 = arith.constant 9.99999974E-6 : f32
    %365 = vector.broadcast %cst_161 : f32 to vector<16x1xf32>
    %366 = arith.addf %364, %365 : vector<16x1xf32>
    %367 = math.rsqrt %366 : vector<16x1xf32>
    %368 = vector.broadcast %367 : vector<16x1xf32> to vector<16x128xf32>
    %369 = arith.mulf %359, %368 : vector<16x128xf32>
    %370 = vector.broadcast %350 : vector<1x128xf32> to vector<16x128xf32>
    %371 = arith.mulf %369, %370 : vector<16x128xf32>
    %372 = vector.broadcast %351 : vector<1x128xf32> to vector<16x128xf32>
    %373 = arith.addf %371, %372 : vector<16x128xf32>
    %c12_162 = arith.constant 12 : index
    %c0_163 = arith.constant 0 : index
    %c0_164 = arith.constant 0 : index
    %374 = vector.load %arg2[%c12_162, %c0_163, %c0_164] : memref<27x128x128xbf16, #tpu.memory_space<vmem>>, vector<1x128x128xbf16>
    %375 = vector.shape_cast %374 : vector<1x128x128xbf16> to vector<128x128xbf16>
    %376 = arith.truncf %373 : vector<16x128xf32> to vector<16x128xbf16>
    %cst_165 = arith.constant dense<0.000000e+00> : vector<16x128xf32>
    %377 = tpu.matmul %376, %375, %cst_165 {dimension_numbers = #tpu.dot_dimension_numbers<[1], [0], [0], [1], [0, 0, 1, 1], [], []>} : vector<16x128xbf16>, vector<128x128xbf16>, vector<16x128xf32> -> vector<16x128xf32>
    %c22 = arith.constant 22 : index
    %c0_166 = arith.constant 0 : index
    %378 = vector.load %arg6[%c22, %c0_166] : memref<72x128xf32, #tpu.memory_space<vmem>>, vector<1x128xf32>
    %379 = vector.broadcast %378 : vector<1x128xf32> to vector<16x128xf32>
    %380 = arith.addf %377, %379 : vector<16x128xf32>
    %c13_167 = arith.constant 13 : index
    %c0_168 = arith.constant 0 : index
    %c0_169 = arith.constant 0 : index
    %381 = vector.load %arg2[%c13_167, %c0_168, %c0_169] : memref<27x128x128xbf16, #tpu.memory_space<vmem>>, vector<1x128x128xbf16>
    %382 = vector.shape_cast %381 : vector<1x128x128xbf16> to vector<128x128xbf16>
    %383 = arith.truncf %302 : vector<16x128xf32> to vector<16x128xbf16>
    %cst_170 = arith.constant dense<0.000000e+00> : vector<16x128xf32>
    %384 = tpu.matmul %383, %382, %cst_170 {dimension_numbers = #tpu.dot_dimension_numbers<[1], [0], [0], [1], [0, 0, 1, 1], [], []>} : vector<16x128xbf16>, vector<128x128xbf16>, vector<16x128xf32> -> vector<16x128xf32>
    %c23 = arith.constant 23 : index
    %c0_171 = arith.constant 0 : index
    %385 = vector.load %arg6[%c23, %c0_171] : memref<72x128xf32, #tpu.memory_space<vmem>>, vector<1x128xf32>
    %386 = vector.broadcast %385 : vector<1x128xf32> to vector<16x128xf32>
    %387 = arith.addf %384, %386 : vector<16x128xf32>
    %c14_172 = arith.constant 14 : index
    %c0_173 = arith.constant 0 : index
    %c0_174 = arith.constant 0 : index
    %388 = vector.load %arg2[%c14_172, %c0_173, %c0_174] : memref<27x128x128xbf16, #tpu.memory_space<vmem>>, vector<1x128x128xbf16>
    %389 = vector.shape_cast %388 : vector<1x128x128xbf16> to vector<128x128xbf16>
    %390 = arith.truncf %302 : vector<16x128xf32> to vector<16x128xbf16>
    %cst_175 = arith.constant dense<0.000000e+00> : vector<16x128xf32>
    %391 = tpu.matmul %390, %389, %cst_175 {dimension_numbers = #tpu.dot_dimension_numbers<[1], [0], [0], [1], [0, 0, 1, 1], [], []>} : vector<16x128xbf16>, vector<128x128xbf16>, vector<16x128xf32> -> vector<16x128xf32>
    %c24_176 = arith.constant 24 : index
    %c0_177 = arith.constant 0 : index
    %392 = vector.load %arg6[%c24_176, %c0_177] : memref<72x128xf32, #tpu.memory_space<vmem>>, vector<1x128xf32>
    %393 = vector.broadcast %392 : vector<1x128xf32> to vector<16x128xf32>
    %394 = arith.addf %391, %393 : vector<16x128xf32>
    %395 = vector.shape_cast %380 : vector<16x128xf32> to vector<2x8x128xf32>
    %396 = vector.shape_cast %387 : vector<16x128xf32> to vector<2x8x128xf32>
    "tpu.trace_start"() <{level = 10 : i32, message = "bqd,bkd->bqk"}> : () -> ()
    %cst_178 = arith.constant dense<0.000000e+00> : vector<2x8x8xf32>
    %397 = tpu.matmul %395, %396, %cst_178 {dimension_numbers = #tpu.dot_dimension_numbers<[2], [2], [1], [1], [0, 0, 0, 1, 1, 1], [0], [0]>} : vector<2x8x128xf32>, vector<2x8x128xf32>, vector<2x8x8xf32> -> vector<2x8x8xf32>
    "tpu.trace_stop"() : () -> ()
    %cst_179 = arith.constant 0.158113882 : f32
    %398 = vector.broadcast %cst_179 : f32 to vector<2x8x8xf32>
    %399 = arith.mulf %397, %398 : vector<2x8x8xf32>
    %cst_180 = arith.constant dense<0xFF800000> : vector<2x8xf32>
    %400 = vector.multi_reduction <maximumf>, %399, %cst_180 [2] : vector<2x8x8xf32> to vector<2x8xf32>
    %401 = vector.shape_cast %400 : vector<2x8xf32> to vector<2x8x1xf32>
    %402 = vector.broadcast %401 : vector<2x8x1xf32> to vector<2x8x8xf32>
    %403 = arith.subf %399, %402 : vector<2x8x8xf32>
    %404 = math.exp %403 : vector<2x8x8xf32>
    %cst_181 = arith.constant dense<0.000000e+00> : vector<2x8xf32>
    %405 = vector.multi_reduction <add>, %404, %cst_181 [2] : vector<2x8x8xf32> to vector<2x8xf32>
    %406 = vector.shape_cast %405 : vector<2x8xf32> to vector<2x8x1xf32>
    %407 = tpu.reciprocal %406 {approx = true} : vector<2x8x1xf32> -> vector<2x8x1xf32>
    %408 = vector.broadcast %407 : vector<2x8x1xf32> to vector<2x8x8xf32>
    %409 = arith.mulf %404, %408 : vector<2x8x8xf32>
    %410 = vector.shape_cast %394 : vector<16x128xf32> to vector<2x8x128xf32>
    "tpu.trace_start"() <{level = 10 : i32, message = "bqk,bkd->bqd"}> : () -> ()
    %cst_182 = arith.constant dense<0.000000e+00> : vector<2x8x128xf32>
    %411 = tpu.matmul %409, %410, %cst_182 {dimension_numbers = #tpu.dot_dimension_numbers<[2], [1], [1], [2], [0, 0, 0, 1, 1, 2], [0], [0]>} : vector<2x8x8xf32>, vector<2x8x128xf32>, vector<2x8x128xf32> -> vector<2x8x128xf32>
    "tpu.trace_stop"() : () -> ()
    %412 = vector.shape_cast %411 : vector<2x8x128xf32> to vector<16x128xf32>
    %c15_183 = arith.constant 15 : index
    %c0_184 = arith.constant 0 : index
    %c0_185 = arith.constant 0 : index
    %413 = vector.load %arg2[%c15_183, %c0_184, %c0_185] : memref<27x128x128xbf16, #tpu.memory_space<vmem>>, vector<1x128x128xbf16>
    %414 = vector.shape_cast %413 : vector<1x128x128xbf16> to vector<128x128xbf16>
    %415 = arith.truncf %412 : vector<16x128xf32> to vector<16x128xbf16>
    %cst_186 = arith.constant dense<0.000000e+00> : vector<16x128xf32>
    %416 = tpu.matmul %415, %414, %cst_186 {dimension_numbers = #tpu.dot_dimension_numbers<[1], [0], [0], [1], [0, 0, 1, 1], [], []>} : vector<16x128xbf16>, vector<128x128xbf16>, vector<16x128xf32> -> vector<16x128xf32>
    %c25_187 = arith.constant 25 : index
    %c0_188 = arith.constant 0 : index
    %417 = vector.load %arg6[%c25_187, %c0_188] : memref<72x128xf32, #tpu.memory_space<vmem>>, vector<1x128xf32>
    %418 = vector.broadcast %417 : vector<1x128xf32> to vector<16x128xf32>
    %419 = arith.addf %416, %418 : vector<16x128xf32>
    %420 = arith.addf %373, %419 : vector<16x128xf32>
    %c29 = arith.constant 29 : index
    %c0_189 = arith.constant 0 : index
    %421 = vector.load %arg6[%c29, %c0_189] : memref<72x128xf32, #tpu.memory_space<vmem>>, vector<1x128xf32>
    %c30 = arith.constant 30 : index
    %c0_190 = arith.constant 0 : index
    %422 = vector.load %arg6[%c30, %c0_190] : memref<72x128xf32, #tpu.memory_space<vmem>>, vector<1x128xf32>
    %cst_191 = arith.constant dense<0.000000e+00> : vector<16xf32>
    %423 = vector.multi_reduction <add>, %420, %cst_191 [1] : vector<16x128xf32> to vector<16xf32>
    %424 = vector.shape_cast %423 : vector<16xf32> to vector<16x1xf32>
    %cst_192 = arith.constant 2.500000e-02 : f32
    %425 = vector.broadcast %cst_192 : f32 to vector<16x1xf32>
    %426 = arith.mulf %424, %425 : vector<16x1xf32>
    %427 = vector.broadcast %426 : vector<16x1xf32> to vector<16x128xf32>
    %428 = arith.subf %420, %427 : vector<16x128xf32>
    %429 = vector.broadcast %8 : vector<1x128xf32> to vector<16x128xf32>
    %430 = arith.mulf %428, %429 : vector<16x128xf32>
    %431 = arith.mulf %430, %430 : vector<16x128xf32>
    %cst_193 = arith.constant dense<0.000000e+00> : vector<16xf32>
    %432 = vector.multi_reduction <add>, %431, %cst_193 [1] : vector<16x128xf32> to vector<16xf32>
    %433 = vector.shape_cast %432 : vector<16xf32> to vector<16x1xf32>
    %cst_194 = arith.constant 2.500000e-02 : f32
    %434 = vector.broadcast %cst_194 : f32 to vector<16x1xf32>
    %435 = arith.mulf %433, %434 : vector<16x1xf32>
    %cst_195 = arith.constant 9.99999974E-6 : f32
    %436 = vector.broadcast %cst_195 : f32 to vector<16x1xf32>
    %437 = arith.addf %435, %436 : vector<16x1xf32>
    %438 = math.rsqrt %437 : vector<16x1xf32>
    %439 = vector.broadcast %438 : vector<16x1xf32> to vector<16x128xf32>
    %440 = arith.mulf %430, %439 : vector<16x128xf32>
    %441 = vector.broadcast %421 : vector<1x128xf32> to vector<16x128xf32>
    %442 = arith.mulf %440, %441 : vector<16x128xf32>
    %443 = vector.broadcast %422 : vector<1x128xf32> to vector<16x128xf32>
    %444 = arith.addf %442, %443 : vector<16x128xf32>
    %c26 = arith.constant 26 : index
    %c0_196 = arith.constant 0 : index
    %445 = vector.load %arg6[%c26, %c0_196] : memref<72x128xf32, #tpu.memory_space<vmem>>, vector<1x128xf32>
    %c2_197 = arith.constant 2 : index
    %c0_198 = arith.constant 0 : index
    %c0_199 = arith.constant 0 : index
    %446 = vector.load %arg3[%c2_197, %c0_198, %c0_199] : memref<4x128x256xbf16, #tpu.memory_space<vmem>>, vector<1x128x256xbf16>
    %447 = vector.shape_cast %446 : vector<1x128x256xbf16> to vector<128x256xbf16>
    %448 = arith.truncf %444 : vector<16x128xf32> to vector<16x128xbf16>
    %cst_200 = arith.constant dense<0.000000e+00> : vector<16x256xf32>
    %449 = tpu.matmul %448, %447, %cst_200 {dimension_numbers = #tpu.dot_dimension_numbers<[1], [0], [0], [1], [0, 0, 1, 1], [], []>} : vector<16x128xbf16>, vector<128x256xbf16>, vector<16x256xf32> -> vector<16x256xf32>
    %c2_201 = arith.constant 2 : index
    %c0_202 = arith.constant 0 : index
    %450 = vector.load %arg5[%c2_201, %c0_202] : memref<4x256xf32, #tpu.memory_space<vmem>>, vector<1x256xf32>
    %451 = vector.broadcast %450 : vector<1x256xf32> to vector<16x256xf32>
    %452 = arith.addf %449, %451 : vector<16x256xf32>
    %cst_203 = arith.constant 0.000000e+00 : f32
    %453 = vector.broadcast %cst_203 : f32 to vector<16x256xf32>
    %454 = arith.maximumf %452, %453 : vector<16x256xf32>
    %c2_204 = arith.constant 2 : index
    %c0_205 = arith.constant 0 : index
    %c0_206 = arith.constant 0 : index
    %455 = vector.load %arg4[%c2_204, %c0_205, %c0_206] : memref<4x256x128xbf16, #tpu.memory_space<vmem>>, vector<1x256x128xbf16>
    %456 = vector.shape_cast %455 : vector<1x256x128xbf16> to vector<256x128xbf16>
    %457 = arith.truncf %454 : vector<16x256xf32> to vector<16x256xbf16>
    %cst_207 = arith.constant dense<0.000000e+00> : vector<16x128xf32>
    %458 = tpu.matmul %457, %456, %cst_207 {dimension_numbers = #tpu.dot_dimension_numbers<[1], [0], [0], [1], [0, 0, 1, 1], [], []>} : vector<16x256xbf16>, vector<256x128xbf16>, vector<16x128xf32> -> vector<16x128xf32>
    %459 = vector.broadcast %445 : vector<1x128xf32> to vector<16x128xf32>
    %460 = arith.addf %458, %459 : vector<16x128xf32>
    %461 = arith.addf %444, %460 : vector<16x128xf32>
    %c31 = arith.constant 31 : index
    %c0_208 = arith.constant 0 : index
    %462 = vector.load %arg6[%c31, %c0_208] : memref<72x128xf32, #tpu.memory_space<vmem>>, vector<1x128xf32>
    %c32 = arith.constant 32 : index
    %c0_209 = arith.constant 0 : index
    %463 = vector.load %arg6[%c32, %c0_209] : memref<72x128xf32, #tpu.memory_space<vmem>>, vector<1x128xf32>
    %cst_210 = arith.constant dense<0.000000e+00> : vector<16xf32>
    %464 = vector.multi_reduction <add>, %461, %cst_210 [1] : vector<16x128xf32> to vector<16xf32>
    %465 = vector.shape_cast %464 : vector<16xf32> to vector<16x1xf32>
    %cst_211 = arith.constant 2.500000e-02 : f32
    %466 = vector.broadcast %cst_211 : f32 to vector<16x1xf32>
    %467 = arith.mulf %465, %466 : vector<16x1xf32>
    %468 = vector.broadcast %467 : vector<16x1xf32> to vector<16x128xf32>
    %469 = arith.subf %461, %468 : vector<16x128xf32>
    %470 = vector.broadcast %8 : vector<1x128xf32> to vector<16x128xf32>
    %471 = arith.mulf %469, %470 : vector<16x128xf32>
    %472 = arith.mulf %471, %471 : vector<16x128xf32>
    %cst_212 = arith.constant dense<0.000000e+00> : vector<16xf32>
    %473 = vector.multi_reduction <add>, %472, %cst_212 [1] : vector<16x128xf32> to vector<16xf32>
    %474 = vector.shape_cast %473 : vector<16xf32> to vector<16x1xf32>
    %cst_213 = arith.constant 2.500000e-02 : f32
    %475 = vector.broadcast %cst_213 : f32 to vector<16x1xf32>
    %476 = arith.mulf %474, %475 : vector<16x1xf32>
    %cst_214 = arith.constant 9.99999974E-6 : f32
    %477 = vector.broadcast %cst_214 : f32 to vector<16x1xf32>
    %478 = arith.addf %476, %477 : vector<16x1xf32>
    %479 = math.rsqrt %478 : vector<16x1xf32>
    %480 = vector.broadcast %479 : vector<16x1xf32> to vector<16x128xf32>
    %481 = arith.mulf %471, %480 : vector<16x128xf32>
    %482 = vector.broadcast %462 : vector<1x128xf32> to vector<16x128xf32>
    %483 = arith.mulf %481, %482 : vector<16x128xf32>
    %484 = vector.broadcast %463 : vector<1x128xf32> to vector<16x128xf32>
    %485 = arith.addf %483, %484 : vector<16x128xf32>
    %c16_215 = arith.constant 16 : index
    %c0_216 = arith.constant 0 : index
    %c0_217 = arith.constant 0 : index
    %486 = vector.load %arg2[%c16_215, %c0_216, %c0_217] : memref<27x128x128xbf16, #tpu.memory_space<vmem>>, vector<1x128x128xbf16>
    %487 = vector.shape_cast %486 : vector<1x128x128xbf16> to vector<128x128xbf16>
    %488 = arith.truncf %485 : vector<16x128xf32> to vector<16x128xbf16>
    %cst_218 = arith.constant dense<0.000000e+00> : vector<16x128xf32>
    %489 = tpu.matmul %488, %487, %cst_218 {dimension_numbers = #tpu.dot_dimension_numbers<[1], [0], [0], [1], [0, 0, 1, 1], [], []>} : vector<16x128xbf16>, vector<128x128xbf16>, vector<16x128xf32> -> vector<16x128xf32>
    %c33 = arith.constant 33 : index
    %c0_219 = arith.constant 0 : index
    %490 = vector.load %arg6[%c33, %c0_219] : memref<72x128xf32, #tpu.memory_space<vmem>>, vector<1x128xf32>
    %491 = vector.broadcast %490 : vector<1x128xf32> to vector<16x128xf32>
    %492 = arith.addf %489, %491 : vector<16x128xf32>
    %c17_220 = arith.constant 17 : index
    %c0_221 = arith.constant 0 : index
    %c0_222 = arith.constant 0 : index
    %493 = vector.load %arg2[%c17_220, %c0_221, %c0_222] : memref<27x128x128xbf16, #tpu.memory_space<vmem>>, vector<1x128x128xbf16>
    %494 = vector.shape_cast %493 : vector<1x128x128xbf16> to vector<128x128xbf16>
    %495 = arith.truncf %485 : vector<16x128xf32> to vector<16x128xbf16>
    %cst_223 = arith.constant dense<0.000000e+00> : vector<16x128xf32>
    %496 = tpu.matmul %495, %494, %cst_223 {dimension_numbers = #tpu.dot_dimension_numbers<[1], [0], [0], [1], [0, 0, 1, 1], [], []>} : vector<16x128xbf16>, vector<128x128xbf16>, vector<16x128xf32> -> vector<16x128xf32>
    %c34 = arith.constant 34 : index
    %c0_224 = arith.constant 0 : index
    %497 = vector.load %arg6[%c34, %c0_224] : memref<72x128xf32, #tpu.memory_space<vmem>>, vector<1x128xf32>
    %498 = vector.broadcast %497 : vector<1x128xf32> to vector<16x128xf32>
    %499 = arith.addf %496, %498 : vector<16x128xf32>
    %c18_225 = arith.constant 18 : index
    %c0_226 = arith.constant 0 : index
    %c0_227 = arith.constant 0 : index
    %500 = vector.load %arg2[%c18_225, %c0_226, %c0_227] : memref<27x128x128xbf16, #tpu.memory_space<vmem>>, vector<1x128x128xbf16>
    %501 = vector.shape_cast %500 : vector<1x128x128xbf16> to vector<128x128xbf16>
    %502 = arith.truncf %485 : vector<16x128xf32> to vector<16x128xbf16>
    %cst_228 = arith.constant dense<0.000000e+00> : vector<16x128xf32>
    %503 = tpu.matmul %502, %501, %cst_228 {dimension_numbers = #tpu.dot_dimension_numbers<[1], [0], [0], [1], [0, 0, 1, 1], [], []>} : vector<16x128xbf16>, vector<128x128xbf16>, vector<16x128xf32> -> vector<16x128xf32>
    %c35 = arith.constant 35 : index
    %c0_229 = arith.constant 0 : index
    %504 = vector.load %arg6[%c35, %c0_229] : memref<72x128xf32, #tpu.memory_space<vmem>>, vector<1x128xf32>
    %505 = vector.broadcast %504 : vector<1x128xf32> to vector<16x128xf32>
    %506 = arith.addf %503, %505 : vector<16x128xf32>
    %507 = vector.shape_cast %492 : vector<16x128xf32> to vector<2x8x128xf32>
    %508 = vector.shape_cast %499 : vector<16x128xf32> to vector<2x8x128xf32>
    "tpu.trace_start"() <{level = 10 : i32, message = "bqd,bkd->bqk"}> : () -> ()
    %cst_230 = arith.constant dense<0.000000e+00> : vector<2x8x8xf32>
    %509 = tpu.matmul %507, %508, %cst_230 {dimension_numbers = #tpu.dot_dimension_numbers<[2], [2], [1], [1], [0, 0, 0, 1, 1, 1], [0], [0]>} : vector<2x8x128xf32>, vector<2x8x128xf32>, vector<2x8x8xf32> -> vector<2x8x8xf32>
    "tpu.trace_stop"() : () -> ()
    %cst_231 = arith.constant 0.158113882 : f32
    %510 = vector.broadcast %cst_231 : f32 to vector<2x8x8xf32>
    %511 = arith.mulf %509, %510 : vector<2x8x8xf32>
    %cst_232 = arith.constant dense<0xFF800000> : vector<2x8xf32>
    %512 = vector.multi_reduction <maximumf>, %511, %cst_232 [2] : vector<2x8x8xf32> to vector<2x8xf32>
    %513 = vector.shape_cast %512 : vector<2x8xf32> to vector<2x8x1xf32>
    %514 = vector.broadcast %513 : vector<2x8x1xf32> to vector<2x8x8xf32>
    %515 = arith.subf %511, %514 : vector<2x8x8xf32>
    %516 = math.exp %515 : vector<2x8x8xf32>
    %cst_233 = arith.constant dense<0.000000e+00> : vector<2x8xf32>
    %517 = vector.multi_reduction <add>, %516, %cst_233 [2] : vector<2x8x8xf32> to vector<2x8xf32>
    %518 = vector.shape_cast %517 : vector<2x8xf32> to vector<2x8x1xf32>
    %519 = tpu.reciprocal %518 {approx = true} : vector<2x8x1xf32> -> vector<2x8x1xf32>
    %520 = vector.broadcast %519 : vector<2x8x1xf32> to vector<2x8x8xf32>
    %521 = arith.mulf %516, %520 : vector<2x8x8xf32>
    %522 = vector.shape_cast %506 : vector<16x128xf32> to vector<2x8x128xf32>
    "tpu.trace_start"() <{level = 10 : i32, message = "bqk,bkd->bqd"}> : () -> ()
    %cst_234 = arith.constant dense<0.000000e+00> : vector<2x8x128xf32>
    %523 = tpu.matmul %521, %522, %cst_234 {dimension_numbers = #tpu.dot_dimension_numbers<[2], [1], [1], [2], [0, 0, 0, 1, 1, 2], [0], [0]>} : vector<2x8x8xf32>, vector<2x8x128xf32>, vector<2x8x128xf32> -> vector<2x8x128xf32>
    "tpu.trace_stop"() : () -> ()
    %524 = vector.shape_cast %523 : vector<2x8x128xf32> to vector<16x128xf32>
    %c19_235 = arith.constant 19 : index
    %c0_236 = arith.constant 0 : index
    %c0_237 = arith.constant 0 : index
    %525 = vector.load %arg2[%c19_235, %c0_236, %c0_237] : memref<27x128x128xbf16, #tpu.memory_space<vmem>>, vector<1x128x128xbf16>
    %526 = vector.shape_cast %525 : vector<1x128x128xbf16> to vector<128x128xbf16>
    %527 = arith.truncf %524 : vector<16x128xf32> to vector<16x128xbf16>
    %cst_238 = arith.constant dense<0.000000e+00> : vector<16x128xf32>
    %528 = tpu.matmul %527, %526, %cst_238 {dimension_numbers = #tpu.dot_dimension_numbers<[1], [0], [0], [1], [0, 0, 1, 1], [], []>} : vector<16x128xbf16>, vector<128x128xbf16>, vector<16x128xf32> -> vector<16x128xf32>
    %c36 = arith.constant 36 : index
    %c0_239 = arith.constant 0 : index
    %529 = vector.load %arg6[%c36, %c0_239] : memref<72x128xf32, #tpu.memory_space<vmem>>, vector<1x128xf32>
    %530 = vector.broadcast %529 : vector<1x128xf32> to vector<16x128xf32>
    %531 = arith.addf %528, %530 : vector<16x128xf32>
    %532 = arith.addf %485, %531 : vector<16x128xf32>
    %c42 = arith.constant 42 : index
    %c0_240 = arith.constant 0 : index
    %533 = vector.load %arg6[%c42, %c0_240] : memref<72x128xf32, #tpu.memory_space<vmem>>, vector<1x128xf32>
    %c43 = arith.constant 43 : index
    %c0_241 = arith.constant 0 : index
    %534 = vector.load %arg6[%c43, %c0_241] : memref<72x128xf32, #tpu.memory_space<vmem>>, vector<1x128xf32>
    %cst_242 = arith.constant dense<0.000000e+00> : vector<16xf32>
    %535 = vector.multi_reduction <add>, %532, %cst_242 [1] : vector<16x128xf32> to vector<16xf32>
    %536 = vector.shape_cast %535 : vector<16xf32> to vector<16x1xf32>
    %cst_243 = arith.constant 2.500000e-02 : f32
    %537 = vector.broadcast %cst_243 : f32 to vector<16x1xf32>
    %538 = arith.mulf %536, %537 : vector<16x1xf32>
    %539 = vector.broadcast %538 : vector<16x1xf32> to vector<16x128xf32>
    %540 = arith.subf %532, %539 : vector<16x128xf32>
    %541 = vector.broadcast %8 : vector<1x128xf32> to vector<16x128xf32>
    %542 = arith.mulf %540, %541 : vector<16x128xf32>
    %543 = arith.mulf %542, %542 : vector<16x128xf32>
    %cst_244 = arith.constant dense<0.000000e+00> : vector<16xf32>
    %544 = vector.multi_reduction <add>, %543, %cst_244 [1] : vector<16x128xf32> to vector<16xf32>
    %545 = vector.shape_cast %544 : vector<16xf32> to vector<16x1xf32>
    %cst_245 = arith.constant 2.500000e-02 : f32
    %546 = vector.broadcast %cst_245 : f32 to vector<16x1xf32>
    %547 = arith.mulf %545, %546 : vector<16x1xf32>
    %cst_246 = arith.constant 9.99999974E-6 : f32
    %548 = vector.broadcast %cst_246 : f32 to vector<16x1xf32>
    %549 = arith.addf %547, %548 : vector<16x1xf32>
    %550 = math.rsqrt %549 : vector<16x1xf32>
    %551 = vector.broadcast %550 : vector<16x1xf32> to vector<16x128xf32>
    %552 = arith.mulf %542, %551 : vector<16x128xf32>
    %553 = vector.broadcast %533 : vector<1x128xf32> to vector<16x128xf32>
    %554 = arith.mulf %552, %553 : vector<16x128xf32>
    %555 = vector.broadcast %534 : vector<1x128xf32> to vector<16x128xf32>
    %556 = arith.addf %554, %555 : vector<16x128xf32>
    %c20_247 = arith.constant 20 : index
    %c0_248 = arith.constant 0 : index
    %c0_249 = arith.constant 0 : index
    %557 = vector.load %arg2[%c20_247, %c0_248, %c0_249] : memref<27x128x128xbf16, #tpu.memory_space<vmem>>, vector<1x128x128xbf16>
    %558 = vector.shape_cast %557 : vector<1x128x128xbf16> to vector<128x128xbf16>
    %559 = arith.truncf %556 : vector<16x128xf32> to vector<16x128xbf16>
    %cst_250 = arith.constant dense<0.000000e+00> : vector<16x128xf32>
    %560 = tpu.matmul %559, %558, %cst_250 {dimension_numbers = #tpu.dot_dimension_numbers<[1], [0], [0], [1], [0, 0, 1, 1], [], []>} : vector<16x128xbf16>, vector<128x128xbf16>, vector<16x128xf32> -> vector<16x128xf32>
    %c37 = arith.constant 37 : index
    %c0_251 = arith.constant 0 : index
    %561 = vector.load %arg6[%c37, %c0_251] : memref<72x128xf32, #tpu.memory_space<vmem>>, vector<1x128xf32>
    %562 = vector.broadcast %561 : vector<1x128xf32> to vector<16x128xf32>
    %563 = arith.addf %560, %562 : vector<16x128xf32>
    %c21_252 = arith.constant 21 : index
    %c0_253 = arith.constant 0 : index
    %c0_254 = arith.constant 0 : index
    %564 = vector.load %arg2[%c21_252, %c0_253, %c0_254] : memref<27x128x128xbf16, #tpu.memory_space<vmem>>, vector<1x128x128xbf16>
    %565 = vector.shape_cast %564 : vector<1x128x128xbf16> to vector<128x128xbf16>
    %566 = arith.truncf %302 : vector<16x128xf32> to vector<16x128xbf16>
    %cst_255 = arith.constant dense<0.000000e+00> : vector<16x128xf32>
    %567 = tpu.matmul %566, %565, %cst_255 {dimension_numbers = #tpu.dot_dimension_numbers<[1], [0], [0], [1], [0, 0, 1, 1], [], []>} : vector<16x128xbf16>, vector<128x128xbf16>, vector<16x128xf32> -> vector<16x128xf32>
    %c38 = arith.constant 38 : index
    %c0_256 = arith.constant 0 : index
    %568 = vector.load %arg6[%c38, %c0_256] : memref<72x128xf32, #tpu.memory_space<vmem>>, vector<1x128xf32>
    %569 = vector.broadcast %568 : vector<1x128xf32> to vector<16x128xf32>
    %570 = arith.addf %567, %569 : vector<16x128xf32>
    %c22_257 = arith.constant 22 : index
    %c0_258 = arith.constant 0 : index
    %c0_259 = arith.constant 0 : index
    %571 = vector.load %arg2[%c22_257, %c0_258, %c0_259] : memref<27x128x128xbf16, #tpu.memory_space<vmem>>, vector<1x128x128xbf16>
    %572 = vector.shape_cast %571 : vector<1x128x128xbf16> to vector<128x128xbf16>
    %573 = arith.truncf %302 : vector<16x128xf32> to vector<16x128xbf16>
    %cst_260 = arith.constant dense<0.000000e+00> : vector<16x128xf32>
    %574 = tpu.matmul %573, %572, %cst_260 {dimension_numbers = #tpu.dot_dimension_numbers<[1], [0], [0], [1], [0, 0, 1, 1], [], []>} : vector<16x128xbf16>, vector<128x128xbf16>, vector<16x128xf32> -> vector<16x128xf32>
    %c39 = arith.constant 39 : index
    %c0_261 = arith.constant 0 : index
    %575 = vector.load %arg6[%c39, %c0_261] : memref<72x128xf32, #tpu.memory_space<vmem>>, vector<1x128xf32>
    %576 = vector.broadcast %575 : vector<1x128xf32> to vector<16x128xf32>
    %577 = arith.addf %574, %576 : vector<16x128xf32>
    %578 = vector.shape_cast %563 : vector<16x128xf32> to vector<2x8x128xf32>
    %579 = vector.shape_cast %570 : vector<16x128xf32> to vector<2x8x128xf32>
    "tpu.trace_start"() <{level = 10 : i32, message = "bqd,bkd->bqk"}> : () -> ()
    %cst_262 = arith.constant dense<0.000000e+00> : vector<2x8x8xf32>
    %580 = tpu.matmul %578, %579, %cst_262 {dimension_numbers = #tpu.dot_dimension_numbers<[2], [2], [1], [1], [0, 0, 0, 1, 1, 1], [0], [0]>} : vector<2x8x128xf32>, vector<2x8x128xf32>, vector<2x8x8xf32> -> vector<2x8x8xf32>
    "tpu.trace_stop"() : () -> ()
    %cst_263 = arith.constant 0.158113882 : f32
    %581 = vector.broadcast %cst_263 : f32 to vector<2x8x8xf32>
    %582 = arith.mulf %580, %581 : vector<2x8x8xf32>
    %cst_264 = arith.constant dense<0xFF800000> : vector<2x8xf32>
    %583 = vector.multi_reduction <maximumf>, %582, %cst_264 [2] : vector<2x8x8xf32> to vector<2x8xf32>
    %584 = vector.shape_cast %583 : vector<2x8xf32> to vector<2x8x1xf32>
    %585 = vector.broadcast %584 : vector<2x8x1xf32> to vector<2x8x8xf32>
    %586 = arith.subf %582, %585 : vector<2x8x8xf32>
    %587 = math.exp %586 : vector<2x8x8xf32>
    %cst_265 = arith.constant dense<0.000000e+00> : vector<2x8xf32>
    %588 = vector.multi_reduction <add>, %587, %cst_265 [2] : vector<2x8x8xf32> to vector<2x8xf32>
    %589 = vector.shape_cast %588 : vector<2x8xf32> to vector<2x8x1xf32>
    %590 = tpu.reciprocal %589 {approx = true} : vector<2x8x1xf32> -> vector<2x8x1xf32>
    %591 = vector.broadcast %590 : vector<2x8x1xf32> to vector<2x8x8xf32>
    %592 = arith.mulf %587, %591 : vector<2x8x8xf32>
    %593 = vector.shape_cast %577 : vector<16x128xf32> to vector<2x8x128xf32>
    "tpu.trace_start"() <{level = 10 : i32, message = "bqk,bkd->bqd"}> : () -> ()
    %cst_266 = arith.constant dense<0.000000e+00> : vector<2x8x128xf32>
    %594 = tpu.matmul %592, %593, %cst_266 {dimension_numbers = #tpu.dot_dimension_numbers<[2], [1], [1], [2], [0, 0, 0, 1, 1, 2], [0], [0]>} : vector<2x8x8xf32>, vector<2x8x128xf32>, vector<2x8x128xf32> -> vector<2x8x128xf32>
    "tpu.trace_stop"() : () -> ()
    %595 = vector.shape_cast %594 : vector<2x8x128xf32> to vector<16x128xf32>
    %c23_267 = arith.constant 23 : index
    %c0_268 = arith.constant 0 : index
    %c0_269 = arith.constant 0 : index
    %596 = vector.load %arg2[%c23_267, %c0_268, %c0_269] : memref<27x128x128xbf16, #tpu.memory_space<vmem>>, vector<1x128x128xbf16>
    %597 = vector.shape_cast %596 : vector<1x128x128xbf16> to vector<128x128xbf16>
    %598 = arith.truncf %595 : vector<16x128xf32> to vector<16x128xbf16>
    %cst_270 = arith.constant dense<0.000000e+00> : vector<16x128xf32>
    %599 = tpu.matmul %598, %597, %cst_270 {dimension_numbers = #tpu.dot_dimension_numbers<[1], [0], [0], [1], [0, 0, 1, 1], [], []>} : vector<16x128xbf16>, vector<128x128xbf16>, vector<16x128xf32> -> vector<16x128xf32>
    %c40 = arith.constant 40 : index
    %c0_271 = arith.constant 0 : index
    %600 = vector.load %arg6[%c40, %c0_271] : memref<72x128xf32, #tpu.memory_space<vmem>>, vector<1x128xf32>
    %601 = vector.broadcast %600 : vector<1x128xf32> to vector<16x128xf32>
    %602 = arith.addf %599, %601 : vector<16x128xf32>
    %603 = arith.addf %556, %602 : vector<16x128xf32>
    %c44 = arith.constant 44 : index
    %c0_272 = arith.constant 0 : index
    %604 = vector.load %arg6[%c44, %c0_272] : memref<72x128xf32, #tpu.memory_space<vmem>>, vector<1x128xf32>
    %c45 = arith.constant 45 : index
    %c0_273 = arith.constant 0 : index
    %605 = vector.load %arg6[%c45, %c0_273] : memref<72x128xf32, #tpu.memory_space<vmem>>, vector<1x128xf32>
    %cst_274 = arith.constant dense<0.000000e+00> : vector<16xf32>
    %606 = vector.multi_reduction <add>, %603, %cst_274 [1] : vector<16x128xf32> to vector<16xf32>
    %607 = vector.shape_cast %606 : vector<16xf32> to vector<16x1xf32>
    %cst_275 = arith.constant 2.500000e-02 : f32
    %608 = vector.broadcast %cst_275 : f32 to vector<16x1xf32>
    %609 = arith.mulf %607, %608 : vector<16x1xf32>
    %610 = vector.broadcast %609 : vector<16x1xf32> to vector<16x128xf32>
    %611 = arith.subf %603, %610 : vector<16x128xf32>
    %612 = vector.broadcast %8 : vector<1x128xf32> to vector<16x128xf32>
    %613 = arith.mulf %611, %612 : vector<16x128xf32>
    %614 = arith.mulf %613, %613 : vector<16x128xf32>
    %cst_276 = arith.constant dense<0.000000e+00> : vector<16xf32>
    %615 = vector.multi_reduction <add>, %614, %cst_276 [1] : vector<16x128xf32> to vector<16xf32>
    %616 = vector.shape_cast %615 : vector<16xf32> to vector<16x1xf32>
    %cst_277 = arith.constant 2.500000e-02 : f32
    %617 = vector.broadcast %cst_277 : f32 to vector<16x1xf32>
    %618 = arith.mulf %616, %617 : vector<16x1xf32>
    %cst_278 = arith.constant 9.99999974E-6 : f32
    %619 = vector.broadcast %cst_278 : f32 to vector<16x1xf32>
    %620 = arith.addf %618, %619 : vector<16x1xf32>
    %621 = math.rsqrt %620 : vector<16x1xf32>
    %622 = vector.broadcast %621 : vector<16x1xf32> to vector<16x128xf32>
    %623 = arith.mulf %613, %622 : vector<16x128xf32>
    %624 = vector.broadcast %604 : vector<1x128xf32> to vector<16x128xf32>
    %625 = arith.mulf %623, %624 : vector<16x128xf32>
    %626 = vector.broadcast %605 : vector<1x128xf32> to vector<16x128xf32>
    %627 = arith.addf %625, %626 : vector<16x128xf32>
    %c41 = arith.constant 41 : index
    %c0_279 = arith.constant 0 : index
    %628 = vector.load %arg6[%c41, %c0_279] : memref<72x128xf32, #tpu.memory_space<vmem>>, vector<1x128xf32>
    %c3_280 = arith.constant 3 : index
    %c0_281 = arith.constant 0 : index
    %c0_282 = arith.constant 0 : index
    %629 = vector.load %arg3[%c3_280, %c0_281, %c0_282] : memref<4x128x256xbf16, #tpu.memory_space<vmem>>, vector<1x128x256xbf16>
    %630 = vector.shape_cast %629 : vector<1x128x256xbf16> to vector<128x256xbf16>
    %631 = arith.truncf %627 : vector<16x128xf32> to vector<16x128xbf16>
    %cst_283 = arith.constant dense<0.000000e+00> : vector<16x256xf32>
    %632 = tpu.matmul %631, %630, %cst_283 {dimension_numbers = #tpu.dot_dimension_numbers<[1], [0], [0], [1], [0, 0, 1, 1], [], []>} : vector<16x128xbf16>, vector<128x256xbf16>, vector<16x256xf32> -> vector<16x256xf32>
    %c3_284 = arith.constant 3 : index
    %c0_285 = arith.constant 0 : index
    %633 = vector.load %arg5[%c3_284, %c0_285] : memref<4x256xf32, #tpu.memory_space<vmem>>, vector<1x256xf32>
    %634 = vector.broadcast %633 : vector<1x256xf32> to vector<16x256xf32>
    %635 = arith.addf %632, %634 : vector<16x256xf32>
    %cst_286 = arith.constant 0.000000e+00 : f32
    %636 = vector.broadcast %cst_286 : f32 to vector<16x256xf32>
    %637 = arith.maximumf %635, %636 : vector<16x256xf32>
    %c3_287 = arith.constant 3 : index
    %c0_288 = arith.constant 0 : index
    %c0_289 = arith.constant 0 : index
    %638 = vector.load %arg4[%c3_287, %c0_288, %c0_289] : memref<4x256x128xbf16, #tpu.memory_space<vmem>>, vector<1x256x128xbf16>
    %639 = vector.shape_cast %638 : vector<1x256x128xbf16> to vector<256x128xbf16>
    %640 = arith.truncf %637 : vector<16x256xf32> to vector<16x256xbf16>
    %cst_290 = arith.constant dense<0.000000e+00> : vector<16x128xf32>
    %641 = tpu.matmul %640, %639, %cst_290 {dimension_numbers = #tpu.dot_dimension_numbers<[1], [0], [0], [1], [0, 0, 1, 1], [], []>} : vector<16x256xbf16>, vector<256x128xbf16>, vector<16x128xf32> -> vector<16x128xf32>
    %642 = vector.broadcast %628 : vector<1x128xf32> to vector<16x128xf32>
    %643 = arith.addf %641, %642 : vector<16x128xf32>
    %644 = arith.addf %627, %643 : vector<16x128xf32>
    %c46 = arith.constant 46 : index
    %c0_291 = arith.constant 0 : index
    %645 = vector.load %arg6[%c46, %c0_291] : memref<72x128xf32, #tpu.memory_space<vmem>>, vector<1x128xf32>
    %c47 = arith.constant 47 : index
    %c0_292 = arith.constant 0 : index
    %646 = vector.load %arg6[%c47, %c0_292] : memref<72x128xf32, #tpu.memory_space<vmem>>, vector<1x128xf32>
    %cst_293 = arith.constant dense<0.000000e+00> : vector<16xf32>
    %647 = vector.multi_reduction <add>, %644, %cst_293 [1] : vector<16x128xf32> to vector<16xf32>
    %648 = vector.shape_cast %647 : vector<16xf32> to vector<16x1xf32>
    %cst_294 = arith.constant 2.500000e-02 : f32
    %649 = vector.broadcast %cst_294 : f32 to vector<16x1xf32>
    %650 = arith.mulf %648, %649 : vector<16x1xf32>
    %651 = vector.broadcast %650 : vector<16x1xf32> to vector<16x128xf32>
    %652 = arith.subf %644, %651 : vector<16x128xf32>
    %653 = vector.broadcast %8 : vector<1x128xf32> to vector<16x128xf32>
    %654 = arith.mulf %652, %653 : vector<16x128xf32>
    %655 = arith.mulf %654, %654 : vector<16x128xf32>
    %cst_295 = arith.constant dense<0.000000e+00> : vector<16xf32>
    %656 = vector.multi_reduction <add>, %655, %cst_295 [1] : vector<16x128xf32> to vector<16xf32>
    %657 = vector.shape_cast %656 : vector<16xf32> to vector<16x1xf32>
    %cst_296 = arith.constant 2.500000e-02 : f32
    %658 = vector.broadcast %cst_296 : f32 to vector<16x1xf32>
    %659 = arith.mulf %657, %658 : vector<16x1xf32>
    %cst_297 = arith.constant 9.99999974E-6 : f32
    %660 = vector.broadcast %cst_297 : f32 to vector<16x1xf32>
    %661 = arith.addf %659, %660 : vector<16x1xf32>
    %662 = math.rsqrt %661 : vector<16x1xf32>
    %663 = vector.broadcast %662 : vector<16x1xf32> to vector<16x128xf32>
    %664 = arith.mulf %654, %663 : vector<16x128xf32>
    %665 = vector.broadcast %645 : vector<1x128xf32> to vector<16x128xf32>
    %666 = arith.mulf %664, %665 : vector<16x128xf32>
    %667 = vector.broadcast %646 : vector<1x128xf32> to vector<16x128xf32>
    %668 = arith.addf %666, %667 : vector<16x128xf32>
    %c26_298 = arith.constant 26 : index
    %c0_299 = arith.constant 0 : index
    %c0_300 = arith.constant 0 : index
    %669 = vector.load %arg2[%c26_298, %c0_299, %c0_300] : memref<27x128x128xbf16, #tpu.memory_space<vmem>>, vector<1x128x128xbf16>
    %670 = vector.shape_cast %669 : vector<1x128x128xbf16> to vector<128x128xbf16>
    %671 = arith.truncf %668 : vector<16x128xf32> to vector<16x128xbf16>
    %cst_301 = arith.constant dense<0.000000e+00> : vector<16x128xf32>
    %672 = tpu.matmul %671, %670, %cst_301 {dimension_numbers = #tpu.dot_dimension_numbers<[1], [0], [0], [1], [0, 0, 1, 1], [], []>} : vector<16x128xbf16>, vector<128x128xbf16>, vector<16x128xf32> -> vector<16x128xf32>
    %c50 = arith.constant 50 : index
    %c0_302 = arith.constant 0 : index
    %673 = vector.load %arg6[%c50, %c0_302] : memref<72x128xf32, #tpu.memory_space<vmem>>, vector<1x128xf32>
    %674 = vector.broadcast %673 : vector<1x128xf32> to vector<16x128xf32>
    %675 = arith.addf %672, %674 : vector<16x128xf32>
    %c0_303 = arith.constant 0 : index
    %c0_304 = arith.constant 0 : index
    %676 = vector.load %arg7[%c0_303, %c0_304] : memref<16x128xf32, #tpu.memory_space<vmem>>, vector<16x128xf32>
    tpu.vector_store %arg7[%c0_303, %c0_304], %675 {strides = array<i32>} : memref<16x128xf32, #tpu.memory_space<vmem>>, vector<16x128xf32>,
    return
  }
}

</mosaic_0001>

<llo_original>
// kernel: transformer_vae_forward.1
$region0: #{transformer_vae_forward.1}
  #allocation0 [shape = 'u32[]', space=smem, size = 0x4, offset = 0x4, fixed_abs, tag = 'smem constant byte address 0x4 - core index']
  #allocation1 [shape = 'u32[144,128]{1,0:T(1,128)}', space=vmem, size = 0x12000, scoped, tag = 'internal scratch']
  %s0 = inlined_call_operand.vmem [shape: f32[16,128], index: 0, kind: input, shape index: {}]
  %s1 = inlined_call_operand.vmem [shape: f32[2,128], index: 1, kind: input, shape index: {}]
  %s2 = inlined_call_operand.hbm [shape: bf16[27,128,128], index: 2, kind: input, shape index: {}]
  %s3 = inlined_call_operand.hbm [shape: bf16[4,128,256], index: 3, kind: input, shape index: {}]
  %s4 = inlined_call_operand.hbm [shape: bf16[4,256,128], index: 4, kind: input, shape index: {}]
  %s5 = inlined_call_operand.vmem [shape: f32[4,256], index: 5, kind: input, shape index: {}]
  %s6 = inlined_call_operand.vmem [shape: f32[72,128], index: 6, kind: input, shape index: {}]
  %s7 = inlined_call_operand.hbm [shape: f32[16,128], index: 7, kind: output, shape index: {0}]
  %s8 = inlined_call_operand.vmem [shape: f32[2,128], index: 8, kind: output, shape index: {1}]
  %s9 = inlined_call_operand.vmem [shape: f32[2,128], index: 9, kind: output, shape index: {2}]
  %10 = xla_tuple %s7, %s8, %s9
  %s11 = sld [smem:[#allocation0]]
  $region66: #{transformer_vae_forward.1} parent=0
    _
  %s13 = ssub.s32 1, %s11
  %s14 = scalar_select 0, %s13, %s11
  $region1: #{transformer_vae_forward.1} parent=0
    #allocation2 [shape = 'u8[884736]{0}', space=vmem, size = 0xd8000, scoped, tag = 'input window, operand 2, single buffered']
    #allocation3 [shape = 's32[1]{0}', space=sflag, size = 0x4, scoped, tag = 'scoped memory for transformer_vae_forward.1']
    #allocation4 [shape = 's32[1]{0}', space=sflag, size = 0x4, scoped, tag = 'scoped memory for transformer_vae_forward.1']
    #allocation5 [shape = 'u8[262144]{0}', space=vmem, size = 0x40000, scoped, tag = 'input window, operand 3, single buffered']
    #allocation6 [shape = 's32[1]{0}', space=sflag, size = 0x4, scoped, tag = 'scoped memory for transformer_vae_forward.1']
    #allocation7 [shape = 'u8[262144]{0}', space=vmem, size = 0x40000, scoped, tag = 'input window, operand 4, single buffered']
    #allocation8 [shape = 'u8[8192]{0}', space=vmem, size = 0x2000, scoped, tag = 'output window, operand 0, single buffered']
    %15 = vsyncpa [#allocation3], 0
    %16 = vsyncpa [#allocation6], 0
    %17 = vsyncpa [#allocation4], 0
    // Predicated region
    $region2: #{transformer_vae_forward.1} parent=1 // pred_check
      _
    $region3: #{transformer_vae_forward.1} parent=1 // pred_check_branch
      %19 = sbr.rel (0) target = $region5
    $region4: #{transformer_vae_forward.1} parent=1 // pred_region
      _
    $region5: #{transformer_vae_forward.1} parent=1 // pred_fallthru
      _
    // Predicated region
    $region6: #{transformer_vae_forward.1} parent=1 // pred_check
      _
    $region7: #{transformer_vae_forward.1} parent=1 // pred_check_branch
      %21 = sbr.rel (0) target = $region9
    $region8: #{transformer_vae_forward.1} parent=1 // pred_region
      _
    $region9: #{transformer_vae_forward.1} parent=1 // pred_fallthru
      _
    // Predicated region
    $region10: #{transformer_vae_forward.1} parent=1 // pred_check
      _
    $region11: #{transformer_vae_forward.1} parent=1 // pred_check_branch
      %23 = sbr.rel (0) target = $region13
    $region12: #{transformer_vae_forward.1} parent=1 // pred_region
      %s25 = ssub.s32 27648, 27648
      %26 = vsyncadd [#allocation3], %s25
      %s27 = sshll.u32 [#allocation2], 4
      %s28 = int_to_ptr.vmem [resolvable:$true] %s27
      %33 = dma.hbm_to_vmem [thread:$0]  %s2, 27648, %s28, [#allocation3], 64, 64, 4
    $region13: #{transformer_vae_forward.1} parent=1 // pred_fallthru
      _
    // Predicated region
    $region14: #{transformer_vae_forward.1} parent=1 // pred_check
      _
    $region15: #{transformer_vae_forward.1} parent=1 // pred_check_branch
      %35 = sbr.rel (0) target = $region17
    $region16: #{transformer_vae_forward.1} parent=1 // pred_region
      %s37 = ssub.s32 8192, 8192
      %38 = vsyncadd [#allocation6], %s37
      %s39 = sshll.u32 [#allocation5], 4
      %s40 = int_to_ptr.vmem [resolvable:$true] %s39
      %45 = dma.hbm_to_vmem [thread:$0]  %s3, 8192, %s40, [#allocation6], 128, 128, 8
    $region17: #{transformer_vae_forward.1} parent=1 // pred_fallthru
      _
    // Predicated region
    $region18: #{transformer_vae_forward.1} parent=1 // pred_check
      _
    $region19: #{transformer_vae_forward.1} parent=1 // pred_check_branch
      %47 = sbr.rel (0) target = $region21
    $region20: #{transformer_vae_forward.1} parent=1 // pred_region
      %s49 = ssub.s32 8192, 8192
      %50 = vsyncadd [#allocation6], %s49
      %s51 = sshll.u32 [#allocation7], 4
      %s52 = int_to_ptr.vmem [resolvable:$true] %s51
      %57 = dma.hbm_to_vmem [thread:$0]  %s4, 8192, %s52, [#allocation6], 64, 64, 4
    $region21: #{transformer_vae_forward.1} parent=1 // pred_fallthru
      _
    // Predicated region
    $region22: #{transformer_vae_forward.1} parent=1 // pred_check
      _
    $region23: #{transformer_vae_forward.1} parent=1 // pred_check_branch
      %59 = sbr.rel (0) target = $region25
    $region24: #{transformer_vae_forward.1} parent=1 // pred_region
      _
    $region25: #{transformer_vae_forward.1} parent=1 // pred_fallthru
      _
    // Predicated region
    $region26: #{transformer_vae_forward.1} parent=1 // pred_check
      _
    $region27: #{transformer_vae_forward.1} parent=1 // pred_check_branch
      %61 = sbr.rel (0) target = $region29
    $region28: #{transformer_vae_forward.1} parent=1 // pred_region
      _
    $region29: #{transformer_vae_forward.1} parent=1 // pred_fallthru
      _
    // Predicated region
    $region30: #{transformer_vae_forward.1} parent=1 // pred_check
      _
    $region31: #{transformer_vae_forward.1} parent=1 // pred_check_branch
      %63 = sbr.rel (0) target = $region33
    $region32: #{transformer_vae_forward.1} parent=1 // pred_region
      %64 = dma.done [#allocation3], 27648
    $region33: #{transformer_vae_forward.1} parent=1 // pred_fallthru
      _
    // Predicated region
    $region34: #{transformer_vae_forward.1} parent=1 // pred_check
      _
    $region35: #{transformer_vae_forward.1} parent=1 // pred_check_branch
      %66 = sbr.rel (0) target = $region37
    $region36: #{transformer_vae_forward.1} parent=1 // pred_region
      %67 = dma.done [#allocation6], 8192
    $region37: #{transformer_vae_forward.1} parent=1 // pred_fallthru
      _
    // Predicated region
    $region38: #{transformer_vae_forward.1} parent=1 // pred_check
      _
    $region39: #{transformer_vae_forward.1} parent=1 // pred_check_branch
      %69 = sbr.rel (0) target = $region41
    $region40: #{transformer_vae_forward.1} parent=1 // pred_region
      %70 = dma.done [#allocation6], 8192
    $region41: #{transformer_vae_forward.1} parent=1 // pred_fallthru
      _
    %v72 = vlaneseq
    %v73 = vand.u32 %v72, 127
    %vm74 = vcmp.lt.s32.totalorder %v73, 32
    %v75 = vsel %vm74, 1, 0
    %v76 = vcvt.s32.f32 %v75
    %vm77 = vcmp.lt.s32.totalorder %v73, 40
    %v78 = vsel %vm77, 1, 0
    %v79 = vcvt.s32.f32 %v78
    %v80 = vld [vmem:[%s6 + $0x38] sm:$0xff]
    %v81 = vld [vmem:[%s0] sm:$0xff]
    %v82 = vld [vmem:[%s0 + $0x8] sm:$0xff]
    %v83 = vadd.f32 %v81, %v80
    %v84 = vadd.f32 %v82, %v80
    %v85 = vld [vmem:[#allocation2] sm:$0xf]
    %v86 = vld [vmem:[#allocation2 + $0x4] sm:$0xf]
    %v87 = vld [vmem:[#allocation2 + $0x8] sm:$0xf]
    %v88 = vld [vmem:[#allocation2 + $0xc] sm:$0xf]
    %v89 = vld [vmem:[#allocation2 + $0x10] sm:$0xf]
    %v90 = vld [vmem:[#allocation2 + $0x14] sm:$0xf]
    %v91 = vld [vmem:[#allocation2 + $0x18] sm:$0xf]
    %v92 = vld [vmem:[#allocation2 + $0x1c] sm:$0xf]
    %v93 = vld [vmem:[#allocation2 + $0x20] sm:$0xf]
    %v94 = vld [vmem:[#allocation2 + $0x24] sm:$0xf]
    %v95 = vld [vmem:[#allocation2 + $0x28] sm:$0xf]
    %v96 = vld [vmem:[#allocation2 + $0x2c] sm:$0xf]
    %v97 = vld [vmem:[#allocation2 + $0x30] sm:$0xf]
    %v98 = vld [vmem:[#allocation2 + $0x34] sm:$0xf]
    %v99 = vld [vmem:[#allocation2 + $0x38] sm:$0xf]
    %v100 = vld [vmem:[#allocation2 + $0x3c] sm:$0xf]
    %v101 = vpack.c.bf16 %v84, %v83
    %v102 = vld [vmem:[%s6] sm:$0x1]
    %v103 = vlaneseq
    %v104 = vshrl.u32 %v103, 7
    %v105 = vsub.s32 0, %v104
    %v106 = vrot.slane %v102, %v105
    %v123 = vunpack.c.l.b16 %v85
    %v124 = vunpack.c.l.b16 %v86
    %v125 = vunpack.c.l.b16 %v87
    %v126 = vunpack.c.l.b16 %v88
    %v127 = vunpack.c.l.b16 %v89
    %v128 = vunpack.c.l.b16 %v90
    %v129 = vunpack.c.l.b16 %v91
    %v130 = vunpack.c.l.b16 %v92
    %v131 = vunpack.c.l.b16 %v93
    %v132 = vunpack.c.l.b16 %v94
    %v133 = vunpack.c.l.b16 %v95
    %v134 = vunpack.c.l.b16 %v96
    %v135 = vunpack.c.l.b16 %v97
    %v136 = vunpack.c.l.b16 %v98
    %v137 = vunpack.c.l.b16 %v99
    %v138 = vunpack.c.l.b16 %v100
    %v139 = vpack.c.b16 %v124, %v123
    %v140 = vpack.c.b16 %v126, %v125
    %v141 = vpack.c.b16 %v128, %v127
    %v142 = vpack.c.b16 %v130, %v129
    %v143 = vpack.c.b16 %v132, %v131
    %v144 = vpack.c.b16 %v134, %v133
    %v145 = vpack.c.b16 %v136, %v135
    %v146 = vpack.c.b16 %v138, %v137
    %155 = vmatprep.subr.bf16.mxu0 0
    %156 = vmatpush1.bf16.msra.mxu0 %v139
    %157 = vmatprep.subr.bf16.mxu0 0
    %158 = vmatpush1.bf16.msra.mxu0 %v140
    %159 = vmatprep.subr.bf16.mxu0 0
    %160 = vmatpush1.bf16.msra.mxu0 %v141
    %161 = vmatprep.subr.bf16.mxu0 0
    %162 = vmatpush1.bf16.msra.mxu0 %v142
    %163 = vmatprep.subr.bf16.mxu0 0
    %164 = vmatpush1.bf16.msra.mxu0 %v143
    %165 = vmatprep.subr.bf16.mxu0 0
    %166 = vmatpush1.bf16.msra.mxu0 %v144
    %167 = vmatprep.subr.bf16.mxu0 0
    %168 = vmatpush1.bf16.msra.mxu0 %v145
    %169 = vmatprep.subr.bf16.mxu0 0
    %170 = vmatpush1.bf16.msra.mxu0 %v146
    %171 = vmatprep.subr.bf16.mxu0 0
    %172 = vmatpush1.bf16.msra.mxu0 0
    %173 = vmatprep.subr.bf16.mxu0 0
    %174 = vmatpush1.bf16.msra.mxu0 0
    %175 = vmatprep.subr.bf16.mxu0 0
    %176 = vmatpush1.bf16.msra.mxu0 0
    %177 = vmatprep.subr.bf16.mxu0 0
    %178 = vmatpush1.bf16.msra.mxu0 0
    %179 = vmatprep.subr.bf16.mxu0 0
    %180 = vmatpush1.bf16.msra.mxu0 0
    %181 = vmatprep.subr.bf16.mxu0 0
    %182 = vmatpush1.bf16.msra.mxu0 0
    %183 = vmatprep.subr.bf16.mxu0 0
    %184 = vmatpush1.bf16.msra.mxu0 0
    %185 = vmatprep.subr.bf16.mxu0 0
    %186 = vmatpush1.bf16.msra.mxu0 0
    %187 = vmatprep.mubr.bf16.mxu0 0
    %188 = vmatmul.mubr.bf16.gmra.mrb[0].mxu0 %v101
    %v189 = vpop.f32.mrb[0].mxu0
    %v190 = vadd.f32 %v106, %v189
    %v191 = vpop.f32.mrb[0].mxu0
    %v192 = vpop.f32.mrb[0].mxu0
    %v193 = vadd.f32 %v106, %v192
    %v194 = vpop.f32.mrb[0].mxu0
    %195 = vdwg.mxu0
    %s196 = scalar_lea.vmem [#allocation2], 64
    %v197 = vld [vmem:[%s196] sm:$0xf]
    %v198 = vld [vmem:[%s196 + $0x4] sm:$0xf]
    %v199 = vld [vmem:[%s196 + $0x8] sm:$0xf]
    %v200 = vld [vmem:[%s196 + $0xc] sm:$0xf]
    %v201 = vld [vmem:[%s196 + $0x10] sm:$0xf]
    %v202 = vld [vmem:[%s196 + $0x14] sm:$0xf]
    %v203 = vld [vmem:[%s196 + $0x18] sm:$0xf]
    %v204 = vld [vmem:[%s196 + $0x1c] sm:$0xf]
    %v205 = vld [vmem:[%s196 + $0x20] sm:$0xf]
    %v206 = vld [vmem:[%s196 + $0x24] sm:$0xf]
    %v207 = vld [vmem:[%s196 + $0x28] sm:$0xf]
    %v208 = vld [vmem:[%s196 + $0x2c] sm:$0xf]
    %v209 = vld [vmem:[%s196 + $0x30] sm:$0xf]
    %v210 = vld [vmem:[%s196 + $0x34] sm:$0xf]
    %v211 = vld [vmem:[%s196 + $0x38] sm:$0xf]
    %v212 = vld [vmem:[%s196 + $0x3c] sm:$0xf]
    %v213 = vld [vmem:[%s6 + $0x1] sm:$0x1]
    %v214 = vlaneseq
    %v215 = vshrl.u32 %v214, 7
    %v216 = vsub.s32 0, %v215
    %v217 = vrot.slane %v213, %v216
    %v234 = vunpack.c.l.b16 %v197
    %v235 = vunpack.c.l.b16 %v198
    %v236 = vunpack.c.l.b16 %v199
    %v237 = vunpack.c.l.b16 %v200
    %v238 = vunpack.c.l.b16 %v201
    %v239 = vunpack.c.l.b16 %v202
    %v240 = vunpack.c.l.b16 %v203
    %v241 = vunpack.c.l.b16 %v204
    %v242 = vunpack.c.l.b16 %v205
    %v243 = vunpack.c.l.b16 %v206
    %v244 = vunpack.c.l.b16 %v207
    %v245 = vunpack.c.l.b16 %v208
    %v246 = vunpack.c.l.b16 %v209
    %v247 = vunpack.c.l.b16 %v210
    %v248 = vunpack.c.l.b16 %v211
    %v249 = vunpack.c.l.b16 %v212
    %v250 = vpack.c.b16 %v235, %v234
    %v251 = vpack.c.b16 %v237, %v236
    %v252 = vpack.c.b16 %v239, %v238
    %v253 = vpack.c.b16 %v241, %v240
    %v254 = vpack.c.b16 %v243, %v242
    %v255 = vpack.c.b16 %v245, %v244
    %v256 = vpack.c.b16 %v247, %v246
    %v257 = vpack.c.b16 %v249, %v248
    %266 = vmatprep.subr.bf16.mxu0 0
    %267 = vmatpush1.bf16.msra.mxu0 %v250
    %268 = vmatprep.subr.bf16.mxu0 0
    %269 = vmatpush1.bf16.msra.mxu0 %v251
    %270 = vmatprep.subr.bf16.mxu0 0
    %271 = vmatpush1.bf16.msra.mxu0 %v252
    %272 = vmatprep.subr.bf16.mxu0 0
    %273 = vmatpush1.bf16.msra.mxu0 %v253
    %274 = vmatprep.subr.bf16.mxu0 0
    %275 = vmatpush1.bf16.msra.mxu0 %v254
    %276 = vmatprep.subr.bf16.mxu0 0
    %277 = vmatpush1.bf16.msra.mxu0 %v255
    %278 = vmatprep.subr.bf16.mxu0 0
    %279 = vmatpush1.bf16.msra.mxu0 %v256
    %280 = vmatprep.subr.bf16.mxu0 0
    %281 = vmatpush1.bf16.msra.mxu0 %v257
    %282 = vmatprep.subr.bf16.mxu0 0
    %283 = vmatpush1.bf16.msra.mxu0 0
    %284 = vmatprep.subr.bf16.mxu0 0
    %285 = vmatpush1.bf16.msra.mxu0 0
    %286 = vmatprep.subr.bf16.mxu0 0
    %287 = vmatpush1.bf16.msra.mxu0 0
    %288 = vmatprep.subr.bf16.mxu0 0
    %289 = vmatpush1.bf16.msra.mxu0 0
    %290 = vmatprep.subr.bf16.mxu0 0
    %291 = vmatpush1.bf16.msra.mxu0 0
    %292 = vmatprep.subr.bf16.mxu0 0
    %293 = vmatpush1.bf16.msra.mxu0 0
    %294 = vmatprep.subr.bf16.mxu0 0
    %295 = vmatpush1.bf16.msra.mxu0 0
    %296 = vmatprep.subr.bf16.mxu0 0
    %297 = vmatpush1.bf16.msra.mxu0 0
    %298 = vmatprep.mubr.bf16.mxu0 0
    %299 = vmatmul.mubr.bf16.gmra.mrb[0].mxu0 %v101
    %v300 = vpop.f32.mrb[0].mxu0
    %v301 = vadd.f32 %v217, %v300
    %v302 = vpop.f32.mrb[0].mxu0
    %v303 = vpop.f32.mrb[0].mxu0
    %v304 = vadd.f32 %v217, %v303
    %v305 = vpop.f32.mrb[0].mxu0
    %306 = vdwg.mxu0
    %s307 = scalar_lea.vmem [#allocation2], 128
    %v308 = vld [vmem:[%s307] sm:$0xf]
    %v309 = vld [vmem:[%s307 + $0x4] sm:$0xf]
    %v310 = vld [vmem:[%s307 + $0x8] sm:$0xf]
    %v311 = vld [vmem:[%s307 + $0xc] sm:$0xf]
    %v312 = vld [vmem:[%s307 + $0x10] sm:$0xf]
    %v313 = vld [vmem:[%s307 + $0x14] sm:$0xf]
    %v314 = vld [vmem:[%s307 + $0x18] sm:$0xf]
    %v315 = vld [vmem:[%s307 + $0x1c] sm:$0xf]
    %v316 = vld [vmem:[%s307 + $0x20] sm:$0xf]
    %v317 = vld [vmem:[%s307 + $0x24] sm:$0xf]
    %v318 = vld [vmem:[%s307 + $0x28] sm:$0xf]
    %v319 = vld [vmem:[%s307 + $0x2c] sm:$0xf]
    %v320 = vld [vmem:[%s307 + $0x30] sm:$0xf]
    %v321 = vld [vmem:[%s307 + $0x34] sm:$0xf]
    %v322 = vld [vmem:[%s307 + $0x38] sm:$0xf]
    %v323 = vld [vmem:[%s307 + $0x3c] sm:$0xf]
    %v324 = vld [vmem:[%s6 + $0x2] sm:$0x1]
    %v325 = vlaneseq
    %v326 = vshrl.u32 %v325, 7
    %v327 = vsub.s32 0, %v326
    %v328 = vrot.slane %v324, %v327
    %v345 = vunpack.c.l.b16 %v308
    %v346 = vunpack.c.l.b16 %v309
    %v347 = vunpack.c.l.b16 %v310
    %v348 = vunpack.c.l.b16 %v311
    %v349 = vunpack.c.l.b16 %v312
    %v350 = vunpack.c.l.b16 %v313
    %v351 = vunpack.c.l.b16 %v314
    %v352 = vunpack.c.l.b16 %v315
    %v353 = vunpack.c.l.b16 %v316
    %v354 = vunpack.c.l.b16 %v317
    %v355 = vunpack.c.l.b16 %v318
    %v356 = vunpack.c.l.b16 %v319
    %v357 = vunpack.c.l.b16 %v320
    %v358 = vunpack.c.l.b16 %v321
    %v359 = vunpack.c.l.b16 %v322
    %v360 = vunpack.c.l.b16 %v323
    %v361 = vpack.c.b16 %v346, %v345
    %v362 = vpack.c.b16 %v348, %v347
    %v363 = vpack.c.b16 %v350, %v349
    %v364 = vpack.c.b16 %v352, %v351
    %v365 = vpack.c.b16 %v354, %v353
    %v366 = vpack.c.b16 %v356, %v355
    %v367 = vpack.c.b16 %v358, %v357
    %v368 = vpack.c.b16 %v360, %v359
    %377 = vmatprep.subr.bf16.mxu0 0
    %378 = vmatpush1.bf16.msra.mxu0 %v361
    %379 = vmatprep.subr.bf16.mxu0 0
    %380 = vmatpush1.bf16.msra.mxu0 %v362
    %381 = vmatprep.subr.bf16.mxu0 0
    %382 = vmatpush1.bf16.msra.mxu0 %v363
    %383 = vmatprep.subr.bf16.mxu0 0
    %384 = vmatpush1.bf16.msra.mxu0 %v364
    %385 = vmatprep.subr.bf16.mxu0 0
    %386 = vmatpush1.bf16.msra.mxu0 %v365
    %387 = vmatprep.subr.bf16.mxu0 0
    %388 = vmatpush1.bf16.msra.mxu0 %v366
    %389 = vmatprep.subr.bf16.mxu0 0
    %390 = vmatpush1.bf16.msra.mxu0 %v367
    %391 = vmatprep.subr.bf16.mxu0 0
    %392 = vmatpush1.bf16.msra.mxu0 %v368
    %393 = vmatprep.subr.bf16.mxu0 0
    %394 = vmatpush1.bf16.msra.mxu0 0
    %395 = vmatprep.subr.bf16.mxu0 0
    %396 = vmatpush1.bf16.msra.mxu0 0
    %397 = vmatprep.subr.bf16.mxu0 0
    %398 = vmatpush1.bf16.msra.mxu0 0
    %399 = vmatprep.subr.bf16.mxu0 0
    %400 = vmatpush1.bf16.msra.mxu0 0
    %401 = vmatprep.subr.bf16.mxu0 0
    %402 = vmatpush1.bf16.msra.mxu0 0
    %403 = vmatprep.subr.bf16.mxu0 0
    %404 = vmatpush1.bf16.msra.mxu0 0
    %405 = vmatprep.subr.bf16.mxu0 0
    %406 = vmatpush1.bf16.msra.mxu0 0
    %407 = vmatprep.subr.bf16.mxu0 0
    %408 = vmatpush1.bf16.msra.mxu0 0
    %409 = vmatprep.mubr.bf16.mxu0 0
    %410 = vmatmul.mubr.bf16.gmra.mrb[0].mxu0 %v101
    %v411 = vpop.f32.mrb[0].mxu0
    %v412 = vadd.f32 %v328, %v411
    %v413 = vpop.f32.mrb[0].mxu0
    %v414 = vpop.f32.mrb[0].mxu0
    %v415 = vadd.f32 %v328, %v414
    %v416 = vpop.f32.mrb[0].mxu0
    %417 = vdwg.mxu0
    %418 = vmatprep.subr.mxu0 0.0
    %419 = vmatpush1.xpose.msra.mxu0 %v301
    %420 = vmatprep.subr.mxu0 0.0
    %421 = vmatpush1.xpose.msra.mxu0 0.0
    %422 = vmatprep.subr.mxu0 0.0
    %423 = vmatpush1.xpose.msra.mxu0 0.0
    %424 = vmatprep.subr.mxu0 0.0
    %425 = vmatpush1.xpose.msra.mxu0 0.0
    %426 = vmatprep.subr.mxu0 0.0
    %427 = vmatpush1.xpose.msra.mxu0 0.0
    %428 = vmatprep.subr.mxu0 0.0
    %429 = vmatpush1.xpose.msra.mxu0 0.0
    %430 = vmatprep.subr.mxu0 0.0
    %431 = vmatpush1.xpose.msra.mxu0 0.0
    %432 = vmatprep.subr.mxu0 0.0
    %433 = vmatpush1.xpose.msra.mxu0 0.0
    %434 = vmatprep.subr.mxu0 0.0
    %435 = vmatpush1.xpose.msra.mxu0 0.0
    %436 = vmatprep.subr.mxu0 0.0
    %437 = vmatpush1.xpose.msra.mxu0 0.0
    %438 = vmatprep.subr.mxu0 0.0
    %439 = vmatpush1.xpose.msra.mxu0 0.0
    %440 = vmatprep.subr.mxu0 0.0
    %441 = vmatpush1.xpose.msra.mxu0 0.0
    %442 = vmatprep.subr.mxu0 0.0
    %443 = vmatpush1.xpose.msra.mxu0 0.0
    %444 = vmatprep.subr.mxu0 0.0
    %445 = vmatpush1.xpose.msra.mxu0 0.0
    %446 = vmatprep.subr.mxu0 0.0
    %447 = vmatpush1.xpose.msra.mxu0 0.0
    %448 = vmatprep.subr.mxu0 0.0
    %449 = vmatpush1.xpose.msra.mxu0 0.0
    %450 = vmatprep.subr.mxu0 0.0
    %451 = vmatpush1.xpose.msra.mxu0 0.0
    %452 = vmatprep.subr.mxu0 0.0
    %453 = vmatpush1.xpose.msra.mxu0 0.0
    %454 = vmatprep.subr.mxu0 0.0
    %455 = vmatpush1.xpose.msra.mxu0 0.0
    %456 = vmatprep.subr.mxu0 0.0
    %457 = vmatpush1.xpose.msra.mxu0 0.0
    %458 = vmatprep.subr.mxu0 0.0
    %459 = vmatpush1.xpose.msra.mxu0 0.0
    %460 = vmatprep.subr.mxu0 0.0
    %461 = vmatpush1.xpose.msra.mxu0 0.0
    %462 = vmatprep.subr.mxu0 0.0
    %463 = vmatpush1.xpose.msra.mxu0 0.0
    %464 = vmatprep.subr.mxu0 0.0
    %465 = vmatpush1.xpose.msra.mxu0 0.0
    %466 = vmatprep.subr.mxu0 0.0
    %467 = vmatpush1.xpose.msra.mxu0 0.0
    %468 = vmatprep.subr.mxu0 0.0
    %469 = vmatpush1.xpose.msra.mxu0 0.0
    %470 = vmatprep.subr.mxu0 0.0
    %471 = vmatpush1.xpose.msra.mxu0 0.0
    %472 = vmatprep.subr.mxu0 0.0
    %473 = vmatpush1.xpose.msra.mxu0 0.0
    %474 = vmatprep.subr.mxu0 0.0
    %475 = vmatpush1.xpose.msra.mxu0 0.0
    %476 = vmatprep.subr.mxu0 0.0
    %477 = vmatpush1.xpose.msra.mxu0 0.0
    %478 = vmatprep.subr.mxu0 0.0
    %479 = vmatpush1.xpose.msra.mxu0 0.0
    %480 = vmatprep.subr.mxu0 0.0
    %481 = vmatpush1.xpose.msra.mxu0 0.0
    %482 = vmatprep.mubr.f32.mxu0 0.0
    %483 = vmatmul.mubr.f32.gmra.mrb[0].mxu0 %v190
    %v484 = vpop.f32.mrb[0].mxu0
    %v485 = vadd.f32 0.0, %v484
    %v486 = vpop.f32.mrb[0].mxu0
    %487 = vdwg.mxu0
    %488 = vmatprep.subr.mxu0 0.0
    %489 = vmatpush1.xpose.msra.mxu0 %v304
    %490 = vmatprep.subr.mxu0 0.0
    %491 = vmatpush1.xpose.msra.mxu0 0.0
    %492 = vmatprep.subr.mxu0 0.0
    %493 = vmatpush1.xpose.msra.mxu0 0.0
    %494 = vmatprep.subr.mxu0 0.0
    %495 = vmatpush1.xpose.msra.mxu0 0.0
    %496 = vmatprep.subr.mxu0 0.0
    %497 = vmatpush1.xpose.msra.mxu0 0.0
    %498 = vmatprep.subr.mxu0 0.0
    %499 = vmatpush1.xpose.msra.mxu0 0.0
    %500 = vmatprep.subr.mxu0 0.0
    %501 = vmatpush1.xpose.msra.mxu0 0.0
    %502 = vmatprep.subr.mxu0 0.0
    %503 = vmatpush1.xpose.msra.mxu0 0.0
    %504 = vmatprep.subr.mxu0 0.0
    %505 = vmatpush1.xpose.msra.mxu0 0.0
    %506 = vmatprep.subr.mxu0 0.0
    %507 = vmatpush1.xpose.msra.mxu0 0.0
    %508 = vmatprep.subr.mxu0 0.0
    %509 = vmatpush1.xpose.msra.mxu0 0.0
    %510 = vmatprep.subr.mxu0 0.0
    %511 = vmatpush1.xpose.msra.mxu0 0.0
    %512 = vmatprep.subr.mxu0 0.0
    %513 = vmatpush1.xpose.msra.mxu0 0.0
    %514 = vmatprep.subr.mxu0 0.0
    %515 = vmatpush1.xpose.msra.mxu0 0.0
    %516 = vmatprep.subr.mxu0 0.0
    %517 = vmatpush1.xpose.msra.mxu0 0.0
    %518 = vmatprep.subr.mxu0 0.0
    %519 = vmatpush1.xpose.msra.mxu0 0.0
    %520 = vmatprep.subr.mxu0 0.0
    %521 = vmatpush1.xpose.msra.mxu0 0.0
    %522 = vmatprep.subr.mxu0 0.0
    %523 = vmatpush1.xpose.msra.mxu0 0.0
    %524 = vmatprep.subr.mxu0 0.0
    %525 = vmatpush1.xpose.msra.mxu0 0.0
    %526 = vmatprep.subr.mxu0 0.0
    %527 = vmatpush1.xpose.msra.mxu0 0.0
    %528 = vmatprep.subr.mxu0 0.0
    %529 = vmatpush1.xpose.msra.mxu0 0.0
    %530 = vmatprep.subr.mxu0 0.0
    %531 = vmatpush1.xpose.msra.mxu0 0.0
    %532 = vmatprep.subr.mxu0 0.0
    %533 = vmatpush1.xpose.msra.mxu0 0.0
    %534 = vmatprep.subr.mxu0 0.0
    %535 = vmatpush1.xpose.msra.mxu0 0.0
    %536 = vmatprep.subr.mxu0 0.0
    %537 = vmatpush1.xpose.msra.mxu0 0.0
    %538 = vmatprep.subr.mxu0 0.0
    %539 = vmatpush1.xpose.msra.mxu0 0.0
    %540 = vmatprep.subr.mxu0 0.0
    %541 = vmatpush1.xpose.msra.mxu0 0.0
    %542 = vmatprep.subr.mxu0 0.0
    %543 = vmatpush1.xpose.msra.mxu0 0.0
    %544 = vmatprep.subr.mxu0 0.0
    %545 = vmatpush1.xpose.msra.mxu0 0.0
    %546 = vmatprep.subr.mxu0 0.0
    %547 = vmatpush1.xpose.msra.mxu0 0.0
    %548 = vmatprep.subr.mxu0 0.0
    %549 = vmatpush1.xpose.msra.mxu0 0.0
    %550 = vmatprep.subr.mxu0 0.0
    %551 = vmatpush1.xpose.msra.mxu0 0.0
    %552 = vmatprep.mubr.f32.mxu0 0.0
    %553 = vmatmul.mubr.f32.gmra.mrb[0].mxu0 %v193
    %v554 = vpop.f32.mrb[0].mxu0
    %v555 = vadd.f32 0.0, %v554
    %v556 = vpop.f32.mrb[0].mxu0
    %557 = vdwg.mxu0
    %v558 = vmul.f32 %v485, 0.17677669
    %v559 = vmul.f32 %v555, 0.17677669
    %vm560 = vcmask 64512
    %v561 = vsel %vm560, %v558, -inf
    %562 = vmax.xlane.f32.xlu0 %v561
    %v563 = vpop.xlane.xlu0 %562
    %v564 = vsel %vm560, %v559, -inf
    %565 = vmax.xlane.f32.xlu0 %v564
    %v566 = vpop.xlane.xlu0 %565
    %v567 = vsub.f32 %v558, %v563
    %v568 = vsub.f32 %v559, %v566
    %v569 = vmul.f32 %v567, 1.442695
    %v570 = vpow.pop %v569
    %v571 = vmul.f32 %v568, 1.442695
    %v572 = vpow.pop %v571
    %v573 = vsel %vm560, %v570, 0.0
    %574 = vadd.xlane.f32.xlu0 %v573
    %v575 = vpop.xlane.xlu0 %574
    %v576 = vsel %vm560, %v572, 0.0
    %577 = vadd.xlane.f32.xlu0 %v576
    %v578 = vpop.xlane.xlu0 %577
    %v579 = vrcp.pop %v575
    %v580 = vrcp.pop %v578
    %v581 = vmul.f32 %v570, %v579
    %v582 = vmul.f32 %v572, %v580
    %v584 = vsel %vm560, %v581, 0
    %586 = vmatprep.subr.mxu0 0.0
    %587 = vmatpush1.msra.mxu0 %v412
    %588 = vmatprep.subr.mxu0 0.0
    %589 = vmatpush1.msra.mxu0 0.0
    %590 = vmatprep.subr.mxu0 0.0
    %591 = vmatpush1.msra.mxu0 0.0
    %592 = vmatprep.subr.mxu0 0.0
    %593 = vmatpush1.msra.mxu0 0.0
    %594 = vmatprep.subr.mxu0 0.0
    %595 = vmatpush1.msra.mxu0 0.0
    %596 = vmatprep.subr.mxu0 0.0
    %597 = vmatpush1.msra.mxu0 0.0
    %598 = vmatprep.subr.mxu0 0.0
    %599 = vmatpush1.msra.mxu0 0.0
    %600 = vmatprep.subr.mxu0 0.0
    %601 = vmatpush1.msra.mxu0 0.0
    %602 = vmatprep.subr.mxu0 0.0
    %603 = vmatpush1.msra.mxu0 0.0
    %604 = vmatprep.subr.mxu0 0.0
    %605 = vmatpush1.msra.mxu0 0.0
    %606 = vmatprep.subr.mxu0 0.0
    %607 = vmatpush1.msra.mxu0 0.0
    %608 = vmatprep.subr.mxu0 0.0
    %609 = vmatpush1.msra.mxu0 0.0
    %610 = vmatprep.subr.mxu0 0.0
    %611 = vmatpush1.msra.mxu0 0.0
    %612 = vmatprep.subr.mxu0 0.0
    %613 = vmatpush1.msra.mxu0 0.0
    %614 = vmatprep.subr.mxu0 0.0
    %615 = vmatpush1.msra.mxu0 0.0
    %616 = vmatprep.subr.mxu0 0.0
    %617 = vmatpush1.msra.mxu0 0.0
    %618 = vmatprep.subr.mxu0 0.0
    %619 = vmatpush1.msra.mxu0 0.0
    %620 = vmatprep.subr.mxu0 0.0
    %621 = vmatpush1.msra.mxu0 0.0
    %622 = vmatprep.subr.mxu0 0.0
    %623 = vmatpush1.msra.mxu0 0.0
    %624 = vmatprep.subr.mxu0 0.0
    %625 = vmatpush1.msra.mxu0 0.0
    %626 = vmatprep.subr.mxu0 0.0
    %627 = vmatpush1.msra.mxu0 0.0
    %628 = vmatprep.subr.mxu0 0.0
    %629 = vmatpush1.msra.mxu0 0.0
    %630 = vmatprep.subr.mxu0 0.0
    %631 = vmatpush1.msra.mxu0 0.0
    %632 = vmatprep.subr.mxu0 0.0
    %633 = vmatpush1.msra.mxu0 0.0
    %634 = vmatprep.subr.mxu0 0.0
    %635 = vmatpush1.msra.mxu0 0.0
    %636 = vmatprep.subr.mxu0 0.0
    %637 = vmatpush1.msra.mxu0 0.0
    %638 = vmatprep.subr.mxu0 0.0
    %639 = vmatpush1.msra.mxu0 0.0
    %640 = vmatprep.subr.mxu0 0.0
    %641 = vmatpush1.msra.mxu0 0.0
    %642 = vmatprep.subr.mxu0 0.0
    %643 = vmatpush1.msra.mxu0 0.0
    %644 = vmatprep.subr.mxu0 0.0
    %645 = vmatpush1.msra.mxu0 0.0
    %646 = vmatprep.subr.mxu0 0.0
    %647 = vmatpush1.msra.mxu0 0.0
    %648 = vmatprep.subr.mxu0 0.0
    %649 = vmatpush1.msra.mxu0 0.0
    %650 = vmatprep.mubr.f32.mxu0 0.0
    %651 = vmatmul.mubr.f32.gmra.mrb[0].mxu0 %v584
    %v652 = vpop.f32.mrb[0].mxu0
    %v653 = vadd.f32 0.0, %v652
    %v654 = vpop.f32.mrb[0].mxu0
    %655 = vdwg.mxu0
    %v657 = vsel %vm560, %v582, 0
    %659 = vmatprep.subr.mxu0 0.0
    %660 = vmatpush1.msra.mxu0 %v415
    %661 = vmatprep.subr.mxu0 0.0
    %662 = vmatpush1.msra.mxu0 0.0
    %663 = vmatprep.subr.mxu0 0.0
    %664 = vmatpush1.msra.mxu0 0.0
    %665 = vmatprep.subr.mxu0 0.0
    %666 = vmatpush1.msra.mxu0 0.0
    %667 = vmatprep.subr.mxu0 0.0
    %668 = vmatpush1.msra.mxu0 0.0
    %669 = vmatprep.subr.mxu0 0.0
    %670 = vmatpush1.msra.mxu0 0.0
    %671 = vmatprep.subr.mxu0 0.0
    %672 = vmatpush1.msra.mxu0 0.0
    %673 = vmatprep.subr.mxu0 0.0
    %674 = vmatpush1.msra.mxu0 0.0
    %675 = vmatprep.subr.mxu0 0.0
    %676 = vmatpush1.msra.mxu0 0.0
    %677 = vmatprep.subr.mxu0 0.0
    %678 = vmatpush1.msra.mxu0 0.0
    %679 = vmatprep.subr.mxu0 0.0
    %680 = vmatpush1.msra.mxu0 0.0
    %681 = vmatprep.subr.mxu0 0.0
    %682 = vmatpush1.msra.mxu0 0.0
    %683 = vmatprep.subr.mxu0 0.0
    %684 = vmatpush1.msra.mxu0 0.0
    %685 = vmatprep.subr.mxu0 0.0
    %686 = vmatpush1.msra.mxu0 0.0
    %687 = vmatprep.subr.mxu0 0.0
    %688 = vmatpush1.msra.mxu0 0.0
    %689 = vmatprep.subr.mxu0 0.0
    %690 = vmatpush1.msra.mxu0 0.0
    %691 = vmatprep.subr.mxu0 0.0
    %692 = vmatpush1.msra.mxu0 0.0
    %693 = vmatprep.subr.mxu0 0.0
    %694 = vmatpush1.msra.mxu0 0.0
    %695 = vmatprep.subr.mxu0 0.0
    %696 = vmatpush1.msra.mxu0 0.0
    %697 = vmatprep.subr.mxu0 0.0
    %698 = vmatpush1.msra.mxu0 0.0
    %699 = vmatprep.subr.mxu0 0.0
    %700 = vmatpush1.msra.mxu0 0.0
    %701 = vmatprep.subr.mxu0 0.0
    %702 = vmatpush1.msra.mxu0 0.0
    %703 = vmatprep.subr.mxu0 0.0
    %704 = vmatpush1.msra.mxu0 0.0
    %705 = vmatprep.subr.mxu0 0.0
    %706 = vmatpush1.msra.mxu0 0.0
    %707 = vmatprep.subr.mxu0 0.0
    %708 = vmatpush1.msra.mxu0 0.0
    %709 = vmatprep.subr.mxu0 0.0
    %710 = vmatpush1.msra.mxu0 0.0
    %711 = vmatprep.subr.mxu0 0.0
    %712 = vmatpush1.msra.mxu0 0.0
    %713 = vmatprep.subr.mxu0 0.0
    %714 = vmatpush1.msra.mxu0 0.0
    %715 = vmatprep.subr.mxu0 0.0
    %716 = vmatpush1.msra.mxu0 0.0
    %717 = vmatprep.subr.mxu0 0.0
    %718 = vmatpush1.msra.mxu0 0.0
    %719 = vmatprep.subr.mxu0 0.0
    %720 = vmatpush1.msra.mxu0 0.0
    %721 = vmatprep.subr.mxu0 0.0
    %722 = vmatpush1.msra.mxu0 0.0
    %723 = vmatprep.mubr.f32.mxu0 0.0
    %724 = vmatmul.mubr.f32.gmra.mrb[0].mxu0 %v657
    %v725 = vpop.f32.mrb[0].mxu0
    %v726 = vadd.f32 0.0, %v725
    %v727 = vpop.f32.mrb[0].mxu0
    %728 = vdwg.mxu0
    %s729 = scalar_lea.vmem [#allocation2], 192
    %v730 = vld [vmem:[%s729] sm:$0xf]
    %v731 = vld [vmem:[%s729 + $0x4] sm:$0xf]
    %v732 = vld [vmem:[%s729 + $0x8] sm:$0xf]
    %v733 = vld [vmem:[%s729 + $0xc] sm:$0xf]
    %v734 = vld [vmem:[%s729 + $0x10] sm:$0xf]
    %v735 = vld [vmem:[%s729 + $0x14] sm:$0xf]
    %v736 = vld [vmem:[%s729 + $0x18] sm:$0xf]
    %v737 = vld [vmem:[%s729 + $0x1c] sm:$0xf]
    %v738 = vld [vmem:[%s729 + $0x20] sm:$0xf]
    %v739 = vld [vmem:[%s729 + $0x24] sm:$0xf]
    %v740 = vld [vmem:[%s729 + $0x28] sm:$0xf]
    %v741 = vld [vmem:[%s729 + $0x2c] sm:$0xf]
    %v742 = vld [vmem:[%s729 + $0x30] sm:$0xf]
    %v743 = vld [vmem:[%s729 + $0x34] sm:$0xf]
    %v744 = vld [vmem:[%s729 + $0x38] sm:$0xf]
    %v745 = vld [vmem:[%s729 + $0x3c] sm:$0xf]
    %v746 = vpack.c.bf16 %v726, %v653
    %v747 = vld [vmem:[%s6 + $0x3] sm:$0x1]
    %v748 = vlaneseq
    %v749 = vshrl.u32 %v748, 7
    %v750 = vsub.s32 0, %v749
    %v751 = vrot.slane %v747, %v750
    %v768 = vunpack.c.l.b16 %v730
    %v769 = vunpack.c.l.b16 %v731
    %v770 = vunpack.c.l.b16 %v732
    %v771 = vunpack.c.l.b16 %v733
    %v772 = vunpack.c.l.b16 %v734
    %v773 = vunpack.c.l.b16 %v735
    %v774 = vunpack.c.l.b16 %v736
    %v775 = vunpack.c.l.b16 %v737
    %v776 = vunpack.c.l.b16 %v738
    %v777 = vunpack.c.l.b16 %v739
    %v778 = vunpack.c.l.b16 %v740
    %v779 = vunpack.c.l.b16 %v741
    %v780 = vunpack.c.l.b16 %v742
    %v781 = vunpack.c.l.b16 %v743
    %v782 = vunpack.c.l.b16 %v744
    %v783 = vunpack.c.l.b16 %v745
    %v784 = vpack.c.b16 %v769, %v768
    %v785 = vpack.c.b16 %v771, %v770
    %v786 = vpack.c.b16 %v773, %v772
    %v787 = vpack.c.b16 %v775, %v774
    %v788 = vpack.c.b16 %v777, %v776
    %v789 = vpack.c.b16 %v779, %v778
    %v790 = vpack.c.b16 %v781, %v780
    %v791 = vpack.c.b16 %v783, %v782
    %800 = vmatprep.subr.bf16.mxu0 0
    %801 = vmatpush1.bf16.msra.mxu0 %v784
    %802 = vmatprep.subr.bf16.mxu0 0
    %803 = vmatpush1.bf16.msra.mxu0 %v785
    %804 = vmatprep.subr.bf16.mxu0 0
    %805 = vmatpush1.bf16.msra.mxu0 %v786
    %806 = vmatprep.subr.bf16.mxu0 0
    %807 = vmatpush1.bf16.msra.mxu0 %v787
    %808 = vmatprep.subr.bf16.mxu0 0
    %809 = vmatpush1.bf16.msra.mxu0 %v788
    %810 = vmatprep.subr.bf16.mxu0 0
    %811 = vmatpush1.bf16.msra.mxu0 %v789
    %812 = vmatprep.subr.bf16.mxu0 0
    %813 = vmatpush1.bf16.msra.mxu0 %v790
    %814 = vmatprep.subr.bf16.mxu0 0
    %815 = vmatpush1.bf16.msra.mxu0 %v791
    %816 = vmatprep.subr.bf16.mxu0 0
    %817 = vmatpush1.bf16.msra.mxu0 0
    %818 = vmatprep.subr.bf16.mxu0 0
    %819 = vmatpush1.bf16.msra.mxu0 0
    %820 = vmatprep.subr.bf16.mxu0 0
    %821 = vmatpush1.bf16.msra.mxu0 0
    %822 = vmatprep.subr.bf16.mxu0 0
    %823 = vmatpush1.bf16.msra.mxu0 0
    %824 = vmatprep.subr.bf16.mxu0 0
    %825 = vmatpush1.bf16.msra.mxu0 0
    %826 = vmatprep.subr.bf16.mxu0 0
    %827 = vmatpush1.bf16.msra.mxu0 0
    %828 = vmatprep.subr.bf16.mxu0 0
    %829 = vmatpush1.bf16.msra.mxu0 0
    %830 = vmatprep.subr.bf16.mxu0 0
    %831 = vmatpush1.bf16.msra.mxu0 0
    %832 = vmatprep.mubr.bf16.mxu0 0
    %833 = vmatmul.mubr.bf16.gmra.mrb[0].mxu0 %v746
    %v834 = vpop.f32.mrb[0].mxu0
    %v835 = vadd.f32 %v751, %v834
    %v836 = vpop.f32.mrb[0].mxu0
    %v837 = vpop.f32.mrb[0].mxu0
    %v838 = vadd.f32 %v751, %v837
    %v839 = vpop.f32.mrb[0].mxu0
    %840 = vdwg.mxu0
    %v841 = vadd.f32 %v83, %v835
    %v842 = vadd.f32 %v84, %v838
    %v843 = vld [vmem:[%s6 + $0x5] sm:$0x1]
    %v844 = vld [vmem:[%s6 + $0x6] sm:$0x1]
    %845 = vadd.xlane.f32.xlu0 %v841
    %v846 = vpop.xlane.xlu0 %845
    %847 = vadd.xlane.f32.xlu0 %v842
    %v848 = vpop.xlane.xlu0 %847
    %v849 = vmul.f32 %v846, 0.03125
    %v850 = vmul.f32 %v848, 0.03125
    %v851 = vsub.f32 %v841, %v849
    %v852 = vsub.f32 %v842, %v850
    %v853 = vmul.f32 %v851, %v76
    %v854 = vmul.f32 %v852, %v76
    %v855 = vmul.f32 %v853, %v853
    %v856 = vmul.f32 %v854, %v854
    %857 = vadd.xlane.f32.xlu0 %v855
    %v858 = vpop.xlane.xlu0 %857
    %859 = vadd.xlane.f32.xlu0 %v856
    %v860 = vpop.xlane.xlu0 %859
    %v861 = vmul.f32 %v858, 0.03125
    %v862 = vmul.f32 %v860, 0.03125
    %v863 = vadd.f32 %v861, 1e-05
    %v864 = vadd.f32 %v862, 1e-05
    %v865 = vrsqrt.pop %v863
    %v866 = vrsqrt.pop %v864
    %v867 = vmul.f32 %v853, %v865
    %v868 = vmul.f32 %v854, %v866
    %v869 = vlaneseq
    %v870 = vshrl.u32 %v869, 7
    %v871 = vsub.s32 0, %v870
    %v872 = vrot.slane %v843, %v871
    %v873 = vmul.f32 %v867, %v872
    %v874 = vmul.f32 %v868, %v872
    %v875 = vlaneseq
    %v876 = vshrl.u32 %v875, 7
    %v877 = vsub.s32 0, %v876
    %v878 = vrot.slane %v844, %v877
    %v879 = vadd.f32 %v873, %v878
    %v880 = vadd.f32 %v874, %v878
    %v881 = vld [vmem:[%s6 + $0x4] sm:$0x1]
    %v882 = vld [vmem:[#allocation5] sm:$0xff]
    %v883 = vld [vmem:[#allocation5 + $0x8] sm:$0xff]
    %v884 = vld [vmem:[#allocation5 + $0x10] sm:$0xff]
    %v885 = vld [vmem:[#allocation5 + $0x18] sm:$0xff]
    %v886 = vld [vmem:[#allocation5 + $0x20] sm:$0xff]
    %v887 = vld [vmem:[#allocation5 + $0x28] sm:$0xff]
    %v888 = vld [vmem:[#allocation5 + $0x30] sm:$0xff]
    %v889 = vld [vmem:[#allocation5 + $0x38] sm:$0xff]
    %v890 = vld [vmem:[#allocation5 + $0x40] sm:$0xff]
    %v891 = vld [vmem:[#allocation5 + $0x48] sm:$0xff]
    %v892 = vld [vmem:[#allocation5 + $0x50] sm:$0xff]
    %v893 = vld [vmem:[#allocation5 + $0x58] sm:$0xff]
    %v894 = vld [vmem:[#allocation5 + $0x60] sm:$0xff]
    %v895 = vld [vmem:[#allocation5 + $0x68] sm:$0xff]
    %v896 = vld [vmem:[#allocation5 + $0x70] sm:$0xff]
    %v897 = vld [vmem:[#allocation5 + $0x78] sm:$0xff]
    %v898 = vpack.c.bf16 %v880, %v879
    %v899 = vld [vmem:[%s5] ss:$4 sm:$0x3]
    %v901 = vlaneseq
    %v902 = vshrl.u32 %v901, 7
    %v903 = vsub.s32 0, %v902
    %v904 = vrot.slane %v899, %v903
    %v905 = vlaneseq
    %v906 = vshrl.u32 %v905, 7
    %v907 = vsub.s32 1, %v906
    %v908 = vrot.slane %v899, %v907
    %v927 = vunpack.c.l.b16 %v882
    %v928 = vunpack.c.h.b16 %v882
    %v929 = vunpack.c.l.b16 %v883
    %v930 = vunpack.c.h.b16 %v883
    %v931 = vunpack.c.l.b16 %v884
    %v932 = vunpack.c.h.b16 %v884
    %v933 = vunpack.c.l.b16 %v885
    %v934 = vunpack.c.h.b16 %v885
    %v935 = vunpack.c.l.b16 %v886
    %v936 = vunpack.c.h.b16 %v886
    %v937 = vunpack.c.l.b16 %v887
    %v938 = vunpack.c.h.b16 %v887
    %v939 = vunpack.c.l.b16 %v888
    %v940 = vunpack.c.h.b16 %v888
    %v941 = vunpack.c.l.b16 %v889
    %v942 = vunpack.c.h.b16 %v889
    %v943 = vunpack.c.l.b16 %v890
    %v944 = vunpack.c.h.b16 %v890
    %v945 = vunpack.c.l.b16 %v891
    %v946 = vunpack.c.h.b16 %v891
    %v947 = vunpack.c.l.b16 %v892
    %v948 = vunpack.c.h.b16 %v892
    %v949 = vunpack.c.l.b16 %v893
    %v950 = vunpack.c.h.b16 %v893
    %v951 = vunpack.c.l.b16 %v894
    %v952 = vunpack.c.h.b16 %v894
    %v953 = vunpack.c.l.b16 %v895
    %v954 = vunpack.c.h.b16 %v895
    %v955 = vunpack.c.l.b16 %v896
    %v956 = vunpack.c.h.b16 %v896
    %v957 = vunpack.c.l.b16 %v897
    %v958 = vunpack.c.h.b16 %v897
    %v959 = vpack.c.b16 %v929, %v927
    %v960 = vpack.c.b16 %v930, %v928
    %v961 = vpack.c.b16 %v933, %v931
    %v962 = vpack.c.b16 %v934, %v932
    %v963 = vpack.c.b16 %v937, %v935
    %v964 = vpack.c.b16 %v938, %v936
    %v965 = vpack.c.b16 %v941, %v939
    %v966 = vpack.c.b16 %v942, %v940
    %v967 = vpack.c.b16 %v945, %v943
    %v968 = vpack.c.b16 %v946, %v944
    %v969 = vpack.c.b16 %v949, %v947
    %v970 = vpack.c.b16 %v950, %v948
    %v971 = vpack.c.b16 %v953, %v951
    %v972 = vpack.c.b16 %v954, %v952
    %v973 = vpack.c.b16 %v957, %v955
    %v974 = vpack.c.b16 %v958, %v956
    %991 = vmatprep.subr.bf16.mxu0 %v960
    %992 = vmatpush1.bf16.msra.mxu0 %v959
    %993 = vmatprep.subr.bf16.mxu0 %v962
    %994 = vmatpush1.bf16.msra.mxu0 %v961
    %995 = vmatprep.subr.bf16.mxu0 %v964
    %996 = vmatpush1.bf16.msra.mxu0 %v963
    %997 = vmatprep.subr.bf16.mxu0 %v966
    %998 = vmatpush1.bf16.msra.mxu0 %v965
    %999 = vmatprep.subr.bf16.mxu0 %v968
    %1000 = vmatpush1.bf16.msra.mxu0 %v967
    %1001 = vmatprep.subr.bf16.mxu0 %v970
    %1002 = vmatpush1.bf16.msra.mxu0 %v969
    %1003 = vmatprep.subr.bf16.mxu0 %v972
    %1004 = vmatpush1.bf16.msra.mxu0 %v971
    %1005 = vmatprep.subr.bf16.mxu0 %v974
    %1006 = vmatpush1.bf16.msra.mxu0 %v973
    %1007 = vmatprep.subr.bf16.mxu0 0
    %1008 = vmatpush1.bf16.msra.mxu0 0
    %1009 = vmatprep.subr.bf16.mxu0 0
    %1010 = vmatpush1.bf16.msra.mxu0 0
    %1011 = vmatprep.subr.bf16.mxu0 0
    %1012 = vmatpush1.bf16.msra.mxu0 0
    %1013 = vmatprep.subr.bf16.mxu0 0
    %1014 = vmatpush1.bf16.msra.mxu0 0
    %1015 = vmatprep.subr.bf16.mxu0 0
    %1016 = vmatpush1.bf16.msra.mxu0 0
    %1017 = vmatprep.subr.bf16.mxu0 0
    %1018 = vmatpush1.bf16.msra.mxu0 0
    %1019 = vmatprep.subr.bf16.mxu0 0
    %1020 = vmatpush1.bf16.msra.mxu0 0
    %1021 = vmatprep.subr.bf16.mxu0 0
    %1022 = vmatpush1.bf16.msra.mxu0 0
    %1023 = vmatprep.mubr.bf16.mxu0 0
    %1024 = vmatmul.mubr.bf16.gmra.mrb[0].mxu0 %v898
    %v1025 = vpop.f32.mrb[0].mxu0
    %v1026 = vadd.f32 %v904, %v1025
    %v1027 = vpop.f32.mrb[0].mxu0
    %v1028 = vadd.f32 %v908, %v1027
    %v1029 = vpop.f32.mrb[0].mxu0
    %v1030 = vadd.f32 %v904, %v1029
    %v1031 = vpop.f32.mrb[0].mxu0
    %v1032 = vadd.f32 %v908, %v1031
    %1033 = vdwg.mxu0
    %v1034 = vmax.f32 %v1026, 0.0
    %v1035 = vmax.f32 %v1028, 0.0
    %v1036 = vmax.f32 %v1030, 0.0
    %v1037 = vmax.f32 %v1032, 0.0
    %v1038 = vld [vmem:[#allocation7] sm:$0xf]
    %v1039 = vld [vmem:[#allocation7 + $0x4] sm:$0xf]
    %v1040 = vld [vmem:[#allocation7 + $0x8] sm:$0xf]
    %v1041 = vld [vmem:[#allocation7 + $0xc] sm:$0xf]
    %v1042 = vld [vmem:[#allocation7 + $0x10] sm:$0xf]
    %v1043 = vld [vmem:[#allocation7 + $0x14] sm:$0xf]
    %v1044 = vld [vmem:[#allocation7 + $0x18] sm:$0xf]
    %v1045 = vld [vmem:[#allocation7 + $0x1c] sm:$0xf]
    %v1046 = vld [vmem:[#allocation7 + $0x20] sm:$0xf]
    %v1047 = vld [vmem:[#allocation7 + $0x24] sm:$0xf]
    %v1048 = vld [vmem:[#allocation7 + $0x28] sm:$0xf]
    %v1049 = vld [vmem:[#allocation7 + $0x2c] sm:$0xf]
    %v1050 = vld [vmem:[#allocation7 + $0x30] sm:$0xf]
    %v1051 = vld [vmem:[#allocation7 + $0x34] sm:$0xf]
    %v1052 = vld [vmem:[#allocation7 + $0x38] sm:$0xf]
    %v1053 = vld [vmem:[#allocation7 + $0x3c] sm:$0xf]
    %v1054 = vld [vmem:[#allocation7 + $0x40] sm:$0xf]
    %v1055 = vld [vmem:[#allocation7 + $0x44] sm:$0xf]
    %v1056 = vld [vmem:[#allocation7 + $0x48] sm:$0xf]
    %v1057 = vld [vmem:[#allocation7 + $0x4c] sm:$0xf]
    %v1058 = vld [vmem:[#allocation7 + $0x50] sm:$0xf]
    %v1059 = vld [vmem:[#allocation7 + $0x54] sm:$0xf]
    %v1060 = vld [vmem:[#allocation7 + $0x58] sm:$0xf]
    %v1061 = vld [vmem:[#allocation7 + $0x5c] sm:$0xf]
    %v1062 = vld [vmem:[#allocation7 + $0x60] sm:$0xf]
    %v1063 = vld [vmem:[#allocation7 + $0x64] sm:$0xf]
    %v1064 = vld [vmem:[#allocation7 + $0x68] sm:$0xf]
    %v1065 = vld [vmem:[#allocation7 + $0x6c] sm:$0xf]
    %v1066 = vld [vmem:[#allocation7 + $0x70] sm:$0xf]
    %v1067 = vld [vmem:[#allocation7 + $0x74] sm:$0xf]
    %v1068 = vld [vmem:[#allocation7 + $0x78] sm:$0xf]
    %v1069 = vld [vmem:[#allocation7 + $0x7c] sm:$0xf]
    %v1070 = vpack.c.bf16 %v1036, %v1034
    %v1071 = vpack.c.bf16 %v1037, %v1035
    %v1072 = vlaneseq
    %v1073 = vshrl.u32 %v1072, 7
    %v1074 = vsub.s32 0, %v1073
    %v1075 = vrot.slane %v881, %v1074
    %v1108 = vunpack.c.l.b16 %v1038
    %v1109 = vunpack.c.l.b16 %v1039
    %v1110 = vunpack.c.l.b16 %v1040
    %v1111 = vunpack.c.l.b16 %v1041
    %v1112 = vunpack.c.l.b16 %v1042
    %v1113 = vunpack.c.l.b16 %v1043
    %v1114 = vunpack.c.l.b16 %v1044
    %v1115 = vunpack.c.l.b16 %v1045
    %v1116 = vunpack.c.l.b16 %v1046
    %v1117 = vunpack.c.l.b16 %v1047
    %v1118 = vunpack.c.l.b16 %v1048
    %v1119 = vunpack.c.l.b16 %v1049
    %v1120 = vunpack.c.l.b16 %v1050
    %v1121 = vunpack.c.l.b16 %v1051
    %v1122 = vunpack.c.l.b16 %v1052
    %v1123 = vunpack.c.l.b16 %v1053
    %v1124 = vunpack.c.l.b16 %v1054
    %v1125 = vunpack.c.l.b16 %v1055
    %v1126 = vunpack.c.l.b16 %v1056
    %v1127 = vunpack.c.l.b16 %v1057
    %v1128 = vunpack.c.l.b16 %v1058
    %v1129 = vunpack.c.l.b16 %v1059
    %v1130 = vunpack.c.l.b16 %v1060
    %v1131 = vunpack.c.l.b16 %v1061
    %v1132 = vunpack.c.l.b16 %v1062
    %v1133 = vunpack.c.l.b16 %v1063
    %v1134 = vunpack.c.l.b16 %v1064
    %v1135 = vunpack.c.l.b16 %v1065
    %v1136 = vunpack.c.l.b16 %v1066
    %v1137 = vunpack.c.l.b16 %v1067
    %v1138 = vunpack.c.l.b16 %v1068
    %v1139 = vunpack.c.l.b16 %v1069
    %v1140 = vpack.c.b16 %v1109, %v1108
    %v1141 = vpack.c.b16 %v1111, %v1110
    %v1142 = vpack.c.b16 %v1113, %v1112
    %v1143 = vpack.c.b16 %v1115, %v1114
    %v1144 = vpack.c.b16 %v1117, %v1116
    %v1145 = vpack.c.b16 %v1119, %v1118
    %v1146 = vpack.c.b16 %v1121, %v1120
    %v1147 = vpack.c.b16 %v1123, %v1122
    %v1148 = vpack.c.b16 %v1125, %v1124
    %v1149 = vpack.c.b16 %v1127, %v1126
    %v1150 = vpack.c.b16 %v1129, %v1128
    %v1151 = vpack.c.b16 %v1131, %v1130
    %v1152 = vpack.c.b16 %v1133, %v1132
    %v1153 = vpack.c.b16 %v1135, %v1134
    %v1154 = vpack.c.b16 %v1137, %v1136
    %v1155 = vpack.c.b16 %v1139, %v1138
    %1172 = vmatprep.subr.bf16.mxu0 0
    %1173 = vmatpush1.bf16.msra.mxu0 %v1140
    %1174 = vmatprep.subr.bf16.mxu0 0
    %1175 = vmatpush1.bf16.msra.mxu0 %v1141
    %1176 = vmatprep.subr.bf16.mxu0 0
    %1177 = vmatpush1.bf16.msra.mxu0 %v1142
    %1178 = vmatprep.subr.bf16.mxu0 0
    %1179 = vmatpush1.bf16.msra.mxu0 %v1143
    %1180 = vmatprep.subr.bf16.mxu0 0
    %1181 = vmatpush1.bf16.msra.mxu0 %v1144
    %1182 = vmatprep.subr.bf16.mxu0 0
    %1183 = vmatpush1.bf16.msra.mxu0 %v1145
    %1184 = vmatprep.subr.bf16.mxu0 0
    %1185 = vmatpush1.bf16.msra.mxu0 %v1146
    %1186 = vmatprep.subr.bf16.mxu0 0
    %1187 = vmatpush1.bf16.msra.mxu0 %v1147
    %1188 = vmatprep.subr.bf16.mxu0 0
    %1189 = vmatpush1.bf16.msra.mxu0 %v1148
    %1190 = vmatprep.subr.bf16.mxu0 0
    %1191 = vmatpush1.bf16.msra.mxu0 %v1149
    %1192 = vmatprep.subr.bf16.mxu0 0
    %1193 = vmatpush1.bf16.msra.mxu0 %v1150
    %1194 = vmatprep.subr.bf16.mxu0 0
    %1195 = vmatpush1.bf16.msra.mxu0 %v1151
    %1196 = vmatprep.subr.bf16.mxu0 0
    %1197 = vmatpush1.bf16.msra.mxu0 %v1152
    %1198 = vmatprep.subr.bf16.mxu0 0
    %1199 = vmatpush1.bf16.msra.mxu0 %v1153
    %1200 = vmatprep.subr.bf16.mxu0 0
    %1201 = vmatpush1.bf16.msra.mxu0 %v1154
    %1202 = vmatprep.subr.bf16.mxu0 0
    %1203 = vmatpush1.bf16.msra.mxu0 %v1155
    %1204 = vmatprep.mubr.bf16.mxu0 %v1071
    %1205 = vmatmul.mubr.bf16.gmra.mrb[0].mxu0 %v1070
    %v1206 = vpop.f32.mrb[0].mxu0
    %v1207 = vadd.f32 %v1075, %v1206
    %v1208 = vpop.f32.mrb[0].mxu0
    %v1209 = vpop.f32.mrb[0].mxu0
    %v1210 = vadd.f32 %v1075, %v1209
    %v1211 = vpop.f32.mrb[0].mxu0
    %1212 = vdwg.mxu0
    %v1213 = vadd.f32 %v879, %v1207
    %v1214 = vadd.f32 %v880, %v1210
    %v1215 = vld [vmem:[%s6 + $0x7] sm:$0x1]
    %v1216 = vld [vmem:[%s6 + $0x8] sm:$0x1]
    %1217 = vadd.xlane.f32.xlu0 %v1213
    %v1218 = vpop.xlane.xlu0 %1217
    %1219 = vadd.xlane.f32.xlu0 %v1214
    %v1220 = vpop.xlane.xlu0 %1219
    %v1221 = vmul.f32 %v1218, 0.03125
    %v1222 = vmul.f32 %v1220, 0.03125
    %v1223 = vsub.f32 %v1213, %v1221
    %v1224 = vsub.f32 %v1214, %v1222
    %v1225 = vmul.f32 %v1223, %v76
    %v1226 = vmul.f32 %v1224, %v76
    %v1227 = vmul.f32 %v1225, %v1225
    %v1228 = vmul.f32 %v1226, %v1226
    %1229 = vadd.xlane.f32.xlu0 %v1227
    %v1230 = vpop.xlane.xlu0 %1229
    %1231 = vadd.xlane.f32.xlu0 %v1228
    %v1232 = vpop.xlane.xlu0 %1231
    %v1233 = vmul.f32 %v1230, 0.03125
    %v1234 = vmul.f32 %v1232, 0.03125
    %v1235 = vadd.f32 %v1233, 1e-05
    %v1236 = vadd.f32 %v1234, 1e-05
    %v1237 = vrsqrt.pop %v1235
    %v1238 = vrsqrt.pop %v1236
    %v1239 = vmul.f32 %v1225, %v1237
    %v1240 = vmul.f32 %v1226, %v1238
    %v1241 = vlaneseq
    %v1242 = vshrl.u32 %v1241, 7
    %v1243 = vsub.s32 0, %v1242
    %v1244 = vrot.slane %v1215, %v1243
    %v1245 = vmul.f32 %v1239, %v1244
    %v1246 = vmul.f32 %v1240, %v1244
    %v1247 = vlaneseq
    %v1248 = vshrl.u32 %v1247, 7
    %v1249 = vsub.s32 0, %v1248
    %v1250 = vrot.slane %v1216, %v1249
    %v1251 = vadd.f32 %v1245, %v1250
    %v1252 = vadd.f32 %v1246, %v1250
    %s1253 = scalar_lea.vmem [#allocation2], 256
    %v1254 = vld [vmem:[%s1253] sm:$0xf]
    %v1255 = vld [vmem:[%s1253 + $0x4] sm:$0xf]
    %v1256 = vld [vmem:[%s1253 + $0x8] sm:$0xf]
    %v1257 = vld [vmem:[%s1253 + $0xc] sm:$0xf]
    %v1258 = vld [vmem:[%s1253 + $0x10] sm:$0xf]
    %v1259 = vld [vmem:[%s1253 + $0x14] sm:$0xf]
    %v1260 = vld [vmem:[%s1253 + $0x18] sm:$0xf]
    %v1261 = vld [vmem:[%s1253 + $0x1c] sm:$0xf]
    %v1262 = vld [vmem:[%s1253 + $0x20] sm:$0xf]
    %v1263 = vld [vmem:[%s1253 + $0x24] sm:$0xf]
    %v1264 = vld [vmem:[%s1253 + $0x28] sm:$0xf]
    %v1265 = vld [vmem:[%s1253 + $0x2c] sm:$0xf]
    %v1266 = vld [vmem:[%s1253 + $0x30] sm:$0xf]
    %v1267 = vld [vmem:[%s1253 + $0x34] sm:$0xf]
    %v1268 = vld [vmem:[%s1253 + $0x38] sm:$0xf]
    %v1269 = vld [vmem:[%s1253 + $0x3c] sm:$0xf]
    %v1270 = vpack.c.bf16 %v1252, %v1251
    %v1271 = vld [vmem:[%s6 + $0x9] sm:$0x1]
    %v1272 = vlaneseq
    %v1273 = vshrl.u32 %v1272, 7
    %v1274 = vsub.s32 0, %v1273
    %v1275 = vrot.slane %v1271, %v1274
    %v1292 = vunpack.c.l.b16 %v1254
    %v1293 = vunpack.c.l.b16 %v1255
    %v1294 = vunpack.c.l.b16 %v1256
    %v1295 = vunpack.c.l.b16 %v1257
    %v1296 = vunpack.c.l.b16 %v1258
    %v1297 = vunpack.c.l.b16 %v1259
    %v1298 = vunpack.c.l.b16 %v1260
    %v1299 = vunpack.c.l.b16 %v1261
    %v1300 = vunpack.c.l.b16 %v1262
    %v1301 = vunpack.c.l.b16 %v1263
    %v1302 = vunpack.c.l.b16 %v1264
    %v1303 = vunpack.c.l.b16 %v1265
    %v1304 = vunpack.c.l.b16 %v1266
    %v1305 = vunpack.c.l.b16 %v1267
    %v1306 = vunpack.c.l.b16 %v1268
    %v1307 = vunpack.c.l.b16 %v1269
    %v1308 = vpack.c.b16 %v1293, %v1292
    %v1309 = vpack.c.b16 %v1295, %v1294
    %v1310 = vpack.c.b16 %v1297, %v1296
    %v1311 = vpack.c.b16 %v1299, %v1298
    %v1312 = vpack.c.b16 %v1301, %v1300
    %v1313 = vpack.c.b16 %v1303, %v1302
    %v1314 = vpack.c.b16 %v1305, %v1304
    %v1315 = vpack.c.b16 %v1307, %v1306
    %1324 = vmatprep.subr.bf16.mxu0 0
    %1325 = vmatpush1.bf16.msra.mxu0 %v1308
    %1326 = vmatprep.subr.bf16.mxu0 0
    %1327 = vmatpush1.bf16.msra.mxu0 %v1309
    %1328 = vmatprep.subr.bf16.mxu0 0
    %1329 = vmatpush1.bf16.msra.mxu0 %v1310
    %1330 = vmatprep.subr.bf16.mxu0 0
    %1331 = vmatpush1.bf16.msra.mxu0 %v1311
    %1332 = vmatprep.subr.bf16.mxu0 0
    %1333 = vmatpush1.bf16.msra.mxu0 %v1312
    %1334 = vmatprep.subr.bf16.mxu0 0
    %1335 = vmatpush1.bf16.msra.mxu0 %v1313
    %1336 = vmatprep.subr.bf16.mxu0 0
    %1337 = vmatpush1.bf16.msra.mxu0 %v1314
    %1338 = vmatprep.subr.bf16.mxu0 0
    %1339 = vmatpush1.bf16.msra.mxu0 %v1315
    %1340 = vmatprep.subr.bf16.mxu0 0
    %1341 = vmatpush1.bf16.msra.mxu0 0
    %1342 = vmatprep.subr.bf16.mxu0 0
    %1343 = vmatpush1.bf16.msra.mxu0 0
    %1344 = vmatprep.subr.bf16.mxu0 0
    %1345 = vmatpush1.bf16.msra.mxu0 0
    %1346 = vmatprep.subr.bf16.mxu0 0
    %1347 = vmatpush1.bf16.msra.mxu0 0
    %1348 = vmatprep.subr.bf16.mxu0 0
    %1349 = vmatpush1.bf16.msra.mxu0 0
    %1350 = vmatprep.subr.bf16.mxu0 0
    %1351 = vmatpush1.bf16.msra.mxu0 0
    %1352 = vmatprep.subr.bf16.mxu0 0
    %1353 = vmatpush1.bf16.msra.mxu0 0
    %1354 = vmatprep.subr.bf16.mxu0 0
    %1355 = vmatpush1.bf16.msra.mxu0 0
    %1356 = vmatprep.mubr.bf16.mxu0 0
    %1357 = vmatmul.mubr.bf16.gmra.mrb[0].mxu0 %v1270
    %v1358 = vpop.f32.mrb[0].mxu0
    %v1359 = vadd.f32 %v1275, %v1358
    %v1360 = vpop.f32.mrb[0].mxu0
    %v1361 = vpop.f32.mrb[0].mxu0
    %v1362 = vadd.f32 %v1275, %v1361
    %v1363 = vpop.f32.mrb[0].mxu0
    %1364 = vdwg.mxu0
    %s1365 = scalar_lea.vmem [#allocation2], 320
    %v1366 = vld [vmem:[%s1365] sm:$0xf]
    %v1367 = vld [vmem:[%s1365 + $0x4] sm:$0xf]
    %v1368 = vld [vmem:[%s1365 + $0x8] sm:$0xf]
    %v1369 = vld [vmem:[%s1365 + $0xc] sm:$0xf]
    %v1370 = vld [vmem:[%s1365 + $0x10] sm:$0xf]
    %v1371 = vld [vmem:[%s1365 + $0x14] sm:$0xf]
    %v1372 = vld [vmem:[%s1365 + $0x18] sm:$0xf]
    %v1373 = vld [vmem:[%s1365 + $0x1c] sm:$0xf]
    %v1374 = vld [vmem:[%s1365 + $0x20] sm:$0xf]
    %v1375 = vld [vmem:[%s1365 + $0x24] sm:$0xf]
    %v1376 = vld [vmem:[%s1365 + $0x28] sm:$0xf]
    %v1377 = vld [vmem:[%s1365 + $0x2c] sm:$0xf]
    %v1378 = vld [vmem:[%s1365 + $0x30] sm:$0xf]
    %v1379 = vld [vmem:[%s1365 + $0x34] sm:$0xf]
    %v1380 = vld [vmem:[%s1365 + $0x38] sm:$0xf]
    %v1381 = vld [vmem:[%s1365 + $0x3c] sm:$0xf]
    %v1382 = vld [vmem:[%s6 + $0xa] sm:$0x1]
    %v1383 = vlaneseq
    %v1384 = vshrl.u32 %v1383, 7
    %v1385 = vsub.s32 0, %v1384
    %v1386 = vrot.slane %v1382, %v1385
    %v1403 = vunpack.c.l.b16 %v1366
    %v1404 = vunpack.c.l.b16 %v1367
    %v1405 = vunpack.c.l.b16 %v1368
    %v1406 = vunpack.c.l.b16 %v1369
    %v1407 = vunpack.c.l.b16 %v1370
    %v1408 = vunpack.c.l.b16 %v1371
    %v1409 = vunpack.c.l.b16 %v1372
    %v1410 = vunpack.c.l.b16 %v1373
    %v1411 = vunpack.c.l.b16 %v1374
    %v1412 = vunpack.c.l.b16 %v1375
    %v1413 = vunpack.c.l.b16 %v1376
    %v1414 = vunpack.c.l.b16 %v1377
    %v1415 = vunpack.c.l.b16 %v1378
    %v1416 = vunpack.c.l.b16 %v1379
    %v1417 = vunpack.c.l.b16 %v1380
    %v1418 = vunpack.c.l.b16 %v1381
    %v1419 = vpack.c.b16 %v1404, %v1403
    %v1420 = vpack.c.b16 %v1406, %v1405
    %v1421 = vpack.c.b16 %v1408, %v1407
    %v1422 = vpack.c.b16 %v1410, %v1409
    %v1423 = vpack.c.b16 %v1412, %v1411
    %v1424 = vpack.c.b16 %v1414, %v1413
    %v1425 = vpack.c.b16 %v1416, %v1415
    %v1426 = vpack.c.b16 %v1418, %v1417
    %1435 = vmatprep.subr.bf16.mxu0 0
    %1436 = vmatpush1.bf16.msra.mxu0 %v1419
    %1437 = vmatprep.subr.bf16.mxu0 0
    %1438 = vmatpush1.bf16.msra.mxu0 %v1420
    %1439 = vmatprep.subr.bf16.mxu0 0
    %1440 = vmatpush1.bf16.msra.mxu0 %v1421
    %1441 = vmatprep.subr.bf16.mxu0 0
    %1442 = vmatpush1.bf16.msra.mxu0 %v1422
    %1443 = vmatprep.subr.bf16.mxu0 0
    %1444 = vmatpush1.bf16.msra.mxu0 %v1423
    %1445 = vmatprep.subr.bf16.mxu0 0
    %1446 = vmatpush1.bf16.msra.mxu0 %v1424
    %1447 = vmatprep.subr.bf16.mxu0 0
    %1448 = vmatpush1.bf16.msra.mxu0 %v1425
    %1449 = vmatprep.subr.bf16.mxu0 0
    %1450 = vmatpush1.bf16.msra.mxu0 %v1426
    %1451 = vmatprep.subr.bf16.mxu0 0
    %1452 = vmatpush1.bf16.msra.mxu0 0
    %1453 = vmatprep.subr.bf16.mxu0 0
    %1454 = vmatpush1.bf16.msra.mxu0 0
    %1455 = vmatprep.subr.bf16.mxu0 0
    %1456 = vmatpush1.bf16.msra.mxu0 0
    %1457 = vmatprep.subr.bf16.mxu0 0
    %1458 = vmatpush1.bf16.msra.mxu0 0
    %1459 = vmatprep.subr.bf16.mxu0 0
    %1460 = vmatpush1.bf16.msra.mxu0 0
    %1461 = vmatprep.subr.bf16.mxu0 0
    %1462 = vmatpush1.bf16.msra.mxu0 0
    %1463 = vmatprep.subr.bf16.mxu0 0
    %1464 = vmatpush1.bf16.msra.mxu0 0
    %1465 = vmatprep.subr.bf16.mxu0 0
    %1466 = vmatpush1.bf16.msra.mxu0 0
    %1467 = vmatprep.mubr.bf16.mxu0 0
    %1468 = vmatmul.mubr.bf16.gmra.mrb[0].mxu0 %v1270
    %v1469 = vpop.f32.mrb[0].mxu0
    %v1470 = vadd.f32 %v1386, %v1469
    %v1471 = vpop.f32.mrb[0].mxu0
    %v1472 = vpop.f32.mrb[0].mxu0
    %v1473 = vadd.f32 %v1386, %v1472
    %v1474 = vpop.f32.mrb[0].mxu0
    %1475 = vdwg.mxu0
    %s1476 = scalar_lea.vmem [#allocation2], 384
    %v1477 = vld [vmem:[%s1476] sm:$0xf]
    %v1478 = vld [vmem:[%s1476 + $0x4] sm:$0xf]
    %v1479 = vld [vmem:[%s1476 + $0x8] sm:$0xf]
    %v1480 = vld [vmem:[%s1476 + $0xc] sm:$0xf]
    %v1481 = vld [vmem:[%s1476 + $0x10] sm:$0xf]
    %v1482 = vld [vmem:[%s1476 + $0x14] sm:$0xf]
    %v1483 = vld [vmem:[%s1476 + $0x18] sm:$0xf]
    %v1484 = vld [vmem:[%s1476 + $0x1c] sm:$0xf]
    %v1485 = vld [vmem:[%s1476 + $0x20] sm:$0xf]
    %v1486 = vld [vmem:[%s1476 + $0x24] sm:$0xf]
    %v1487 = vld [vmem:[%s1476 + $0x28] sm:$0xf]
    %v1488 = vld [vmem:[%s1476 + $0x2c] sm:$0xf]
    %v1489 = vld [vmem:[%s1476 + $0x30] sm:$0xf]
    %v1490 = vld [vmem:[%s1476 + $0x34] sm:$0xf]
    %v1491 = vld [vmem:[%s1476 + $0x38] sm:$0xf]
    %v1492 = vld [vmem:[%s1476 + $0x3c] sm:$0xf]
    %v1493 = vld [vmem:[%s6 + $0xb] sm:$0x1]
    %v1494 = vlaneseq
    %v1495 = vshrl.u32 %v1494, 7
    %v1496 = vsub.s32 0, %v1495
    %v1497 = vrot.slane %v1493, %v1496
    %v1514 = vunpack.c.l.b16 %v1477
    %v1515 = vunpack.c.l.b16 %v1478
    %v1516 = vunpack.c.l.b16 %v1479
    %v1517 = vunpack.c.l.b16 %v1480
    %v1518 = vunpack.c.l.b16 %v1481
    %v1519 = vunpack.c.l.b16 %v1482
    %v1520 = vunpack.c.l.b16 %v1483
    %v1521 = vunpack.c.l.b16 %v1484
    %v1522 = vunpack.c.l.b16 %v1485
    %v1523 = vunpack.c.l.b16 %v1486
    %v1524 = vunpack.c.l.b16 %v1487
    %v1525 = vunpack.c.l.b16 %v1488
    %v1526 = vunpack.c.l.b16 %v1489
    %v1527 = vunpack.c.l.b16 %v1490
    %v1528 = vunpack.c.l.b16 %v1491
    %v1529 = vunpack.c.l.b16 %v1492
    %v1530 = vpack.c.b16 %v1515, %v1514
    %v1531 = vpack.c.b16 %v1517, %v1516
    %v1532 = vpack.c.b16 %v1519, %v1518
    %v1533 = vpack.c.b16 %v1521, %v1520
    %v1534 = vpack.c.b16 %v1523, %v1522
    %v1535 = vpack.c.b16 %v1525, %v1524
    %v1536 = vpack.c.b16 %v1527, %v1526
    %v1537 = vpack.c.b16 %v1529, %v1528
    %1546 = vmatprep.subr.bf16.mxu0 0
    %1547 = vmatpush1.bf16.msra.mxu0 %v1530
    %1548 = vmatprep.subr.bf16.mxu0 0
    %1549 = vmatpush1.bf16.msra.mxu0 %v1531
    %1550 = vmatprep.subr.bf16.mxu0 0
    %1551 = vmatpush1.bf16.msra.mxu0 %v1532
    %1552 = vmatprep.subr.bf16.mxu0 0
    %1553 = vmatpush1.bf16.msra.mxu0 %v1533
    %1554 = vmatprep.subr.bf16.mxu0 0
    %1555 = vmatpush1.bf16.msra.mxu0 %v1534
    %1556 = vmatprep.subr.bf16.mxu0 0
    %1557 = vmatpush1.bf16.msra.mxu0 %v1535
    %1558 = vmatprep.subr.bf16.mxu0 0
    %1559 = vmatpush1.bf16.msra.mxu0 %v1536
    %1560 = vmatprep.subr.bf16.mxu0 0
    %1561 = vmatpush1.bf16.msra.mxu0 %v1537
    %1562 = vmatprep.subr.bf16.mxu0 0
    %1563 = vmatpush1.bf16.msra.mxu0 0
    %1564 = vmatprep.subr.bf16.mxu0 0
    %1565 = vmatpush1.bf16.msra.mxu0 0
    %1566 = vmatprep.subr.bf16.mxu0 0
    %1567 = vmatpush1.bf16.msra.mxu0 0
    %1568 = vmatprep.subr.bf16.mxu0 0
    %1569 = vmatpush1.bf16.msra.mxu0 0
    %1570 = vmatprep.subr.bf16.mxu0 0
    %1571 = vmatpush1.bf16.msra.mxu0 0
    %1572 = vmatprep.subr.bf16.mxu0 0
    %1573 = vmatpush1.bf16.msra.mxu0 0
    %1574 = vmatprep.subr.bf16.mxu0 0
    %1575 = vmatpush1.bf16.msra.mxu0 0
    %1576 = vmatprep.subr.bf16.mxu0 0
    %1577 = vmatpush1.bf16.msra.mxu0 0
    %1578 = vmatprep.mubr.bf16.mxu0 0
    %1579 = vmatmul.mubr.bf16.gmra.mrb[0].mxu0 %v1270
    %v1580 = vpop.f32.mrb[0].mxu0
    %v1581 = vadd.f32 %v1497, %v1580
    %v1582 = vpop.f32.mrb[0].mxu0
    %v1583 = vpop.f32.mrb[0].mxu0
    %v1584 = vadd.f32 %v1497, %v1583
    %v1585 = vpop.f32.mrb[0].mxu0
    %1586 = vdwg.mxu0
    %1587 = vmatprep.subr.mxu0 0.0
    %1588 = vmatpush1.xpose.msra.mxu0 %v1470
    %1589 = vmatprep.subr.mxu0 0.0
    %1590 = vmatpush1.xpose.msra.mxu0 0.0
    %1591 = vmatprep.subr.mxu0 0.0
    %1592 = vmatpush1.xpose.msra.mxu0 0.0
    %1593 = vmatprep.subr.mxu0 0.0
    %1594 = vmatpush1.xpose.msra.mxu0 0.0
    %1595 = vmatprep.subr.mxu0 0.0
    %1596 = vmatpush1.xpose.msra.mxu0 0.0
    %1597 = vmatprep.subr.mxu0 0.0
    %1598 = vmatpush1.xpose.msra.mxu0 0.0
    %1599 = vmatprep.subr.mxu0 0.0
    %1600 = vmatpush1.xpose.msra.mxu0 0.0
    %1601 = vmatprep.subr.mxu0 0.0
    %1602 = vmatpush1.xpose.msra.mxu0 0.0
    %1603 = vmatprep.subr.mxu0 0.0
    %1604 = vmatpush1.xpose.msra.mxu0 0.0
    %1605 = vmatprep.subr.mxu0 0.0
    %1606 = vmatpush1.xpose.msra.mxu0 0.0
    %1607 = vmatprep.subr.mxu0 0.0
    %1608 = vmatpush1.xpose.msra.mxu0 0.0
    %1609 = vmatprep.subr.mxu0 0.0
    %1610 = vmatpush1.xpose.msra.mxu0 0.0
    %1611 = vmatprep.subr.mxu0 0.0
    %1612 = vmatpush1.xpose.msra.mxu0 0.0
    %1613 = vmatprep.subr.mxu0 0.0
    %1614 = vmatpush1.xpose.msra.mxu0 0.0
    %1615 = vmatprep.subr.mxu0 0.0
    %1616 = vmatpush1.xpose.msra.mxu0 0.0
    %1617 = vmatprep.subr.mxu0 0.0
    %1618 = vmatpush1.xpose.msra.mxu0 0.0
    %1619 = vmatprep.subr.mxu0 0.0
    %1620 = vmatpush1.xpose.msra.mxu0 0.0
    %1621 = vmatprep.subr.mxu0 0.0
    %1622 = vmatpush1.xpose.msra.mxu0 0.0
    %1623 = vmatprep.subr.mxu0 0.0
    %1624 = vmatpush1.xpose.msra.mxu0 0.0
    %1625 = vmatprep.subr.mxu0 0.0
    %1626 = vmatpush1.xpose.msra.mxu0 0.0
    %1627 = vmatprep.subr.mxu0 0.0
    %1628 = vmatpush1.xpose.msra.mxu0 0.0
    %1629 = vmatprep.subr.mxu0 0.0
    %1630 = vmatpush1.xpose.msra.mxu0 0.0
    %1631 = vmatprep.subr.mxu0 0.0
    %1632 = vmatpush1.xpose.msra.mxu0 0.0
    %1633 = vmatprep.subr.mxu0 0.0
    %1634 = vmatpush1.xpose.msra.mxu0 0.0
    %1635 = vmatprep.subr.mxu0 0.0
    %1636 = vmatpush1.xpose.msra.mxu0 0.0
    %1637 = vmatprep.subr.mxu0 0.0
    %1638 = vmatpush1.xpose.msra.mxu0 0.0
    %1639 = vmatprep.subr.mxu0 0.0
    %1640 = vmatpush1.xpose.msra.mxu0 0.0
    %1641 = vmatprep.subr.mxu0 0.0
    %1642 = vmatpush1.xpose.msra.mxu0 0.0
    %1643 = vmatprep.subr.mxu0 0.0
    %1644 = vmatpush1.xpose.msra.mxu0 0.0
    %1645 = vmatprep.subr.mxu0 0.0
    %1646 = vmatpush1.xpose.msra.mxu0 0.0
    %1647 = vmatprep.subr.mxu0 0.0
    %1648 = vmatpush1.xpose.msra.mxu0 0.0
    %1649 = vmatprep.subr.mxu0 0.0
    %1650 = vmatpush1.xpose.msra.mxu0 0.0
    %1651 = vmatprep.mubr.f32.mxu0 0.0
    %1652 = vmatmul.mubr.f32.gmra.mrb[0].mxu0 %v1359
    %v1653 = vpop.f32.mrb[0].mxu0
    %v1654 = vadd.f32 0.0, %v1653
    %v1655 = vpop.f32.mrb[0].mxu0
    %1656 = vdwg.mxu0
    %1657 = vmatprep.subr.mxu0 0.0
    %1658 = vmatpush1.xpose.msra.mxu0 %v1473
    %1659 = vmatprep.subr.mxu0 0.0
    %1660 = vmatpush1.xpose.msra.mxu0 0.0
    %1661 = vmatprep.subr.mxu0 0.0
    %1662 = vmatpush1.xpose.msra.mxu0 0.0
    %1663 = vmatprep.subr.mxu0 0.0
    %1664 = vmatpush1.xpose.msra.mxu0 0.0
    %1665 = vmatprep.subr.mxu0 0.0
    %1666 = vmatpush1.xpose.msra.mxu0 0.0
    %1667 = vmatprep.subr.mxu0 0.0
    %1668 = vmatpush1.xpose.msra.mxu0 0.0
    %1669 = vmatprep.subr.mxu0 0.0
    %1670 = vmatpush1.xpose.msra.mxu0 0.0
    %1671 = vmatprep.subr.mxu0 0.0
    %1672 = vmatpush1.xpose.msra.mxu0 0.0
    %1673 = vmatprep.subr.mxu0 0.0
    %1674 = vmatpush1.xpose.msra.mxu0 0.0
    %1675 = vmatprep.subr.mxu0 0.0
    %1676 = vmatpush1.xpose.msra.mxu0 0.0
    %1677 = vmatprep.subr.mxu0 0.0
    %1678 = vmatpush1.xpose.msra.mxu0 0.0
    %1679 = vmatprep.subr.mxu0 0.0
    %1680 = vmatpush1.xpose.msra.mxu0 0.0
    %1681 = vmatprep.subr.mxu0 0.0
    %1682 = vmatpush1.xpose.msra.mxu0 0.0
    %1683 = vmatprep.subr.mxu0 0.0
    %1684 = vmatpush1.xpose.msra.mxu0 0.0
    %1685 = vmatprep.subr.mxu0 0.0
    %1686 = vmatpush1.xpose.msra.mxu0 0.0
    %1687 = vmatprep.subr.mxu0 0.0
    %1688 = vmatpush1.xpose.msra.mxu0 0.0
    %1689 = vmatprep.subr.mxu0 0.0
    %1690 = vmatpush1.xpose.msra.mxu0 0.0
    %1691 = vmatprep.subr.mxu0 0.0
    %1692 = vmatpush1.xpose.msra.mxu0 0.0
    %1693 = vmatprep.subr.mxu0 0.0
    %1694 = vmatpush1.xpose.msra.mxu0 0.0
    %1695 = vmatprep.subr.mxu0 0.0
    %1696 = vmatpush1.xpose.msra.mxu0 0.0
    %1697 = vmatprep.subr.mxu0 0.0
    %1698 = vmatpush1.xpose.msra.mxu0 0.0
    %1699 = vmatprep.subr.mxu0 0.0
    %1700 = vmatpush1.xpose.msra.mxu0 0.0
    %1701 = vmatprep.subr.mxu0 0.0
    %1702 = vmatpush1.xpose.msra.mxu0 0.0
    %1703 = vmatprep.subr.mxu0 0.0
    %1704 = vmatpush1.xpose.msra.mxu0 0.0
    %1705 = vmatprep.subr.mxu0 0.0
    %1706 = vmatpush1.xpose.msra.mxu0 0.0
    %1707 = vmatprep.subr.mxu0 0.0
    %1708 = vmatpush1.xpose.msra.mxu0 0.0
    %1709 = vmatprep.subr.mxu0 0.0
    %1710 = vmatpush1.xpose.msra.mxu0 0.0
    %1711 = vmatprep.subr.mxu0 0.0
    %1712 = vmatpush1.xpose.msra.mxu0 0.0
    %1713 = vmatprep.subr.mxu0 0.0
    %1714 = vmatpush1.xpose.msra.mxu0 0.0
    %1715 = vmatprep.subr.mxu0 0.0
    %1716 = vmatpush1.xpose.msra.mxu0 0.0
    %1717 = vmatprep.subr.mxu0 0.0
    %1718 = vmatpush1.xpose.msra.mxu0 0.0
    %1719 = vmatprep.subr.mxu0 0.0
    %1720 = vmatpush1.xpose.msra.mxu0 0.0
    %1721 = vmatprep.mubr.f32.mxu0 0.0
    %1722 = vmatmul.mubr.f32.gmra.mrb[0].mxu0 %v1362
    %v1723 = vpop.f32.mrb[0].mxu0
    %v1724 = vadd.f32 0.0, %v1723
    %v1725 = vpop.f32.mrb[0].mxu0
    %1726 = vdwg.mxu0
    %v1727 = vmul.f32 %v1654, 0.17677669
    %v1728 = vmul.f32 %v1724, 0.17677669
    %v1729 = vsel %vm560, %v1727, -inf
    %1730 = vmax.xlane.f32.xlu0 %v1729
    %v1731 = vpop.xlane.xlu0 %1730
    %v1732 = vsel %vm560, %v1728, -inf
    %1733 = vmax.xlane.f32.xlu0 %v1732
    %v1734 = vpop.xlane.xlu0 %1733
    %v1735 = vsub.f32 %v1727, %v1731
    %v1736 = vsub.f32 %v1728, %v1734
    %v1737 = vmul.f32 %v1735, 1.442695
    %v1738 = vpow.pop %v1737
    %v1739 = vmul.f32 %v1736, 1.442695
    %v1740 = vpow.pop %v1739
    %v1741 = vsel %vm560, %v1738, 0.0
    %1742 = vadd.xlane.f32.xlu0 %v1741
    %v1743 = vpop.xlane.xlu0 %1742
    %v1744 = vsel %vm560, %v1740, 0.0
    %1745 = vadd.xlane.f32.xlu0 %v1744
    %v1746 = vpop.xlane.xlu0 %1745
    %v1747 = vrcp.pop %v1743
    %v1748 = vrcp.pop %v1746
    %v1749 = vmul.f32 %v1738, %v1747
    %v1750 = vmul.f32 %v1740, %v1748
    %v1752 = vsel %vm560, %v1749, 0
    %1754 = vmatprep.subr.mxu0 0.0
    %1755 = vmatpush1.msra.mxu0 %v1581
    %1756 = vmatprep.subr.mxu0 0.0
    %1757 = vmatpush1.msra.mxu0 0.0
    %1758 = vmatprep.subr.mxu0 0.0
    %1759 = vmatpush1.msra.mxu0 0.0
    %1760 = vmatprep.subr.mxu0 0.0
    %1761 = vmatpush1.msra.mxu0 0.0
    %1762 = vmatprep.subr.mxu0 0.0
    %1763 = vmatpush1.msra.mxu0 0.0
    %1764 = vmatprep.subr.mxu0 0.0
    %1765 = vmatpush1.msra.mxu0 0.0
    %1766 = vmatprep.subr.mxu0 0.0
    %1767 = vmatpush1.msra.mxu0 0.0
    %1768 = vmatprep.subr.mxu0 0.0
    %1769 = vmatpush1.msra.mxu0 0.0
    %1770 = vmatprep.subr.mxu0 0.0
    %1771 = vmatpush1.msra.mxu0 0.0
    %1772 = vmatprep.subr.mxu0 0.0
    %1773 = vmatpush1.msra.mxu0 0.0
    %1774 = vmatprep.subr.mxu0 0.0
    %1775 = vmatpush1.msra.mxu0 0.0
    %1776 = vmatprep.subr.mxu0 0.0
    %1777 = vmatpush1.msra.mxu0 0.0
    %1778 = vmatprep.subr.mxu0 0.0
    %1779 = vmatpush1.msra.mxu0 0.0
    %1780 = vmatprep.subr.mxu0 0.0
    %1781 = vmatpush1.msra.mxu0 0.0
    %1782 = vmatprep.subr.mxu0 0.0
    %1783 = vmatpush1.msra.mxu0 0.0
    %1784 = vmatprep.subr.mxu0 0.0
    %1785 = vmatpush1.msra.mxu0 0.0
    %1786 = vmatprep.subr.mxu0 0.0
    %1787 = vmatpush1.msra.mxu0 0.0
    %1788 = vmatprep.subr.mxu0 0.0
    %1789 = vmatpush1.msra.mxu0 0.0
    %1790 = vmatprep.subr.mxu0 0.0
    %1791 = vmatpush1.msra.mxu0 0.0
    %1792 = vmatprep.subr.mxu0 0.0
    %1793 = vmatpush1.msra.mxu0 0.0
    %1794 = vmatprep.subr.mxu0 0.0
    %1795 = vmatpush1.msra.mxu0 0.0
    %1796 = vmatprep.subr.mxu0 0.0
    %1797 = vmatpush1.msra.mxu0 0.0
    %1798 = vmatprep.subr.mxu0 0.0
    %1799 = vmatpush1.msra.mxu0 0.0
    %1800 = vmatprep.subr.mxu0 0.0
    %1801 = vmatpush1.msra.mxu0 0.0
    %1802 = vmatprep.subr.mxu0 0.0
    %1803 = vmatpush1.msra.mxu0 0.0
    %1804 = vmatprep.subr.mxu0 0.0
    %1805 = vmatpush1.msra.mxu0 0.0
    %1806 = vmatprep.subr.mxu0 0.0
    %1807 = vmatpush1.msra.mxu0 0.0
    %1808 = vmatprep.subr.mxu0 0.0
    %1809 = vmatpush1.msra.mxu0 0.0
    %1810 = vmatprep.subr.mxu0 0.0
    %1811 = vmatpush1.msra.mxu0 0.0
    %1812 = vmatprep.subr.mxu0 0.0
    %1813 = vmatpush1.msra.mxu0 0.0
    %1814 = vmatprep.subr.mxu0 0.0
    %1815 = vmatpush1.msra.mxu0 0.0
    %1816 = vmatprep.subr.mxu0 0.0
    %1817 = vmatpush1.msra.mxu0 0.0
    %1818 = vmatprep.mubr.f32.mxu0 0.0
    %1819 = vmatmul.mubr.f32.gmra.mrb[0].mxu0 %v1752
    %v1820 = vpop.f32.mrb[0].mxu0
    %v1821 = vadd.f32 0.0, %v1820
    %v1822 = vpop.f32.mrb[0].mxu0
    %1823 = vdwg.mxu0
    %v1825 = vsel %vm560, %v1750, 0
    %1827 = vmatprep.subr.mxu0 0.0
    %1828 = vmatpush1.msra.mxu0 %v1584
    %1829 = vmatprep.subr.mxu0 0.0
    %1830 = vmatpush1.msra.mxu0 0.0
    %1831 = vmatprep.subr.mxu0 0.0
    %1832 = vmatpush1.msra.mxu0 0.0
    %1833 = vmatprep.subr.mxu0 0.0
    %1834 = vmatpush1.msra.mxu0 0.0
    %1835 = vmatprep.subr.mxu0 0.0
    %1836 = vmatpush1.msra.mxu0 0.0
    %1837 = vmatprep.subr.mxu0 0.0
    %1838 = vmatpush1.msra.mxu0 0.0
    %1839 = vmatprep.subr.mxu0 0.0
    %1840 = vmatpush1.msra.mxu0 0.0
    %1841 = vmatprep.subr.mxu0 0.0
    %1842 = vmatpush1.msra.mxu0 0.0
    %1843 = vmatprep.subr.mxu0 0.0
    %1844 = vmatpush1.msra.mxu0 0.0
    %1845 = vmatprep.subr.mxu0 0.0
    %1846 = vmatpush1.msra.mxu0 0.0
    %1847 = vmatprep.subr.mxu0 0.0
    %1848 = vmatpush1.msra.mxu0 0.0
    %1849 = vmatprep.subr.mxu0 0.0
    %1850 = vmatpush1.msra.mxu0 0.0
    %1851 = vmatprep.subr.mxu0 0.0
    %1852 = vmatpush1.msra.mxu0 0.0
    %1853 = vmatprep.subr.mxu0 0.0
    %1854 = vmatpush1.msra.mxu0 0.0
    %1855 = vmatprep.subr.mxu0 0.0
    %1856 = vmatpush1.msra.mxu0 0.0
    %1857 = vmatprep.subr.mxu0 0.0
    %1858 = vmatpush1.msra.mxu0 0.0
    %1859 = vmatprep.subr.mxu0 0.0
    %1860 = vmatpush1.msra.mxu0 0.0
    %1861 = vmatprep.subr.mxu0 0.0
    %1862 = vmatpush1.msra.mxu0 0.0
    %1863 = vmatprep.subr.mxu0 0.0
    %1864 = vmatpush1.msra.mxu0 0.0
    %1865 = vmatprep.subr.mxu0 0.0
    %1866 = vmatpush1.msra.mxu0 0.0
    %1867 = vmatprep.subr.mxu0 0.0
    %1868 = vmatpush1.msra.mxu0 0.0
    %1869 = vmatprep.subr.mxu0 0.0
    %1870 = vmatpush1.msra.mxu0 0.0
    %1871 = vmatprep.subr.mxu0 0.0
    %1872 = vmatpush1.msra.mxu0 0.0
    %1873 = vmatprep.subr.mxu0 0.0
    %1874 = vmatpush1.msra.mxu0 0.0
    %1875 = vmatprep.subr.mxu0 0.0
    %1876 = vmatpush1.msra.mxu0 0.0
    %1877 = vmatprep.subr.mxu0 0.0
    %1878 = vmatpush1.msra.mxu0 0.0
    %1879 = vmatprep.subr.mxu0 0.0
    %1880 = vmatpush1.msra.mxu0 0.0
    %1881 = vmatprep.subr.mxu0 0.0
    %1882 = vmatpush1.msra.mxu0 0.0
    %1883 = vmatprep.subr.mxu0 0.0
    %1884 = vmatpush1.msra.mxu0 0.0
    %1885 = vmatprep.subr.mxu0 0.0
    %1886 = vmatpush1.msra.mxu0 0.0
    %1887 = vmatprep.subr.mxu0 0.0
    %1888 = vmatpush1.msra.mxu0 0.0
    %1889 = vmatprep.subr.mxu0 0.0
    %1890 = vmatpush1.msra.mxu0 0.0
    %1891 = vmatprep.mubr.f32.mxu0 0.0
    %1892 = vmatmul.mubr.f32.gmra.mrb[0].mxu0 %v1825
    %v1893 = vpop.f32.mrb[0].mxu0
    %v1894 = vadd.f32 0.0, %v1893
    %v1895 = vpop.f32.mrb[0].mxu0
    %1896 = vdwg.mxu0
    %s1897 = scalar_lea.vmem [#allocation2], 448
    %v1898 = vld [vmem:[%s1897] sm:$0xf]
    %v1899 = vld [vmem:[%s1897 + $0x4] sm:$0xf]
    %v1900 = vld [vmem:[%s1897 + $0x8] sm:$0xf]
    %v1901 = vld [vmem:[%s1897 + $0xc] sm:$0xf]
    %v1902 = vld [vmem:[%s1897 + $0x10] sm:$0xf]
    %v1903 = vld [vmem:[%s1897 + $0x14] sm:$0xf]
    %v1904 = vld [vmem:[%s1897 + $0x18] sm:$0xf]
    %v1905 = vld [vmem:[%s1897 + $0x1c] sm:$0xf]
    %v1906 = vld [vmem:[%s1897 + $0x20] sm:$0xf]
    %v1907 = vld [vmem:[%s1897 + $0x24] sm:$0xf]
    %v1908 = vld [vmem:[%s1897 + $0x28] sm:$0xf]
    %v1909 = vld [vmem:[%s1897 + $0x2c] sm:$0xf]
    %v1910 = vld [vmem:[%s1897 + $0x30] sm:$0xf]
    %v1911 = vld [vmem:[%s1897 + $0x34] sm:$0xf]
    %v1912 = vld [vmem:[%s1897 + $0x38] sm:$0xf]
    %v1913 = vld [vmem:[%s1897 + $0x3c] sm:$0xf]
    %v1914 = vpack.c.bf16 %v1894, %v1821
    %v1915 = vld [vmem:[%s6 + $0xc] sm:$0x1]
    %v1916 = vlaneseq
    %v1917 = vshrl.u32 %v1916, 7
    %v1918 = vsub.s32 0, %v1917
    %v1919 = vrot.slane %v1915, %v1918
    %v1936 = vunpack.c.l.b16 %v1898
    %v1937 = vunpack.c.l.b16 %v1899
    %v1938 = vunpack.c.l.b16 %v1900
    %v1939 = vunpack.c.l.b16 %v1901
    %v1940 = vunpack.c.l.b16 %v1902
    %v1941 = vunpack.c.l.b16 %v1903
    %v1942 = vunpack.c.l.b16 %v1904
    %v1943 = vunpack.c.l.b16 %v1905
    %v1944 = vunpack.c.l.b16 %v1906
    %v1945 = vunpack.c.l.b16 %v1907
    %v1946 = vunpack.c.l.b16 %v1908
    %v1947 = vunpack.c.l.b16 %v1909
    %v1948 = vunpack.c.l.b16 %v1910
    %v1949 = vunpack.c.l.b16 %v1911
    %v1950 = vunpack.c.l.b16 %v1912
    %v1951 = vunpack.c.l.b16 %v1913
    %v1952 = vpack.c.b16 %v1937, %v1936
    %v1953 = vpack.c.b16 %v1939, %v1938
    %v1954 = vpack.c.b16 %v1941, %v1940
    %v1955 = vpack.c.b16 %v1943, %v1942
    %v1956 = vpack.c.b16 %v1945, %v1944
    %v1957 = vpack.c.b16 %v1947, %v1946
    %v1958 = vpack.c.b16 %v1949, %v1948
    %v1959 = vpack.c.b16 %v1951, %v1950
    %1968 = vmatprep.subr.bf16.mxu0 0
    %1969 = vmatpush1.bf16.msra.mxu0 %v1952
    %1970 = vmatprep.subr.bf16.mxu0 0
    %1971 = vmatpush1.bf16.msra.mxu0 %v1953
    %1972 = vmatprep.subr.bf16.mxu0 0
    %1973 = vmatpush1.bf16.msra.mxu0 %v1954
    %1974 = vmatprep.subr.bf16.mxu0 0
    %1975 = vmatpush1.bf16.msra.mxu0 %v1955
    %1976 = vmatprep.subr.bf16.mxu0 0
    %1977 = vmatpush1.bf16.msra.mxu0 %v1956
    %1978 = vmatprep.subr.bf16.mxu0 0
    %1979 = vmatpush1.bf16.msra.mxu0 %v1957
    %1980 = vmatprep.subr.bf16.mxu0 0
    %1981 = vmatpush1.bf16.msra.mxu0 %v1958
    %1982 = vmatprep.subr.bf16.mxu0 0
    %1983 = vmatpush1.bf16.msra.mxu0 %v1959
    %1984 = vmatprep.subr.bf16.mxu0 0
    %1985 = vmatpush1.bf16.msra.mxu0 0
    %1986 = vmatprep.subr.bf16.mxu0 0
    %1987 = vmatpush1.bf16.msra.mxu0 0
    %1988 = vmatprep.subr.bf16.mxu0 0
    %1989 = vmatpush1.bf16.msra.mxu0 0
    %1990 = vmatprep.subr.bf16.mxu0 0
    %1991 = vmatpush1.bf16.msra.mxu0 0
    %1992 = vmatprep.subr.bf16.mxu0 0
    %1993 = vmatpush1.bf16.msra.mxu0 0
    %1994 = vmatprep.subr.bf16.mxu0 0
    %1995 = vmatpush1.bf16.msra.mxu0 0
    %1996 = vmatprep.subr.bf16.mxu0 0
    %1997 = vmatpush1.bf16.msra.mxu0 0
    %1998 = vmatprep.subr.bf16.mxu0 0
    %1999 = vmatpush1.bf16.msra.mxu0 0
    %2000 = vmatprep.mubr.bf16.mxu0 0
    %2001 = vmatmul.mubr.bf16.gmra.mrb[0].mxu0 %v1914
    %v2002 = vpop.f32.mrb[0].mxu0
    %v2003 = vadd.f32 %v1919, %v2002
    %v2004 = vpop.f32.mrb[0].mxu0
    %v2005 = vpop.f32.mrb[0].mxu0
    %v2006 = vadd.f32 %v1919, %v2005
    %v2007 = vpop.f32.mrb[0].mxu0
    %2008 = vdwg.mxu0
    %v2009 = vadd.f32 %v1251, %v2003
    %v2010 = vadd.f32 %v1252, %v2006
    %v2011 = vld [vmem:[%s6 + $0xe] sm:$0x1]
    %v2012 = vld [vmem:[%s6 + $0xf] sm:$0x1]
    %2013 = vadd.xlane.f32.xlu0 %v2009
    %v2014 = vpop.xlane.xlu0 %2013
    %2015 = vadd.xlane.f32.xlu0 %v2010
    %v2016 = vpop.xlane.xlu0 %2015
    %v2017 = vmul.f32 %v2014, 0.03125
    %v2018 = vmul.f32 %v2016, 0.03125
    %v2019 = vsub.f32 %v2009, %v2017
    %v2020 = vsub.f32 %v2010, %v2018
    %v2021 = vmul.f32 %v2019, %v76
    %v2022 = vmul.f32 %v2020, %v76
    %v2023 = vmul.f32 %v2021, %v2021
    %v2024 = vmul.f32 %v2022, %v2022
    %2025 = vadd.xlane.f32.xlu0 %v2023
    %v2026 = vpop.xlane.xlu0 %2025
    %2027 = vadd.xlane.f32.xlu0 %v2024
    %v2028 = vpop.xlane.xlu0 %2027
    %v2029 = vmul.f32 %v2026, 0.03125
    %v2030 = vmul.f32 %v2028, 0.03125
    %v2031 = vadd.f32 %v2029, 1e-05
    %v2032 = vadd.f32 %v2030, 1e-05
    %v2033 = vrsqrt.pop %v2031
    %v2034 = vrsqrt.pop %v2032
    %v2035 = vmul.f32 %v2021, %v2033
    %v2036 = vmul.f32 %v2022, %v2034
    %v2037 = vlaneseq
    %v2038 = vshrl.u32 %v2037, 7
    %v2039 = vsub.s32 0, %v2038
    %v2040 = vrot.slane %v2011, %v2039
    %v2041 = vmul.f32 %v2035, %v2040
    %v2042 = vmul.f32 %v2036, %v2040
    %v2043 = vlaneseq
    %v2044 = vshrl.u32 %v2043, 7
    %v2045 = vsub.s32 0, %v2044
    %v2046 = vrot.slane %v2012, %v2045
    %v2047 = vadd.f32 %v2041, %v2046
    %v2048 = vadd.f32 %v2042, %v2046
    %v2049 = vld [vmem:[%s6 + $0xd] sm:$0x1]
    %s2050 = scalar_lea.vmem [#allocation5], 128
    %v2051 = vld [vmem:[%s2050] sm:$0xff]
    %v2052 = vld [vmem:[%s2050 + $0x8] sm:$0xff]
    %v2053 = vld [vmem:[%s2050 + $0x10] sm:$0xff]
    %v2054 = vld [vmem:[%s2050 + $0x18] sm:$0xff]
    %v2055 = vld [vmem:[%s2050 + $0x20] sm:$0xff]
    %v2056 = vld [vmem:[%s2050 + $0x28] sm:$0xff]
    %v2057 = vld [vmem:[%s2050 + $0x30] sm:$0xff]
    %v2058 = vld [vmem:[%s2050 + $0x38] sm:$0xff]
    %v2059 = vld [vmem:[%s2050 + $0x40] sm:$0xff]
    %v2060 = vld [vmem:[%s2050 + $0x48] sm:$0xff]
    %v2061 = vld [vmem:[%s2050 + $0x50] sm:$0xff]
    %v2062 = vld [vmem:[%s2050 + $0x58] sm:$0xff]
    %v2063 = vld [vmem:[%s2050 + $0x60] sm:$0xff]
    %v2064 = vld [vmem:[%s2050 + $0x68] sm:$0xff]
    %v2065 = vld [vmem:[%s2050 + $0x70] sm:$0xff]
    %v2066 = vld [vmem:[%s2050 + $0x78] sm:$0xff]
    %v2067 = vpack.c.bf16 %v2048, %v2047
    %s2068 = scalar_lea.vmem %s5, 1
    %v2069 = vld [vmem:[%s2068] ss:$4 sm:$0x3]
    %v2071 = vlaneseq
    %v2072 = vshrl.u32 %v2071, 7
    %v2073 = vsub.s32 0, %v2072
    %v2074 = vrot.slane %v2069, %v2073
    %v2075 = vlaneseq
    %v2076 = vshrl.u32 %v2075, 7
    %v2077 = vsub.s32 1, %v2076
    %v2078 = vrot.slane %v2069, %v2077
    %v2097 = vunpack.c.l.b16 %v2051
    %v2098 = vunpack.c.h.b16 %v2051
    %v2099 = vunpack.c.l.b16 %v2052
    %v2100 = vunpack.c.h.b16 %v2052
    %v2101 = vunpack.c.l.b16 %v2053
    %v2102 = vunpack.c.h.b16 %v2053
    %v2103 = vunpack.c.l.b16 %v2054
    %v2104 = vunpack.c.h.b16 %v2054
    %v2105 = vunpack.c.l.b16 %v2055
    %v2106 = vunpack.c.h.b16 %v2055
    %v2107 = vunpack.c.l.b16 %v2056
    %v2108 = vunpack.c.h.b16 %v2056
    %v2109 = vunpack.c.l.b16 %v2057
    %v2110 = vunpack.c.h.b16 %v2057
    %v2111 = vunpack.c.l.b16 %v2058
    %v2112 = vunpack.c.h.b16 %v2058
    %v2113 = vunpack.c.l.b16 %v2059
    %v2114 = vunpack.c.h.b16 %v2059
    %v2115 = vunpack.c.l.b16 %v2060
    %v2116 = vunpack.c.h.b16 %v2060
    %v2117 = vunpack.c.l.b16 %v2061
    %v2118 = vunpack.c.h.b16 %v2061
    %v2119 = vunpack.c.l.b16 %v2062
    %v2120 = vunpack.c.h.b16 %v2062
    %v2121 = vunpack.c.l.b16 %v2063
    %v2122 = vunpack.c.h.b16 %v2063
    %v2123 = vunpack.c.l.b16 %v2064
    %v2124 = vunpack.c.h.b16 %v2064
    %v2125 = vunpack.c.l.b16 %v2065
    %v2126 = vunpack.c.h.b16 %v2065
    %v2127 = vunpack.c.l.b16 %v2066
    %v2128 = vunpack.c.h.b16 %v2066
    %v2129 = vpack.c.b16 %v2099, %v2097
    %v2130 = vpack.c.b16 %v2100, %v2098
    %v2131 = vpack.c.b16 %v2103, %v2101
    %v2132 = vpack.c.b16 %v2104, %v2102
    %v2133 = vpack.c.b16 %v2107, %v2105
    %v2134 = vpack.c.b16 %v2108, %v2106
    %v2135 = vpack.c.b16 %v2111, %v2109
    %v2136 = vpack.c.b16 %v2112, %v2110
    %v2137 = vpack.c.b16 %v2115, %v2113
    %v2138 = vpack.c.b16 %v2116, %v2114
    %v2139 = vpack.c.b16 %v2119, %v2117
    %v2140 = vpack.c.b16 %v2120, %v2118
    %v2141 = vpack.c.b16 %v2123, %v2121
    %v2142 = vpack.c.b16 %v2124, %v2122
    %v2143 = vpack.c.b16 %v2127, %v2125
    %v2144 = vpack.c.b16 %v2128, %v2126
    %2161 = vmatprep.subr.bf16.mxu0 %v2130
    %2162 = vmatpush1.bf16.msra.mxu0 %v2129
    %2163 = vmatprep.subr.bf16.mxu0 %v2132
    %2164 = vmatpush1.bf16.msra.mxu0 %v2131
    %2165 = vmatprep.subr.bf16.mxu0 %v2134
    %2166 = vmatpush1.bf16.msra.mxu0 %v2133
    %2167 = vmatprep.subr.bf16.mxu0 %v2136
    %2168 = vmatpush1.bf16.msra.mxu0 %v2135
    %2169 = vmatprep.subr.bf16.mxu0 %v2138
    %2170 = vmatpush1.bf16.msra.mxu0 %v2137
    %2171 = vmatprep.subr.bf16.mxu0 %v2140
    %2172 = vmatpush1.bf16.msra.mxu0 %v2139
    %2173 = vmatprep.subr.bf16.mxu0 %v2142
    %2174 = vmatpush1.bf16.msra.mxu0 %v2141
    %2175 = vmatprep.subr.bf16.mxu0 %v2144
    %2176 = vmatpush1.bf16.msra.mxu0 %v2143
    %2177 = vmatprep.subr.bf16.mxu0 0
    %2178 = vmatpush1.bf16.msra.mxu0 0
    %2179 = vmatprep.subr.bf16.mxu0 0
    %2180 = vmatpush1.bf16.msra.mxu0 0
    %2181 = vmatprep.subr.bf16.mxu0 0
    %2182 = vmatpush1.bf16.msra.mxu0 0
    %2183 = vmatprep.subr.bf16.mxu0 0
    %2184 = vmatpush1.bf16.msra.mxu0 0
    %2185 = vmatprep.subr.bf16.mxu0 0
    %2186 = vmatpush1.bf16.msra.mxu0 0
    %2187 = vmatprep.subr.bf16.mxu0 0
    %2188 = vmatpush1.bf16.msra.mxu0 0
    %2189 = vmatprep.subr.bf16.mxu0 0
    %2190 = vmatpush1.bf16.msra.mxu0 0
    %2191 = vmatprep.subr.bf16.mxu0 0
    %2192 = vmatpush1.bf16.msra.mxu0 0
    %2193 = vmatprep.mubr.bf16.mxu0 0
    %2194 = vmatmul.mubr.bf16.gmra.mrb[0].mxu0 %v2067
    %v2195 = vpop.f32.mrb[0].mxu0
    %v2196 = vadd.f32 %v2074, %v2195
    %v2197 = vpop.f32.mrb[0].mxu0
    %v2198 = vadd.f32 %v2078, %v2197
    %v2199 = vpop.f32.mrb[0].mxu0
    %v2200 = vadd.f32 %v2074, %v2199
    %v2201 = vpop.f32.mrb[0].mxu0
    %v2202 = vadd.f32 %v2078, %v2201
    %2203 = vdwg.mxu0
    %v2204 = vmax.f32 %v2196, 0.0
    %v2205 = vmax.f32 %v2198, 0.0
    %v2206 = vmax.f32 %v2200, 0.0
    %v2207 = vmax.f32 %v2202, 0.0
    %s2208 = scalar_lea.vmem [#allocation7], 128
    %v2209 = vld [vmem:[%s2208] sm:$0xf]
    %v2210 = vld [vmem:[%s2208 + $0x4] sm:$0xf]
    %v2211 = vld [vmem:[%s2208 + $0x8] sm:$0xf]
    %v2212 = vld [vmem:[%s2208 + $0xc] sm:$0xf]
    %v2213 = vld [vmem:[%s2208 + $0x10] sm:$0xf]
    %v2214 = vld [vmem:[%s2208 + $0x14] sm:$0xf]
    %v2215 = vld [vmem:[%s2208 + $0x18] sm:$0xf]
    %v2216 = vld [vmem:[%s2208 + $0x1c] sm:$0xf]
    %v2217 = vld [vmem:[%s2208 + $0x20] sm:$0xf]
    %v2218 = vld [vmem:[%s2208 + $0x24] sm:$0xf]
    %v2219 = vld [vmem:[%s2208 + $0x28] sm:$0xf]
    %v2220 = vld [vmem:[%s2208 + $0x2c] sm:$0xf]
    %v2221 = vld [vmem:[%s2208 + $0x30] sm:$0xf]
    %v2222 = vld [vmem:[%s2208 + $0x34] sm:$0xf]
    %v2223 = vld [vmem:[%s2208 + $0x38] sm:$0xf]
    %v2224 = vld [vmem:[%s2208 + $0x3c] sm:$0xf]
    %v2225 = vld [vmem:[%s2208 + $0x40] sm:$0xf]
    %v2226 = vld [vmem:[%s2208 + $0x44] sm:$0xf]
    %v2227 = vld [vmem:[%s2208 + $0x48] sm:$0xf]
    %v2228 = vld [vmem:[%s2208 + $0x4c] sm:$0xf]
    %v2229 = vld [vmem:[%s2208 + $0x50] sm:$0xf]
    %v2230 = vld [vmem:[%s2208 + $0x54] sm:$0xf]
    %v2231 = vld [vmem:[%s2208 + $0x58] sm:$0xf]
    %v2232 = vld [vmem:[%s2208 + $0x5c] sm:$0xf]
    %v2233 = vld [vmem:[%s2208 + $0x60] sm:$0xf]
    %v2234 = vld [vmem:[%s2208 + $0x64] sm:$0xf]
    %v2235 = vld [vmem:[%s2208 + $0x68] sm:$0xf]
    %v2236 = vld [vmem:[%s2208 + $0x6c] sm:$0xf]
    %v2237 = vld [vmem:[%s2208 + $0x70] sm:$0xf]
    %v2238 = vld [vmem:[%s2208 + $0x74] sm:$0xf]
    %v2239 = vld [vmem:[%s2208 + $0x78] sm:$0xf]
    %v2240 = vld [vmem:[%s2208 + $0x7c] sm:$0xf]
    %v2241 = vpack.c.bf16 %v2206, %v2204
    %v2242 = vpack.c.bf16 %v2207, %v2205
    %v2243 = vlaneseq
    %v2244 = vshrl.u32 %v2243, 7
    %v2245 = vsub.s32 0, %v2244
    %v2246 = vrot.slane %v2049, %v2245
    %v2279 = vunpack.c.l.b16 %v2209
    %v2280 = vunpack.c.l.b16 %v2210
    %v2281 = vunpack.c.l.b16 %v2211
    %v2282 = vunpack.c.l.b16 %v2212
    %v2283 = vunpack.c.l.b16 %v2213
    %v2284 = vunpack.c.l.b16 %v2214
    %v2285 = vunpack.c.l.b16 %v2215
    %v2286 = vunpack.c.l.b16 %v2216
    %v2287 = vunpack.c.l.b16 %v2217
    %v2288 = vunpack.c.l.b16 %v2218
    %v2289 = vunpack.c.l.b16 %v2219
    %v2290 = vunpack.c.l.b16 %v2220
    %v2291 = vunpack.c.l.b16 %v2221
    %v2292 = vunpack.c.l.b16 %v2222
    %v2293 = vunpack.c.l.b16 %v2223
    %v2294 = vunpack.c.l.b16 %v2224
    %v2295 = vunpack.c.l.b16 %v2225
    %v2296 = vunpack.c.l.b16 %v2226
    %v2297 = vunpack.c.l.b16 %v2227
    %v2298 = vunpack.c.l.b16 %v2228
    %v2299 = vunpack.c.l.b16 %v2229
    %v2300 = vunpack.c.l.b16 %v2230
    %v2301 = vunpack.c.l.b16 %v2231
    %v2302 = vunpack.c.l.b16 %v2232
    %v2303 = vunpack.c.l.b16 %v2233
    %v2304 = vunpack.c.l.b16 %v2234
    %v2305 = vunpack.c.l.b16 %v2235
    %v2306 = vunpack.c.l.b16 %v2236
    %v2307 = vunpack.c.l.b16 %v2237
    %v2308 = vunpack.c.l.b16 %v2238
    %v2309 = vunpack.c.l.b16 %v2239
    %v2310 = vunpack.c.l.b16 %v2240
    %v2311 = vpack.c.b16 %v2280, %v2279
    %v2312 = vpack.c.b16 %v2282, %v2281
    %v2313 = vpack.c.b16 %v2284, %v2283
    %v2314 = vpack.c.b16 %v2286, %v2285
    %v2315 = vpack.c.b16 %v2288, %v2287
    %v2316 = vpack.c.b16 %v2290, %v2289
    %v2317 = vpack.c.b16 %v2292, %v2291
    %v2318 = vpack.c.b16 %v2294, %v2293
    %v2319 = vpack.c.b16 %v2296, %v2295
    %v2320 = vpack.c.b16 %v2298, %v2297
    %v2321 = vpack.c.b16 %v2300, %v2299
    %v2322 = vpack.c.b16 %v2302, %v2301
    %v2323 = vpack.c.b16 %v2304, %v2303
    %v2324 = vpack.c.b16 %v2306, %v2305
    %v2325 = vpack.c.b16 %v2308, %v2307
    %v2326 = vpack.c.b16 %v2310, %v2309
    %2343 = vmatprep.subr.bf16.mxu0 0
    %2344 = vmatpush1.bf16.msra.mxu0 %v2311
    %2345 = vmatprep.subr.bf16.mxu0 0
    %2346 = vmatpush1.bf16.msra.mxu0 %v2312
    %2347 = vmatprep.subr.bf16.mxu0 0
    %2348 = vmatpush1.bf16.msra.mxu0 %v2313
    %2349 = vmatprep.subr.bf16.mxu0 0
    %2350 = vmatpush1.bf16.msra.mxu0 %v2314
    %2351 = vmatprep.subr.bf16.mxu0 0
    %2352 = vmatpush1.bf16.msra.mxu0 %v2315
    %2353 = vmatprep.subr.bf16.mxu0 0
    %2354 = vmatpush1.bf16.msra.mxu0 %v2316
    %2355 = vmatprep.subr.bf16.mxu0 0
    %2356 = vmatpush1.bf16.msra.mxu0 %v2317
    %2357 = vmatprep.subr.bf16.mxu0 0
    %2358 = vmatpush1.bf16.msra.mxu0 %v2318
    %2359 = vmatprep.subr.bf16.mxu0 0
    %2360 = vmatpush1.bf16.msra.mxu0 %v2319
    %2361 = vmatprep.subr.bf16.mxu0 0
    %2362 = vmatpush1.bf16.msra.mxu0 %v2320
    %2363 = vmatprep.subr.bf16.mxu0 0
    %2364 = vmatpush1.bf16.msra.mxu0 %v2321
    %2365 = vmatprep.subr.bf16.mxu0 0
    %2366 = vmatpush1.bf16.msra.mxu0 %v2322
    %2367 = vmatprep.subr.bf16.mxu0 0
    %2368 = vmatpush1.bf16.msra.mxu0 %v2323
    %2369 = vmatprep.subr.bf16.mxu0 0
    %2370 = vmatpush1.bf16.msra.mxu0 %v2324
    %2371 = vmatprep.subr.bf16.mxu0 0
    %2372 = vmatpush1.bf16.msra.mxu0 %v2325
    %2373 = vmatprep.subr.bf16.mxu0 0
    %2374 = vmatpush1.bf16.msra.mxu0 %v2326
    %2375 = vmatprep.mubr.bf16.mxu0 %v2242
    %2376 = vmatmul.mubr.bf16.gmra.mrb[0].mxu0 %v2241
    %v2377 = vpop.f32.mrb[0].mxu0
    %v2378 = vadd.f32 %v2246, %v2377
    %v2379 = vpop.f32.mrb[0].mxu0
    %v2380 = vpop.f32.mrb[0].mxu0
    %v2381 = vadd.f32 %v2246, %v2380
    %v2382 = vpop.f32.mrb[0].mxu0
    %2383 = vdwg.mxu0
    %v2384 = vadd.f32 %v2047, %v2378
    %v2385 = vadd.f32 %v2048, %v2381
    %v2386 = vld [vmem:[%s6 + $0x10] sm:$0x1]
    %v2387 = vld [vmem:[%s6 + $0x11] sm:$0x1]
    %2388 = vadd.xlane.f32.xlu0 %v2384
    %v2389 = vpop.xlane.xlu0 %2388
    %2390 = vadd.xlane.f32.xlu0 %v2385
    %v2391 = vpop.xlane.xlu0 %2390
    %v2392 = vmul.f32 %v2389, 0.03125
    %v2393 = vmul.f32 %v2391, 0.03125
    %v2394 = vsub.f32 %v2384, %v2392
    %v2395 = vsub.f32 %v2385, %v2393
    %v2396 = vmul.f32 %v2394, %v76
    %v2397 = vmul.f32 %v2395, %v76
    %v2398 = vmul.f32 %v2396, %v2396
    %v2399 = vmul.f32 %v2397, %v2397
    %2400 = vadd.xlane.f32.xlu0 %v2398
    %v2401 = vpop.xlane.xlu0 %2400
    %2402 = vadd.xlane.f32.xlu0 %v2399
    %v2403 = vpop.xlane.xlu0 %2402
    %v2404 = vmul.f32 %v2401, 0.03125
    %v2405 = vmul.f32 %v2403, 0.03125
    %v2406 = vadd.f32 %v2404, 1e-05
    %v2407 = vadd.f32 %v2405, 1e-05
    %v2408 = vrsqrt.pop %v2406
    %v2409 = vrsqrt.pop %v2407
    %v2410 = vmul.f32 %v2396, %v2408
    %v2411 = vmul.f32 %v2397, %v2409
    %v2412 = vlaneseq
    %v2413 = vshrl.u32 %v2412, 7
    %v2414 = vsub.s32 0, %v2413
    %v2415 = vrot.slane %v2386, %v2414
    %v2416 = vmul.f32 %v2410, %v2415
    %v2417 = vmul.f32 %v2411, %v2415
    %v2418 = vlaneseq
    %v2419 = vshrl.u32 %v2418, 7
    %v2420 = vsub.s32 0, %v2419
    %v2421 = vrot.slane %v2387, %v2420
    %v2422 = vadd.f32 %v2416, %v2421
    %v2423 = vadd.f32 %v2417, %v2421
    %s2424 = scalar_lea.vmem [#allocation2], 1536
    %v2425 = vld [vmem:[%s2424] sm:$0xf]
    %v2426 = vld [vmem:[%s2424 + $0x4] sm:$0xf]
    %v2427 = vld [vmem:[%s2424 + $0x8] sm:$0xf]
    %v2428 = vld [vmem:[%s2424 + $0xc] sm:$0xf]
    %v2429 = vld [vmem:[%s2424 + $0x10] sm:$0xf]
    %v2430 = vld [vmem:[%s2424 + $0x14] sm:$0xf]
    %v2431 = vld [vmem:[%s2424 + $0x18] sm:$0xf]
    %v2432 = vld [vmem:[%s2424 + $0x1c] sm:$0xf]
    %v2433 = vld [vmem:[%s2424 + $0x20] sm:$0xf]
    %v2434 = vld [vmem:[%s2424 + $0x24] sm:$0xf]
    %v2435 = vld [vmem:[%s2424 + $0x28] sm:$0xf]
    %v2436 = vld [vmem:[%s2424 + $0x2c] sm:$0xf]
    %v2437 = vld [vmem:[%s2424 + $0x30] sm:$0xf]
    %v2438 = vld [vmem:[%s2424 + $0x34] sm:$0xf]
    %v2439 = vld [vmem:[%s2424 + $0x38] sm:$0xf]
    %v2440 = vld [vmem:[%s2424 + $0x3c] sm:$0xf]
    %v2441 = vpack.c.bf16 %v2422, %v2422
    %v2442 = vpack.c.bf16 %v2423, %v2423
    %v2443 = vld [vmem:[%s6 + $0x30] sm:$0x1]
    %v2444 = vlaneseq
    %v2445 = vshrl.u32 %v2444, 7
    %v2446 = vsub.s32 0, %v2445
    %v2447 = vrot.slane %v2443, %v2446
    %v2450 = vunpack.c.l.b16 %v2441
    %v2451 = vunpack.c.l.b16 %v2442
    %v2452 = vrot.slane %v2450, 7
    %v2453 = vrot.slane %v2451, 6
    %vm2454 = vcmask 1041409
    %v2455 = vsel %vm2454, %v2453, %v2452
    %v2456 = vpack.c.b16 %v2455, %v2455
    %v2474 = vunpack.c.l.b16 %v2425
    %v2475 = vunpack.c.l.b16 %v2426
    %v2476 = vunpack.c.l.b16 %v2427
    %v2477 = vunpack.c.l.b16 %v2428
    %v2478 = vunpack.c.l.b16 %v2429
    %v2479 = vunpack.c.l.b16 %v2430
    %v2480 = vunpack.c.l.b16 %v2431
    %v2481 = vunpack.c.l.b16 %v2432
    %v2482 = vunpack.c.l.b16 %v2433
    %v2483 = vunpack.c.l.b16 %v2434
    %v2484 = vunpack.c.l.b16 %v2435
    %v2485 = vunpack.c.l.b16 %v2436
    %v2486 = vunpack.c.l.b16 %v2437
    %v2487 = vunpack.c.l.b16 %v2438
    %v2488 = vunpack.c.l.b16 %v2439
    %v2489 = vunpack.c.l.b16 %v2440
    %v2490 = vpack.c.b16 %v2475, %v2474
    %v2491 = vpack.c.b16 %v2477, %v2476
    %v2492 = vpack.c.b16 %v2479, %v2478
    %v2493 = vpack.c.b16 %v2481, %v2480
    %v2494 = vpack.c.b16 %v2483, %v2482
    %v2495 = vpack.c.b16 %v2485, %v2484
    %v2496 = vpack.c.b16 %v2487, %v2486
    %v2497 = vpack.c.b16 %v2489, %v2488
    %2506 = vmatprep.subr.bf16.mxu0 0
    %2507 = vmatpush1.bf16.msra.mxu0 %v2490
    %2508 = vmatprep.subr.bf16.mxu0 0
    %2509 = vmatpush1.bf16.msra.mxu0 %v2491
    %2510 = vmatprep.subr.bf16.mxu0 0
    %2511 = vmatpush1.bf16.msra.mxu0 %v2492
    %2512 = vmatprep.subr.bf16.mxu0 0
    %2513 = vmatpush1.bf16.msra.mxu0 %v2493
    %2514 = vmatprep.subr.bf16.mxu0 0
    %2515 = vmatpush1.bf16.msra.mxu0 %v2494
    %2516 = vmatprep.subr.bf16.mxu0 0
    %2517 = vmatpush1.bf16.msra.mxu0 %v2495
    %2518 = vmatprep.subr.bf16.mxu0 0
    %2519 = vmatpush1.bf16.msra.mxu0 %v2496
    %2520 = vmatprep.subr.bf16.mxu0 0
    %2521 = vmatpush1.bf16.msra.mxu0 %v2497
    %2522 = vmatprep.subr.bf16.mxu0 0
    %2523 = vmatpush1.bf16.msra.mxu0 0
    %2524 = vmatprep.subr.bf16.mxu0 0
    %2525 = vmatpush1.bf16.msra.mxu0 0
    %2526 = vmatprep.subr.bf16.mxu0 0
    %2527 = vmatpush1.bf16.msra.mxu0 0
    %2528 = vmatprep.subr.bf16.mxu0 0
    %2529 = vmatpush1.bf16.msra.mxu0 0
    %2530 = vmatprep.subr.bf16.mxu0 0
    %2531 = vmatpush1.bf16.msra.mxu0 0
    %2532 = vmatprep.subr.bf16.mxu0 0
    %2533 = vmatpush1.bf16.msra.mxu0 0
    %2534 = vmatprep.subr.bf16.mxu0 0
    %2535 = vmatpush1.bf16.msra.mxu0 0
    %2536 = vmatprep.subr.bf16.mxu0 0
    %2537 = vmatpush1.bf16.msra.mxu0 0
    %2538 = vmatprep.mubr.bf16.mxu0 0
    %2539 = vmatmul.mubr.bf16.gmra.mrb[0].mxu0 %v2456
    %v2540 = vpop.f32.mrb[0].mxu0
    %v2541 = vadd.f32 %v2447, %v2540
    %v2542 = vpop.f32.mrb[0].mxu0
    %v2543 = vpop.f32.mrb[0].mxu0
    %v2544 = vpop.f32.mrb[0].mxu0
    %2545 = vdwg.mxu0
    %v2546 = vtanh.pop %v2541
    %s2547 = scalar_lea.vmem [#allocation2], 1600
    %v2548 = vld [vmem:[%s2547] sm:$0xf]
    %v2549 = vld [vmem:[%s2547 + $0x4] sm:$0xf]
    %v2550 = vld [vmem:[%s2547 + $0x8] sm:$0xf]
    %v2551 = vld [vmem:[%s2547 + $0xc] sm:$0xf]
    %v2552 = vld [vmem:[%s2547 + $0x10] sm:$0xf]
    %v2553 = vld [vmem:[%s2547 + $0x14] sm:$0xf]
    %v2554 = vld [vmem:[%s2547 + $0x18] sm:$0xf]
    %v2555 = vld [vmem:[%s2547 + $0x1c] sm:$0xf]
    %v2556 = vld [vmem:[%s2547 + $0x20] sm:$0xf]
    %v2557 = vld [vmem:[%s2547 + $0x24] sm:$0xf]
    %v2558 = vld [vmem:[%s2547 + $0x28] sm:$0xf]
    %v2559 = vld [vmem:[%s2547 + $0x2c] sm:$0xf]
    %v2560 = vld [vmem:[%s2547 + $0x30] sm:$0xf]
    %v2561 = vld [vmem:[%s2547 + $0x34] sm:$0xf]
    %v2562 = vld [vmem:[%s2547 + $0x38] sm:$0xf]
    %v2563 = vld [vmem:[%s2547 + $0x3c] sm:$0xf]
    %v2564 = vld [vmem:[%s6 + $0x31] sm:$0x1]
    %v2565 = vlaneseq
    %v2566 = vshrl.u32 %v2565, 7
    %v2567 = vsub.s32 0, %v2566
    %v2568 = vrot.slane %v2564, %v2567
    %v2585 = vunpack.c.l.b16 %v2548
    %v2586 = vunpack.c.l.b16 %v2549
    %v2587 = vunpack.c.l.b16 %v2550
    %v2588 = vunpack.c.l.b16 %v2551
    %v2589 = vunpack.c.l.b16 %v2552
    %v2590 = vunpack.c.l.b16 %v2553
    %v2591 = vunpack.c.l.b16 %v2554
    %v2592 = vunpack.c.l.b16 %v2555
    %v2593 = vunpack.c.l.b16 %v2556
    %v2594 = vunpack.c.l.b16 %v2557
    %v2595 = vunpack.c.l.b16 %v2558
    %v2596 = vunpack.c.l.b16 %v2559
    %v2597 = vunpack.c.l.b16 %v2560
    %v2598 = vunpack.c.l.b16 %v2561
    %v2599 = vunpack.c.l.b16 %v2562
    %v2600 = vunpack.c.l.b16 %v2563
    %v2601 = vpack.c.b16 %v2586, %v2585
    %v2602 = vpack.c.b16 %v2588, %v2587
    %v2603 = vpack.c.b16 %v2590, %v2589
    %v2604 = vpack.c.b16 %v2592, %v2591
    %v2605 = vpack.c.b16 %v2594, %v2593
    %v2606 = vpack.c.b16 %v2596, %v2595
    %v2607 = vpack.c.b16 %v2598, %v2597
    %v2608 = vpack.c.b16 %v2600, %v2599
    %2617 = vmatprep.subr.bf16.mxu0 0
    %2618 = vmatpush1.bf16.msra.mxu0 %v2601
    %2619 = vmatprep.subr.bf16.mxu0 0
    %2620 = vmatpush1.bf16.msra.mxu0 %v2602
    %2621 = vmatprep.subr.bf16.mxu0 0
    %2622 = vmatpush1.bf16.msra.mxu0 %v2603
    %2623 = vmatprep.subr.bf16.mxu0 0
    %2624 = vmatpush1.bf16.msra.mxu0 %v2604
    %2625 = vmatprep.subr.bf16.mxu0 0
    %2626 = vmatpush1.bf16.msra.mxu0 %v2605
    %2627 = vmatprep.subr.bf16.mxu0 0
    %2628 = vmatpush1.bf16.msra.mxu0 %v2606
    %2629 = vmatprep.subr.bf16.mxu0 0
    %2630 = vmatpush1.bf16.msra.mxu0 %v2607
    %2631 = vmatprep.subr.bf16.mxu0 0
    %2632 = vmatpush1.bf16.msra.mxu0 %v2608
    %2633 = vmatprep.subr.bf16.mxu0 0
    %2634 = vmatpush1.bf16.msra.mxu0 0
    %2635 = vmatprep.subr.bf16.mxu0 0
    %2636 = vmatpush1.bf16.msra.mxu0 0
    %2637 = vmatprep.subr.bf16.mxu0 0
    %2638 = vmatpush1.bf16.msra.mxu0 0
    %2639 = vmatprep.subr.bf16.mxu0 0
    %2640 = vmatpush1.bf16.msra.mxu0 0
    %2641 = vmatprep.subr.bf16.mxu0 0
    %2642 = vmatpush1.bf16.msra.mxu0 0
    %2643 = vmatprep.subr.bf16.mxu0 0
    %2644 = vmatpush1.bf16.msra.mxu0 0
    %2645 = vmatprep.subr.bf16.mxu0 0
    %2646 = vmatpush1.bf16.msra.mxu0 0
    %2647 = vmatprep.subr.bf16.mxu0 0
    %2648 = vmatpush1.bf16.msra.mxu0 0
    %2649 = vmatprep.mubr.bf16.mxu0 0
    %2650 = vmatmul.mubr.bf16.gmra.mrb[0].mxu0 %v2456
    %v2651 = vpop.f32.mrb[0].mxu0
    %v2652 = vadd.f32 %v2568, %v2651
    %v2653 = vpop.f32.mrb[0].mxu0
    %v2654 = vpop.f32.mrb[0].mxu0
    %v2655 = vpop.f32.mrb[0].mxu0
    %2656 = vdwg.mxu0
    %v2657 = vmax.f32 %v2652, 0.0
    %2658 = vst [vmem:[%s8] sm:$0x3] %v2546
    %2659 = vst [vmem:[%s9] sm:$0x3] %v2657
    %v2660 = vld [vmem:[%s1] sm:$0x3]
    %v2661 = vmul.f32 %v2657, %v2660
    %v2662 = vadd.f32 %v2546, %v2661
    %v2663 = vlaneseq
    %v2664 = vshrl.u32 %v2663, 7
    %v2665 = vadd.s32 %v2664, 8
    %v2666 = vadd.s32 %v73, 1
    %vm2667 = vcmp.eq.s32.totalorder %v2664, %v2666
    %vm2668 = vcmp.eq.s32.totalorder %v2665, %v2666
    %vm2669 = vcmp.lt.s32.totalorder %v2664, 0
    %v2670 = vsub.s32 0, %v2664
    %v2671 = vsel %vm2669, %v2670, %v2664
    %v2672 = vshrl.u32 %v2671, 3
    %v2673 = vand.u32 %v2671, 7
    %v2674 = vsub.s32 0, %v2673
    %v2675 = vsel %vm2669, %v2674, %v2673
    %vm2676 = vcmp.lt.s32.totalorder %v2665, 0
    %v2677 = vsub.s32 0, %v2665
    %v2678 = vsel %vm2676, %v2677, %v2665
    %v2679 = vshrl.u32 %v2678, 3
    %v2680 = vand.u32 %v2678, 7
    %v2681 = vsub.s32 0, %v2680
    %v2682 = vsel %vm2676, %v2681, %v2680
    %vm2683 = vcmp.ne.s32.totalorder %v2675, 0
    %vm2684 = vcmp.ne.s32.totalorder %v2682, 0
    %vm2685 = vcmp.lt.s32.totalorder %v2675, 0
    %vm2686 = vcmp.lt.s32.totalorder %v2682, 0
    %vm2687 = vmand %vm2685, %vm2683
    %vm2688 = vmand %vm2686, %vm2684
    %v2689 = vadd.s32 %v2675, 8
    %v2690 = vadd.s32 %v2682, 8
    %v2691 = vsel %vm2687, %v2689, %v2675
    %v2692 = vsel %vm2688, %v2690, %v2682
    %vm2693 = vcmp.ne.s32.totalorder %v2691, 0
    %vm2694 = vcmp.ne.s32.totalorder %v2692, 0
    %vm2695 = vmand %vm2667, %vm2693
    %vm2696 = vmand %vm2668, %vm2694
    %v2697 = vsel %vm2695, 1.0, 0.0
    %v2698 = vsel %vm2696, 1.0, 0.0
    %v2699 = vld [vmem:[%s0] sm:$0xff]
    %v2700 = vld [vmem:[%s0 + $0x8] sm:$0xff]
    %vm2701 = vcmask 130048
    %v2703 = vsel %vm2701, %v2697, 0
    %v2706 = vsel %vm2701, %v2698, 0
    %2708 = vmatprep.subr.mxu0 0.0
    %2709 = vmatpush1.msra.mxu0 %v2699
    %2710 = vmatprep.subr.mxu0 0.0
    %2711 = vmatpush1.msra.mxu0 %v2700
    %2712 = vmatprep.subr.mxu0 0.0
    %2713 = vmatpush1.msra.mxu0 0.0
    %2714 = vmatprep.subr.mxu0 0.0
    %2715 = vmatpush1.msra.mxu0 0.0
    %2716 = vmatprep.subr.mxu0 0.0
    %2717 = vmatpush1.msra.mxu0 0.0
    %2718 = vmatprep.subr.mxu0 0.0
    %2719 = vmatpush1.msra.mxu0 0.0
    %2720 = vmatprep.subr.mxu0 0.0
    %2721 = vmatpush1.msra.mxu0 0.0
    %2722 = vmatprep.subr.mxu0 0.0
    %2723 = vmatpush1.msra.mxu0 0.0
    %2724 = vmatprep.subr.mxu0 0.0
    %2725 = vmatpush1.msra.mxu0 0.0
    %2726 = vmatprep.subr.mxu0 0.0
    %2727 = vmatpush1.msra.mxu0 0.0
    %2728 = vmatprep.subr.mxu0 0.0
    %2729 = vmatpush1.msra.mxu0 0.0
    %2730 = vmatprep.subr.mxu0 0.0
    %2731 = vmatpush1.msra.mxu0 0.0
    %2732 = vmatprep.subr.mxu0 0.0
    %2733 = vmatpush1.msra.mxu0 0.0
    %2734 = vmatprep.subr.mxu0 0.0
    %2735 = vmatpush1.msra.mxu0 0.0
    %2736 = vmatprep.subr.mxu0 0.0
    %2737 = vmatpush1.msra.mxu0 0.0
    %2738 = vmatprep.subr.mxu0 0.0
    %2739 = vmatpush1.msra.mxu0 0.0
    %2740 = vmatprep.subr.mxu0 0.0
    %2741 = vmatpush1.msra.mxu0 0.0
    %2742 = vmatprep.subr.mxu0 0.0
    %2743 = vmatpush1.msra.mxu0 0.0
    %2744 = vmatprep.subr.mxu0 0.0
    %2745 = vmatpush1.msra.mxu0 0.0
    %2746 = vmatprep.subr.mxu0 0.0
    %2747 = vmatpush1.msra.mxu0 0.0
    %2748 = vmatprep.subr.mxu0 0.0
    %2749 = vmatpush1.msra.mxu0 0.0
    %2750 = vmatprep.subr.mxu0 0.0
    %2751 = vmatpush1.msra.mxu0 0.0
    %2752 = vmatprep.subr.mxu0 0.0
    %2753 = vmatpush1.msra.mxu0 0.0
    %2754 = vmatprep.subr.mxu0 0.0
    %2755 = vmatpush1.msra.mxu0 0.0
    %2756 = vmatprep.subr.mxu0 0.0
    %2757 = vmatpush1.msra.mxu0 0.0
    %2758 = vmatprep.subr.mxu0 0.0
    %2759 = vmatpush1.msra.mxu0 0.0
    %2760 = vmatprep.subr.mxu0 0.0
    %2761 = vmatpush1.msra.mxu0 0.0
    %2762 = vmatprep.subr.mxu0 0.0
    %2763 = vmatpush1.msra.mxu0 0.0
    %2764 = vmatprep.subr.mxu0 0.0
    %2765 = vmatpush1.msra.mxu0 0.0
    %2766 = vmatprep.subr.mxu0 0.0
    %2767 = vmatpush1.msra.mxu0 0.0
    %2768 = vmatprep.subr.mxu0 0.0
    %2769 = vmatpush1.msra.mxu0 0.0
    %2770 = vmatprep.subr.mxu0 0.0
    %2771 = vmatpush1.msra.mxu0 0.0
    %2772 = vmatprep.mubr.f32.mxu0 0.0
    %2773 = vmatmul.mubr.f32.gmra.mrb[0].mxu0 %v2703
    %v2774 = vpop.f32.mrb[0].mxu0
    %v2775 = vadd.f32 0.0, %v2774
    %v2776 = vpop.f32.mrb[0].mxu0
    %2777 = vmatprep.mubr.f32.mxu0 0.0
    %2778 = vmatmul.mubr.f32.gmra.mrb[0].mxu0 %v2706
    %v2779 = vpop.f32.mrb[0].mxu0
    %v2780 = vadd.f32 0.0, %v2779
    %v2781 = vpop.f32.mrb[0].mxu0
    %2782 = vdwg.mxu0
    %v2783 = vld [vmem:[%s6 + $0x40] sm:$0xff]
    %v2786 = vunpack.c.l.s4 1966171168
    %v2787 = vunpack.c.0.s8 %v2786
    %v2788 = vlaneseq
    %v2789 = vshrl.u32 %v2788, 7
    %v2790 = vsub.s32 %v2787, %v2789
    %v2791 = vrot.slane %v2662, %v2790
    %v2792 = vcombine.high %v2791, %v2791
    %v2794 = vunpack.c.l.s4 1966171168
    %v2795 = vunpack.c.0.s8 %v2794
    %v2796 = vlaneseq
    %v2797 = vshrl.u32 %v2796, 7
    %v2798 = vsub.s32 %v2795, %v2797
    %v2799 = vrot.slane %v2791, %v2798
    %v2801 = vunpack.c.l.s4 1966171168
    %v2802 = vunpack.c.0.s8 %v2801
    %v2803 = vlaneseq
    %v2804 = vshrl.u32 %v2803, 7
    %v2805 = vsub.s32 %v2802, %v2804
    %v2806 = vrot.slane %v2792, %v2805
    %v2807 = vlaneseq
    %v2808 = vshrl.u32 %v2807, 7
    %v2809 = vsub.s32 0, %v2808
    %v2810 = vrot.slane %v2799, %v2809
    %v2811 = vlaneseq
    %v2812 = vshrl.u32 %v2811, 7
    %v2813 = vsub.s32 0, %v2812
    %v2814 = vrot.slane %v2806, %v2813
    %v2817 = vadd.f32 %v2775, %v2810
    %v2818 = vadd.f32 %v2780, %v2814
    %v2819 = vadd.f32 %v2817, %v2783
    %v2820 = vadd.f32 %v2818, %v2783
    %s2821 = scalar_lea.vmem [#allocation2], 512
    %v2822 = vld [vmem:[%s2821] sm:$0xf]
    %v2823 = vld [vmem:[%s2821 + $0x4] sm:$0xf]
    %v2824 = vld [vmem:[%s2821 + $0x8] sm:$0xf]
    %v2825 = vld [vmem:[%s2821 + $0xc] sm:$0xf]
    %v2826 = vld [vmem:[%s2821 + $0x10] sm:$0xf]
    %v2827 = vld [vmem:[%s2821 + $0x14] sm:$0xf]
    %v2828 = vld [vmem:[%s2821 + $0x18] sm:$0xf]
    %v2829 = vld [vmem:[%s2821 + $0x1c] sm:$0xf]
    %v2830 = vld [vmem:[%s2821 + $0x20] sm:$0xf]
    %v2831 = vld [vmem:[%s2821 + $0x24] sm:$0xf]
    %v2832 = vld [vmem:[%s2821 + $0x28] sm:$0xf]
    %v2833 = vld [vmem:[%s2821 + $0x2c] sm:$0xf]
    %v2834 = vld [vmem:[%s2821 + $0x30] sm:$0xf]
    %v2835 = vld [vmem:[%s2821 + $0x34] sm:$0xf]
    %v2836 = vld [vmem:[%s2821 + $0x38] sm:$0xf]
    %v2837 = vld [vmem:[%s2821 + $0x3c] sm:$0xf]
    %v2838 = vpack.c.bf16 %v2820, %v2819
    %v2839 = vld [vmem:[%s6 + $0x12] sm:$0x1]
    %v2840 = vlaneseq
    %v2841 = vshrl.u32 %v2840, 7
    %v2842 = vsub.s32 0, %v2841
    %v2843 = vrot.slane %v2839, %v2842
    %v2860 = vunpack.c.l.b16 %v2822
    %v2861 = vunpack.c.l.b16 %v2823
    %v2862 = vunpack.c.l.b16 %v2824
    %v2863 = vunpack.c.l.b16 %v2825
    %v2864 = vunpack.c.l.b16 %v2826
    %v2865 = vunpack.c.l.b16 %v2827
    %v2866 = vunpack.c.l.b16 %v2828
    %v2867 = vunpack.c.l.b16 %v2829
    %v2868 = vunpack.c.l.b16 %v2830
    %v2869 = vunpack.c.l.b16 %v2831
    %v2870 = vunpack.c.l.b16 %v2832
    %v2871 = vunpack.c.l.b16 %v2833
    %v2872 = vunpack.c.l.b16 %v2834
    %v2873 = vunpack.c.l.b16 %v2835
    %v2874 = vunpack.c.l.b16 %v2836
    %v2875 = vunpack.c.l.b16 %v2837
    %v2876 = vpack.c.b16 %v2861, %v2860
    %v2877 = vpack.c.b16 %v2863, %v2862
    %v2878 = vpack.c.b16 %v2865, %v2864
    %v2879 = vpack.c.b16 %v2867, %v2866
    %v2880 = vpack.c.b16 %v2869, %v2868
    %v2881 = vpack.c.b16 %v2871, %v2870
    %v2882 = vpack.c.b16 %v2873, %v2872
    %v2883 = vpack.c.b16 %v2875, %v2874
    %2892 = vmatprep.subr.bf16.mxu0 0
    %2893 = vmatpush1.bf16.msra.mxu0 %v2876
    %2894 = vmatprep.subr.bf16.mxu0 0
    %2895 = vmatpush1.bf16.msra.mxu0 %v2877
    %2896 = vmatprep.subr.bf16.mxu0 0
    %2897 = vmatpush1.bf16.msra.mxu0 %v2878
    %2898 = vmatprep.subr.bf16.mxu0 0
    %2899 = vmatpush1.bf16.msra.mxu0 %v2879
    %2900 = vmatprep.subr.bf16.mxu0 0
    %2901 = vmatpush1.bf16.msra.mxu0 %v2880
    %2902 = vmatprep.subr.bf16.mxu0 0
    %2903 = vmatpush1.bf16.msra.mxu0 %v2881
    %2904 = vmatprep.subr.bf16.mxu0 0
    %2905 = vmatpush1.bf16.msra.mxu0 %v2882
    %2906 = vmatprep.subr.bf16.mxu0 0
    %2907 = vmatpush1.bf16.msra.mxu0 %v2883
    %2908 = vmatprep.subr.bf16.mxu0 0
    %2909 = vmatpush1.bf16.msra.mxu0 0
    %2910 = vmatprep.subr.bf16.mxu0 0
    %2911 = vmatpush1.bf16.msra.mxu0 0
    %2912 = vmatprep.subr.bf16.mxu0 0
    %2913 = vmatpush1.bf16.msra.mxu0 0
    %2914 = vmatprep.subr.bf16.mxu0 0
    %2915 = vmatpush1.bf16.msra.mxu0 0
    %2916 = vmatprep.subr.bf16.mxu0 0
    %2917 = vmatpush1.bf16.msra.mxu0 0
    %2918 = vmatprep.subr.bf16.mxu0 0
    %2919 = vmatpush1.bf16.msra.mxu0 0
    %2920 = vmatprep.subr.bf16.mxu0 0
    %2921 = vmatpush1.bf16.msra.mxu0 0
    %2922 = vmatprep.subr.bf16.mxu0 0
    %2923 = vmatpush1.bf16.msra.mxu0 0
    %2924 = vmatprep.mubr.bf16.mxu0 0
    %2925 = vmatmul.mubr.bf16.gmra.mrb[0].mxu0 %v2838
    %v2926 = vpop.f32.mrb[0].mxu0
    %v2927 = vadd.f32 %v2843, %v2926
    %v2928 = vpop.f32.mrb[0].mxu0
    %v2929 = vpop.f32.mrb[0].mxu0
    %v2930 = vadd.f32 %v2843, %v2929
    %v2931 = vpop.f32.mrb[0].mxu0
    %2932 = vdwg.mxu0
    %s2933 = scalar_lea.vmem [#allocation2], 576
    %v2934 = vld [vmem:[%s2933] sm:$0xf]
    %v2935 = vld [vmem:[%s2933 + $0x4] sm:$0xf]
    %v2936 = vld [vmem:[%s2933 + $0x8] sm:$0xf]
    %v2937 = vld [vmem:[%s2933 + $0xc] sm:$0xf]
    %v2938 = vld [vmem:[%s2933 + $0x10] sm:$0xf]
    %v2939 = vld [vmem:[%s2933 + $0x14] sm:$0xf]
    %v2940 = vld [vmem:[%s2933 + $0x18] sm:$0xf]
    %v2941 = vld [vmem:[%s2933 + $0x1c] sm:$0xf]
    %v2942 = vld [vmem:[%s2933 + $0x20] sm:$0xf]
    %v2943 = vld [vmem:[%s2933 + $0x24] sm:$0xf]
    %v2944 = vld [vmem:[%s2933 + $0x28] sm:$0xf]
    %v2945 = vld [vmem:[%s2933 + $0x2c] sm:$0xf]
    %v2946 = vld [vmem:[%s2933 + $0x30] sm:$0xf]
    %v2947 = vld [vmem:[%s2933 + $0x34] sm:$0xf]
    %v2948 = vld [vmem:[%s2933 + $0x38] sm:$0xf]
    %v2949 = vld [vmem:[%s2933 + $0x3c] sm:$0xf]
    %v2950 = vld [vmem:[%s6 + $0x13] sm:$0x1]
    %v2951 = vlaneseq
    %v2952 = vshrl.u32 %v2951, 7
    %v2953 = vsub.s32 0, %v2952
    %v2954 = vrot.slane %v2950, %v2953
    %v2971 = vunpack.c.l.b16 %v2934
    %v2972 = vunpack.c.l.b16 %v2935
    %v2973 = vunpack.c.l.b16 %v2936
    %v2974 = vunpack.c.l.b16 %v2937
    %v2975 = vunpack.c.l.b16 %v2938
    %v2976 = vunpack.c.l.b16 %v2939
    %v2977 = vunpack.c.l.b16 %v2940
    %v2978 = vunpack.c.l.b16 %v2941
    %v2979 = vunpack.c.l.b16 %v2942
    %v2980 = vunpack.c.l.b16 %v2943
    %v2981 = vunpack.c.l.b16 %v2944
    %v2982 = vunpack.c.l.b16 %v2945
    %v2983 = vunpack.c.l.b16 %v2946
    %v2984 = vunpack.c.l.b16 %v2947
    %v2985 = vunpack.c.l.b16 %v2948
    %v2986 = vunpack.c.l.b16 %v2949
    %v2987 = vpack.c.b16 %v2972, %v2971
    %v2988 = vpack.c.b16 %v2974, %v2973
    %v2989 = vpack.c.b16 %v2976, %v2975
    %v2990 = vpack.c.b16 %v2978, %v2977
    %v2991 = vpack.c.b16 %v2980, %v2979
    %v2992 = vpack.c.b16 %v2982, %v2981
    %v2993 = vpack.c.b16 %v2984, %v2983
    %v2994 = vpack.c.b16 %v2986, %v2985
    %3003 = vmatprep.subr.bf16.mxu0 0
    %3004 = vmatpush1.bf16.msra.mxu0 %v2987
    %3005 = vmatprep.subr.bf16.mxu0 0
    %3006 = vmatpush1.bf16.msra.mxu0 %v2988
    %3007 = vmatprep.subr.bf16.mxu0 0
    %3008 = vmatpush1.bf16.msra.mxu0 %v2989
    %3009 = vmatprep.subr.bf16.mxu0 0
    %3010 = vmatpush1.bf16.msra.mxu0 %v2990
    %3011 = vmatprep.subr.bf16.mxu0 0
    %3012 = vmatpush1.bf16.msra.mxu0 %v2991
    %3013 = vmatprep.subr.bf16.mxu0 0
    %3014 = vmatpush1.bf16.msra.mxu0 %v2992
    %3015 = vmatprep.subr.bf16.mxu0 0
    %3016 = vmatpush1.bf16.msra.mxu0 %v2993
    %3017 = vmatprep.subr.bf16.mxu0 0
    %3018 = vmatpush1.bf16.msra.mxu0 %v2994
    %3019 = vmatprep.subr.bf16.mxu0 0
    %3020 = vmatpush1.bf16.msra.mxu0 0
    %3021 = vmatprep.subr.bf16.mxu0 0
    %3022 = vmatpush1.bf16.msra.mxu0 0
    %3023 = vmatprep.subr.bf16.mxu0 0
    %3024 = vmatpush1.bf16.msra.mxu0 0
    %3025 = vmatprep.subr.bf16.mxu0 0
    %3026 = vmatpush1.bf16.msra.mxu0 0
    %3027 = vmatprep.subr.bf16.mxu0 0
    %3028 = vmatpush1.bf16.msra.mxu0 0
    %3029 = vmatprep.subr.bf16.mxu0 0
    %3030 = vmatpush1.bf16.msra.mxu0 0
    %3031 = vmatprep.subr.bf16.mxu0 0
    %3032 = vmatpush1.bf16.msra.mxu0 0
    %3033 = vmatprep.subr.bf16.mxu0 0
    %3034 = vmatpush1.bf16.msra.mxu0 0
    %3035 = vmatprep.mubr.bf16.mxu0 0
    %3036 = vmatmul.mubr.bf16.gmra.mrb[0].mxu0 %v2838
    %v3037 = vpop.f32.mrb[0].mxu0
    %v3038 = vadd.f32 %v2954, %v3037
    %v3039 = vpop.f32.mrb[0].mxu0
    %v3040 = vpop.f32.mrb[0].mxu0
    %v3041 = vadd.f32 %v2954, %v3040
    %v3042 = vpop.f32.mrb[0].mxu0
    %3043 = vdwg.mxu0
    %s3044 = scalar_lea.vmem [#allocation2], 640
    %v3045 = vld [vmem:[%s3044] sm:$0xf]
    %v3046 = vld [vmem:[%s3044 + $0x4] sm:$0xf]
    %v3047 = vld [vmem:[%s3044 + $0x8] sm:$0xf]
    %v3048 = vld [vmem:[%s3044 + $0xc] sm:$0xf]
    %v3049 = vld [vmem:[%s3044 + $0x10] sm:$0xf]
    %v3050 = vld [vmem:[%s3044 + $0x14] sm:$0xf]
    %v3051 = vld [vmem:[%s3044 + $0x18] sm:$0xf]
    %v3052 = vld [vmem:[%s3044 + $0x1c] sm:$0xf]
    %v3053 = vld [vmem:[%s3044 + $0x20] sm:$0xf]
    %v3054 = vld [vmem:[%s3044 + $0x24] sm:$0xf]
    %v3055 = vld [vmem:[%s3044 + $0x28] sm:$0xf]
    %v3056 = vld [vmem:[%s3044 + $0x2c] sm:$0xf]
    %v3057 = vld [vmem:[%s3044 + $0x30] sm:$0xf]
    %v3058 = vld [vmem:[%s3044 + $0x34] sm:$0xf]
    %v3059 = vld [vmem:[%s3044 + $0x38] sm:$0xf]
    %v3060 = vld [vmem:[%s3044 + $0x3c] sm:$0xf]
    %v3061 = vld [vmem:[%s6 + $0x14] sm:$0x1]
    %v3062 = vlaneseq
    %v3063 = vshrl.u32 %v3062, 7
    %v3064 = vsub.s32 0, %v3063
    %v3065 = vrot.slane %v3061, %v3064
    %v3082 = vunpack.c.l.b16 %v3045
    %v3083 = vunpack.c.l.b16 %v3046
    %v3084 = vunpack.c.l.b16 %v3047
    %v3085 = vunpack.c.l.b16 %v3048
    %v3086 = vunpack.c.l.b16 %v3049
    %v3087 = vunpack.c.l.b16 %v3050
    %v3088 = vunpack.c.l.b16 %v3051
    %v3089 = vunpack.c.l.b16 %v3052
    %v3090 = vunpack.c.l.b16 %v3053
    %v3091 = vunpack.c.l.b16 %v3054
    %v3092 = vunpack.c.l.b16 %v3055
    %v3093 = vunpack.c.l.b16 %v3056
    %v3094 = vunpack.c.l.b16 %v3057
    %v3095 = vunpack.c.l.b16 %v3058
    %v3096 = vunpack.c.l.b16 %v3059
    %v3097 = vunpack.c.l.b16 %v3060
    %v3098 = vpack.c.b16 %v3083, %v3082
    %v3099 = vpack.c.b16 %v3085, %v3084
    %v3100 = vpack.c.b16 %v3087, %v3086
    %v3101 = vpack.c.b16 %v3089, %v3088
    %v3102 = vpack.c.b16 %v3091, %v3090
    %v3103 = vpack.c.b16 %v3093, %v3092
    %v3104 = vpack.c.b16 %v3095, %v3094
    %v3105 = vpack.c.b16 %v3097, %v3096
    %3114 = vmatprep.subr.bf16.mxu0 0
    %3115 = vmatpush1.bf16.msra.mxu0 %v3098
    %3116 = vmatprep.subr.bf16.mxu0 0
    %3117 = vmatpush1.bf16.msra.mxu0 %v3099
    %3118 = vmatprep.subr.bf16.mxu0 0
    %3119 = vmatpush1.bf16.msra.mxu0 %v3100
    %3120 = vmatprep.subr.bf16.mxu0 0
    %3121 = vmatpush1.bf16.msra.mxu0 %v3101
    %3122 = vmatprep.subr.bf16.mxu0 0
    %3123 = vmatpush1.bf16.msra.mxu0 %v3102
    %3124 = vmatprep.subr.bf16.mxu0 0
    %3125 = vmatpush1.bf16.msra.mxu0 %v3103
    %3126 = vmatprep.subr.bf16.mxu0 0
    %3127 = vmatpush1.bf16.msra.mxu0 %v3104
    %3128 = vmatprep.subr.bf16.mxu0 0
    %3129 = vmatpush1.bf16.msra.mxu0 %v3105
    %3130 = vmatprep.subr.bf16.mxu0 0
    %3131 = vmatpush1.bf16.msra.mxu0 0
    %3132 = vmatprep.subr.bf16.mxu0 0
    %3133 = vmatpush1.bf16.msra.mxu0 0
    %3134 = vmatprep.subr.bf16.mxu0 0
    %3135 = vmatpush1.bf16.msra.mxu0 0
    %3136 = vmatprep.subr.bf16.mxu0 0
    %3137 = vmatpush1.bf16.msra.mxu0 0
    %3138 = vmatprep.subr.bf16.mxu0 0
    %3139 = vmatpush1.bf16.msra.mxu0 0
    %3140 = vmatprep.subr.bf16.mxu0 0
    %3141 = vmatpush1.bf16.msra.mxu0 0
    %3142 = vmatprep.subr.bf16.mxu0 0
    %3143 = vmatpush1.bf16.msra.mxu0 0
    %3144 = vmatprep.subr.bf16.mxu0 0
    %3145 = vmatpush1.bf16.msra.mxu0 0
    %3146 = vmatprep.mubr.bf16.mxu0 0
    %3147 = vmatmul.mubr.bf16.gmra.mrb[0].mxu0 %v2838
    %v3148 = vpop.f32.mrb[0].mxu0
    %v3149 = vadd.f32 %v3065, %v3148
    %v3150 = vpop.f32.mrb[0].mxu0
    %v3151 = vpop.f32.mrb[0].mxu0
    %v3152 = vadd.f32 %v3065, %v3151
    %v3153 = vpop.f32.mrb[0].mxu0
    %3154 = vdwg.mxu0
    %3155 = vmatprep.subr.mxu0 0.0
    %3156 = vmatpush1.xpose.msra.mxu0 %v3038
    %3157 = vmatprep.subr.mxu0 0.0
    %3158 = vmatpush1.xpose.msra.mxu0 0.0
    %3159 = vmatprep.subr.mxu0 0.0
    %3160 = vmatpush1.xpose.msra.mxu0 0.0
    %3161 = vmatprep.subr.mxu0 0.0
    %3162 = vmatpush1.xpose.msra.mxu0 0.0
    %3163 = vmatprep.subr.mxu0 0.0
    %3164 = vmatpush1.xpose.msra.mxu0 0.0
    %3165 = vmatprep.subr.mxu0 0.0
    %3166 = vmatpush1.xpose.msra.mxu0 0.0
    %3167 = vmatprep.subr.mxu0 0.0
    %3168 = vmatpush1.xpose.msra.mxu0 0.0
    %3169 = vmatprep.subr.mxu0 0.0
    %3170 = vmatpush1.xpose.msra.mxu0 0.0
    %3171 = vmatprep.subr.mxu0 0.0
    %3172 = vmatpush1.xpose.msra.mxu0 0.0
    %3173 = vmatprep.subr.mxu0 0.0
    %3174 = vmatpush1.xpose.msra.mxu0 0.0
    %3175 = vmatprep.subr.mxu0 0.0
    %3176 = vmatpush1.xpose.msra.mxu0 0.0
    %3177 = vmatprep.subr.mxu0 0.0
    %3178 = vmatpush1.xpose.msra.mxu0 0.0
    %3179 = vmatprep.subr.mxu0 0.0
    %3180 = vmatpush1.xpose.msra.mxu0 0.0
    %3181 = vmatprep.subr.mxu0 0.0
    %3182 = vmatpush1.xpose.msra.mxu0 0.0
    %3183 = vmatprep.subr.mxu0 0.0
    %3184 = vmatpush1.xpose.msra.mxu0 0.0
    %3185 = vmatprep.subr.mxu0 0.0
    %3186 = vmatpush1.xpose.msra.mxu0 0.0
    %3187 = vmatprep.subr.mxu0 0.0
    %3188 = vmatpush1.xpose.msra.mxu0 0.0
    %3189 = vmatprep.subr.mxu0 0.0
    %3190 = vmatpush1.xpose.msra.mxu0 0.0
    %3191 = vmatprep.subr.mxu0 0.0
    %3192 = vmatpush1.xpose.msra.mxu0 0.0
    %3193 = vmatprep.subr.mxu0 0.0
    %3194 = vmatpush1.xpose.msra.mxu0 0.0
    %3195 = vmatprep.subr.mxu0 0.0
    %3196 = vmatpush1.xpose.msra.mxu0 0.0
    %3197 = vmatprep.subr.mxu0 0.0
    %3198 = vmatpush1.xpose.msra.mxu0 0.0
    %3199 = vmatprep.subr.mxu0 0.0
    %3200 = vmatpush1.xpose.msra.mxu0 0.0
    %3201 = vmatprep.subr.mxu0 0.0
    %3202 = vmatpush1.xpose.msra.mxu0 0.0
    %3203 = vmatprep.subr.mxu0 0.0
    %3204 = vmatpush1.xpose.msra.mxu0 0.0
    %3205 = vmatprep.subr.mxu0 0.0
    %3206 = vmatpush1.xpose.msra.mxu0 0.0
    %3207 = vmatprep.subr.mxu0 0.0
    %3208 = vmatpush1.xpose.msra.mxu0 0.0
    %3209 = vmatprep.subr.mxu0 0.0
    %3210 = vmatpush1.xpose.msra.mxu0 0.0
    %3211 = vmatprep.subr.mxu0 0.0
    %3212 = vmatpush1.xpose.msra.mxu0 0.0
    %3213 = vmatprep.subr.mxu0 0.0
    %3214 = vmatpush1.xpose.msra.mxu0 0.0
    %3215 = vmatprep.subr.mxu0 0.0
    %3216 = vmatpush1.xpose.msra.mxu0 0.0
    %3217 = vmatprep.subr.mxu0 0.0
    %3218 = vmatpush1.xpose.msra.mxu0 0.0
    %3219 = vmatprep.mubr.f32.mxu0 0.0
    %3220 = vmatmul.mubr.f32.gmra.mrb[0].mxu0 %v2927
    %v3221 = vpop.f32.mrb[0].mxu0
    %v3222 = vadd.f32 0.0, %v3221
    %v3223 = vpop.f32.mrb[0].mxu0
    %3224 = vdwg.mxu0
    %3225 = vmatprep.subr.mxu0 0.0
    %3226 = vmatpush1.xpose.msra.mxu0 %v3041
    %3227 = vmatprep.subr.mxu0 0.0
    %3228 = vmatpush1.xpose.msra.mxu0 0.0
    %3229 = vmatprep.subr.mxu0 0.0
    %3230 = vmatpush1.xpose.msra.mxu0 0.0
    %3231 = vmatprep.subr.mxu0 0.0
    %3232 = vmatpush1.xpose.msra.mxu0 0.0
    %3233 = vmatprep.subr.mxu0 0.0
    %3234 = vmatpush1.xpose.msra.mxu0 0.0
    %3235 = vmatprep.subr.mxu0 0.0
    %3236 = vmatpush1.xpose.msra.mxu0 0.0
    %3237 = vmatprep.subr.mxu0 0.0
    %3238 = vmatpush1.xpose.msra.mxu0 0.0
    %3239 = vmatprep.subr.mxu0 0.0
    %3240 = vmatpush1.xpose.msra.mxu0 0.0
    %3241 = vmatprep.subr.mxu0 0.0
    %3242 = vmatpush1.xpose.msra.mxu0 0.0
    %3243 = vmatprep.subr.mxu0 0.0
    %3244 = vmatpush1.xpose.msra.mxu0 0.0
    %3245 = vmatprep.subr.mxu0 0.0
    %3246 = vmatpush1.xpose.msra.mxu0 0.0
    %3247 = vmatprep.subr.mxu0 0.0
    %3248 = vmatpush1.xpose.msra.mxu0 0.0
    %3249 = vmatprep.subr.mxu0 0.0
    %3250 = vmatpush1.xpose.msra.mxu0 0.0
    %3251 = vmatprep.subr.mxu0 0.0
    %3252 = vmatpush1.xpose.msra.mxu0 0.0
    %3253 = vmatprep.subr.mxu0 0.0
    %3254 = vmatpush1.xpose.msra.mxu0 0.0
    %3255 = vmatprep.subr.mxu0 0.0
    %3256 = vmatpush1.xpose.msra.mxu0 0.0
    %3257 = vmatprep.subr.mxu0 0.0
    %3258 = vmatpush1.xpose.msra.mxu0 0.0
    %3259 = vmatprep.subr.mxu0 0.0
    %3260 = vmatpush1.xpose.msra.mxu0 0.0
    %3261 = vmatprep.subr.mxu0 0.0
    %3262 = vmatpush1.xpose.msra.mxu0 0.0
    %3263 = vmatprep.subr.mxu0 0.0
    %3264 = vmatpush1.xpose.msra.mxu0 0.0
    %3265 = vmatprep.subr.mxu0 0.0
    %3266 = vmatpush1.xpose.msra.mxu0 0.0
    %3267 = vmatprep.subr.mxu0 0.0
    %3268 = vmatpush1.xpose.msra.mxu0 0.0
    %3269 = vmatprep.subr.mxu0 0.0
    %3270 = vmatpush1.xpose.msra.mxu0 0.0
    %3271 = vmatprep.subr.mxu0 0.0
    %3272 = vmatpush1.xpose.msra.mxu0 0.0
    %3273 = vmatprep.subr.mxu0 0.0
    %3274 = vmatpush1.xpose.msra.mxu0 0.0
    %3275 = vmatprep.subr.mxu0 0.0
    %3276 = vmatpush1.xpose.msra.mxu0 0.0
    %3277 = vmatprep.subr.mxu0 0.0
    %3278 = vmatpush1.xpose.msra.mxu0 0.0
    %3279 = vmatprep.subr.mxu0 0.0
    %3280 = vmatpush1.xpose.msra.mxu0 0.0
    %3281 = vmatprep.subr.mxu0 0.0
    %3282 = vmatpush1.xpose.msra.mxu0 0.0
    %3283 = vmatprep.subr.mxu0 0.0
    %3284 = vmatpush1.xpose.msra.mxu0 0.0
    %3285 = vmatprep.subr.mxu0 0.0
    %3286 = vmatpush1.xpose.msra.mxu0 0.0
    %3287 = vmatprep.subr.mxu0 0.0
    %3288 = vmatpush1.xpose.msra.mxu0 0.0
    %3289 = vmatprep.mubr.f32.mxu0 0.0
    %3290 = vmatmul.mubr.f32.gmra.mrb[0].mxu0 %v2930
    %v3291 = vpop.f32.mrb[0].mxu0
    %v3292 = vadd.f32 0.0, %v3291
    %v3293 = vpop.f32.mrb[0].mxu0
    %3294 = vdwg.mxu0
    %v3295 = vmul.f32 %v3222, 0.15811388
    %v3296 = vmul.f32 %v3292, 0.15811388
    %v3297 = vsel %vm560, %v3295, -inf
    %3298 = vmax.xlane.f32.xlu0 %v3297
    %v3299 = vpop.xlane.xlu0 %3298
    %v3300 = vsel %vm560, %v3296, -inf
    %3301 = vmax.xlane.f32.xlu0 %v3300
    %v3302 = vpop.xlane.xlu0 %3301
    %v3303 = vsub.f32 %v3295, %v3299
    %v3304 = vsub.f32 %v3296, %v3302
    %v3305 = vmul.f32 %v3303, 1.442695
    %v3306 = vpow.pop %v3305
    %v3307 = vmul.f32 %v3304, 1.442695
    %v3308 = vpow.pop %v3307
    %v3309 = vsel %vm560, %v3306, 0.0
    %3310 = vadd.xlane.f32.xlu0 %v3309
    %v3311 = vpop.xlane.xlu0 %3310
    %v3312 = vsel %vm560, %v3308, 0.0
    %3313 = vadd.xlane.f32.xlu0 %v3312
    %v3314 = vpop.xlane.xlu0 %3313
    %v3315 = vrcp.pop %v3311
    %v3316 = vrcp.pop %v3314
    %v3317 = vmul.f32 %v3306, %v3315
    %v3318 = vmul.f32 %v3308, %v3316
    %v3320 = vsel %vm560, %v3317, 0
    %3322 = vmatprep.subr.mxu0 0.0
    %3323 = vmatpush1.msra.mxu0 %v3149
    %3324 = vmatprep.subr.mxu0 0.0
    %3325 = vmatpush1.msra.mxu0 0.0
    %3326 = vmatprep.subr.mxu0 0.0
    %3327 = vmatpush1.msra.mxu0 0.0
    %3328 = vmatprep.subr.mxu0 0.0
    %3329 = vmatpush1.msra.mxu0 0.0
    %3330 = vmatprep.subr.mxu0 0.0
    %3331 = vmatpush1.msra.mxu0 0.0
    %3332 = vmatprep.subr.mxu0 0.0
    %3333 = vmatpush1.msra.mxu0 0.0
    %3334 = vmatprep.subr.mxu0 0.0
    %3335 = vmatpush1.msra.mxu0 0.0
    %3336 = vmatprep.subr.mxu0 0.0
    %3337 = vmatpush1.msra.mxu0 0.0
    %3338 = vmatprep.subr.mxu0 0.0
    %3339 = vmatpush1.msra.mxu0 0.0
    %3340 = vmatprep.subr.mxu0 0.0
    %3341 = vmatpush1.msra.mxu0 0.0
    %3342 = vmatprep.subr.mxu0 0.0
    %3343 = vmatpush1.msra.mxu0 0.0
    %3344 = vmatprep.subr.mxu0 0.0
    %3345 = vmatpush1.msra.mxu0 0.0
    %3346 = vmatprep.subr.mxu0 0.0
    %3347 = vmatpush1.msra.mxu0 0.0
    %3348 = vmatprep.subr.mxu0 0.0
    %3349 = vmatpush1.msra.mxu0 0.0
    %3350 = vmatprep.subr.mxu0 0.0
    %3351 = vmatpush1.msra.mxu0 0.0
    %3352 = vmatprep.subr.mxu0 0.0
    %3353 = vmatpush1.msra.mxu0 0.0
    %3354 = vmatprep.subr.mxu0 0.0
    %3355 = vmatpush1.msra.mxu0 0.0
    %3356 = vmatprep.subr.mxu0 0.0
    %3357 = vmatpush1.msra.mxu0 0.0
    %3358 = vmatprep.subr.mxu0 0.0
    %3359 = vmatpush1.msra.mxu0 0.0
    %3360 = vmatprep.subr.mxu0 0.0
    %3361 = vmatpush1.msra.mxu0 0.0
    %3362 = vmatprep.subr.mxu0 0.0
    %3363 = vmatpush1.msra.mxu0 0.0
    %3364 = vmatprep.subr.mxu0 0.0
    %3365 = vmatpush1.msra.mxu0 0.0
    %3366 = vmatprep.subr.mxu0 0.0
    %3367 = vmatpush1.msra.mxu0 0.0
    %3368 = vmatprep.subr.mxu0 0.0
    %3369 = vmatpush1.msra.mxu0 0.0
    %3370 = vmatprep.subr.mxu0 0.0
    %3371 = vmatpush1.msra.mxu0 0.0
    %3372 = vmatprep.subr.mxu0 0.0
    %3373 = vmatpush1.msra.mxu0 0.0
    %3374 = vmatprep.subr.mxu0 0.0
    %3375 = vmatpush1.msra.mxu0 0.0
    %3376 = vmatprep.subr.mxu0 0.0
    %3377 = vmatpush1.msra.mxu0 0.0
    %3378 = vmatprep.subr.mxu0 0.0
    %3379 = vmatpush1.msra.mxu0 0.0
    %3380 = vmatprep.subr.mxu0 0.0
    %3381 = vmatpush1.msra.mxu0 0.0
    %3382 = vmatprep.subr.mxu0 0.0
    %3383 = vmatpush1.msra.mxu0 0.0
    %3384 = vmatprep.subr.mxu0 0.0
    %3385 = vmatpush1.msra.mxu0 0.0
    %3386 = vmatprep.mubr.f32.mxu0 0.0
    %3387 = vmatmul.mubr.f32.gmra.mrb[0].mxu0 %v3320
    %v3388 = vpop.f32.mrb[0].mxu0
    %v3389 = vadd.f32 0.0, %v3388
    %v3390 = vpop.f32.mrb[0].mxu0
    %3391 = vdwg.mxu0
    %v3393 = vsel %vm560, %v3318, 0
    %3395 = vmatprep.subr.mxu0 0.0
    %3396 = vmatpush1.msra.mxu0 %v3152
    %3397 = vmatprep.subr.mxu0 0.0
    %3398 = vmatpush1.msra.mxu0 0.0
    %3399 = vmatprep.subr.mxu0 0.0
    %3400 = vmatpush1.msra.mxu0 0.0
    %3401 = vmatprep.subr.mxu0 0.0
    %3402 = vmatpush1.msra.mxu0 0.0
    %3403 = vmatprep.subr.mxu0 0.0
    %3404 = vmatpush1.msra.mxu0 0.0
    %3405 = vmatprep.subr.mxu0 0.0
    %3406 = vmatpush1.msra.mxu0 0.0
    %3407 = vmatprep.subr.mxu0 0.0
    %3408 = vmatpush1.msra.mxu0 0.0
    %3409 = vmatprep.subr.mxu0 0.0
    %3410 = vmatpush1.msra.mxu0 0.0
    %3411 = vmatprep.subr.mxu0 0.0
    %3412 = vmatpush1.msra.mxu0 0.0
    %3413 = vmatprep.subr.mxu0 0.0
    %3414 = vmatpush1.msra.mxu0 0.0
    %3415 = vmatprep.subr.mxu0 0.0
    %3416 = vmatpush1.msra.mxu0 0.0
    %3417 = vmatprep.subr.mxu0 0.0
    %3418 = vmatpush1.msra.mxu0 0.0
    %3419 = vmatprep.subr.mxu0 0.0
    %3420 = vmatpush1.msra.mxu0 0.0
    %3421 = vmatprep.subr.mxu0 0.0
    %3422 = vmatpush1.msra.mxu0 0.0
    %3423 = vmatprep.subr.mxu0 0.0
    %3424 = vmatpush1.msra.mxu0 0.0
    %3425 = vmatprep.subr.mxu0 0.0
    %3426 = vmatpush1.msra.mxu0 0.0
    %3427 = vmatprep.subr.mxu0 0.0
    %3428 = vmatpush1.msra.mxu0 0.0
    %3429 = vmatprep.subr.mxu0 0.0
    %3430 = vmatpush1.msra.mxu0 0.0
    %3431 = vmatprep.subr.mxu0 0.0
    %3432 = vmatpush1.msra.mxu0 0.0
    %3433 = vmatprep.subr.mxu0 0.0
    %3434 = vmatpush1.msra.mxu0 0.0
    %3435 = vmatprep.subr.mxu0 0.0
    %3436 = vmatpush1.msra.mxu0 0.0
    %3437 = vmatprep.subr.mxu0 0.0
    %3438 = vmatpush1.msra.mxu0 0.0
    %3439 = vmatprep.subr.mxu0 0.0
    %3440 = vmatpush1.msra.mxu0 0.0
    %3441 = vmatprep.subr.mxu0 0.0
    %3442 = vmatpush1.msra.mxu0 0.0
    %3443 = vmatprep.subr.mxu0 0.0
    %3444 = vmatpush1.msra.mxu0 0.0
    %3445 = vmatprep.subr.mxu0 0.0
    %3446 = vmatpush1.msra.mxu0 0.0
    %3447 = vmatprep.subr.mxu0 0.0
    %3448 = vmatpush1.msra.mxu0 0.0
    %3449 = vmatprep.subr.mxu0 0.0
    %3450 = vmatpush1.msra.mxu0 0.0
    %3451 = vmatprep.subr.mxu0 0.0
    %3452 = vmatpush1.msra.mxu0 0.0
    %3453 = vmatprep.subr.mxu0 0.0
    %3454 = vmatpush1.msra.mxu0 0.0
    %3455 = vmatprep.subr.mxu0 0.0
    %3456 = vmatpush1.msra.mxu0 0.0
    %3457 = vmatprep.subr.mxu0 0.0
    %3458 = vmatpush1.msra.mxu0 0.0
    %3459 = vmatprep.mubr.f32.mxu0 0.0
    %3460 = vmatmul.mubr.f32.gmra.mrb[0].mxu0 %v3393
    %v3461 = vpop.f32.mrb[0].mxu0
    %v3462 = vadd.f32 0.0, %v3461
    %v3463 = vpop.f32.mrb[0].mxu0
    %3464 = vdwg.mxu0
    %s3465 = scalar_lea.vmem [#allocation2], 704
    %v3466 = vld [vmem:[%s3465] sm:$0xf]
    %v3467 = vld [vmem:[%s3465 + $0x4] sm:$0xf]
    %v3468 = vld [vmem:[%s3465 + $0x8] sm:$0xf]
    %v3469 = vld [vmem:[%s3465 + $0xc] sm:$0xf]
    %v3470 = vld [vmem:[%s3465 + $0x10] sm:$0xf]
    %v3471 = vld [vmem:[%s3465 + $0x14] sm:$0xf]
    %v3472 = vld [vmem:[%s3465 + $0x18] sm:$0xf]
    %v3473 = vld [vmem:[%s3465 + $0x1c] sm:$0xf]
    %v3474 = vld [vmem:[%s3465 + $0x20] sm:$0xf]
    %v3475 = vld [vmem:[%s3465 + $0x24] sm:$0xf]
    %v3476 = vld [vmem:[%s3465 + $0x28] sm:$0xf]
    %v3477 = vld [vmem:[%s3465 + $0x2c] sm:$0xf]
    %v3478 = vld [vmem:[%s3465 + $0x30] sm:$0xf]
    %v3479 = vld [vmem:[%s3465 + $0x34] sm:$0xf]
    %v3480 = vld [vmem:[%s3465 + $0x38] sm:$0xf]
    %v3481 = vld [vmem:[%s3465 + $0x3c] sm:$0xf]
    %v3482 = vpack.c.bf16 %v3462, %v3389
    %v3483 = vld [vmem:[%s6 + $0x15] sm:$0x1]
    %v3484 = vlaneseq
    %v3485 = vshrl.u32 %v3484, 7
    %v3486 = vsub.s32 0, %v3485
    %v3487 = vrot.slane %v3483, %v3486
    %v3504 = vunpack.c.l.b16 %v3466
    %v3505 = vunpack.c.l.b16 %v3467
    %v3506 = vunpack.c.l.b16 %v3468
    %v3507 = vunpack.c.l.b16 %v3469
    %v3508 = vunpack.c.l.b16 %v3470
    %v3509 = vunpack.c.l.b16 %v3471
    %v3510 = vunpack.c.l.b16 %v3472
    %v3511 = vunpack.c.l.b16 %v3473
    %v3512 = vunpack.c.l.b16 %v3474
    %v3513 = vunpack.c.l.b16 %v3475
    %v3514 = vunpack.c.l.b16 %v3476
    %v3515 = vunpack.c.l.b16 %v3477
    %v3516 = vunpack.c.l.b16 %v3478
    %v3517 = vunpack.c.l.b16 %v3479
    %v3518 = vunpack.c.l.b16 %v3480
    %v3519 = vunpack.c.l.b16 %v3481
    %v3520 = vpack.c.b16 %v3505, %v3504
    %v3521 = vpack.c.b16 %v3507, %v3506
    %v3522 = vpack.c.b16 %v3509, %v3508
    %v3523 = vpack.c.b16 %v3511, %v3510
    %v3524 = vpack.c.b16 %v3513, %v3512
    %v3525 = vpack.c.b16 %v3515, %v3514
    %v3526 = vpack.c.b16 %v3517, %v3516
    %v3527 = vpack.c.b16 %v3519, %v3518
    %3536 = vmatprep.subr.bf16.mxu0 0
    %3537 = vmatpush1.bf16.msra.mxu0 %v3520
    %3538 = vmatprep.subr.bf16.mxu0 0
    %3539 = vmatpush1.bf16.msra.mxu0 %v3521
    %3540 = vmatprep.subr.bf16.mxu0 0
    %3541 = vmatpush1.bf16.msra.mxu0 %v3522
    %3542 = vmatprep.subr.bf16.mxu0 0
    %3543 = vmatpush1.bf16.msra.mxu0 %v3523
    %3544 = vmatprep.subr.bf16.mxu0 0
    %3545 = vmatpush1.bf16.msra.mxu0 %v3524
    %3546 = vmatprep.subr.bf16.mxu0 0
    %3547 = vmatpush1.bf16.msra.mxu0 %v3525
    %3548 = vmatprep.subr.bf16.mxu0 0
    %3549 = vmatpush1.bf16.msra.mxu0 %v3526
    %3550 = vmatprep.subr.bf16.mxu0 0
    %3551 = vmatpush1.bf16.msra.mxu0 %v3527
    %3552 = vmatprep.subr.bf16.mxu0 0
    %3553 = vmatpush1.bf16.msra.mxu0 0
    %3554 = vmatprep.subr.bf16.mxu0 0
    %3555 = vmatpush1.bf16.msra.mxu0 0
    %3556 = vmatprep.subr.bf16.mxu0 0
    %3557 = vmatpush1.bf16.msra.mxu0 0
    %3558 = vmatprep.subr.bf16.mxu0 0
    %3559 = vmatpush1.bf16.msra.mxu0 0
    %3560 = vmatprep.subr.bf16.mxu0 0
    %3561 = vmatpush1.bf16.msra.mxu0 0
    %3562 = vmatprep.subr.bf16.mxu0 0
    %3563 = vmatpush1.bf16.msra.mxu0 0
    %3564 = vmatprep.subr.bf16.mxu0 0
    %3565 = vmatpush1.bf16.msra.mxu0 0
    %3566 = vmatprep.subr.bf16.mxu0 0
    %3567 = vmatpush1.bf16.msra.mxu0 0
    %3568 = vmatprep.mubr.bf16.mxu0 0
    %3569 = vmatmul.mubr.bf16.gmra.mrb[0].mxu0 %v3482
    %v3570 = vpop.f32.mrb[0].mxu0
    %v3571 = vadd.f32 %v3487, %v3570
    %v3572 = vpop.f32.mrb[0].mxu0
    %v3573 = vpop.f32.mrb[0].mxu0
    %v3574 = vadd.f32 %v3487, %v3573
    %v3575 = vpop.f32.mrb[0].mxu0
    %3576 = vdwg.mxu0
    %v3577 = vadd.f32 %v2819, %v3571
    %v3578 = vadd.f32 %v2820, %v3574
    %v3579 = vld [vmem:[%s6 + $0x1b] sm:$0x1]
    %v3580 = vld [vmem:[%s6 + $0x1c] sm:$0x1]
    %3581 = vadd.xlane.f32.xlu0 %v3577
    %v3582 = vpop.xlane.xlu0 %3581
    %3583 = vadd.xlane.f32.xlu0 %v3578
    %v3584 = vpop.xlane.xlu0 %3583
    %v3585 = vmul.f32 %v3582, 0.025
    %v3586 = vmul.f32 %v3584, 0.025
    %v3587 = vsub.f32 %v3577, %v3585
    %v3588 = vsub.f32 %v3578, %v3586
    %v3589 = vmul.f32 %v3587, %v79
    %v3590 = vmul.f32 %v3588, %v79
    %v3591 = vmul.f32 %v3589, %v3589
    %v3592 = vmul.f32 %v3590, %v3590
    %3593 = vadd.xlane.f32.xlu0 %v3591
    %v3594 = vpop.xlane.xlu0 %3593
    %3595 = vadd.xlane.f32.xlu0 %v3592
    %v3596 = vpop.xlane.xlu0 %3595
    %v3597 = vmul.f32 %v3594, 0.025
    %v3598 = vmul.f32 %v3596, 0.025
    %v3599 = vadd.f32 %v3597, 1e-05
    %v3600 = vadd.f32 %v3598, 1e-05
    %v3601 = vrsqrt.pop %v3599
    %v3602 = vrsqrt.pop %v3600
    %v3603 = vmul.f32 %v3589, %v3601
    %v3604 = vmul.f32 %v3590, %v3602
    %v3605 = vlaneseq
    %v3606 = vshrl.u32 %v3605, 7
    %v3607 = vsub.s32 0, %v3606
    %v3608 = vrot.slane %v3579, %v3607
    %v3609 = vmul.f32 %v3603, %v3608
    %v3610 = vmul.f32 %v3604, %v3608
    %v3611 = vlaneseq
    %v3612 = vshrl.u32 %v3611, 7
    %v3613 = vsub.s32 0, %v3612
    %v3614 = vrot.slane %v3580, %v3613
    %v3615 = vadd.f32 %v3609, %v3614
    %v3616 = vadd.f32 %v3610, %v3614
    %s3617 = scalar_lea.vmem [#allocation2], 768
    %v3618 = vld [vmem:[%s3617] sm:$0xf]
    %v3619 = vld [vmem:[%s3617 + $0x4] sm:$0xf]
    %v3620 = vld [vmem:[%s3617 + $0x8] sm:$0xf]
    %v3621 = vld [vmem:[%s3617 + $0xc] sm:$0xf]
    %v3622 = vld [vmem:[%s3617 + $0x10] sm:$0xf]
    %v3623 = vld [vmem:[%s3617 + $0x14] sm:$0xf]
    %v3624 = vld [vmem:[%s3617 + $0x18] sm:$0xf]
    %v3625 = vld [vmem:[%s3617 + $0x1c] sm:$0xf]
    %v3626 = vld [vmem:[%s3617 + $0x20] sm:$0xf]
    %v3627 = vld [vmem:[%s3617 + $0x24] sm:$0xf]
    %v3628 = vld [vmem:[%s3617 + $0x28] sm:$0xf]
    %v3629 = vld [vmem:[%s3617 + $0x2c] sm:$0xf]
    %v3630 = vld [vmem:[%s3617 + $0x30] sm:$0xf]
    %v3631 = vld [vmem:[%s3617 + $0x34] sm:$0xf]
    %v3632 = vld [vmem:[%s3617 + $0x38] sm:$0xf]
    %v3633 = vld [vmem:[%s3617 + $0x3c] sm:$0xf]
    %v3634 = vpack.c.bf16 %v3616, %v3615
    %v3635 = vld [vmem:[%s6 + $0x16] sm:$0x1]
    %v3636 = vlaneseq
    %v3637 = vshrl.u32 %v3636, 7
    %v3638 = vsub.s32 0, %v3637
    %v3639 = vrot.slane %v3635, %v3638
    %v3656 = vunpack.c.l.b16 %v3618
    %v3657 = vunpack.c.l.b16 %v3619
    %v3658 = vunpack.c.l.b16 %v3620
    %v3659 = vunpack.c.l.b16 %v3621
    %v3660 = vunpack.c.l.b16 %v3622
    %v3661 = vunpack.c.l.b16 %v3623
    %v3662 = vunpack.c.l.b16 %v3624
    %v3663 = vunpack.c.l.b16 %v3625
    %v3664 = vunpack.c.l.b16 %v3626
    %v3665 = vunpack.c.l.b16 %v3627
    %v3666 = vunpack.c.l.b16 %v3628
    %v3667 = vunpack.c.l.b16 %v3629
    %v3668 = vunpack.c.l.b16 %v3630
    %v3669 = vunpack.c.l.b16 %v3631
    %v3670 = vunpack.c.l.b16 %v3632
    %v3671 = vunpack.c.l.b16 %v3633
    %v3672 = vpack.c.b16 %v3657, %v3656
    %v3673 = vpack.c.b16 %v3659, %v3658
    %v3674 = vpack.c.b16 %v3661, %v3660
    %v3675 = vpack.c.b16 %v3663, %v3662
    %v3676 = vpack.c.b16 %v3665, %v3664
    %v3677 = vpack.c.b16 %v3667, %v3666
    %v3678 = vpack.c.b16 %v3669, %v3668
    %v3679 = vpack.c.b16 %v3671, %v3670
    %3688 = vmatprep.subr.bf16.mxu0 0
    %3689 = vmatpush1.bf16.msra.mxu0 %v3672
    %3690 = vmatprep.subr.bf16.mxu0 0
    %3691 = vmatpush1.bf16.msra.mxu0 %v3673
    %3692 = vmatprep.subr.bf16.mxu0 0
    %3693 = vmatpush1.bf16.msra.mxu0 %v3674
    %3694 = vmatprep.subr.bf16.mxu0 0
    %3695 = vmatpush1.bf16.msra.mxu0 %v3675
    %3696 = vmatprep.subr.bf16.mxu0 0
    %3697 = vmatpush1.bf16.msra.mxu0 %v3676
    %3698 = vmatprep.subr.bf16.mxu0 0
    %3699 = vmatpush1.bf16.msra.mxu0 %v3677
    %3700 = vmatprep.subr.bf16.mxu0 0
    %3701 = vmatpush1.bf16.msra.mxu0 %v3678
    %3702 = vmatprep.subr.bf16.mxu0 0
    %3703 = vmatpush1.bf16.msra.mxu0 %v3679
    %3704 = vmatprep.subr.bf16.mxu0 0
    %3705 = vmatpush1.bf16.msra.mxu0 0
    %3706 = vmatprep.subr.bf16.mxu0 0
    %3707 = vmatpush1.bf16.msra.mxu0 0
    %3708 = vmatprep.subr.bf16.mxu0 0
    %3709 = vmatpush1.bf16.msra.mxu0 0
    %3710 = vmatprep.subr.bf16.mxu0 0
    %3711 = vmatpush1.bf16.msra.mxu0 0
    %3712 = vmatprep.subr.bf16.mxu0 0
    %3713 = vmatpush1.bf16.msra.mxu0 0
    %3714 = vmatprep.subr.bf16.mxu0 0
    %3715 = vmatpush1.bf16.msra.mxu0 0
    %3716 = vmatprep.subr.bf16.mxu0 0
    %3717 = vmatpush1.bf16.msra.mxu0 0
    %3718 = vmatprep.subr.bf16.mxu0 0
    %3719 = vmatpush1.bf16.msra.mxu0 0
    %3720 = vmatprep.mubr.bf16.mxu0 0
    %3721 = vmatmul.mubr.bf16.gmra.mrb[0].mxu0 %v3634
    %v3722 = vpop.f32.mrb[0].mxu0
    %v3723 = vadd.f32 %v3639, %v3722
    %v3724 = vpop.f32.mrb[0].mxu0
    %v3725 = vpop.f32.mrb[0].mxu0
    %v3726 = vadd.f32 %v3639, %v3725
    %v3727 = vpop.f32.mrb[0].mxu0
    %3728 = vdwg.mxu0
    %s3729 = scalar_lea.vmem [#allocation2], 832
    %v3730 = vld [vmem:[%s3729] sm:$0xf]
    %v3731 = vld [vmem:[%s3729 + $0x4] sm:$0xf]
    %v3732 = vld [vmem:[%s3729 + $0x8] sm:$0xf]
    %v3733 = vld [vmem:[%s3729 + $0xc] sm:$0xf]
    %v3734 = vld [vmem:[%s3729 + $0x10] sm:$0xf]
    %v3735 = vld [vmem:[%s3729 + $0x14] sm:$0xf]
    %v3736 = vld [vmem:[%s3729 + $0x18] sm:$0xf]
    %v3737 = vld [vmem:[%s3729 + $0x1c] sm:$0xf]
    %v3738 = vld [vmem:[%s3729 + $0x20] sm:$0xf]
    %v3739 = vld [vmem:[%s3729 + $0x24] sm:$0xf]
    %v3740 = vld [vmem:[%s3729 + $0x28] sm:$0xf]
    %v3741 = vld [vmem:[%s3729 + $0x2c] sm:$0xf]
    %v3742 = vld [vmem:[%s3729 + $0x30] sm:$0xf]
    %v3743 = vld [vmem:[%s3729 + $0x34] sm:$0xf]
    %v3744 = vld [vmem:[%s3729 + $0x38] sm:$0xf]
    %v3745 = vld [vmem:[%s3729 + $0x3c] sm:$0xf]
    %v3746 = vld [vmem:[%s6 + $0x17] sm:$0x1]
    %v3747 = vlaneseq
    %v3748 = vshrl.u32 %v3747, 7
    %v3749 = vsub.s32 0, %v3748
    %v3750 = vrot.slane %v3746, %v3749
    %v3767 = vunpack.c.l.b16 %v3730
    %v3768 = vunpack.c.l.b16 %v3731
    %v3769 = vunpack.c.l.b16 %v3732
    %v3770 = vunpack.c.l.b16 %v3733
    %v3771 = vunpack.c.l.b16 %v3734
    %v3772 = vunpack.c.l.b16 %v3735
    %v3773 = vunpack.c.l.b16 %v3736
    %v3774 = vunpack.c.l.b16 %v3737
    %v3775 = vunpack.c.l.b16 %v3738
    %v3776 = vunpack.c.l.b16 %v3739
    %v3777 = vunpack.c.l.b16 %v3740
    %v3778 = vunpack.c.l.b16 %v3741
    %v3779 = vunpack.c.l.b16 %v3742
    %v3780 = vunpack.c.l.b16 %v3743
    %v3781 = vunpack.c.l.b16 %v3744
    %v3782 = vunpack.c.l.b16 %v3745
    %v3783 = vpack.c.b16 %v3768, %v3767
    %v3784 = vpack.c.b16 %v3770, %v3769
    %v3785 = vpack.c.b16 %v3772, %v3771
    %v3786 = vpack.c.b16 %v3774, %v3773
    %v3787 = vpack.c.b16 %v3776, %v3775
    %v3788 = vpack.c.b16 %v3778, %v3777
    %v3789 = vpack.c.b16 %v3780, %v3779
    %v3790 = vpack.c.b16 %v3782, %v3781
    %3799 = vmatprep.subr.bf16.mxu0 0
    %3800 = vmatpush1.bf16.msra.mxu0 %v3783
    %3801 = vmatprep.subr.bf16.mxu0 0
    %3802 = vmatpush1.bf16.msra.mxu0 %v3784
    %3803 = vmatprep.subr.bf16.mxu0 0
    %3804 = vmatpush1.bf16.msra.mxu0 %v3785
    %3805 = vmatprep.subr.bf16.mxu0 0
    %3806 = vmatpush1.bf16.msra.mxu0 %v3786
    %3807 = vmatprep.subr.bf16.mxu0 0
    %3808 = vmatpush1.bf16.msra.mxu0 %v3787
    %3809 = vmatprep.subr.bf16.mxu0 0
    %3810 = vmatpush1.bf16.msra.mxu0 %v3788
    %3811 = vmatprep.subr.bf16.mxu0 0
    %3812 = vmatpush1.bf16.msra.mxu0 %v3789
    %3813 = vmatprep.subr.bf16.mxu0 0
    %3814 = vmatpush1.bf16.msra.mxu0 %v3790
    %3815 = vmatprep.subr.bf16.mxu0 0
    %3816 = vmatpush1.bf16.msra.mxu0 0
    %3817 = vmatprep.subr.bf16.mxu0 0
    %3818 = vmatpush1.bf16.msra.mxu0 0
    %3819 = vmatprep.subr.bf16.mxu0 0
    %3820 = vmatpush1.bf16.msra.mxu0 0
    %3821 = vmatprep.subr.bf16.mxu0 0
    %3822 = vmatpush1.bf16.msra.mxu0 0
    %3823 = vmatprep.subr.bf16.mxu0 0
    %3824 = vmatpush1.bf16.msra.mxu0 0
    %3825 = vmatprep.subr.bf16.mxu0 0
    %3826 = vmatpush1.bf16.msra.mxu0 0
    %3827 = vmatprep.subr.bf16.mxu0 0
    %3828 = vmatpush1.bf16.msra.mxu0 0
    %3829 = vmatprep.subr.bf16.mxu0 0
    %3830 = vmatpush1.bf16.msra.mxu0 0
    %3831 = vmatprep.mubr.bf16.mxu0 0
    %3832 = vmatmul.mubr.bf16.gmra.mrb[0].mxu0 %v2838
    %v3833 = vpop.f32.mrb[0].mxu0
    %v3834 = vadd.f32 %v3750, %v3833
    %v3835 = vpop.f32.mrb[0].mxu0
    %v3836 = vpop.f32.mrb[0].mxu0
    %v3837 = vadd.f32 %v3750, %v3836
    %v3838 = vpop.f32.mrb[0].mxu0
    %3839 = vdwg.mxu0
    %s3840 = scalar_lea.vmem [#allocation2], 896
    %v3841 = vld [vmem:[%s3840] sm:$0xf]
    %v3842 = vld [vmem:[%s3840 + $0x4] sm:$0xf]
    %v3843 = vld [vmem:[%s3840 + $0x8] sm:$0xf]
    %v3844 = vld [vmem:[%s3840 + $0xc] sm:$0xf]
    %v3845 = vld [vmem:[%s3840 + $0x10] sm:$0xf]
    %v3846 = vld [vmem:[%s3840 + $0x14] sm:$0xf]
    %v3847 = vld [vmem:[%s3840 + $0x18] sm:$0xf]
    %v3848 = vld [vmem:[%s3840 + $0x1c] sm:$0xf]
    %v3849 = vld [vmem:[%s3840 + $0x20] sm:$0xf]
    %v3850 = vld [vmem:[%s3840 + $0x24] sm:$0xf]
    %v3851 = vld [vmem:[%s3840 + $0x28] sm:$0xf]
    %v3852 = vld [vmem:[%s3840 + $0x2c] sm:$0xf]
    %v3853 = vld [vmem:[%s3840 + $0x30] sm:$0xf]
    %v3854 = vld [vmem:[%s3840 + $0x34] sm:$0xf]
    %v3855 = vld [vmem:[%s3840 + $0x38] sm:$0xf]
    %v3856 = vld [vmem:[%s3840 + $0x3c] sm:$0xf]
    %v3857 = vld [vmem:[%s6 + $0x18] sm:$0x1]
    %v3858 = vlaneseq
    %v3859 = vshrl.u32 %v3858, 7
    %v3860 = vsub.s32 0, %v3859
    %v3861 = vrot.slane %v3857, %v3860
    %v3878 = vunpack.c.l.b16 %v3841
    %v3879 = vunpack.c.l.b16 %v3842
    %v3880 = vunpack.c.l.b16 %v3843
    %v3881 = vunpack.c.l.b16 %v3844
    %v3882 = vunpack.c.l.b16 %v3845
    %v3883 = vunpack.c.l.b16 %v3846
    %v3884 = vunpack.c.l.b16 %v3847
    %v3885 = vunpack.c.l.b16 %v3848
    %v3886 = vunpack.c.l.b16 %v3849
    %v3887 = vunpack.c.l.b16 %v3850
    %v3888 = vunpack.c.l.b16 %v3851
    %v3889 = vunpack.c.l.b16 %v3852
    %v3890 = vunpack.c.l.b16 %v3853
    %v3891 = vunpack.c.l.b16 %v3854
    %v3892 = vunpack.c.l.b16 %v3855
    %v3893 = vunpack.c.l.b16 %v3856
    %v3894 = vpack.c.b16 %v3879, %v3878
    %v3895 = vpack.c.b16 %v3881, %v3880
    %v3896 = vpack.c.b16 %v3883, %v3882
    %v3897 = vpack.c.b16 %v3885, %v3884
    %v3898 = vpack.c.b16 %v3887, %v3886
    %v3899 = vpack.c.b16 %v3889, %v3888
    %v3900 = vpack.c.b16 %v3891, %v3890
    %v3901 = vpack.c.b16 %v3893, %v3892
    %3910 = vmatprep.subr.bf16.mxu0 0
    %3911 = vmatpush1.bf16.msra.mxu0 %v3894
    %3912 = vmatprep.subr.bf16.mxu0 0
    %3913 = vmatpush1.bf16.msra.mxu0 %v3895
    %3914 = vmatprep.subr.bf16.mxu0 0
    %3915 = vmatpush1.bf16.msra.mxu0 %v3896
    %3916 = vmatprep.subr.bf16.mxu0 0
    %3917 = vmatpush1.bf16.msra.mxu0 %v3897
    %3918 = vmatprep.subr.bf16.mxu0 0
    %3919 = vmatpush1.bf16.msra.mxu0 %v3898
    %3920 = vmatprep.subr.bf16.mxu0 0
    %3921 = vmatpush1.bf16.msra.mxu0 %v3899
    %3922 = vmatprep.subr.bf16.mxu0 0
    %3923 = vmatpush1.bf16.msra.mxu0 %v3900
    %3924 = vmatprep.subr.bf16.mxu0 0
    %3925 = vmatpush1.bf16.msra.mxu0 %v3901
    %3926 = vmatprep.subr.bf16.mxu0 0
    %3927 = vmatpush1.bf16.msra.mxu0 0
    %3928 = vmatprep.subr.bf16.mxu0 0
    %3929 = vmatpush1.bf16.msra.mxu0 0
    %3930 = vmatprep.subr.bf16.mxu0 0
    %3931 = vmatpush1.bf16.msra.mxu0 0
    %3932 = vmatprep.subr.bf16.mxu0 0
    %3933 = vmatpush1.bf16.msra.mxu0 0
    %3934 = vmatprep.subr.bf16.mxu0 0
    %3935 = vmatpush1.bf16.msra.mxu0 0
    %3936 = vmatprep.subr.bf16.mxu0 0
    %3937 = vmatpush1.bf16.msra.mxu0 0
    %3938 = vmatprep.subr.bf16.mxu0 0
    %3939 = vmatpush1.bf16.msra.mxu0 0
    %3940 = vmatprep.subr.bf16.mxu0 0
    %3941 = vmatpush1.bf16.msra.mxu0 0
    %3942 = vmatprep.mubr.bf16.mxu0 0
    %3943 = vmatmul.mubr.bf16.gmra.mrb[0].mxu0 %v2838
    %v3944 = vpop.f32.mrb[0].mxu0
    %v3945 = vadd.f32 %v3861, %v3944
    %v3946 = vpop.f32.mrb[0].mxu0
    %v3947 = vpop.f32.mrb[0].mxu0
    %v3948 = vadd.f32 %v3861, %v3947
    %v3949 = vpop.f32.mrb[0].mxu0
    %3950 = vdwg.mxu0
    %3951 = vmatprep.subr.mxu0 0.0
    %3952 = vmatpush1.xpose.msra.mxu0 %v3834
    %3953 = vmatprep.subr.mxu0 0.0
    %3954 = vmatpush1.xpose.msra.mxu0 0.0
    %3955 = vmatprep.subr.mxu0 0.0
    %3956 = vmatpush1.xpose.msra.mxu0 0.0
    %3957 = vmatprep.subr.mxu0 0.0
    %3958 = vmatpush1.xpose.msra.mxu0 0.0
    %3959 = vmatprep.subr.mxu0 0.0
    %3960 = vmatpush1.xpose.msra.mxu0 0.0
    %3961 = vmatprep.subr.mxu0 0.0
    %3962 = vmatpush1.xpose.msra.mxu0 0.0
    %3963 = vmatprep.subr.mxu0 0.0
    %3964 = vmatpush1.xpose.msra.mxu0 0.0
    %3965 = vmatprep.subr.mxu0 0.0
    %3966 = vmatpush1.xpose.msra.mxu0 0.0
    %3967 = vmatprep.subr.mxu0 0.0
    %3968 = vmatpush1.xpose.msra.mxu0 0.0
    %3969 = vmatprep.subr.mxu0 0.0
    %3970 = vmatpush1.xpose.msra.mxu0 0.0
    %3971 = vmatprep.subr.mxu0 0.0
    %3972 = vmatpush1.xpose.msra.mxu0 0.0
    %3973 = vmatprep.subr.mxu0 0.0
    %3974 = vmatpush1.xpose.msra.mxu0 0.0
    %3975 = vmatprep.subr.mxu0 0.0
    %3976 = vmatpush1.xpose.msra.mxu0 0.0
    %3977 = vmatprep.subr.mxu0 0.0
    %3978 = vmatpush1.xpose.msra.mxu0 0.0
    %3979 = vmatprep.subr.mxu0 0.0
    %3980 = vmatpush1.xpose.msra.mxu0 0.0
    %3981 = vmatprep.subr.mxu0 0.0
    %3982 = vmatpush1.xpose.msra.mxu0 0.0
    %3983 = vmatprep.subr.mxu0 0.0
    %3984 = vmatpush1.xpose.msra.mxu0 0.0
    %3985 = vmatprep.subr.mxu0 0.0
    %3986 = vmatpush1.xpose.msra.mxu0 0.0
    %3987 = vmatprep.subr.mxu0 0.0
    %3988 = vmatpush1.xpose.msra.mxu0 0.0
    %3989 = vmatprep.subr.mxu0 0.0
    %3990 = vmatpush1.xpose.msra.mxu0 0.0
    %3991 = vmatprep.subr.mxu0 0.0
    %3992 = vmatpush1.xpose.msra.mxu0 0.0
    %3993 = vmatprep.subr.mxu0 0.0
    %3994 = vmatpush1.xpose.msra.mxu0 0.0
    %3995 = vmatprep.subr.mxu0 0.0
    %3996 = vmatpush1.xpose.msra.mxu0 0.0
    %3997 = vmatprep.subr.mxu0 0.0
    %3998 = vmatpush1.xpose.msra.mxu0 0.0
    %3999 = vmatprep.subr.mxu0 0.0
    %4000 = vmatpush1.xpose.msra.mxu0 0.0
    %4001 = vmatprep.subr.mxu0 0.0
    %4002 = vmatpush1.xpose.msra.mxu0 0.0
    %4003 = vmatprep.subr.mxu0 0.0
    %4004 = vmatpush1.xpose.msra.mxu0 0.0
    %4005 = vmatprep.subr.mxu0 0.0
    %4006 = vmatpush1.xpose.msra.mxu0 0.0
    %4007 = vmatprep.subr.mxu0 0.0
    %4008 = vmatpush1.xpose.msra.mxu0 0.0
    %4009 = vmatprep.subr.mxu0 0.0
    %4010 = vmatpush1.xpose.msra.mxu0 0.0
    %4011 = vmatprep.subr.mxu0 0.0
    %4012 = vmatpush1.xpose.msra.mxu0 0.0
    %4013 = vmatprep.subr.mxu0 0.0
    %4014 = vmatpush1.xpose.msra.mxu0 0.0
    %4015 = vmatprep.mubr.f32.mxu0 0.0
    %4016 = vmatmul.mubr.f32.gmra.mrb[0].mxu0 %v3723
    %v4017 = vpop.f32.mrb[0].mxu0
    %v4018 = vadd.f32 0.0, %v4017
    %v4019 = vpop.f32.mrb[0].mxu0
    %4020 = vdwg.mxu0
    %4021 = vmatprep.subr.mxu0 0.0
    %4022 = vmatpush1.xpose.msra.mxu0 %v3837
    %4023 = vmatprep.subr.mxu0 0.0
    %4024 = vmatpush1.xpose.msra.mxu0 0.0
    %4025 = vmatprep.subr.mxu0 0.0
    %4026 = vmatpush1.xpose.msra.mxu0 0.0
    %4027 = vmatprep.subr.mxu0 0.0
    %4028 = vmatpush1.xpose.msra.mxu0 0.0
    %4029 = vmatprep.subr.mxu0 0.0
    %4030 = vmatpush1.xpose.msra.mxu0 0.0
    %4031 = vmatprep.subr.mxu0 0.0
    %4032 = vmatpush1.xpose.msra.mxu0 0.0
    %4033 = vmatprep.subr.mxu0 0.0
    %4034 = vmatpush1.xpose.msra.mxu0 0.0
    %4035 = vmatprep.subr.mxu0 0.0
    %4036 = vmatpush1.xpose.msra.mxu0 0.0
    %4037 = vmatprep.subr.mxu0 0.0
    %4038 = vmatpush1.xpose.msra.mxu0 0.0
    %4039 = vmatprep.subr.mxu0 0.0
    %4040 = vmatpush1.xpose.msra.mxu0 0.0
    %4041 = vmatprep.subr.mxu0 0.0
    %4042 = vmatpush1.xpose.msra.mxu0 0.0
    %4043 = vmatprep.subr.mxu0 0.0
    %4044 = vmatpush1.xpose.msra.mxu0 0.0
    %4045 = vmatprep.subr.mxu0 0.0
    %4046 = vmatpush1.xpose.msra.mxu0 0.0
    %4047 = vmatprep.subr.mxu0 0.0
    %4048 = vmatpush1.xpose.msra.mxu0 0.0
    %4049 = vmatprep.subr.mxu0 0.0
    %4050 = vmatpush1.xpose.msra.mxu0 0.0
    %4051 = vmatprep.subr.mxu0 0.0
    %4052 = vmatpush1.xpose.msra.mxu0 0.0
    %4053 = vmatprep.subr.mxu0 0.0
    %4054 = vmatpush1.xpose.msra.mxu0 0.0
    %4055 = vmatprep.subr.mxu0 0.0
    %4056 = vmatpush1.xpose.msra.mxu0 0.0
    %4057 = vmatprep.subr.mxu0 0.0
    %4058 = vmatpush1.xpose.msra.mxu0 0.0
    %4059 = vmatprep.subr.mxu0 0.0
    %4060 = vmatpush1.xpose.msra.mxu0 0.0
    %4061 = vmatprep.subr.mxu0 0.0
    %4062 = vmatpush1.xpose.msra.mxu0 0.0
    %4063 = vmatprep.subr.mxu0 0.0
    %4064 = vmatpush1.xpose.msra.mxu0 0.0
    %4065 = vmatprep.subr.mxu0 0.0
    %4066 = vmatpush1.xpose.msra.mxu0 0.0
    %4067 = vmatprep.subr.mxu0 0.0
    %4068 = vmatpush1.xpose.msra.mxu0 0.0
    %4069 = vmatprep.subr.mxu0 0.0
    %4070 = vmatpush1.xpose.msra.mxu0 0.0
    %4071 = vmatprep.subr.mxu0 0.0
    %4072 = vmatpush1.xpose.msra.mxu0 0.0
    %4073 = vmatprep.subr.mxu0 0.0
    %4074 = vmatpush1.xpose.msra.mxu0 0.0
    %4075 = vmatprep.subr.mxu0 0.0
    %4076 = vmatpush1.xpose.msra.mxu0 0.0
    %4077 = vmatprep.subr.mxu0 0.0
    %4078 = vmatpush1.xpose.msra.mxu0 0.0
    %4079 = vmatprep.subr.mxu0 0.0
    %4080 = vmatpush1.xpose.msra.mxu0 0.0
    %4081 = vmatprep.subr.mxu0 0.0
    %4082 = vmatpush1.xpose.msra.mxu0 0.0
    %4083 = vmatprep.subr.mxu0 0.0
    %4084 = vmatpush1.xpose.msra.mxu0 0.0
    %4085 = vmatprep.mubr.f32.mxu0 0.0
    %4086 = vmatmul.mubr.f32.gmra.mrb[0].mxu0 %v3726
    %v4087 = vpop.f32.mrb[0].mxu0
    %v4088 = vadd.f32 0.0, %v4087
    %v4089 = vpop.f32.mrb[0].mxu0
    %4090 = vdwg.mxu0
    %v4091 = vmul.f32 %v4018, 0.15811388
    %v4092 = vmul.f32 %v4088, 0.15811388
    %v4093 = vsel %vm560, %v4091, -inf
    %4094 = vmax.xlane.f32.xlu0 %v4093
    %v4095 = vpop.xlane.xlu0 %4094
    %v4096 = vsel %vm560, %v4092, -inf
    %4097 = vmax.xlane.f32.xlu0 %v4096
    %v4098 = vpop.xlane.xlu0 %4097
    %v4099 = vsub.f32 %v4091, %v4095
    %v4100 = vsub.f32 %v4092, %v4098
    %v4101 = vmul.f32 %v4099, 1.442695
    %v4102 = vpow.pop %v4101
    %v4103 = vmul.f32 %v4100, 1.442695
    %v4104 = vpow.pop %v4103
    %v4105 = vsel %vm560, %v4102, 0.0
    %4106 = vadd.xlane.f32.xlu0 %v4105
    %v4107 = vpop.xlane.xlu0 %4106
    %v4108 = vsel %vm560, %v4104, 0.0
    %4109 = vadd.xlane.f32.xlu0 %v4108
    %v4110 = vpop.xlane.xlu0 %4109
    %v4111 = vrcp.pop %v4107
    %v4112 = vrcp.pop %v4110
    %v4113 = vmul.f32 %v4102, %v4111
    %v4114 = vmul.f32 %v4104, %v4112
    %v4116 = vsel %vm560, %v4113, 0
    %4118 = vmatprep.subr.mxu0 0.0
    %4119 = vmatpush1.msra.mxu0 %v3945
    %4120 = vmatprep.subr.mxu0 0.0
    %4121 = vmatpush1.msra.mxu0 0.0
    %4122 = vmatprep.subr.mxu0 0.0
    %4123 = vmatpush1.msra.mxu0 0.0
    %4124 = vmatprep.subr.mxu0 0.0
    %4125 = vmatpush1.msra.mxu0 0.0
    %4126 = vmatprep.subr.mxu0 0.0
    %4127 = vmatpush1.msra.mxu0 0.0
    %4128 = vmatprep.subr.mxu0 0.0
    %4129 = vmatpush1.msra.mxu0 0.0
    %4130 = vmatprep.subr.mxu0 0.0
    %4131 = vmatpush1.msra.mxu0 0.0
    %4132 = vmatprep.subr.mxu0 0.0
    %4133 = vmatpush1.msra.mxu0 0.0
    %4134 = vmatprep.subr.mxu0 0.0
    %4135 = vmatpush1.msra.mxu0 0.0
    %4136 = vmatprep.subr.mxu0 0.0
    %4137 = vmatpush1.msra.mxu0 0.0
    %4138 = vmatprep.subr.mxu0 0.0
    %4139 = vmatpush1.msra.mxu0 0.0
    %4140 = vmatprep.subr.mxu0 0.0
    %4141 = vmatpush1.msra.mxu0 0.0
    %4142 = vmatprep.subr.mxu0 0.0
    %4143 = vmatpush1.msra.mxu0 0.0
    %4144 = vmatprep.subr.mxu0 0.0
    %4145 = vmatpush1.msra.mxu0 0.0
    %4146 = vmatprep.subr.mxu0 0.0
    %4147 = vmatpush1.msra.mxu0 0.0
    %4148 = vmatprep.subr.mxu0 0.0
    %4149 = vmatpush1.msra.mxu0 0.0
    %4150 = vmatprep.subr.mxu0 0.0
    %4151 = vmatpush1.msra.mxu0 0.0
    %4152 = vmatprep.subr.mxu0 0.0
    %4153 = vmatpush1.msra.mxu0 0.0
    %4154 = vmatprep.subr.mxu0 0.0
    %4155 = vmatpush1.msra.mxu0 0.0
    %4156 = vmatprep.subr.mxu0 0.0
    %4157 = vmatpush1.msra.mxu0 0.0
    %4158 = vmatprep.subr.mxu0 0.0
    %4159 = vmatpush1.msra.mxu0 0.0
    %4160 = vmatprep.subr.mxu0 0.0
    %4161 = vmatpush1.msra.mxu0 0.0
    %4162 = vmatprep.subr.mxu0 0.0
    %4163 = vmatpush1.msra.mxu0 0.0
    %4164 = vmatprep.subr.mxu0 0.0
    %4165 = vmatpush1.msra.mxu0 0.0
    %4166 = vmatprep.subr.mxu0 0.0
    %4167 = vmatpush1.msra.mxu0 0.0
    %4168 = vmatprep.subr.mxu0 0.0
    %4169 = vmatpush1.msra.mxu0 0.0
    %4170 = vmatprep.subr.mxu0 0.0
    %4171 = vmatpush1.msra.mxu0 0.0
    %4172 = vmatprep.subr.mxu0 0.0
    %4173 = vmatpush1.msra.mxu0 0.0
    %4174 = vmatprep.subr.mxu0 0.0
    %4175 = vmatpush1.msra.mxu0 0.0
    %4176 = vmatprep.subr.mxu0 0.0
    %4177 = vmatpush1.msra.mxu0 0.0
    %4178 = vmatprep.subr.mxu0 0.0
    %4179 = vmatpush1.msra.mxu0 0.0
    %4180 = vmatprep.subr.mxu0 0.0
    %4181 = vmatpush1.msra.mxu0 0.0
    %4182 = vmatprep.mubr.f32.mxu0 0.0
    %4183 = vmatmul.mubr.f32.gmra.mrb[0].mxu0 %v4116
    %v4184 = vpop.f32.mrb[0].mxu0
    %v4185 = vadd.f32 0.0, %v4184
    %v4186 = vpop.f32.mrb[0].mxu0
    %4187 = vdwg.mxu0
    %v4189 = vsel %vm560, %v4114, 0
    %4191 = vmatprep.subr.mxu0 0.0
    %4192 = vmatpush1.msra.mxu0 %v3948
    %4193 = vmatprep.subr.mxu0 0.0
    %4194 = vmatpush1.msra.mxu0 0.0
    %4195 = vmatprep.subr.mxu0 0.0
    %4196 = vmatpush1.msra.mxu0 0.0
    %4197 = vmatprep.subr.mxu0 0.0
    %4198 = vmatpush1.msra.mxu0 0.0
    %4199 = vmatprep.subr.mxu0 0.0
    %4200 = vmatpush1.msra.mxu0 0.0
    %4201 = vmatprep.subr.mxu0 0.0
    %4202 = vmatpush1.msra.mxu0 0.0
    %4203 = vmatprep.subr.mxu0 0.0
    %4204 = vmatpush1.msra.mxu0 0.0
    %4205 = vmatprep.subr.mxu0 0.0
    %4206 = vmatpush1.msra.mxu0 0.0
    %4207 = vmatprep.subr.mxu0 0.0
    %4208 = vmatpush1.msra.mxu0 0.0
    %4209 = vmatprep.subr.mxu0 0.0
    %4210 = vmatpush1.msra.mxu0 0.0
    %4211 = vmatprep.subr.mxu0 0.0
    %4212 = vmatpush1.msra.mxu0 0.0
    %4213 = vmatprep.subr.mxu0 0.0
    %4214 = vmatpush1.msra.mxu0 0.0
    %4215 = vmatprep.subr.mxu0 0.0
    %4216 = vmatpush1.msra.mxu0 0.0
    %4217 = vmatprep.subr.mxu0 0.0
    %4218 = vmatpush1.msra.mxu0 0.0
    %4219 = vmatprep.subr.mxu0 0.0
    %4220 = vmatpush1.msra.mxu0 0.0
    %4221 = vmatprep.subr.mxu0 0.0
    %4222 = vmatpush1.msra.mxu0 0.0
    %4223 = vmatprep.subr.mxu0 0.0
    %4224 = vmatpush1.msra.mxu0 0.0
    %4225 = vmatprep.subr.mxu0 0.0
    %4226 = vmatpush1.msra.mxu0 0.0
    %4227 = vmatprep.subr.mxu0 0.0
    %4228 = vmatpush1.msra.mxu0 0.0
    %4229 = vmatprep.subr.mxu0 0.0
    %4230 = vmatpush1.msra.mxu0 0.0
    %4231 = vmatprep.subr.mxu0 0.0
    %4232 = vmatpush1.msra.mxu0 0.0
    %4233 = vmatprep.subr.mxu0 0.0
    %4234 = vmatpush1.msra.mxu0 0.0
    %4235 = vmatprep.subr.mxu0 0.0
    %4236 = vmatpush1.msra.mxu0 0.0
    %4237 = vmatprep.subr.mxu0 0.0
    %4238 = vmatpush1.msra.mxu0 0.0
    %4239 = vmatprep.subr.mxu0 0.0
    %4240 = vmatpush1.msra.mxu0 0.0
    %4241 = vmatprep.subr.mxu0 0.0
    %4242 = vmatpush1.msra.mxu0 0.0
    %4243 = vmatprep.subr.mxu0 0.0
    %4244 = vmatpush1.msra.mxu0 0.0
    %4245 = vmatprep.subr.mxu0 0.0
    %4246 = vmatpush1.msra.mxu0 0.0
    %4247 = vmatprep.subr.mxu0 0.0
    %4248 = vmatpush1.msra.mxu0 0.0
    %4249 = vmatprep.subr.mxu0 0.0
    %4250 = vmatpush1.msra.mxu0 0.0
    %4251 = vmatprep.subr.mxu0 0.0
    %4252 = vmatpush1.msra.mxu0 0.0
    %4253 = vmatprep.subr.mxu0 0.0
    %4254 = vmatpush1.msra.mxu0 0.0
    %4255 = vmatprep.mubr.f32.mxu0 0.0
    %4256 = vmatmul.mubr.f32.gmra.mrb[0].mxu0 %v4189
    %v4257 = vpop.f32.mrb[0].mxu0
    %v4258 = vadd.f32 0.0, %v4257
    %v4259 = vpop.f32.mrb[0].mxu0
    %4260 = vdwg.mxu0
    %s4261 = scalar_lea.vmem [#allocation2], 960
    %v4262 = vld [vmem:[%s4261] sm:$0xf]
    %v4263 = vld [vmem:[%s4261 + $0x4] sm:$0xf]
    %v4264 = vld [vmem:[%s4261 + $0x8] sm:$0xf]
    %v4265 = vld [vmem:[%s4261 + $0xc] sm:$0xf]
    %v4266 = vld [vmem:[%s4261 + $0x10] sm:$0xf]
    %v4267 = vld [vmem:[%s4261 + $0x14] sm:$0xf]
    %v4268 = vld [vmem:[%s4261 + $0x18] sm:$0xf]
    %v4269 = vld [vmem:[%s4261 + $0x1c] sm:$0xf]
    %v4270 = vld [vmem:[%s4261 + $0x20] sm:$0xf]
    %v4271 = vld [vmem:[%s4261 + $0x24] sm:$0xf]
    %v4272 = vld [vmem:[%s4261 + $0x28] sm:$0xf]
    %v4273 = vld [vmem:[%s4261 + $0x2c] sm:$0xf]
    %v4274 = vld [vmem:[%s4261 + $0x30] sm:$0xf]
    %v4275 = vld [vmem:[%s4261 + $0x34] sm:$0xf]
    %v4276 = vld [vmem:[%s4261 + $0x38] sm:$0xf]
    %v4277 = vld [vmem:[%s4261 + $0x3c] sm:$0xf]
    %v4278 = vpack.c.bf16 %v4258, %v4185
    %v4279 = vld [vmem:[%s6 + $0x19] sm:$0x1]
    %v4280 = vlaneseq
    %v4281 = vshrl.u32 %v4280, 7
    %v4282 = vsub.s32 0, %v4281
    %v4283 = vrot.slane %v4279, %v4282
    %v4300 = vunpack.c.l.b16 %v4262
    %v4301 = vunpack.c.l.b16 %v4263
    %v4302 = vunpack.c.l.b16 %v4264
    %v4303 = vunpack.c.l.b16 %v4265
    %v4304 = vunpack.c.l.b16 %v4266
    %v4305 = vunpack.c.l.b16 %v4267
    %v4306 = vunpack.c.l.b16 %v4268
    %v4307 = vunpack.c.l.b16 %v4269
    %v4308 = vunpack.c.l.b16 %v4270
    %v4309 = vunpack.c.l.b16 %v4271
    %v4310 = vunpack.c.l.b16 %v4272
    %v4311 = vunpack.c.l.b16 %v4273
    %v4312 = vunpack.c.l.b16 %v4274
    %v4313 = vunpack.c.l.b16 %v4275
    %v4314 = vunpack.c.l.b16 %v4276
    %v4315 = vunpack.c.l.b16 %v4277
    %v4316 = vpack.c.b16 %v4301, %v4300
    %v4317 = vpack.c.b16 %v4303, %v4302
    %v4318 = vpack.c.b16 %v4305, %v4304
    %v4319 = vpack.c.b16 %v4307, %v4306
    %v4320 = vpack.c.b16 %v4309, %v4308
    %v4321 = vpack.c.b16 %v4311, %v4310
    %v4322 = vpack.c.b16 %v4313, %v4312
    %v4323 = vpack.c.b16 %v4315, %v4314
    %4332 = vmatprep.subr.bf16.mxu0 0
    %4333 = vmatpush1.bf16.msra.mxu0 %v4316
    %4334 = vmatprep.subr.bf16.mxu0 0
    %4335 = vmatpush1.bf16.msra.mxu0 %v4317
    %4336 = vmatprep.subr.bf16.mxu0 0
    %4337 = vmatpush1.bf16.msra.mxu0 %v4318
    %4338 = vmatprep.subr.bf16.mxu0 0
    %4339 = vmatpush1.bf16.msra.mxu0 %v4319
    %4340 = vmatprep.subr.bf16.mxu0 0
    %4341 = vmatpush1.bf16.msra.mxu0 %v4320
    %4342 = vmatprep.subr.bf16.mxu0 0
    %4343 = vmatpush1.bf16.msra.mxu0 %v4321
    %4344 = vmatprep.subr.bf16.mxu0 0
    %4345 = vmatpush1.bf16.msra.mxu0 %v4322
    %4346 = vmatprep.subr.bf16.mxu0 0
    %4347 = vmatpush1.bf16.msra.mxu0 %v4323
    %4348 = vmatprep.subr.bf16.mxu0 0
    %4349 = vmatpush1.bf16.msra.mxu0 0
    %4350 = vmatprep.subr.bf16.mxu0 0
    %4351 = vmatpush1.bf16.msra.mxu0 0
    %4352 = vmatprep.subr.bf16.mxu0 0
    %4353 = vmatpush1.bf16.msra.mxu0 0
    %4354 = vmatprep.subr.bf16.mxu0 0
    %4355 = vmatpush1.bf16.msra.mxu0 0
    %4356 = vmatprep.subr.bf16.mxu0 0
    %4357 = vmatpush1.bf16.msra.mxu0 0
    %4358 = vmatprep.subr.bf16.mxu0 0
    %4359 = vmatpush1.bf16.msra.mxu0 0
    %4360 = vmatprep.subr.bf16.mxu0 0
    %4361 = vmatpush1.bf16.msra.mxu0 0
    %4362 = vmatprep.subr.bf16.mxu0 0
    %4363 = vmatpush1.bf16.msra.mxu0 0
    %4364 = vmatprep.mubr.bf16.mxu0 0
    %4365 = vmatmul.mubr.bf16.gmra.mrb[0].mxu0 %v4278
    %v4366 = vpop.f32.mrb[0].mxu0
    %v4367 = vadd.f32 %v4283, %v4366
    %v4368 = vpop.f32.mrb[0].mxu0
    %v4369 = vpop.f32.mrb[0].mxu0
    %v4370 = vadd.f32 %v4283, %v4369
    %v4371 = vpop.f32.mrb[0].mxu0
    %4372 = vdwg.mxu0
    %v4373 = vadd.f32 %v3615, %v4367
    %v4374 = vadd.f32 %v3616, %v4370
    %v4375 = vld [vmem:[%s6 + $0x1d] sm:$0x1]
    %v4376 = vld [vmem:[%s6 + $0x1e] sm:$0x1]
    %4377 = vadd.xlane.f32.xlu0 %v4373
    %v4378 = vpop.xlane.xlu0 %4377
    %4379 = vadd.xlane.f32.xlu0 %v4374
    %v4380 = vpop.xlane.xlu0 %4379
    %v4381 = vmul.f32 %v4378, 0.025
    %v4382 = vmul.f32 %v4380, 0.025
    %v4383 = vsub.f32 %v4373, %v4381
    %v4384 = vsub.f32 %v4374, %v4382
    %v4385 = vmul.f32 %v4383, %v79
    %v4386 = vmul.f32 %v4384, %v79
    %v4387 = vmul.f32 %v4385, %v4385
    %v4388 = vmul.f32 %v4386, %v4386
    %4389 = vadd.xlane.f32.xlu0 %v4387
    %v4390 = vpop.xlane.xlu0 %4389
    %4391 = vadd.xlane.f32.xlu0 %v4388
    %v4392 = vpop.xlane.xlu0 %4391
    %v4393 = vmul.f32 %v4390, 0.025
    %v4394 = vmul.f32 %v4392, 0.025
    %v4395 = vadd.f32 %v4393, 1e-05
    %v4396 = vadd.f32 %v4394, 1e-05
    %v4397 = vrsqrt.pop %v4395
    %v4398 = vrsqrt.pop %v4396
    %v4399 = vmul.f32 %v4385, %v4397
    %v4400 = vmul.f32 %v4386, %v4398
    %v4401 = vlaneseq
    %v4402 = vshrl.u32 %v4401, 7
    %v4403 = vsub.s32 0, %v4402
    %v4404 = vrot.slane %v4375, %v4403
    %v4405 = vmul.f32 %v4399, %v4404
    %v4406 = vmul.f32 %v4400, %v4404
    %v4407 = vlaneseq
    %v4408 = vshrl.u32 %v4407, 7
    %v4409 = vsub.s32 0, %v4408
    %v4410 = vrot.slane %v4376, %v4409
    %v4411 = vadd.f32 %v4405, %v4410
    %v4412 = vadd.f32 %v4406, %v4410
    %v4413 = vld [vmem:[%s6 + $0x1a] sm:$0x1]
    %s4414 = scalar_lea.vmem [#allocation5], 256
    %v4415 = vld [vmem:[%s4414] sm:$0xff]
    %v4416 = vld [vmem:[%s4414 + $0x8] sm:$0xff]
    %v4417 = vld [vmem:[%s4414 + $0x10] sm:$0xff]
    %v4418 = vld [vmem:[%s4414 + $0x18] sm:$0xff]
    %v4419 = vld [vmem:[%s4414 + $0x20] sm:$0xff]
    %v4420 = vld [vmem:[%s4414 + $0x28] sm:$0xff]
    %v4421 = vld [vmem:[%s4414 + $0x30] sm:$0xff]
    %v4422 = vld [vmem:[%s4414 + $0x38] sm:$0xff]
    %v4423 = vld [vmem:[%s4414 + $0x40] sm:$0xff]
    %v4424 = vld [vmem:[%s4414 + $0x48] sm:$0xff]
    %v4425 = vld [vmem:[%s4414 + $0x50] sm:$0xff]
    %v4426 = vld [vmem:[%s4414 + $0x58] sm:$0xff]
    %v4427 = vld [vmem:[%s4414 + $0x60] sm:$0xff]
    %v4428 = vld [vmem:[%s4414 + $0x68] sm:$0xff]
    %v4429 = vld [vmem:[%s4414 + $0x70] sm:$0xff]
    %v4430 = vld [vmem:[%s4414 + $0x78] sm:$0xff]
    %v4431 = vpack.c.bf16 %v4412, %v4411
    %s4432 = scalar_lea.vmem %s5, 2
    %v4433 = vld [vmem:[%s4432] ss:$4 sm:$0x3]
    %v4435 = vlaneseq
    %v4436 = vshrl.u32 %v4435, 7
    %v4437 = vsub.s32 0, %v4436
    %v4438 = vrot.slane %v4433, %v4437
    %v4439 = vlaneseq
    %v4440 = vshrl.u32 %v4439, 7
    %v4441 = vsub.s32 1, %v4440
    %v4442 = vrot.slane %v4433, %v4441
    %v4461 = vunpack.c.l.b16 %v4415
    %v4462 = vunpack.c.h.b16 %v4415
    %v4463 = vunpack.c.l.b16 %v4416
    %v4464 = vunpack.c.h.b16 %v4416
    %v4465 = vunpack.c.l.b16 %v4417
    %v4466 = vunpack.c.h.b16 %v4417
    %v4467 = vunpack.c.l.b16 %v4418
    %v4468 = vunpack.c.h.b16 %v4418
    %v4469 = vunpack.c.l.b16 %v4419
    %v4470 = vunpack.c.h.b16 %v4419
    %v4471 = vunpack.c.l.b16 %v4420
    %v4472 = vunpack.c.h.b16 %v4420
    %v4473 = vunpack.c.l.b16 %v4421
    %v4474 = vunpack.c.h.b16 %v4421
    %v4475 = vunpack.c.l.b16 %v4422
    %v4476 = vunpack.c.h.b16 %v4422
    %v4477 = vunpack.c.l.b16 %v4423
    %v4478 = vunpack.c.h.b16 %v4423
    %v4479 = vunpack.c.l.b16 %v4424
    %v4480 = vunpack.c.h.b16 %v4424
    %v4481 = vunpack.c.l.b16 %v4425
    %v4482 = vunpack.c.h.b16 %v4425
    %v4483 = vunpack.c.l.b16 %v4426
    %v4484 = vunpack.c.h.b16 %v4426
    %v4485 = vunpack.c.l.b16 %v4427
    %v4486 = vunpack.c.h.b16 %v4427
    %v4487 = vunpack.c.l.b16 %v4428
    %v4488 = vunpack.c.h.b16 %v4428
    %v4489 = vunpack.c.l.b16 %v4429
    %v4490 = vunpack.c.h.b16 %v4429
    %v4491 = vunpack.c.l.b16 %v4430
    %v4492 = vunpack.c.h.b16 %v4430
    %v4493 = vpack.c.b16 %v4463, %v4461
    %v4494 = vpack.c.b16 %v4464, %v4462
    %v4495 = vpack.c.b16 %v4467, %v4465
    %v4496 = vpack.c.b16 %v4468, %v4466
    %v4497 = vpack.c.b16 %v4471, %v4469
    %v4498 = vpack.c.b16 %v4472, %v4470
    %v4499 = vpack.c.b16 %v4475, %v4473
    %v4500 = vpack.c.b16 %v4476, %v4474
    %v4501 = vpack.c.b16 %v4479, %v4477
    %v4502 = vpack.c.b16 %v4480, %v4478
    %v4503 = vpack.c.b16 %v4483, %v4481
    %v4504 = vpack.c.b16 %v4484, %v4482
    %v4505 = vpack.c.b16 %v4487, %v4485
    %v4506 = vpack.c.b16 %v4488, %v4486
    %v4507 = vpack.c.b16 %v4491, %v4489
    %v4508 = vpack.c.b16 %v4492, %v4490
    %4525 = vmatprep.subr.bf16.mxu0 %v4494
    %4526 = vmatpush1.bf16.msra.mxu0 %v4493
    %4527 = vmatprep.subr.bf16.mxu0 %v4496
    %4528 = vmatpush1.bf16.msra.mxu0 %v4495
    %4529 = vmatprep.subr.bf16.mxu0 %v4498
    %4530 = vmatpush1.bf16.msra.mxu0 %v4497
    %4531 = vmatprep.subr.bf16.mxu0 %v4500
    %4532 = vmatpush1.bf16.msra.mxu0 %v4499
    %4533 = vmatprep.subr.bf16.mxu0 %v4502
    %4534 = vmatpush1.bf16.msra.mxu0 %v4501
    %4535 = vmatprep.subr.bf16.mxu0 %v4504
    %4536 = vmatpush1.bf16.msra.mxu0 %v4503
    %4537 = vmatprep.subr.bf16.mxu0 %v4506
    %4538 = vmatpush1.bf16.msra.mxu0 %v4505
    %4539 = vmatprep.subr.bf16.mxu0 %v4508
    %4540 = vmatpush1.bf16.msra.mxu0 %v4507
    %4541 = vmatprep.subr.bf16.mxu0 0
    %4542 = vmatpush1.bf16.msra.mxu0 0
    %4543 = vmatprep.subr.bf16.mxu0 0
    %4544 = vmatpush1.bf16.msra.mxu0 0
    %4545 = vmatprep.subr.bf16.mxu0 0
    %4546 = vmatpush1.bf16.msra.mxu0 0
    %4547 = vmatprep.subr.bf16.mxu0 0
    %4548 = vmatpush1.bf16.msra.mxu0 0
    %4549 = vmatprep.subr.bf16.mxu0 0
    %4550 = vmatpush1.bf16.msra.mxu0 0
    %4551 = vmatprep.subr.bf16.mxu0 0
    %4552 = vmatpush1.bf16.msra.mxu0 0
    %4553 = vmatprep.subr.bf16.mxu0 0
    %4554 = vmatpush1.bf16.msra.mxu0 0
    %4555 = vmatprep.subr.bf16.mxu0 0
    %4556 = vmatpush1.bf16.msra.mxu0 0
    %4557 = vmatprep.mubr.bf16.mxu0 0
    %4558 = vmatmul.mubr.bf16.gmra.mrb[0].mxu0 %v4431
    %v4559 = vpop.f32.mrb[0].mxu0
    %v4560 = vadd.f32 %v4438, %v4559
    %v4561 = vpop.f32.mrb[0].mxu0
    %v4562 = vadd.f32 %v4442, %v4561
    %v4563 = vpop.f32.mrb[0].mxu0
    %v4564 = vadd.f32 %v4438, %v4563
    %v4565 = vpop.f32.mrb[0].mxu0
    %v4566 = vadd.f32 %v4442, %v4565
    %4567 = vdwg.mxu0
    %v4568 = vmax.f32 %v4560, 0.0
    %v4569 = vmax.f32 %v4562, 0.0
    %v4570 = vmax.f32 %v4564, 0.0
    %v4571 = vmax.f32 %v4566, 0.0
    %s4572 = scalar_lea.vmem [#allocation7], 256
    %v4573 = vld [vmem:[%s4572] sm:$0xf]
    %v4574 = vld [vmem:[%s4572 + $0x4] sm:$0xf]
    %v4575 = vld [vmem:[%s4572 + $0x8] sm:$0xf]
    %v4576 = vld [vmem:[%s4572 + $0xc] sm:$0xf]
    %v4577 = vld [vmem:[%s4572 + $0x10] sm:$0xf]
    %v4578 = vld [vmem:[%s4572 + $0x14] sm:$0xf]
    %v4579 = vld [vmem:[%s4572 + $0x18] sm:$0xf]
    %v4580 = vld [vmem:[%s4572 + $0x1c] sm:$0xf]
    %v4581 = vld [vmem:[%s4572 + $0x20] sm:$0xf]
    %v4582 = vld [vmem:[%s4572 + $0x24] sm:$0xf]
    %v4583 = vld [vmem:[%s4572 + $0x28] sm:$0xf]
    %v4584 = vld [vmem:[%s4572 + $0x2c] sm:$0xf]
    %v4585 = vld [vmem:[%s4572 + $0x30] sm:$0xf]
    %v4586 = vld [vmem:[%s4572 + $0x34] sm:$0xf]
    %v4587 = vld [vmem:[%s4572 + $0x38] sm:$0xf]
    %v4588 = vld [vmem:[%s4572 + $0x3c] sm:$0xf]
    %v4589 = vld [vmem:[%s4572 + $0x40] sm:$0xf]
    %v4590 = vld [vmem:[%s4572 + $0x44] sm:$0xf]
    %v4591 = vld [vmem:[%s4572 + $0x48] sm:$0xf]
    %v4592 = vld [vmem:[%s4572 + $0x4c] sm:$0xf]
    %v4593 = vld [vmem:[%s4572 + $0x50] sm:$0xf]
    %v4594 = vld [vmem:[%s4572 + $0x54] sm:$0xf]
    %v4595 = vld [vmem:[%s4572 + $0x58] sm:$0xf]
    %v4596 = vld [vmem:[%s4572 + $0x5c] sm:$0xf]
    %v4597 = vld [vmem:[%s4572 + $0x60] sm:$0xf]
    %v4598 = vld [vmem:[%s4572 + $0x64] sm:$0xf]
    %v4599 = vld [vmem:[%s4572 + $0x68] sm:$0xf]
    %v4600 = vld [vmem:[%s4572 + $0x6c] sm:$0xf]
    %v4601 = vld [vmem:[%s4572 + $0x70] sm:$0xf]
    %v4602 = vld [vmem:[%s4572 + $0x74] sm:$0xf]
    %v4603 = vld [vmem:[%s4572 + $0x78] sm:$0xf]
    %v4604 = vld [vmem:[%s4572 + $0x7c] sm:$0xf]
    %v4605 = vpack.c.bf16 %v4570, %v4568
    %v4606 = vpack.c.bf16 %v4571, %v4569
    %v4607 = vlaneseq
    %v4608 = vshrl.u32 %v4607, 7
    %v4609 = vsub.s32 0, %v4608
    %v4610 = vrot.slane %v4413, %v4609
    %v4643 = vunpack.c.l.b16 %v4573
    %v4644 = vunpack.c.l.b16 %v4574
    %v4645 = vunpack.c.l.b16 %v4575
    %v4646 = vunpack.c.l.b16 %v4576
    %v4647 = vunpack.c.l.b16 %v4577
    %v4648 = vunpack.c.l.b16 %v4578
    %v4649 = vunpack.c.l.b16 %v4579
    %v4650 = vunpack.c.l.b16 %v4580
    %v4651 = vunpack.c.l.b16 %v4581
    %v4652 = vunpack.c.l.b16 %v4582
    %v4653 = vunpack.c.l.b16 %v4583
    %v4654 = vunpack.c.l.b16 %v4584
    %v4655 = vunpack.c.l.b16 %v4585
    %v4656 = vunpack.c.l.b16 %v4586
    %v4657 = vunpack.c.l.b16 %v4587
    %v4658 = vunpack.c.l.b16 %v4588
    %v4659 = vunpack.c.l.b16 %v4589
    %v4660 = vunpack.c.l.b16 %v4590
    %v4661 = vunpack.c.l.b16 %v4591
    %v4662 = vunpack.c.l.b16 %v4592
    %v4663 = vunpack.c.l.b16 %v4593
    %v4664 = vunpack.c.l.b16 %v4594
    %v4665 = vunpack.c.l.b16 %v4595
    %v4666 = vunpack.c.l.b16 %v4596
    %v4667 = vunpack.c.l.b16 %v4597
    %v4668 = vunpack.c.l.b16 %v4598
    %v4669 = vunpack.c.l.b16 %v4599
    %v4670 = vunpack.c.l.b16 %v4600
    %v4671 = vunpack.c.l.b16 %v4601
    %v4672 = vunpack.c.l.b16 %v4602
    %v4673 = vunpack.c.l.b16 %v4603
    %v4674 = vunpack.c.l.b16 %v4604
    %v4675 = vpack.c.b16 %v4644, %v4643
    %v4676 = vpack.c.b16 %v4646, %v4645
    %v4677 = vpack.c.b16 %v4648, %v4647
    %v4678 = vpack.c.b16 %v4650, %v4649
    %v4679 = vpack.c.b16 %v4652, %v4651
    %v4680 = vpack.c.b16 %v4654, %v4653
    %v4681 = vpack.c.b16 %v4656, %v4655
    %v4682 = vpack.c.b16 %v4658, %v4657
    %v4683 = vpack.c.b16 %v4660, %v4659
    %v4684 = vpack.c.b16 %v4662, %v4661
    %v4685 = vpack.c.b16 %v4664, %v4663
    %v4686 = vpack.c.b16 %v4666, %v4665
    %v4687 = vpack.c.b16 %v4668, %v4667
    %v4688 = vpack.c.b16 %v4670, %v4669
    %v4689 = vpack.c.b16 %v4672, %v4671
    %v4690 = vpack.c.b16 %v4674, %v4673
    %4707 = vmatprep.subr.bf16.mxu0 0
    %4708 = vmatpush1.bf16.msra.mxu0 %v4675
    %4709 = vmatprep.subr.bf16.mxu0 0
    %4710 = vmatpush1.bf16.msra.mxu0 %v4676
    %4711 = vmatprep.subr.bf16.mxu0 0
    %4712 = vmatpush1.bf16.msra.mxu0 %v4677
    %4713 = vmatprep.subr.bf16.mxu0 0
    %4714 = vmatpush1.bf16.msra.mxu0 %v4678
    %4715 = vmatprep.subr.bf16.mxu0 0
    %4716 = vmatpush1.bf16.msra.mxu0 %v4679
    %4717 = vmatprep.subr.bf16.mxu0 0
    %4718 = vmatpush1.bf16.msra.mxu0 %v4680
    %4719 = vmatprep.subr.bf16.mxu0 0
    %4720 = vmatpush1.bf16.msra.mxu0 %v4681
    %4721 = vmatprep.subr.bf16.mxu0 0
    %4722 = vmatpush1.bf16.msra.mxu0 %v4682
    %4723 = vmatprep.subr.bf16.mxu0 0
    %4724 = vmatpush1.bf16.msra.mxu0 %v4683
    %4725 = vmatprep.subr.bf16.mxu0 0
    %4726 = vmatpush1.bf16.msra.mxu0 %v4684
    %4727 = vmatprep.subr.bf16.mxu0 0
    %4728 = vmatpush1.bf16.msra.mxu0 %v4685
    %4729 = vmatprep.subr.bf16.mxu0 0
    %4730 = vmatpush1.bf16.msra.mxu0 %v4686
    %4731 = vmatprep.subr.bf16.mxu0 0
    %4732 = vmatpush1.bf16.msra.mxu0 %v4687
    %4733 = vmatprep.subr.bf16.mxu0 0
    %4734 = vmatpush1.bf16.msra.mxu0 %v4688
    %4735 = vmatprep.subr.bf16.mxu0 0
    %4736 = vmatpush1.bf16.msra.mxu0 %v4689
    %4737 = vmatprep.subr.bf16.mxu0 0
    %4738 = vmatpush1.bf16.msra.mxu0 %v4690
    %4739 = vmatprep.mubr.bf16.mxu0 %v4606
    %4740 = vmatmul.mubr.bf16.gmra.mrb[0].mxu0 %v4605
    %v4741 = vpop.f32.mrb[0].mxu0
    %v4742 = vadd.f32 %v4610, %v4741
    %v4743 = vpop.f32.mrb[0].mxu0
    %v4744 = vpop.f32.mrb[0].mxu0
    %v4745 = vadd.f32 %v4610, %v4744
    %v4746 = vpop.f32.mrb[0].mxu0
    %4747 = vdwg.mxu0
    %v4748 = vadd.f32 %v4411, %v4742
    %v4749 = vadd.f32 %v4412, %v4745
    %v4750 = vld [vmem:[%s6 + $0x1f] sm:$0x1]
    %v4751 = vld [vmem:[%s6 + $0x20] sm:$0x1]
    %4752 = vadd.xlane.f32.xlu0 %v4748
    %v4753 = vpop.xlane.xlu0 %4752
    %4754 = vadd.xlane.f32.xlu0 %v4749
    %v4755 = vpop.xlane.xlu0 %4754
    %v4756 = vmul.f32 %v4753, 0.025
    %v4757 = vmul.f32 %v4755, 0.025
    %v4758 = vsub.f32 %v4748, %v4756
    %v4759 = vsub.f32 %v4749, %v4757
    %v4760 = vmul.f32 %v4758, %v79
    %v4761 = vmul.f32 %v4759, %v79
    %v4762 = vmul.f32 %v4760, %v4760
    %v4763 = vmul.f32 %v4761, %v4761
    %4764 = vadd.xlane.f32.xlu0 %v4762
    %v4765 = vpop.xlane.xlu0 %4764
    %4766 = vadd.xlane.f32.xlu0 %v4763
    %v4767 = vpop.xlane.xlu0 %4766
    %v4768 = vmul.f32 %v4765, 0.025
    %v4769 = vmul.f32 %v4767, 0.025
    %v4770 = vadd.f32 %v4768, 1e-05
    %v4771 = vadd.f32 %v4769, 1e-05
    %v4772 = vrsqrt.pop %v4770
    %v4773 = vrsqrt.pop %v4771
    %v4774 = vmul.f32 %v4760, %v4772
    %v4775 = vmul.f32 %v4761, %v4773
    %v4776 = vlaneseq
    %v4777 = vshrl.u32 %v4776, 7
    %v4778 = vsub.s32 0, %v4777
    %v4779 = vrot.slane %v4750, %v4778
    %v4780 = vmul.f32 %v4774, %v4779
    %v4781 = vmul.f32 %v4775, %v4779
    %v4782 = vlaneseq
    %v4783 = vshrl.u32 %v4782, 7
    %v4784 = vsub.s32 0, %v4783
    %v4785 = vrot.slane %v4751, %v4784
    %v4786 = vadd.f32 %v4780, %v4785
    %v4787 = vadd.f32 %v4781, %v4785
    %s4788 = scalar_lea.vmem [#allocation2], 1024
    %v4789 = vld [vmem:[%s4788] sm:$0xf]
    %v4790 = vld [vmem:[%s4788 + $0x4] sm:$0xf]
    %v4791 = vld [vmem:[%s4788 + $0x8] sm:$0xf]
    %v4792 = vld [vmem:[%s4788 + $0xc] sm:$0xf]
    %v4793 = vld [vmem:[%s4788 + $0x10] sm:$0xf]
    %v4794 = vld [vmem:[%s4788 + $0x14] sm:$0xf]
    %v4795 = vld [vmem:[%s4788 + $0x18] sm:$0xf]
    %v4796 = vld [vmem:[%s4788 + $0x1c] sm:$0xf]
    %v4797 = vld [vmem:[%s4788 + $0x20] sm:$0xf]
    %v4798 = vld [vmem:[%s4788 + $0x24] sm:$0xf]
    %v4799 = vld [vmem:[%s4788 + $0x28] sm:$0xf]
    %v4800 = vld [vmem:[%s4788 + $0x2c] sm:$0xf]
    %v4801 = vld [vmem:[%s4788 + $0x30] sm:$0xf]
    %v4802 = vld [vmem:[%s4788 + $0x34] sm:$0xf]
    %v4803 = vld [vmem:[%s4788 + $0x38] sm:$0xf]
    %v4804 = vld [vmem:[%s4788 + $0x3c] sm:$0xf]
    %v4805 = vpack.c.bf16 %v4787, %v4786
    %v4806 = vld [vmem:[%s6 + $0x21] sm:$0x1]
    %v4807 = vlaneseq
    %v4808 = vshrl.u32 %v4807, 7
    %v4809 = vsub.s32 0, %v4808
    %v4810 = vrot.slane %v4806, %v4809
    %v4827 = vunpack.c.l.b16 %v4789
    %v4828 = vunpack.c.l.b16 %v4790
    %v4829 = vunpack.c.l.b16 %v4791
    %v4830 = vunpack.c.l.b16 %v4792
    %v4831 = vunpack.c.l.b16 %v4793
    %v4832 = vunpack.c.l.b16 %v4794
    %v4833 = vunpack.c.l.b16 %v4795
    %v4834 = vunpack.c.l.b16 %v4796
    %v4835 = vunpack.c.l.b16 %v4797
    %v4836 = vunpack.c.l.b16 %v4798
    %v4837 = vunpack.c.l.b16 %v4799
    %v4838 = vunpack.c.l.b16 %v4800
    %v4839 = vunpack.c.l.b16 %v4801
    %v4840 = vunpack.c.l.b16 %v4802
    %v4841 = vunpack.c.l.b16 %v4803
    %v4842 = vunpack.c.l.b16 %v4804
    %v4843 = vpack.c.b16 %v4828, %v4827
    %v4844 = vpack.c.b16 %v4830, %v4829
    %v4845 = vpack.c.b16 %v4832, %v4831
    %v4846 = vpack.c.b16 %v4834, %v4833
    %v4847 = vpack.c.b16 %v4836, %v4835
    %v4848 = vpack.c.b16 %v4838, %v4837
    %v4849 = vpack.c.b16 %v4840, %v4839
    %v4850 = vpack.c.b16 %v4842, %v4841
    %4859 = vmatprep.subr.bf16.mxu0 0
    %4860 = vmatpush1.bf16.msra.mxu0 %v4843
    %4861 = vmatprep.subr.bf16.mxu0 0
    %4862 = vmatpush1.bf16.msra.mxu0 %v4844
    %4863 = vmatprep.subr.bf16.mxu0 0
    %4864 = vmatpush1.bf16.msra.mxu0 %v4845
    %4865 = vmatprep.subr.bf16.mxu0 0
    %4866 = vmatpush1.bf16.msra.mxu0 %v4846
    %4867 = vmatprep.subr.bf16.mxu0 0
    %4868 = vmatpush1.bf16.msra.mxu0 %v4847
    %4869 = vmatprep.subr.bf16.mxu0 0
    %4870 = vmatpush1.bf16.msra.mxu0 %v4848
    %4871 = vmatprep.subr.bf16.mxu0 0
    %4872 = vmatpush1.bf16.msra.mxu0 %v4849
    %4873 = vmatprep.subr.bf16.mxu0 0
    %4874 = vmatpush1.bf16.msra.mxu0 %v4850
    %4875 = vmatprep.subr.bf16.mxu0 0
    %4876 = vmatpush1.bf16.msra.mxu0 0
    %4877 = vmatprep.subr.bf16.mxu0 0
    %4878 = vmatpush1.bf16.msra.mxu0 0
    %4879 = vmatprep.subr.bf16.mxu0 0
    %4880 = vmatpush1.bf16.msra.mxu0 0
    %4881 = vmatprep.subr.bf16.mxu0 0
    %4882 = vmatpush1.bf16.msra.mxu0 0
    %4883 = vmatprep.subr.bf16.mxu0 0
    %4884 = vmatpush1.bf16.msra.mxu0 0
    %4885 = vmatprep.subr.bf16.mxu0 0
    %4886 = vmatpush1.bf16.msra.mxu0 0
    %4887 = vmatprep.subr.bf16.mxu0 0
    %4888 = vmatpush1.bf16.msra.mxu0 0
    %4889 = vmatprep.subr.bf16.mxu0 0
    %4890 = vmatpush1.bf16.msra.mxu0 0
    %4891 = vmatprep.mubr.bf16.mxu0 0
    %4892 = vmatmul.mubr.bf16.gmra.mrb[0].mxu0 %v4805
    %v4893 = vpop.f32.mrb[0].mxu0
    %v4894 = vadd.f32 %v4810, %v4893
    %v4895 = vpop.f32.mrb[0].mxu0
    %v4896 = vpop.f32.mrb[0].mxu0
    %v4897 = vadd.f32 %v4810, %v4896
    %v4898 = vpop.f32.mrb[0].mxu0
    %4899 = vdwg.mxu0
    %s4900 = scalar_lea.vmem [#allocation2], 1088
    %v4901 = vld [vmem:[%s4900] sm:$0xf]
    %v4902 = vld [vmem:[%s4900 + $0x4] sm:$0xf]
    %v4903 = vld [vmem:[%s4900 + $0x8] sm:$0xf]
    %v4904 = vld [vmem:[%s4900 + $0xc] sm:$0xf]
    %v4905 = vld [vmem:[%s4900 + $0x10] sm:$0xf]
    %v4906 = vld [vmem:[%s4900 + $0x14] sm:$0xf]
    %v4907 = vld [vmem:[%s4900 + $0x18] sm:$0xf]
    %v4908 = vld [vmem:[%s4900 + $0x1c] sm:$0xf]
    %v4909 = vld [vmem:[%s4900 + $0x20] sm:$0xf]
    %v4910 = vld [vmem:[%s4900 + $0x24] sm:$0xf]
    %v4911 = vld [vmem:[%s4900 + $0x28] sm:$0xf]
    %v4912 = vld [vmem:[%s4900 + $0x2c] sm:$0xf]
    %v4913 = vld [vmem:[%s4900 + $0x30] sm:$0xf]
    %v4914 = vld [vmem:[%s4900 + $0x34] sm:$0xf]
    %v4915 = vld [vmem:[%s4900 + $0x38] sm:$0xf]
    %v4916 = vld [vmem:[%s4900 + $0x3c] sm:$0xf]
    %v4917 = vld [vmem:[%s6 + $0x22] sm:$0x1]
    %v4918 = vlaneseq
    %v4919 = vshrl.u32 %v4918, 7
    %v4920 = vsub.s32 0, %v4919
    %v4921 = vrot.slane %v4917, %v4920
    %v4938 = vunpack.c.l.b16 %v4901
    %v4939 = vunpack.c.l.b16 %v4902
    %v4940 = vunpack.c.l.b16 %v4903
    %v4941 = vunpack.c.l.b16 %v4904
    %v4942 = vunpack.c.l.b16 %v4905
    %v4943 = vunpack.c.l.b16 %v4906
    %v4944 = vunpack.c.l.b16 %v4907
    %v4945 = vunpack.c.l.b16 %v4908
    %v4946 = vunpack.c.l.b16 %v4909
    %v4947 = vunpack.c.l.b16 %v4910
    %v4948 = vunpack.c.l.b16 %v4911
    %v4949 = vunpack.c.l.b16 %v4912
    %v4950 = vunpack.c.l.b16 %v4913
    %v4951 = vunpack.c.l.b16 %v4914
    %v4952 = vunpack.c.l.b16 %v4915
    %v4953 = vunpack.c.l.b16 %v4916
    %v4954 = vpack.c.b16 %v4939, %v4938
    %v4955 = vpack.c.b16 %v4941, %v4940
    %v4956 = vpack.c.b16 %v4943, %v4942
    %v4957 = vpack.c.b16 %v4945, %v4944
    %v4958 = vpack.c.b16 %v4947, %v4946
    %v4959 = vpack.c.b16 %v4949, %v4948
    %v4960 = vpack.c.b16 %v4951, %v4950
    %v4961 = vpack.c.b16 %v4953, %v4952
    %4970 = vmatprep.subr.bf16.mxu0 0
    %4971 = vmatpush1.bf16.msra.mxu0 %v4954
    %4972 = vmatprep.subr.bf16.mxu0 0
    %4973 = vmatpush1.bf16.msra.mxu0 %v4955
    %4974 = vmatprep.subr.bf16.mxu0 0
    %4975 = vmatpush1.bf16.msra.mxu0 %v4956
    %4976 = vmatprep.subr.bf16.mxu0 0
    %4977 = vmatpush1.bf16.msra.mxu0 %v4957
    %4978 = vmatprep.subr.bf16.mxu0 0
    %4979 = vmatpush1.bf16.msra.mxu0 %v4958
    %4980 = vmatprep.subr.bf16.mxu0 0
    %4981 = vmatpush1.bf16.msra.mxu0 %v4959
    %4982 = vmatprep.subr.bf16.mxu0 0
    %4983 = vmatpush1.bf16.msra.mxu0 %v4960
    %4984 = vmatprep.subr.bf16.mxu0 0
    %4985 = vmatpush1.bf16.msra.mxu0 %v4961
    %4986 = vmatprep.subr.bf16.mxu0 0
    %4987 = vmatpush1.bf16.msra.mxu0 0
    %4988 = vmatprep.subr.bf16.mxu0 0
    %4989 = vmatpush1.bf16.msra.mxu0 0
    %4990 = vmatprep.subr.bf16.mxu0 0
    %4991 = vmatpush1.bf16.msra.mxu0 0
    %4992 = vmatprep.subr.bf16.mxu0 0
    %4993 = vmatpush1.bf16.msra.mxu0 0
    %4994 = vmatprep.subr.bf16.mxu0 0
    %4995 = vmatpush1.bf16.msra.mxu0 0
    %4996 = vmatprep.subr.bf16.mxu0 0
    %4997 = vmatpush1.bf16.msra.mxu0 0
    %4998 = vmatprep.subr.bf16.mxu0 0
    %4999 = vmatpush1.bf16.msra.mxu0 0
    %5000 = vmatprep.subr.bf16.mxu0 0
    %5001 = vmatpush1.bf16.msra.mxu0 0
    %5002 = vmatprep.mubr.bf16.mxu0 0
    %5003 = vmatmul.mubr.bf16.gmra.mrb[0].mxu0 %v4805
    %v5004 = vpop.f32.mrb[0].mxu0
    %v5005 = vadd.f32 %v4921, %v5004
    %v5006 = vpop.f32.mrb[0].mxu0
    %v5007 = vpop.f32.mrb[0].mxu0
    %v5008 = vadd.f32 %v4921, %v5007
    %v5009 = vpop.f32.mrb[0].mxu0
    %5010 = vdwg.mxu0
    %s5011 = scalar_lea.vmem [#allocation2], 1152
    %v5012 = vld [vmem:[%s5011] sm:$0xf]
    %v5013 = vld [vmem:[%s5011 + $0x4] sm:$0xf]
    %v5014 = vld [vmem:[%s5011 + $0x8] sm:$0xf]
    %v5015 = vld [vmem:[%s5011 + $0xc] sm:$0xf]
    %v5016 = vld [vmem:[%s5011 + $0x10] sm:$0xf]
    %v5017 = vld [vmem:[%s5011 + $0x14] sm:$0xf]
    %v5018 = vld [vmem:[%s5011 + $0x18] sm:$0xf]
    %v5019 = vld [vmem:[%s5011 + $0x1c] sm:$0xf]
    %v5020 = vld [vmem:[%s5011 + $0x20] sm:$0xf]
    %v5021 = vld [vmem:[%s5011 + $0x24] sm:$0xf]
    %v5022 = vld [vmem:[%s5011 + $0x28] sm:$0xf]
    %v5023 = vld [vmem:[%s5011 + $0x2c] sm:$0xf]
    %v5024 = vld [vmem:[%s5011 + $0x30] sm:$0xf]
    %v5025 = vld [vmem:[%s5011 + $0x34] sm:$0xf]
    %v5026 = vld [vmem:[%s5011 + $0x38] sm:$0xf]
    %v5027 = vld [vmem:[%s5011 + $0x3c] sm:$0xf]
    %v5028 = vld [vmem:[%s6 + $0x23] sm:$0x1]
    %v5029 = vlaneseq
    %v5030 = vshrl.u32 %v5029, 7
    %v5031 = vsub.s32 0, %v5030
    %v5032 = vrot.slane %v5028, %v5031
    %v5049 = vunpack.c.l.b16 %v5012
    %v5050 = vunpack.c.l.b16 %v5013
    %v5051 = vunpack.c.l.b16 %v5014
    %v5052 = vunpack.c.l.b16 %v5015
    %v5053 = vunpack.c.l.b16 %v5016
    %v5054 = vunpack.c.l.b16 %v5017
    %v5055 = vunpack.c.l.b16 %v5018
    %v5056 = vunpack.c.l.b16 %v5019
    %v5057 = vunpack.c.l.b16 %v5020
    %v5058 = vunpack.c.l.b16 %v5021
    %v5059 = vunpack.c.l.b16 %v5022
    %v5060 = vunpack.c.l.b16 %v5023
    %v5061 = vunpack.c.l.b16 %v5024
    %v5062 = vunpack.c.l.b16 %v5025
    %v5063 = vunpack.c.l.b16 %v5026
    %v5064 = vunpack.c.l.b16 %v5027
    %v5065 = vpack.c.b16 %v5050, %v5049
    %v5066 = vpack.c.b16 %v5052, %v5051
    %v5067 = vpack.c.b16 %v5054, %v5053
    %v5068 = vpack.c.b16 %v5056, %v5055
    %v5069 = vpack.c.b16 %v5058, %v5057
    %v5070 = vpack.c.b16 %v5060, %v5059
    %v5071 = vpack.c.b16 %v5062, %v5061
    %v5072 = vpack.c.b16 %v5064, %v5063
    %5081 = vmatprep.subr.bf16.mxu0 0
    %5082 = vmatpush1.bf16.msra.mxu0 %v5065
    %5083 = vmatprep.subr.bf16.mxu0 0
    %5084 = vmatpush1.bf16.msra.mxu0 %v5066
    %5085 = vmatprep.subr.bf16.mxu0 0
    %5086 = vmatpush1.bf16.msra.mxu0 %v5067
    %5087 = vmatprep.subr.bf16.mxu0 0
    %5088 = vmatpush1.bf16.msra.mxu0 %v5068
    %5089 = vmatprep.subr.bf16.mxu0 0
    %5090 = vmatpush1.bf16.msra.mxu0 %v5069
    %5091 = vmatprep.subr.bf16.mxu0 0
    %5092 = vmatpush1.bf16.msra.mxu0 %v5070
    %5093 = vmatprep.subr.bf16.mxu0 0
    %5094 = vmatpush1.bf16.msra.mxu0 %v5071
    %5095 = vmatprep.subr.bf16.mxu0 0
    %5096 = vmatpush1.bf16.msra.mxu0 %v5072
    %5097 = vmatprep.subr.bf16.mxu0 0
    %5098 = vmatpush1.bf16.msra.mxu0 0
    %5099 = vmatprep.subr.bf16.mxu0 0
    %5100 = vmatpush1.bf16.msra.mxu0 0
    %5101 = vmatprep.subr.bf16.mxu0 0
    %5102 = vmatpush1.bf16.msra.mxu0 0
    %5103 = vmatprep.subr.bf16.mxu0 0
    %5104 = vmatpush1.bf16.msra.mxu0 0
    %5105 = vmatprep.subr.bf16.mxu0 0
    %5106 = vmatpush1.bf16.msra.mxu0 0
    %5107 = vmatprep.subr.bf16.mxu0 0
    %5108 = vmatpush1.bf16.msra.mxu0 0
    %5109 = vmatprep.subr.bf16.mxu0 0
    %5110 = vmatpush1.bf16.msra.mxu0 0
    %5111 = vmatprep.subr.bf16.mxu0 0
    %5112 = vmatpush1.bf16.msra.mxu0 0
    %5113 = vmatprep.mubr.bf16.mxu0 0
    %5114 = vmatmul.mubr.bf16.gmra.mrb[0].mxu0 %v4805
    %v5115 = vpop.f32.mrb[0].mxu0
    %v5116 = vadd.f32 %v5032, %v5115
    %v5117 = vpop.f32.mrb[0].mxu0
    %v5118 = vpop.f32.mrb[0].mxu0
    %v5119 = vadd.f32 %v5032, %v5118
    %v5120 = vpop.f32.mrb[0].mxu0
    %5121 = vdwg.mxu0
    %5122 = vmatprep.subr.mxu0 0.0
    %5123 = vmatpush1.xpose.msra.mxu0 %v5005
    %5124 = vmatprep.subr.mxu0 0.0
    %5125 = vmatpush1.xpose.msra.mxu0 0.0
    %5126 = vmatprep.subr.mxu0 0.0
    %5127 = vmatpush1.xpose.msra.mxu0 0.0
    %5128 = vmatprep.subr.mxu0 0.0
    %5129 = vmatpush1.xpose.msra.mxu0 0.0
    %5130 = vmatprep.subr.mxu0 0.0
    %5131 = vmatpush1.xpose.msra.mxu0 0.0
    %5132 = vmatprep.subr.mxu0 0.0
    %5133 = vmatpush1.xpose.msra.mxu0 0.0
    %5134 = vmatprep.subr.mxu0 0.0
    %5135 = vmatpush1.xpose.msra.mxu0 0.0
    %5136 = vmatprep.subr.mxu0 0.0
    %5137 = vmatpush1.xpose.msra.mxu0 0.0
    %5138 = vmatprep.subr.mxu0 0.0
    %5139 = vmatpush1.xpose.msra.mxu0 0.0
    %5140 = vmatprep.subr.mxu0 0.0
    %5141 = vmatpush1.xpose.msra.mxu0 0.0
    %5142 = vmatprep.subr.mxu0 0.0
    %5143 = vmatpush1.xpose.msra.mxu0 0.0
    %5144 = vmatprep.subr.mxu0 0.0
    %5145 = vmatpush1.xpose.msra.mxu0 0.0
    %5146 = vmatprep.subr.mxu0 0.0
    %5147 = vmatpush1.xpose.msra.mxu0 0.0
    %5148 = vmatprep.subr.mxu0 0.0
    %5149 = vmatpush1.xpose.msra.mxu0 0.0
    %5150 = vmatprep.subr.mxu0 0.0
    %5151 = vmatpush1.xpose.msra.mxu0 0.0
    %5152 = vmatprep.subr.mxu0 0.0
    %5153 = vmatpush1.xpose.msra.mxu0 0.0
    %5154 = vmatprep.subr.mxu0 0.0
    %5155 = vmatpush1.xpose.msra.mxu0 0.0
    %5156 = vmatprep.subr.mxu0 0.0
    %5157 = vmatpush1.xpose.msra.mxu0 0.0
    %5158 = vmatprep.subr.mxu0 0.0
    %5159 = vmatpush1.xpose.msra.mxu0 0.0
    %5160 = vmatprep.subr.mxu0 0.0
    %5161 = vmatpush1.xpose.msra.mxu0 0.0
    %5162 = vmatprep.subr.mxu0 0.0
    %5163 = vmatpush1.xpose.msra.mxu0 0.0
    %5164 = vmatprep.subr.mxu0 0.0
    %5165 = vmatpush1.xpose.msra.mxu0 0.0
    %5166 = vmatprep.subr.mxu0 0.0
    %5167 = vmatpush1.xpose.msra.mxu0 0.0
    %5168 = vmatprep.subr.mxu0 0.0
    %5169 = vmatpush1.xpose.msra.mxu0 0.0
    %5170 = vmatprep.subr.mxu0 0.0
    %5171 = vmatpush1.xpose.msra.mxu0 0.0
    %5172 = vmatprep.subr.mxu0 0.0
    %5173 = vmatpush1.xpose.msra.mxu0 0.0
    %5174 = vmatprep.subr.mxu0 0.0
    %5175 = vmatpush1.xpose.msra.mxu0 0.0
    %5176 = vmatprep.subr.mxu0 0.0
    %5177 = vmatpush1.xpose.msra.mxu0 0.0
    %5178 = vmatprep.subr.mxu0 0.0
    %5179 = vmatpush1.xpose.msra.mxu0 0.0
    %5180 = vmatprep.subr.mxu0 0.0
    %5181 = vmatpush1.xpose.msra.mxu0 0.0
    %5182 = vmatprep.subr.mxu0 0.0
    %5183 = vmatpush1.xpose.msra.mxu0 0.0
    %5184 = vmatprep.subr.mxu0 0.0
    %5185 = vmatpush1.xpose.msra.mxu0 0.0
    %5186 = vmatprep.mubr.f32.mxu0 0.0
    %5187 = vmatmul.mubr.f32.gmra.mrb[0].mxu0 %v4894
    %v5188 = vpop.f32.mrb[0].mxu0
    %v5189 = vadd.f32 0.0, %v5188
    %v5190 = vpop.f32.mrb[0].mxu0
    %5191 = vdwg.mxu0
    %5192 = vmatprep.subr.mxu0 0.0
    %5193 = vmatpush1.xpose.msra.mxu0 %v5008
    %5194 = vmatprep.subr.mxu0 0.0
    %5195 = vmatpush1.xpose.msra.mxu0 0.0
    %5196 = vmatprep.subr.mxu0 0.0
    %5197 = vmatpush1.xpose.msra.mxu0 0.0
    %5198 = vmatprep.subr.mxu0 0.0
    %5199 = vmatpush1.xpose.msra.mxu0 0.0
    %5200 = vmatprep.subr.mxu0 0.0
    %5201 = vmatpush1.xpose.msra.mxu0 0.0
    %5202 = vmatprep.subr.mxu0 0.0
    %5203 = vmatpush1.xpose.msra.mxu0 0.0
    %5204 = vmatprep.subr.mxu0 0.0
    %5205 = vmatpush1.xpose.msra.mxu0 0.0
    %5206 = vmatprep.subr.mxu0 0.0
    %5207 = vmatpush1.xpose.msra.mxu0 0.0
    %5208 = vmatprep.subr.mxu0 0.0
    %5209 = vmatpush1.xpose.msra.mxu0 0.0
    %5210 = vmatprep.subr.mxu0 0.0
    %5211 = vmatpush1.xpose.msra.mxu0 0.0
    %5212 = vmatprep.subr.mxu0 0.0
    %5213 = vmatpush1.xpose.msra.mxu0 0.0
    %5214 = vmatprep.subr.mxu0 0.0
    %5215 = vmatpush1.xpose.msra.mxu0 0.0
    %5216 = vmatprep.subr.mxu0 0.0
    %5217 = vmatpush1.xpose.msra.mxu0 0.0
    %5218 = vmatprep.subr.mxu0 0.0
    %5219 = vmatpush1.xpose.msra.mxu0 0.0
    %5220 = vmatprep.subr.mxu0 0.0
    %5221 = vmatpush1.xpose.msra.mxu0 0.0
    %5222 = vmatprep.subr.mxu0 0.0
    %5223 = vmatpush1.xpose.msra.mxu0 0.0
    %5224 = vmatprep.subr.mxu0 0.0
    %5225 = vmatpush1.xpose.msra.mxu0 0.0
    %5226 = vmatprep.subr.mxu0 0.0
    %5227 = vmatpush1.xpose.msra.mxu0 0.0
    %5228 = vmatprep.subr.mxu0 0.0
    %5229 = vmatpush1.xpose.msra.mxu0 0.0
    %5230 = vmatprep.subr.mxu0 0.0
    %5231 = vmatpush1.xpose.msra.mxu0 0.0
    %5232 = vmatprep.subr.mxu0 0.0
    %5233 = vmatpush1.xpose.msra.mxu0 0.0
    %5234 = vmatprep.subr.mxu0 0.0
    %5235 = vmatpush1.xpose.msra.mxu0 0.0
    %5236 = vmatprep.subr.mxu0 0.0
    %5237 = vmatpush1.xpose.msra.mxu0 0.0
    %5238 = vmatprep.subr.mxu0 0.0
    %5239 = vmatpush1.xpose.msra.mxu0 0.0
    %5240 = vmatprep.subr.mxu0 0.0
    %5241 = vmatpush1.xpose.msra.mxu0 0.0
    %5242 = vmatprep.subr.mxu0 0.0
    %5243 = vmatpush1.xpose.msra.mxu0 0.0
    %5244 = vmatprep.subr.mxu0 0.0
    %5245 = vmatpush1.xpose.msra.mxu0 0.0
    %5246 = vmatprep.subr.mxu0 0.0
    %5247 = vmatpush1.xpose.msra.mxu0 0.0
    %5248 = vmatprep.subr.mxu0 0.0
    %5249 = vmatpush1.xpose.msra.mxu0 0.0
    %5250 = vmatprep.subr.mxu0 0.0
    %5251 = vmatpush1.xpose.msra.mxu0 0.0
    %5252 = vmatprep.subr.mxu0 0.0
    %5253 = vmatpush1.xpose.msra.mxu0 0.0
    %5254 = vmatprep.subr.mxu0 0.0
    %5255 = vmatpush1.xpose.msra.mxu0 0.0
    %5256 = vmatprep.mubr.f32.mxu0 0.0
    %5257 = vmatmul.mubr.f32.gmra.mrb[0].mxu0 %v4897
    %v5258 = vpop.f32.mrb[0].mxu0
    %v5259 = vadd.f32 0.0, %v5258
    %v5260 = vpop.f32.mrb[0].mxu0
    %5261 = vdwg.mxu0
    %v5262 = vmul.f32 %v5189, 0.15811388
    %v5263 = vmul.f32 %v5259, 0.15811388
    %v5264 = vsel %vm560, %v5262, -inf
    %5265 = vmax.xlane.f32.xlu0 %v5264
    %v5266 = vpop.xlane.xlu0 %5265
    %v5267 = vsel %vm560, %v5263, -inf
    %5268 = vmax.xlane.f32.xlu0 %v5267
    %v5269 = vpop.xlane.xlu0 %5268
    %v5270 = vsub.f32 %v5262, %v5266
    %v5271 = vsub.f32 %v5263, %v5269
    %v5272 = vmul.f32 %v5270, 1.442695
    %v5273 = vpow.pop %v5272
    %v5274 = vmul.f32 %v5271, 1.442695
    %v5275 = vpow.pop %v5274
    %v5276 = vsel %vm560, %v5273, 0.0
    %5277 = vadd.xlane.f32.xlu0 %v5276
    %v5278 = vpop.xlane.xlu0 %5277
    %v5279 = vsel %vm560, %v5275, 0.0
    %5280 = vadd.xlane.f32.xlu0 %v5279
    %v5281 = vpop.xlane.xlu0 %5280
    %v5282 = vrcp.pop %v5278
    %v5283 = vrcp.pop %v5281
    %v5284 = vmul.f32 %v5273, %v5282
    %v5285 = vmul.f32 %v5275, %v5283
    %v5287 = vsel %vm560, %v5284, 0
    %5289 = vmatprep.subr.mxu0 0.0
    %5290 = vmatpush1.msra.mxu0 %v5116
    %5291 = vmatprep.subr.mxu0 0.0
    %5292 = vmatpush1.msra.mxu0 0.0
    %5293 = vmatprep.subr.mxu0 0.0
    %5294 = vmatpush1.msra.mxu0 0.0
    %5295 = vmatprep.subr.mxu0 0.0
    %5296 = vmatpush1.msra.mxu0 0.0
    %5297 = vmatprep.subr.mxu0 0.0
    %5298 = vmatpush1.msra.mxu0 0.0
    %5299 = vmatprep.subr.mxu0 0.0
    %5300 = vmatpush1.msra.mxu0 0.0
    %5301 = vmatprep.subr.mxu0 0.0
    %5302 = vmatpush1.msra.mxu0 0.0
    %5303 = vmatprep.subr.mxu0 0.0
    %5304 = vmatpush1.msra.mxu0 0.0
    %5305 = vmatprep.subr.mxu0 0.0
    %5306 = vmatpush1.msra.mxu0 0.0
    %5307 = vmatprep.subr.mxu0 0.0
    %5308 = vmatpush1.msra.mxu0 0.0
    %5309 = vmatprep.subr.mxu0 0.0
    %5310 = vmatpush1.msra.mxu0 0.0
    %5311 = vmatprep.subr.mxu0 0.0
    %5312 = vmatpush1.msra.mxu0 0.0
    %5313 = vmatprep.subr.mxu0 0.0
    %5314 = vmatpush1.msra.mxu0 0.0
    %5315 = vmatprep.subr.mxu0 0.0
    %5316 = vmatpush1.msra.mxu0 0.0
    %5317 = vmatprep.subr.mxu0 0.0
    %5318 = vmatpush1.msra.mxu0 0.0
    %5319 = vmatprep.subr.mxu0 0.0
    %5320 = vmatpush1.msra.mxu0 0.0
    %5321 = vmatprep.subr.mxu0 0.0
    %5322 = vmatpush1.msra.mxu0 0.0
    %5323 = vmatprep.subr.mxu0 0.0
    %5324 = vmatpush1.msra.mxu0 0.0
    %5325 = vmatprep.subr.mxu0 0.0
    %5326 = vmatpush1.msra.mxu0 0.0
    %5327 = vmatprep.subr.mxu0 0.0
    %5328 = vmatpush1.msra.mxu0 0.0
    %5329 = vmatprep.subr.mxu0 0.0
    %5330 = vmatpush1.msra.mxu0 0.0
    %5331 = vmatprep.subr.mxu0 0.0
    %5332 = vmatpush1.msra.mxu0 0.0
    %5333 = vmatprep.subr.mxu0 0.0
    %5334 = vmatpush1.msra.mxu0 0.0
    %5335 = vmatprep.subr.mxu0 0.0
    %5336 = vmatpush1.msra.mxu0 0.0
    %5337 = vmatprep.subr.mxu0 0.0
    %5338 = vmatpush1.msra.mxu0 0.0
    %5339 = vmatprep.subr.mxu0 0.0
    %5340 = vmatpush1.msra.mxu0 0.0
    %5341 = vmatprep.subr.mxu0 0.0
    %5342 = vmatpush1.msra.mxu0 0.0
    %5343 = vmatprep.subr.mxu0 0.0
    %5344 = vmatpush1.msra.mxu0 0.0
    %5345 = vmatprep.subr.mxu0 0.0
    %5346 = vmatpush1.msra.mxu0 0.0
    %5347 = vmatprep.subr.mxu0 0.0
    %5348 = vmatpush1.msra.mxu0 0.0
    %5349 = vmatprep.subr.mxu0 0.0
    %5350 = vmatpush1.msra.mxu0 0.0
    %5351 = vmatprep.subr.mxu0 0.0
    %5352 = vmatpush1.msra.mxu0 0.0
    %5353 = vmatprep.mubr.f32.mxu0 0.0
    %5354 = vmatmul.mubr.f32.gmra.mrb[0].mxu0 %v5287
    %v5355 = vpop.f32.mrb[0].mxu0
    %v5356 = vadd.f32 0.0, %v5355
    %v5357 = vpop.f32.mrb[0].mxu0
    %5358 = vdwg.mxu0
    %v5360 = vsel %vm560, %v5285, 0
    %5362 = vmatprep.subr.mxu0 0.0
    %5363 = vmatpush1.msra.mxu0 %v5119
    %5364 = vmatprep.subr.mxu0 0.0
    %5365 = vmatpush1.msra.mxu0 0.0
    %5366 = vmatprep.subr.mxu0 0.0
    %5367 = vmatpush1.msra.mxu0 0.0
    %5368 = vmatprep.subr.mxu0 0.0
    %5369 = vmatpush1.msra.mxu0 0.0
    %5370 = vmatprep.subr.mxu0 0.0
    %5371 = vmatpush1.msra.mxu0 0.0
    %5372 = vmatprep.subr.mxu0 0.0
    %5373 = vmatpush1.msra.mxu0 0.0
    %5374 = vmatprep.subr.mxu0 0.0
    %5375 = vmatpush1.msra.mxu0 0.0
    %5376 = vmatprep.subr.mxu0 0.0
    %5377 = vmatpush1.msra.mxu0 0.0
    %5378 = vmatprep.subr.mxu0 0.0
    %5379 = vmatpush1.msra.mxu0 0.0
    %5380 = vmatprep.subr.mxu0 0.0
    %5381 = vmatpush1.msra.mxu0 0.0
    %5382 = vmatprep.subr.mxu0 0.0
    %5383 = vmatpush1.msra.mxu0 0.0
    %5384 = vmatprep.subr.mxu0 0.0
    %5385 = vmatpush1.msra.mxu0 0.0
    %5386 = vmatprep.subr.mxu0 0.0
    %5387 = vmatpush1.msra.mxu0 0.0
    %5388 = vmatprep.subr.mxu0 0.0
    %5389 = vmatpush1.msra.mxu0 0.0
    %5390 = vmatprep.subr.mxu0 0.0
    %5391 = vmatpush1.msra.mxu0 0.0
    %5392 = vmatprep.subr.mxu0 0.0
    %5393 = vmatpush1.msra.mxu0 0.0
    %5394 = vmatprep.subr.mxu0 0.0
    %5395 = vmatpush1.msra.mxu0 0.0
    %5396 = vmatprep.subr.mxu0 0.0
    %5397 = vmatpush1.msra.mxu0 0.0
    %5398 = vmatprep.subr.mxu0 0.0
    %5399 = vmatpush1.msra.mxu0 0.0
    %5400 = vmatprep.subr.mxu0 0.0
    %5401 = vmatpush1.msra.mxu0 0.0
    %5402 = vmatprep.subr.mxu0 0.0
    %5403 = vmatpush1.msra.mxu0 0.0
    %5404 = vmatprep.subr.mxu0 0.0
    %5405 = vmatpush1.msra.mxu0 0.0
    %5406 = vmatprep.subr.mxu0 0.0
    %5407 = vmatpush1.msra.mxu0 0.0
    %5408 = vmatprep.subr.mxu0 0.0
    %5409 = vmatpush1.msra.mxu0 0.0
    %5410 = vmatprep.subr.mxu0 0.0
    %5411 = vmatpush1.msra.mxu0 0.0
    %5412 = vmatprep.subr.mxu0 0.0
    %5413 = vmatpush1.msra.mxu0 0.0
    %5414 = vmatprep.subr.mxu0 0.0
    %5415 = vmatpush1.msra.mxu0 0.0
    %5416 = vmatprep.subr.mxu0 0.0
    %5417 = vmatpush1.msra.mxu0 0.0
    %5418 = vmatprep.subr.mxu0 0.0
    %5419 = vmatpush1.msra.mxu0 0.0
    %5420 = vmatprep.subr.mxu0 0.0
    %5421 = vmatpush1.msra.mxu0 0.0
    %5422 = vmatprep.subr.mxu0 0.0
    %5423 = vmatpush1.msra.mxu0 0.0
    %5424 = vmatprep.subr.mxu0 0.0
    %5425 = vmatpush1.msra.mxu0 0.0
    %5426 = vmatprep.mubr.f32.mxu0 0.0
    %5427 = vmatmul.mubr.f32.gmra.mrb[0].mxu0 %v5360
    %v5428 = vpop.f32.mrb[0].mxu0
    %v5429 = vadd.f32 0.0, %v5428
    %v5430 = vpop.f32.mrb[0].mxu0
    %5431 = vdwg.mxu0
    %s5432 = scalar_lea.vmem [#allocation2], 1216
    %v5433 = vld [vmem:[%s5432] sm:$0xf]
    %v5434 = vld [vmem:[%s5432 + $0x4] sm:$0xf]
    %v5435 = vld [vmem:[%s5432 + $0x8] sm:$0xf]
    %v5436 = vld [vmem:[%s5432 + $0xc] sm:$0xf]
    %v5437 = vld [vmem:[%s5432 + $0x10] sm:$0xf]
    %v5438 = vld [vmem:[%s5432 + $0x14] sm:$0xf]
    %v5439 = vld [vmem:[%s5432 + $0x18] sm:$0xf]
    %v5440 = vld [vmem:[%s5432 + $0x1c] sm:$0xf]
    %v5441 = vld [vmem:[%s5432 + $0x20] sm:$0xf]
    %v5442 = vld [vmem:[%s5432 + $0x24] sm:$0xf]
    %v5443 = vld [vmem:[%s5432 + $0x28] sm:$0xf]
    %v5444 = vld [vmem:[%s5432 + $0x2c] sm:$0xf]
    %v5445 = vld [vmem:[%s5432 + $0x30] sm:$0xf]
    %v5446 = vld [vmem:[%s5432 + $0x34] sm:$0xf]
    %v5447 = vld [vmem:[%s5432 + $0x38] sm:$0xf]
    %v5448 = vld [vmem:[%s5432 + $0x3c] sm:$0xf]
    %v5449 = vpack.c.bf16 %v5429, %v5356
    %v5450 = vld [vmem:[%s6 + $0x24] sm:$0x1]
    %v5451 = vlaneseq
    %v5452 = vshrl.u32 %v5451, 7
    %v5453 = vsub.s32 0, %v5452
    %v5454 = vrot.slane %v5450, %v5453
    %v5471 = vunpack.c.l.b16 %v5433
    %v5472 = vunpack.c.l.b16 %v5434
    %v5473 = vunpack.c.l.b16 %v5435
    %v5474 = vunpack.c.l.b16 %v5436
    %v5475 = vunpack.c.l.b16 %v5437
    %v5476 = vunpack.c.l.b16 %v5438
    %v5477 = vunpack.c.l.b16 %v5439
    %v5478 = vunpack.c.l.b16 %v5440
    %v5479 = vunpack.c.l.b16 %v5441
    %v5480 = vunpack.c.l.b16 %v5442
    %v5481 = vunpack.c.l.b16 %v5443
    %v5482 = vunpack.c.l.b16 %v5444
    %v5483 = vunpack.c.l.b16 %v5445
    %v5484 = vunpack.c.l.b16 %v5446
    %v5485 = vunpack.c.l.b16 %v5447
    %v5486 = vunpack.c.l.b16 %v5448
    %v5487 = vpack.c.b16 %v5472, %v5471
    %v5488 = vpack.c.b16 %v5474, %v5473
    %v5489 = vpack.c.b16 %v5476, %v5475
    %v5490 = vpack.c.b16 %v5478, %v5477
    %v5491 = vpack.c.b16 %v5480, %v5479
    %v5492 = vpack.c.b16 %v5482, %v5481
    %v5493 = vpack.c.b16 %v5484, %v5483
    %v5494 = vpack.c.b16 %v5486, %v5485
    %5503 = vmatprep.subr.bf16.mxu0 0
    %5504 = vmatpush1.bf16.msra.mxu0 %v5487
    %5505 = vmatprep.subr.bf16.mxu0 0
    %5506 = vmatpush1.bf16.msra.mxu0 %v5488
    %5507 = vmatprep.subr.bf16.mxu0 0
    %5508 = vmatpush1.bf16.msra.mxu0 %v5489
    %5509 = vmatprep.subr.bf16.mxu0 0
    %5510 = vmatpush1.bf16.msra.mxu0 %v5490
    %5511 = vmatprep.subr.bf16.mxu0 0
    %5512 = vmatpush1.bf16.msra.mxu0 %v5491
    %5513 = vmatprep.subr.bf16.mxu0 0
    %5514 = vmatpush1.bf16.msra.mxu0 %v5492
    %5515 = vmatprep.subr.bf16.mxu0 0
    %5516 = vmatpush1.bf16.msra.mxu0 %v5493
    %5517 = vmatprep.subr.bf16.mxu0 0
    %5518 = vmatpush1.bf16.msra.mxu0 %v5494
    %5519 = vmatprep.subr.bf16.mxu0 0
    %5520 = vmatpush1.bf16.msra.mxu0 0
    %5521 = vmatprep.subr.bf16.mxu0 0
    %5522 = vmatpush1.bf16.msra.mxu0 0
    %5523 = vmatprep.subr.bf16.mxu0 0
    %5524 = vmatpush1.bf16.msra.mxu0 0
    %5525 = vmatprep.subr.bf16.mxu0 0
    %5526 = vmatpush1.bf16.msra.mxu0 0
    %5527 = vmatprep.subr.bf16.mxu0 0
    %5528 = vmatpush1.bf16.msra.mxu0 0
    %5529 = vmatprep.subr.bf16.mxu0 0
    %5530 = vmatpush1.bf16.msra.mxu0 0
    %5531 = vmatprep.subr.bf16.mxu0 0
    %5532 = vmatpush1.bf16.msra.mxu0 0
    %5533 = vmatprep.subr.bf16.mxu0 0
    %5534 = vmatpush1.bf16.msra.mxu0 0
    %5535 = vmatprep.mubr.bf16.mxu0 0
    %5536 = vmatmul.mubr.bf16.gmra.mrb[0].mxu0 %v5449
    %v5537 = vpop.f32.mrb[0].mxu0
    %v5538 = vadd.f32 %v5454, %v5537
    %v5539 = vpop.f32.mrb[0].mxu0
    %v5540 = vpop.f32.mrb[0].mxu0
    %v5541 = vadd.f32 %v5454, %v5540
    %v5542 = vpop.f32.mrb[0].mxu0
    %5543 = vdwg.mxu0
    %v5544 = vadd.f32 %v4786, %v5538
    %v5545 = vadd.f32 %v4787, %v5541
    %v5546 = vld [vmem:[%s6 + $0x2a] sm:$0x1]
    %v5547 = vld [vmem:[%s6 + $0x2b] sm:$0x1]
    %5548 = vadd.xlane.f32.xlu0 %v5544
    %v5549 = vpop.xlane.xlu0 %5548
    %5550 = vadd.xlane.f32.xlu0 %v5545
    %v5551 = vpop.xlane.xlu0 %5550
    %v5552 = vmul.f32 %v5549, 0.025
    %v5553 = vmul.f32 %v5551, 0.025
    %v5554 = vsub.f32 %v5544, %v5552
    %v5555 = vsub.f32 %v5545, %v5553
    %v5556 = vmul.f32 %v5554, %v79
    %v5557 = vmul.f32 %v5555, %v79
    %v5558 = vmul.f32 %v5556, %v5556
    %v5559 = vmul.f32 %v5557, %v5557
    %5560 = vadd.xlane.f32.xlu0 %v5558
    %v5561 = vpop.xlane.xlu0 %5560
    %5562 = vadd.xlane.f32.xlu0 %v5559
    %v5563 = vpop.xlane.xlu0 %5562
    %v5564 = vmul.f32 %v5561, 0.025
    %v5565 = vmul.f32 %v5563, 0.025
    %v5566 = vadd.f32 %v5564, 1e-05
    %v5567 = vadd.f32 %v5565, 1e-05
    %v5568 = vrsqrt.pop %v5566
    %v5569 = vrsqrt.pop %v5567
    %v5570 = vmul.f32 %v5556, %v5568
    %v5571 = vmul.f32 %v5557, %v5569
    %v5572 = vlaneseq
    %v5573 = vshrl.u32 %v5572, 7
    %v5574 = vsub.s32 0, %v5573
    %v5575 = vrot.slane %v5546, %v5574
    %v5576 = vmul.f32 %v5570, %v5575
    %v5577 = vmul.f32 %v5571, %v5575
    %v5578 = vlaneseq
    %v5579 = vshrl.u32 %v5578, 7
    %v5580 = vsub.s32 0, %v5579
    %v5581 = vrot.slane %v5547, %v5580
    %v5582 = vadd.f32 %v5576, %v5581
    %v5583 = vadd.f32 %v5577, %v5581
    %s5584 = scalar_lea.vmem [#allocation2], 1280
    %v5585 = vld [vmem:[%s5584] sm:$0xf]
    %v5586 = vld [vmem:[%s5584 + $0x4] sm:$0xf]
    %v5587 = vld [vmem:[%s5584 + $0x8] sm:$0xf]
    %v5588 = vld [vmem:[%s5584 + $0xc] sm:$0xf]
    %v5589 = vld [vmem:[%s5584 + $0x10] sm:$0xf]
    %v5590 = vld [vmem:[%s5584 + $0x14] sm:$0xf]
    %v5591 = vld [vmem:[%s5584 + $0x18] sm:$0xf]
    %v5592 = vld [vmem:[%s5584 + $0x1c] sm:$0xf]
    %v5593 = vld [vmem:[%s5584 + $0x20] sm:$0xf]
    %v5594 = vld [vmem:[%s5584 + $0x24] sm:$0xf]
    %v5595 = vld [vmem:[%s5584 + $0x28] sm:$0xf]
    %v5596 = vld [vmem:[%s5584 + $0x2c] sm:$0xf]
    %v5597 = vld [vmem:[%s5584 + $0x30] sm:$0xf]
    %v5598 = vld [vmem:[%s5584 + $0x34] sm:$0xf]
    %v5599 = vld [vmem:[%s5584 + $0x38] sm:$0xf]
    %v5600 = vld [vmem:[%s5584 + $0x3c] sm:$0xf]
    %v5601 = vpack.c.bf16 %v5583, %v5582
    %v5602 = vld [vmem:[%s6 + $0x25] sm:$0x1]
    %v5603 = vlaneseq
    %v5604 = vshrl.u32 %v5603, 7
    %v5605 = vsub.s32 0, %v5604
    %v5606 = vrot.slane %v5602, %v5605
    %v5623 = vunpack.c.l.b16 %v5585
    %v5624 = vunpack.c.l.b16 %v5586
    %v5625 = vunpack.c.l.b16 %v5587
    %v5626 = vunpack.c.l.b16 %v5588
    %v5627 = vunpack.c.l.b16 %v5589
    %v5628 = vunpack.c.l.b16 %v5590
    %v5629 = vunpack.c.l.b16 %v5591
    %v5630 = vunpack.c.l.b16 %v5592
    %v5631 = vunpack.c.l.b16 %v5593
    %v5632 = vunpack.c.l.b16 %v5594
    %v5633 = vunpack.c.l.b16 %v5595
    %v5634 = vunpack.c.l.b16 %v5596
    %v5635 = vunpack.c.l.b16 %v5597
    %v5636 = vunpack.c.l.b16 %v5598
    %v5637 = vunpack.c.l.b16 %v5599
    %v5638 = vunpack.c.l.b16 %v5600
    %v5639 = vpack.c.b16 %v5624, %v5623
    %v5640 = vpack.c.b16 %v5626, %v5625
    %v5641 = vpack.c.b16 %v5628, %v5627
    %v5642 = vpack.c.b16 %v5630, %v5629
    %v5643 = vpack.c.b16 %v5632, %v5631
    %v5644 = vpack.c.b16 %v5634, %v5633
    %v5645 = vpack.c.b16 %v5636, %v5635
    %v5646 = vpack.c.b16 %v5638, %v5637
    %5655 = vmatprep.subr.bf16.mxu0 0
    %5656 = vmatpush1.bf16.msra.mxu0 %v5639
    %5657 = vmatprep.subr.bf16.mxu0 0
    %5658 = vmatpush1.bf16.msra.mxu0 %v5640
    %5659 = vmatprep.subr.bf16.mxu0 0
    %5660 = vmatpush1.bf16.msra.mxu0 %v5641
    %5661 = vmatprep.subr.bf16.mxu0 0
    %5662 = vmatpush1.bf16.msra.mxu0 %v5642
    %5663 = vmatprep.subr.bf16.mxu0 0
    %5664 = vmatpush1.bf16.msra.mxu0 %v5643
    %5665 = vmatprep.subr.bf16.mxu0 0
    %5666 = vmatpush1.bf16.msra.mxu0 %v5644
    %5667 = vmatprep.subr.bf16.mxu0 0
    %5668 = vmatpush1.bf16.msra.mxu0 %v5645
    %5669 = vmatprep.subr.bf16.mxu0 0
    %5670 = vmatpush1.bf16.msra.mxu0 %v5646
    %5671 = vmatprep.subr.bf16.mxu0 0
    %5672 = vmatpush1.bf16.msra.mxu0 0
    %5673 = vmatprep.subr.bf16.mxu0 0
    %5674 = vmatpush1.bf16.msra.mxu0 0
    %5675 = vmatprep.subr.bf16.mxu0 0
    %5676 = vmatpush1.bf16.msra.mxu0 0
    %5677 = vmatprep.subr.bf16.mxu0 0
    %5678 = vmatpush1.bf16.msra.mxu0 0
    %5679 = vmatprep.subr.bf16.mxu0 0
    %5680 = vmatpush1.bf16.msra.mxu0 0
    %5681 = vmatprep.subr.bf16.mxu0 0
    %5682 = vmatpush1.bf16.msra.mxu0 0
    %5683 = vmatprep.subr.bf16.mxu0 0
    %5684 = vmatpush1.bf16.msra.mxu0 0
    %5685 = vmatprep.subr.bf16.mxu0 0
    %5686 = vmatpush1.bf16.msra.mxu0 0
    %5687 = vmatprep.mubr.bf16.mxu0 0
    %5688 = vmatmul.mubr.bf16.gmra.mrb[0].mxu0 %v5601
    %v5689 = vpop.f32.mrb[0].mxu0
    %v5690 = vadd.f32 %v5606, %v5689
    %v5691 = vpop.f32.mrb[0].mxu0
    %v5692 = vpop.f32.mrb[0].mxu0
    %v5693 = vadd.f32 %v5606, %v5692
    %v5694 = vpop.f32.mrb[0].mxu0
    %5695 = vdwg.mxu0
    %s5696 = scalar_lea.vmem [#allocation2], 1344
    %v5697 = vld [vmem:[%s5696] sm:$0xf]
    %v5698 = vld [vmem:[%s5696 + $0x4] sm:$0xf]
    %v5699 = vld [vmem:[%s5696 + $0x8] sm:$0xf]
    %v5700 = vld [vmem:[%s5696 + $0xc] sm:$0xf]
    %v5701 = vld [vmem:[%s5696 + $0x10] sm:$0xf]
    %v5702 = vld [vmem:[%s5696 + $0x14] sm:$0xf]
    %v5703 = vld [vmem:[%s5696 + $0x18] sm:$0xf]
    %v5704 = vld [vmem:[%s5696 + $0x1c] sm:$0xf]
    %v5705 = vld [vmem:[%s5696 + $0x20] sm:$0xf]
    %v5706 = vld [vmem:[%s5696 + $0x24] sm:$0xf]
    %v5707 = vld [vmem:[%s5696 + $0x28] sm:$0xf]
    %v5708 = vld [vmem:[%s5696 + $0x2c] sm:$0xf]
    %v5709 = vld [vmem:[%s5696 + $0x30] sm:$0xf]
    %v5710 = vld [vmem:[%s5696 + $0x34] sm:$0xf]
    %v5711 = vld [vmem:[%s5696 + $0x38] sm:$0xf]
    %v5712 = vld [vmem:[%s5696 + $0x3c] sm:$0xf]
    %v5713 = vld [vmem:[%s6 + $0x26] sm:$0x1]
    %v5714 = vlaneseq
    %v5715 = vshrl.u32 %v5714, 7
    %v5716 = vsub.s32 0, %v5715
    %v5717 = vrot.slane %v5713, %v5716
    %v5734 = vunpack.c.l.b16 %v5697
    %v5735 = vunpack.c.l.b16 %v5698
    %v5736 = vunpack.c.l.b16 %v5699
    %v5737 = vunpack.c.l.b16 %v5700
    %v5738 = vunpack.c.l.b16 %v5701
    %v5739 = vunpack.c.l.b16 %v5702
    %v5740 = vunpack.c.l.b16 %v5703
    %v5741 = vunpack.c.l.b16 %v5704
    %v5742 = vunpack.c.l.b16 %v5705
    %v5743 = vunpack.c.l.b16 %v5706
    %v5744 = vunpack.c.l.b16 %v5707
    %v5745 = vunpack.c.l.b16 %v5708
    %v5746 = vunpack.c.l.b16 %v5709
    %v5747 = vunpack.c.l.b16 %v5710
    %v5748 = vunpack.c.l.b16 %v5711
    %v5749 = vunpack.c.l.b16 %v5712
    %v5750 = vpack.c.b16 %v5735, %v5734
    %v5751 = vpack.c.b16 %v5737, %v5736
    %v5752 = vpack.c.b16 %v5739, %v5738
    %v5753 = vpack.c.b16 %v5741, %v5740
    %v5754 = vpack.c.b16 %v5743, %v5742
    %v5755 = vpack.c.b16 %v5745, %v5744
    %v5756 = vpack.c.b16 %v5747, %v5746
    %v5757 = vpack.c.b16 %v5749, %v5748
    %5766 = vmatprep.subr.bf16.mxu0 0
    %5767 = vmatpush1.bf16.msra.mxu0 %v5750
    %5768 = vmatprep.subr.bf16.mxu0 0
    %5769 = vmatpush1.bf16.msra.mxu0 %v5751
    %5770 = vmatprep.subr.bf16.mxu0 0
    %5771 = vmatpush1.bf16.msra.mxu0 %v5752
    %5772 = vmatprep.subr.bf16.mxu0 0
    %5773 = vmatpush1.bf16.msra.mxu0 %v5753
    %5774 = vmatprep.subr.bf16.mxu0 0
    %5775 = vmatpush1.bf16.msra.mxu0 %v5754
    %5776 = vmatprep.subr.bf16.mxu0 0
    %5777 = vmatpush1.bf16.msra.mxu0 %v5755
    %5778 = vmatprep.subr.bf16.mxu0 0
    %5779 = vmatpush1.bf16.msra.mxu0 %v5756
    %5780 = vmatprep.subr.bf16.mxu0 0
    %5781 = vmatpush1.bf16.msra.mxu0 %v5757
    %5782 = vmatprep.subr.bf16.mxu0 0
    %5783 = vmatpush1.bf16.msra.mxu0 0
    %5784 = vmatprep.subr.bf16.mxu0 0
    %5785 = vmatpush1.bf16.msra.mxu0 0
    %5786 = vmatprep.subr.bf16.mxu0 0
    %5787 = vmatpush1.bf16.msra.mxu0 0
    %5788 = vmatprep.subr.bf16.mxu0 0
    %5789 = vmatpush1.bf16.msra.mxu0 0
    %5790 = vmatprep.subr.bf16.mxu0 0
    %5791 = vmatpush1.bf16.msra.mxu0 0
    %5792 = vmatprep.subr.bf16.mxu0 0
    %5793 = vmatpush1.bf16.msra.mxu0 0
    %5794 = vmatprep.subr.bf16.mxu0 0
    %5795 = vmatpush1.bf16.msra.mxu0 0
    %5796 = vmatprep.subr.bf16.mxu0 0
    %5797 = vmatpush1.bf16.msra.mxu0 0
    %5798 = vmatprep.mubr.bf16.mxu0 0
    %5799 = vmatmul.mubr.bf16.gmra.mrb[0].mxu0 %v2838
    %v5800 = vpop.f32.mrb[0].mxu0
    %v5801 = vadd.f32 %v5717, %v5800
    %v5802 = vpop.f32.mrb[0].mxu0
    %v5803 = vpop.f32.mrb[0].mxu0
    %v5804 = vadd.f32 %v5717, %v5803
    %v5805 = vpop.f32.mrb[0].mxu0
    %5806 = vdwg.mxu0
    %s5807 = scalar_lea.vmem [#allocation2], 1408
    %v5808 = vld [vmem:[%s5807] sm:$0xf]
    %v5809 = vld [vmem:[%s5807 + $0x4] sm:$0xf]
    %v5810 = vld [vmem:[%s5807 + $0x8] sm:$0xf]
    %v5811 = vld [vmem:[%s5807 + $0xc] sm:$0xf]
    %v5812 = vld [vmem:[%s5807 + $0x10] sm:$0xf]
    %v5813 = vld [vmem:[%s5807 + $0x14] sm:$0xf]
    %v5814 = vld [vmem:[%s5807 + $0x18] sm:$0xf]
    %v5815 = vld [vmem:[%s5807 + $0x1c] sm:$0xf]
    %v5816 = vld [vmem:[%s5807 + $0x20] sm:$0xf]
    %v5817 = vld [vmem:[%s5807 + $0x24] sm:$0xf]
    %v5818 = vld [vmem:[%s5807 + $0x28] sm:$0xf]
    %v5819 = vld [vmem:[%s5807 + $0x2c] sm:$0xf]
    %v5820 = vld [vmem:[%s5807 + $0x30] sm:$0xf]
    %v5821 = vld [vmem:[%s5807 + $0x34] sm:$0xf]
    %v5822 = vld [vmem:[%s5807 + $0x38] sm:$0xf]
    %v5823 = vld [vmem:[%s5807 + $0x3c] sm:$0xf]
    %v5824 = vld [vmem:[%s6 + $0x27] sm:$0x1]
    %v5825 = vlaneseq
    %v5826 = vshrl.u32 %v5825, 7
    %v5827 = vsub.s32 0, %v5826
    %v5828 = vrot.slane %v5824, %v5827
    %v5845 = vunpack.c.l.b16 %v5808
    %v5846 = vunpack.c.l.b16 %v5809
    %v5847 = vunpack.c.l.b16 %v5810
    %v5848 = vunpack.c.l.b16 %v5811
    %v5849 = vunpack.c.l.b16 %v5812
    %v5850 = vunpack.c.l.b16 %v5813
    %v5851 = vunpack.c.l.b16 %v5814
    %v5852 = vunpack.c.l.b16 %v5815
    %v5853 = vunpack.c.l.b16 %v5816
    %v5854 = vunpack.c.l.b16 %v5817
    %v5855 = vunpack.c.l.b16 %v5818
    %v5856 = vunpack.c.l.b16 %v5819
    %v5857 = vunpack.c.l.b16 %v5820
    %v5858 = vunpack.c.l.b16 %v5821
    %v5859 = vunpack.c.l.b16 %v5822
    %v5860 = vunpack.c.l.b16 %v5823
    %v5861 = vpack.c.b16 %v5846, %v5845
    %v5862 = vpack.c.b16 %v5848, %v5847
    %v5863 = vpack.c.b16 %v5850, %v5849
    %v5864 = vpack.c.b16 %v5852, %v5851
    %v5865 = vpack.c.b16 %v5854, %v5853
    %v5866 = vpack.c.b16 %v5856, %v5855
    %v5867 = vpack.c.b16 %v5858, %v5857
    %v5868 = vpack.c.b16 %v5860, %v5859
    %5877 = vmatprep.subr.bf16.mxu0 0
    %5878 = vmatpush1.bf16.msra.mxu0 %v5861
    %5879 = vmatprep.subr.bf16.mxu0 0
    %5880 = vmatpush1.bf16.msra.mxu0 %v5862
    %5881 = vmatprep.subr.bf16.mxu0 0
    %5882 = vmatpush1.bf16.msra.mxu0 %v5863
    %5883 = vmatprep.subr.bf16.mxu0 0
    %5884 = vmatpush1.bf16.msra.mxu0 %v5864
    %5885 = vmatprep.subr.bf16.mxu0 0
    %5886 = vmatpush1.bf16.msra.mxu0 %v5865
    %5887 = vmatprep.subr.bf16.mxu0 0
    %5888 = vmatpush1.bf16.msra.mxu0 %v5866
    %5889 = vmatprep.subr.bf16.mxu0 0
    %5890 = vmatpush1.bf16.msra.mxu0 %v5867
    %5891 = vmatprep.subr.bf16.mxu0 0
    %5892 = vmatpush1.bf16.msra.mxu0 %v5868
    %5893 = vmatprep.subr.bf16.mxu0 0
    %5894 = vmatpush1.bf16.msra.mxu0 0
    %5895 = vmatprep.subr.bf16.mxu0 0
    %5896 = vmatpush1.bf16.msra.mxu0 0
    %5897 = vmatprep.subr.bf16.mxu0 0
    %5898 = vmatpush1.bf16.msra.mxu0 0
    %5899 = vmatprep.subr.bf16.mxu0 0
    %5900 = vmatpush1.bf16.msra.mxu0 0
    %5901 = vmatprep.subr.bf16.mxu0 0
    %5902 = vmatpush1.bf16.msra.mxu0 0
    %5903 = vmatprep.subr.bf16.mxu0 0
    %5904 = vmatpush1.bf16.msra.mxu0 0
    %5905 = vmatprep.subr.bf16.mxu0 0
    %5906 = vmatpush1.bf16.msra.mxu0 0
    %5907 = vmatprep.subr.bf16.mxu0 0
    %5908 = vmatpush1.bf16.msra.mxu0 0
    %5909 = vmatprep.mubr.bf16.mxu0 0
    %5910 = vmatmul.mubr.bf16.gmra.mrb[0].mxu0 %v2838
    %v5911 = vpop.f32.mrb[0].mxu0
    %v5912 = vadd.f32 %v5828, %v5911
    %v5913 = vpop.f32.mrb[0].mxu0
    %v5914 = vpop.f32.mrb[0].mxu0
    %v5915 = vadd.f32 %v5828, %v5914
    %v5916 = vpop.f32.mrb[0].mxu0
    %5917 = vdwg.mxu0
    %5918 = vmatprep.subr.mxu0 0.0
    %5919 = vmatpush1.xpose.msra.mxu0 %v5801
    %5920 = vmatprep.subr.mxu0 0.0
    %5921 = vmatpush1.xpose.msra.mxu0 0.0
    %5922 = vmatprep.subr.mxu0 0.0
    %5923 = vmatpush1.xpose.msra.mxu0 0.0
    %5924 = vmatprep.subr.mxu0 0.0
    %5925 = vmatpush1.xpose.msra.mxu0 0.0
    %5926 = vmatprep.subr.mxu0 0.0
    %5927 = vmatpush1.xpose.msra.mxu0 0.0
    %5928 = vmatprep.subr.mxu0 0.0
    %5929 = vmatpush1.xpose.msra.mxu0 0.0
    %5930 = vmatprep.subr.mxu0 0.0
    %5931 = vmatpush1.xpose.msra.mxu0 0.0
    %5932 = vmatprep.subr.mxu0 0.0
    %5933 = vmatpush1.xpose.msra.mxu0 0.0
    %5934 = vmatprep.subr.mxu0 0.0
    %5935 = vmatpush1.xpose.msra.mxu0 0.0
    %5936 = vmatprep.subr.mxu0 0.0
    %5937 = vmatpush1.xpose.msra.mxu0 0.0
    %5938 = vmatprep.subr.mxu0 0.0
    %5939 = vmatpush1.xpose.msra.mxu0 0.0
    %5940 = vmatprep.subr.mxu0 0.0
    %5941 = vmatpush1.xpose.msra.mxu0 0.0
    %5942 = vmatprep.subr.mxu0 0.0
    %5943 = vmatpush1.xpose.msra.mxu0 0.0
    %5944 = vmatprep.subr.mxu0 0.0
    %5945 = vmatpush1.xpose.msra.mxu0 0.0
    %5946 = vmatprep.subr.mxu0 0.0
    %5947 = vmatpush1.xpose.msra.mxu0 0.0
    %5948 = vmatprep.subr.mxu0 0.0
    %5949 = vmatpush1.xpose.msra.mxu0 0.0
    %5950 = vmatprep.subr.mxu0 0.0
    %5951 = vmatpush1.xpose.msra.mxu0 0.0
    %5952 = vmatprep.subr.mxu0 0.0
    %5953 = vmatpush1.xpose.msra.mxu0 0.0
    %5954 = vmatprep.subr.mxu0 0.0
    %5955 = vmatpush1.xpose.msra.mxu0 0.0
    %5956 = vmatprep.subr.mxu0 0.0
    %5957 = vmatpush1.xpose.msra.mxu0 0.0
    %5958 = vmatprep.subr.mxu0 0.0
    %5959 = vmatpush1.xpose.msra.mxu0 0.0
    %5960 = vmatprep.subr.mxu0 0.0
    %5961 = vmatpush1.xpose.msra.mxu0 0.0
    %5962 = vmatprep.subr.mxu0 0.0
    %5963 = vmatpush1.xpose.msra.mxu0 0.0
    %5964 = vmatprep.subr.mxu0 0.0
    %5965 = vmatpush1.xpose.msra.mxu0 0.0
    %5966 = vmatprep.subr.mxu0 0.0
    %5967 = vmatpush1.xpose.msra.mxu0 0.0
    %5968 = vmatprep.subr.mxu0 0.0
    %5969 = vmatpush1.xpose.msra.mxu0 0.0
    %5970 = vmatprep.subr.mxu0 0.0
    %5971 = vmatpush1.xpose.msra.mxu0 0.0
    %5972 = vmatprep.subr.mxu0 0.0
    %5973 = vmatpush1.xpose.msra.mxu0 0.0
    %5974 = vmatprep.subr.mxu0 0.0
    %5975 = vmatpush1.xpose.msra.mxu0 0.0
    %5976 = vmatprep.subr.mxu0 0.0
    %5977 = vmatpush1.xpose.msra.mxu0 0.0
    %5978 = vmatprep.subr.mxu0 0.0
    %5979 = vmatpush1.xpose.msra.mxu0 0.0
    %5980 = vmatprep.subr.mxu0 0.0
    %5981 = vmatpush1.xpose.msra.mxu0 0.0
    %5982 = vmatprep.mubr.f32.mxu0 0.0
    %5983 = vmatmul.mubr.f32.gmra.mrb[0].mxu0 %v5690
    %v5984 = vpop.f32.mrb[0].mxu0
    %v5985 = vadd.f32 0.0, %v5984
    %v5986 = vpop.f32.mrb[0].mxu0
    %5987 = vdwg.mxu0
    %5988 = vmatprep.subr.mxu0 0.0
    %5989 = vmatpush1.xpose.msra.mxu0 %v5804
    %5990 = vmatprep.subr.mxu0 0.0
    %5991 = vmatpush1.xpose.msra.mxu0 0.0
    %5992 = vmatprep.subr.mxu0 0.0
    %5993 = vmatpush1.xpose.msra.mxu0 0.0
    %5994 = vmatprep.subr.mxu0 0.0
    %5995 = vmatpush1.xpose.msra.mxu0 0.0
    %5996 = vmatprep.subr.mxu0 0.0
    %5997 = vmatpush1.xpose.msra.mxu0 0.0
    %5998 = vmatprep.subr.mxu0 0.0
    %5999 = vmatpush1.xpose.msra.mxu0 0.0
    %6000 = vmatprep.subr.mxu0 0.0
    %6001 = vmatpush1.xpose.msra.mxu0 0.0
    %6002 = vmatprep.subr.mxu0 0.0
    %6003 = vmatpush1.xpose.msra.mxu0 0.0
    %6004 = vmatprep.subr.mxu0 0.0
    %6005 = vmatpush1.xpose.msra.mxu0 0.0
    %6006 = vmatprep.subr.mxu0 0.0
    %6007 = vmatpush1.xpose.msra.mxu0 0.0
    %6008 = vmatprep.subr.mxu0 0.0
    %6009 = vmatpush1.xpose.msra.mxu0 0.0
    %6010 = vmatprep.subr.mxu0 0.0
    %6011 = vmatpush1.xpose.msra.mxu0 0.0
    %6012 = vmatprep.subr.mxu0 0.0
    %6013 = vmatpush1.xpose.msra.mxu0 0.0
    %6014 = vmatprep.subr.mxu0 0.0
    %6015 = vmatpush1.xpose.msra.mxu0 0.0
    %6016 = vmatprep.subr.mxu0 0.0
    %6017 = vmatpush1.xpose.msra.mxu0 0.0
    %6018 = vmatprep.subr.mxu0 0.0
    %6019 = vmatpush1.xpose.msra.mxu0 0.0
    %6020 = vmatprep.subr.mxu0 0.0
    %6021 = vmatpush1.xpose.msra.mxu0 0.0
    %6022 = vmatprep.subr.mxu0 0.0
    %6023 = vmatpush1.xpose.msra.mxu0 0.0
    %6024 = vmatprep.subr.mxu0 0.0
    %6025 = vmatpush1.xpose.msra.mxu0 0.0
    %6026 = vmatprep.subr.mxu0 0.0
    %6027 = vmatpush1.xpose.msra.mxu0 0.0
    %6028 = vmatprep.subr.mxu0 0.0
    %6029 = vmatpush1.xpose.msra.mxu0 0.0
    %6030 = vmatprep.subr.mxu0 0.0
    %6031 = vmatpush1.xpose.msra.mxu0 0.0
    %6032 = vmatprep.subr.mxu0 0.0
    %6033 = vmatpush1.xpose.msra.mxu0 0.0
    %6034 = vmatprep.subr.mxu0 0.0
    %6035 = vmatpush1.xpose.msra.mxu0 0.0
    %6036 = vmatprep.subr.mxu0 0.0
    %6037 = vmatpush1.xpose.msra.mxu0 0.0
    %6038 = vmatprep.subr.mxu0 0.0
    %6039 = vmatpush1.xpose.msra.mxu0 0.0
    %6040 = vmatprep.subr.mxu0 0.0
    %6041 = vmatpush1.xpose.msra.mxu0 0.0
    %6042 = vmatprep.subr.mxu0 0.0
    %6043 = vmatpush1.xpose.msra.mxu0 0.0
    %6044 = vmatprep.subr.mxu0 0.0
    %6045 = vmatpush1.xpose.msra.mxu0 0.0
    %6046 = vmatprep.subr.mxu0 0.0
    %6047 = vmatpush1.xpose.msra.mxu0 0.0
    %6048 = vmatprep.subr.mxu0 0.0
    %6049 = vmatpush1.xpose.msra.mxu0 0.0
    %6050 = vmatprep.subr.mxu0 0.0
    %6051 = vmatpush1.xpose.msra.mxu0 0.0
    %6052 = vmatprep.mubr.f32.mxu0 0.0
    %6053 = vmatmul.mubr.f32.gmra.mrb[0].mxu0 %v5693
    %v6054 = vpop.f32.mrb[0].mxu0
    %v6055 = vadd.f32 0.0, %v6054
    %v6056 = vpop.f32.mrb[0].mxu0
    %6057 = vdwg.mxu0
    %v6058 = vmul.f32 %v5985, 0.15811388
    %v6059 = vmul.f32 %v6055, 0.15811388
    %v6060 = vsel %vm560, %v6058, -inf
    %6061 = vmax.xlane.f32.xlu0 %v6060
    %v6062 = vpop.xlane.xlu0 %6061
    %v6063 = vsel %vm560, %v6059, -inf
    %6064 = vmax.xlane.f32.xlu0 %v6063
    %v6065 = vpop.xlane.xlu0 %6064
    %v6066 = vsub.f32 %v6058, %v6062
    %v6067 = vsub.f32 %v6059, %v6065
    %v6068 = vmul.f32 %v6066, 1.442695
    %v6069 = vpow.pop %v6068
    %v6070 = vmul.f32 %v6067, 1.442695
    %v6071 = vpow.pop %v6070
    %v6072 = vsel %vm560, %v6069, 0.0
    %6073 = vadd.xlane.f32.xlu0 %v6072
    %v6074 = vpop.xlane.xlu0 %6073
    %v6075 = vsel %vm560, %v6071, 0.0
    %6076 = vadd.xlane.f32.xlu0 %v6075
    %v6077 = vpop.xlane.xlu0 %6076
    %v6078 = vrcp.pop %v6074
    %v6079 = vrcp.pop %v6077
    %v6080 = vmul.f32 %v6069, %v6078
    %v6081 = vmul.f32 %v6071, %v6079
    %v6083 = vsel %vm560, %v6080, 0
    %6085 = vmatprep.subr.mxu0 0.0
    %6086 = vmatpush1.msra.mxu0 %v5912
    %6087 = vmatprep.subr.mxu0 0.0
    %6088 = vmatpush1.msra.mxu0 0.0
    %6089 = vmatprep.subr.mxu0 0.0
    %6090 = vmatpush1.msra.mxu0 0.0
    %6091 = vmatprep.subr.mxu0 0.0
    %6092 = vmatpush1.msra.mxu0 0.0
    %6093 = vmatprep.subr.mxu0 0.0
    %6094 = vmatpush1.msra.mxu0 0.0
    %6095 = vmatprep.subr.mxu0 0.0
    %6096 = vmatpush1.msra.mxu0 0.0
    %6097 = vmatprep.subr.mxu0 0.0
    %6098 = vmatpush1.msra.mxu0 0.0
    %6099 = vmatprep.subr.mxu0 0.0
    %6100 = vmatpush1.msra.mxu0 0.0
    %6101 = vmatprep.subr.mxu0 0.0
    %6102 = vmatpush1.msra.mxu0 0.0
    %6103 = vmatprep.subr.mxu0 0.0
    %6104 = vmatpush1.msra.mxu0 0.0
    %6105 = vmatprep.subr.mxu0 0.0
    %6106 = vmatpush1.msra.mxu0 0.0
    %6107 = vmatprep.subr.mxu0 0.0
    %6108 = vmatpush1.msra.mxu0 0.0
    %6109 = vmatprep.subr.mxu0 0.0
    %6110 = vmatpush1.msra.mxu0 0.0
    %6111 = vmatprep.subr.mxu0 0.0
    %6112 = vmatpush1.msra.mxu0 0.0
    %6113 = vmatprep.subr.mxu0 0.0
    %6114 = vmatpush1.msra.mxu0 0.0
    %6115 = vmatprep.subr.mxu0 0.0
    %6116 = vmatpush1.msra.mxu0 0.0
    %6117 = vmatprep.subr.mxu0 0.0
    %6118 = vmatpush1.msra.mxu0 0.0
    %6119 = vmatprep.subr.mxu0 0.0
    %6120 = vmatpush1.msra.mxu0 0.0
    %6121 = vmatprep.subr.mxu0 0.0
    %6122 = vmatpush1.msra.mxu0 0.0
    %6123 = vmatprep.subr.mxu0 0.0
    %6124 = vmatpush1.msra.mxu0 0.0
    %6125 = vmatprep.subr.mxu0 0.0
    %6126 = vmatpush1.msra.mxu0 0.0
    %6127 = vmatprep.subr.mxu0 0.0
    %6128 = vmatpush1.msra.mxu0 0.0
    %6129 = vmatprep.subr.mxu0 0.0
    %6130 = vmatpush1.msra.mxu0 0.0
    %6131 = vmatprep.subr.mxu0 0.0
    %6132 = vmatpush1.msra.mxu0 0.0
    %6133 = vmatprep.subr.mxu0 0.0
    %6134 = vmatpush1.msra.mxu0 0.0
    %6135 = vmatprep.subr.mxu0 0.0
    %6136 = vmatpush1.msra.mxu0 0.0
    %6137 = vmatprep.subr.mxu0 0.0
    %6138 = vmatpush1.msra.mxu0 0.0
    %6139 = vmatprep.subr.mxu0 0.0
    %6140 = vmatpush1.msra.mxu0 0.0
    %6141 = vmatprep.subr.mxu0 0.0
    %6142 = vmatpush1.msra.mxu0 0.0
    %6143 = vmatprep.subr.mxu0 0.0
    %6144 = vmatpush1.msra.mxu0 0.0
    %6145 = vmatprep.subr.mxu0 0.0
    %6146 = vmatpush1.msra.mxu0 0.0
    %6147 = vmatprep.subr.mxu0 0.0
    %6148 = vmatpush1.msra.mxu0 0.0
    %6149 = vmatprep.mubr.f32.mxu0 0.0
    %6150 = vmatmul.mubr.f32.gmra.mrb[0].mxu0 %v6083
    %v6151 = vpop.f32.mrb[0].mxu0
    %v6152 = vadd.f32 0.0, %v6151
    %v6153 = vpop.f32.mrb[0].mxu0
    %6154 = vdwg.mxu0
    %v6156 = vsel %vm560, %v6081, 0
    %6158 = vmatprep.subr.mxu0 0.0
    %6159 = vmatpush1.msra.mxu0 %v5915
    %6160 = vmatprep.subr.mxu0 0.0
    %6161 = vmatpush1.msra.mxu0 0.0
    %6162 = vmatprep.subr.mxu0 0.0
    %6163 = vmatpush1.msra.mxu0 0.0
    %6164 = vmatprep.subr.mxu0 0.0
    %6165 = vmatpush1.msra.mxu0 0.0
    %6166 = vmatprep.subr.mxu0 0.0
    %6167 = vmatpush1.msra.mxu0 0.0
    %6168 = vmatprep.subr.mxu0 0.0
    %6169 = vmatpush1.msra.mxu0 0.0
    %6170 = vmatprep.subr.mxu0 0.0
    %6171 = vmatpush1.msra.mxu0 0.0
    %6172 = vmatprep.subr.mxu0 0.0
    %6173 = vmatpush1.msra.mxu0 0.0
    %6174 = vmatprep.subr.mxu0 0.0
    %6175 = vmatpush1.msra.mxu0 0.0
    %6176 = vmatprep.subr.mxu0 0.0
    %6177 = vmatpush1.msra.mxu0 0.0
    %6178 = vmatprep.subr.mxu0 0.0
    %6179 = vmatpush1.msra.mxu0 0.0
    %6180 = vmatprep.subr.mxu0 0.0
    %6181 = vmatpush1.msra.mxu0 0.0
    %6182 = vmatprep.subr.mxu0 0.0
    %6183 = vmatpush1.msra.mxu0 0.0
    %6184 = vmatprep.subr.mxu0 0.0
    %6185 = vmatpush1.msra.mxu0 0.0
    %6186 = vmatprep.subr.mxu0 0.0
    %6187 = vmatpush1.msra.mxu0 0.0
    %6188 = vmatprep.subr.mxu0 0.0
    %6189 = vmatpush1.msra.mxu0 0.0
    %6190 = vmatprep.subr.mxu0 0.0
    %6191 = vmatpush1.msra.mxu0 0.0
    %6192 = vmatprep.subr.mxu0 0.0
    %6193 = vmatpush1.msra.mxu0 0.0
    %6194 = vmatprep.subr.mxu0 0.0
    %6195 = vmatpush1.msra.mxu0 0.0
    %6196 = vmatprep.subr.mxu0 0.0
    %6197 = vmatpush1.msra.mxu0 0.0
    %6198 = vmatprep.subr.mxu0 0.0
    %6199 = vmatpush1.msra.mxu0 0.0
    %6200 = vmatprep.subr.mxu0 0.0
    %6201 = vmatpush1.msra.mxu0 0.0
    %6202 = vmatprep.subr.mxu0 0.0
    %6203 = vmatpush1.msra.mxu0 0.0
    %6204 = vmatprep.subr.mxu0 0.0
    %6205 = vmatpush1.msra.mxu0 0.0
    %6206 = vmatprep.subr.mxu0 0.0
    %6207 = vmatpush1.msra.mxu0 0.0
    %6208 = vmatprep.subr.mxu0 0.0
    %6209 = vmatpush1.msra.mxu0 0.0
    %6210 = vmatprep.subr.mxu0 0.0
    %6211 = vmatpush1.msra.mxu0 0.0
    %6212 = vmatprep.subr.mxu0 0.0
    %6213 = vmatpush1.msra.mxu0 0.0
    %6214 = vmatprep.subr.mxu0 0.0
    %6215 = vmatpush1.msra.mxu0 0.0
    %6216 = vmatprep.subr.mxu0 0.0
    %6217 = vmatpush1.msra.mxu0 0.0
    %6218 = vmatprep.subr.mxu0 0.0
    %6219 = vmatpush1.msra.mxu0 0.0
    %6220 = vmatprep.subr.mxu0 0.0
    %6221 = vmatpush1.msra.mxu0 0.0
    %6222 = vmatprep.mubr.f32.mxu0 0.0
    %6223 = vmatmul.mubr.f32.gmra.mrb[0].mxu0 %v6156
    %v6224 = vpop.f32.mrb[0].mxu0
    %v6225 = vadd.f32 0.0, %v6224
    %v6226 = vpop.f32.mrb[0].mxu0
    %6227 = vdwg.mxu0
    %s6228 = scalar_lea.vmem [#allocation2], 1472
    %v6229 = vld [vmem:[%s6228] sm:$0xf]
    %v6230 = vld [vmem:[%s6228 + $0x4] sm:$0xf]
    %v6231 = vld [vmem:[%s6228 + $0x8] sm:$0xf]
    %v6232 = vld [vmem:[%s6228 + $0xc] sm:$0xf]
    %v6233 = vld [vmem:[%s6228 + $0x10] sm:$0xf]
    %v6234 = vld [vmem:[%s6228 + $0x14] sm:$0xf]
    %v6235 = vld [vmem:[%s6228 + $0x18] sm:$0xf]
    %v6236 = vld [vmem:[%s6228 + $0x1c] sm:$0xf]
    %v6237 = vld [vmem:[%s6228 + $0x20] sm:$0xf]
    %v6238 = vld [vmem:[%s6228 + $0x24] sm:$0xf]
    %v6239 = vld [vmem:[%s6228 + $0x28] sm:$0xf]
    %v6240 = vld [vmem:[%s6228 + $0x2c] sm:$0xf]
    %v6241 = vld [vmem:[%s6228 + $0x30] sm:$0xf]
    %v6242 = vld [vmem:[%s6228 + $0x34] sm:$0xf]
    %v6243 = vld [vmem:[%s6228 + $0x38] sm:$0xf]
    %v6244 = vld [vmem:[%s6228 + $0x3c] sm:$0xf]
    %v6245 = vpack.c.bf16 %v6225, %v6152
    %v6246 = vld [vmem:[%s6 + $0x28] sm:$0x1]
    %v6247 = vlaneseq
    %v6248 = vshrl.u32 %v6247, 7
    %v6249 = vsub.s32 0, %v6248
    %v6250 = vrot.slane %v6246, %v6249
    %v6267 = vunpack.c.l.b16 %v6229
    %v6268 = vunpack.c.l.b16 %v6230
    %v6269 = vunpack.c.l.b16 %v6231
    %v6270 = vunpack.c.l.b16 %v6232
    %v6271 = vunpack.c.l.b16 %v6233
    %v6272 = vunpack.c.l.b16 %v6234
    %v6273 = vunpack.c.l.b16 %v6235
    %v6274 = vunpack.c.l.b16 %v6236
    %v6275 = vunpack.c.l.b16 %v6237
    %v6276 = vunpack.c.l.b16 %v6238
    %v6277 = vunpack.c.l.b16 %v6239
    %v6278 = vunpack.c.l.b16 %v6240
    %v6279 = vunpack.c.l.b16 %v6241
    %v6280 = vunpack.c.l.b16 %v6242
    %v6281 = vunpack.c.l.b16 %v6243
    %v6282 = vunpack.c.l.b16 %v6244
    %v6283 = vpack.c.b16 %v6268, %v6267
    %v6284 = vpack.c.b16 %v6270, %v6269
    %v6285 = vpack.c.b16 %v6272, %v6271
    %v6286 = vpack.c.b16 %v6274, %v6273
    %v6287 = vpack.c.b16 %v6276, %v6275
    %v6288 = vpack.c.b16 %v6278, %v6277
    %v6289 = vpack.c.b16 %v6280, %v6279
    %v6290 = vpack.c.b16 %v6282, %v6281
    %6299 = vmatprep.subr.bf16.mxu0 0
    %6300 = vmatpush1.bf16.msra.mxu0 %v6283
    %6301 = vmatprep.subr.bf16.mxu0 0
    %6302 = vmatpush1.bf16.msra.mxu0 %v6284
    %6303 = vmatprep.subr.bf16.mxu0 0
    %6304 = vmatpush1.bf16.msra.mxu0 %v6285
    %6305 = vmatprep.subr.bf16.mxu0 0
    %6306 = vmatpush1.bf16.msra.mxu0 %v6286
    %6307 = vmatprep.subr.bf16.mxu0 0
    %6308 = vmatpush1.bf16.msra.mxu0 %v6287
    %6309 = vmatprep.subr.bf16.mxu0 0
    %6310 = vmatpush1.bf16.msra.mxu0 %v6288
    %6311 = vmatprep.subr.bf16.mxu0 0
    %6312 = vmatpush1.bf16.msra.mxu0 %v6289
    %6313 = vmatprep.subr.bf16.mxu0 0
    %6314 = vmatpush1.bf16.msra.mxu0 %v6290
    %6315 = vmatprep.subr.bf16.mxu0 0
    %6316 = vmatpush1.bf16.msra.mxu0 0
    %6317 = vmatprep.subr.bf16.mxu0 0
    %6318 = vmatpush1.bf16.msra.mxu0 0
    %6319 = vmatprep.subr.bf16.mxu0 0
    %6320 = vmatpush1.bf16.msra.mxu0 0
    %6321 = vmatprep.subr.bf16.mxu0 0
    %6322 = vmatpush1.bf16.msra.mxu0 0
    %6323 = vmatprep.subr.bf16.mxu0 0
    %6324 = vmatpush1.bf16.msra.mxu0 0
    %6325 = vmatprep.subr.bf16.mxu0 0
    %6326 = vmatpush1.bf16.msra.mxu0 0
    %6327 = vmatprep.subr.bf16.mxu0 0
    %6328 = vmatpush1.bf16.msra.mxu0 0
    %6329 = vmatprep.subr.bf16.mxu0 0
    %6330 = vmatpush1.bf16.msra.mxu0 0
    %6331 = vmatprep.mubr.bf16.mxu0 0
    %6332 = vmatmul.mubr.bf16.gmra.mrb[0].mxu0 %v6245
    %v6333 = vpop.f32.mrb[0].mxu0
    %v6334 = vadd.f32 %v6250, %v6333
    %v6335 = vpop.f32.mrb[0].mxu0
    %v6336 = vpop.f32.mrb[0].mxu0
    %v6337 = vadd.f32 %v6250, %v6336
    %v6338 = vpop.f32.mrb[0].mxu0
    %6339 = vdwg.mxu0
    %v6340 = vadd.f32 %v5582, %v6334
    %v6341 = vadd.f32 %v5583, %v6337
    %v6342 = vld [vmem:[%s6 + $0x2c] sm:$0x1]
    %v6343 = vld [vmem:[%s6 + $0x2d] sm:$0x1]
    %6344 = vadd.xlane.f32.xlu0 %v6340
    %v6345 = vpop.xlane.xlu0 %6344
    %6346 = vadd.xlane.f32.xlu0 %v6341
    %v6347 = vpop.xlane.xlu0 %6346
    %v6348 = vmul.f32 %v6345, 0.025
    %v6349 = vmul.f32 %v6347, 0.025
    %v6350 = vsub.f32 %v6340, %v6348
    %v6351 = vsub.f32 %v6341, %v6349
    %v6352 = vmul.f32 %v6350, %v79
    %v6353 = vmul.f32 %v6351, %v79
    %v6354 = vmul.f32 %v6352, %v6352
    %v6355 = vmul.f32 %v6353, %v6353
    %6356 = vadd.xlane.f32.xlu0 %v6354
    %v6357 = vpop.xlane.xlu0 %6356
    %6358 = vadd.xlane.f32.xlu0 %v6355
    %v6359 = vpop.xlane.xlu0 %6358
    %v6360 = vmul.f32 %v6357, 0.025
    %v6361 = vmul.f32 %v6359, 0.025
    %v6362 = vadd.f32 %v6360, 1e-05
    %v6363 = vadd.f32 %v6361, 1e-05
    %v6364 = vrsqrt.pop %v6362
    %v6365 = vrsqrt.pop %v6363
    %v6366 = vmul.f32 %v6352, %v6364
    %v6367 = vmul.f32 %v6353, %v6365
    %v6368 = vlaneseq
    %v6369 = vshrl.u32 %v6368, 7
    %v6370 = vsub.s32 0, %v6369
    %v6371 = vrot.slane %v6342, %v6370
    %v6372 = vmul.f32 %v6366, %v6371
    %v6373 = vmul.f32 %v6367, %v6371
    %v6374 = vlaneseq
    %v6375 = vshrl.u32 %v6374, 7
    %v6376 = vsub.s32 0, %v6375
    %v6377 = vrot.slane %v6343, %v6376
    %v6378 = vadd.f32 %v6372, %v6377
    %v6379 = vadd.f32 %v6373, %v6377
    %v6380 = vld [vmem:[%s6 + $0x29] sm:$0x1]
    %s6381 = scalar_lea.vmem [#allocation5], 384
    %v6382 = vld [vmem:[%s6381] sm:$0xff]
    %v6383 = vld [vmem:[%s6381 + $0x8] sm:$0xff]
    %v6384 = vld [vmem:[%s6381 + $0x10] sm:$0xff]
    %v6385 = vld [vmem:[%s6381 + $0x18] sm:$0xff]
    %v6386 = vld [vmem:[%s6381 + $0x20] sm:$0xff]
    %v6387 = vld [vmem:[%s6381 + $0x28] sm:$0xff]
    %v6388 = vld [vmem:[%s6381 + $0x30] sm:$0xff]
    %v6389 = vld [vmem:[%s6381 + $0x38] sm:$0xff]
    %v6390 = vld [vmem:[%s6381 + $0x40] sm:$0xff]
    %v6391 = vld [vmem:[%s6381 + $0x48] sm:$0xff]
    %v6392 = vld [vmem:[%s6381 + $0x50] sm:$0xff]
    %v6393 = vld [vmem:[%s6381 + $0x58] sm:$0xff]
    %v6394 = vld [vmem:[%s6381 + $0x60] sm:$0xff]
    %v6395 = vld [vmem:[%s6381 + $0x68] sm:$0xff]
    %v6396 = vld [vmem:[%s6381 + $0x70] sm:$0xff]
    %v6397 = vld [vmem:[%s6381 + $0x78] sm:$0xff]
    %v6398 = vpack.c.bf16 %v6379, %v6378
    %s6399 = scalar_lea.vmem %s5, 3
    %v6400 = vld [vmem:[%s6399] ss:$4 sm:$0x3]
    %v6402 = vlaneseq
    %v6403 = vshrl.u32 %v6402, 7
    %v6404 = vsub.s32 0, %v6403
    %v6405 = vrot.slane %v6400, %v6404
    %v6406 = vlaneseq
    %v6407 = vshrl.u32 %v6406, 7
    %v6408 = vsub.s32 1, %v6407
    %v6409 = vrot.slane %v6400, %v6408
    %v6428 = vunpack.c.l.b16 %v6382
    %v6429 = vunpack.c.h.b16 %v6382
    %v6430 = vunpack.c.l.b16 %v6383
    %v6431 = vunpack.c.h.b16 %v6383
    %v6432 = vunpack.c.l.b16 %v6384
    %v6433 = vunpack.c.h.b16 %v6384
    %v6434 = vunpack.c.l.b16 %v6385
    %v6435 = vunpack.c.h.b16 %v6385
    %v6436 = vunpack.c.l.b16 %v6386
    %v6437 = vunpack.c.h.b16 %v6386
    %v6438 = vunpack.c.l.b16 %v6387
    %v6439 = vunpack.c.h.b16 %v6387
    %v6440 = vunpack.c.l.b16 %v6388
    %v6441 = vunpack.c.h.b16 %v6388
    %v6442 = vunpack.c.l.b16 %v6389
    %v6443 = vunpack.c.h.b16 %v6389
    %v6444 = vunpack.c.l.b16 %v6390
    %v6445 = vunpack.c.h.b16 %v6390
    %v6446 = vunpack.c.l.b16 %v6391
    %v6447 = vunpack.c.h.b16 %v6391
    %v6448 = vunpack.c.l.b16 %v6392
    %v6449 = vunpack.c.h.b16 %v6392
    %v6450 = vunpack.c.l.b16 %v6393
    %v6451 = vunpack.c.h.b16 %v6393
    %v6452 = vunpack.c.l.b16 %v6394
    %v6453 = vunpack.c.h.b16 %v6394
    %v6454 = vunpack.c.l.b16 %v6395
    %v6455 = vunpack.c.h.b16 %v6395
    %v6456 = vunpack.c.l.b16 %v6396
    %v6457 = vunpack.c.h.b16 %v6396
    %v6458 = vunpack.c.l.b16 %v6397
    %v6459 = vunpack.c.h.b16 %v6397
    %v6460 = vpack.c.b16 %v6430, %v6428
    %v6461 = vpack.c.b16 %v6431, %v6429
    %v6462 = vpack.c.b16 %v6434, %v6432
    %v6463 = vpack.c.b16 %v6435, %v6433
    %v6464 = vpack.c.b16 %v6438, %v6436
    %v6465 = vpack.c.b16 %v6439, %v6437
    %v6466 = vpack.c.b16 %v6442, %v6440
    %v6467 = vpack.c.b16 %v6443, %v6441
    %v6468 = vpack.c.b16 %v6446, %v6444
    %v6469 = vpack.c.b16 %v6447, %v6445
    %v6470 = vpack.c.b16 %v6450, %v6448
    %v6471 = vpack.c.b16 %v6451, %v6449
    %v6472 = vpack.c.b16 %v6454, %v6452
    %v6473 = vpack.c.b16 %v6455, %v6453
    %v6474 = vpack.c.b16 %v6458, %v6456
    %v6475 = vpack.c.b16 %v6459, %v6457
    %6492 = vmatprep.subr.bf16.mxu0 %v6461
    %6493 = vmatpush1.bf16.msra.mxu0 %v6460
    %6494 = vmatprep.subr.bf16.mxu0 %v6463
    %6495 = vmatpush1.bf16.msra.mxu0 %v6462
    %6496 = vmatprep.subr.bf16.mxu0 %v6465
    %6497 = vmatpush1.bf16.msra.mxu0 %v6464
    %6498 = vmatprep.subr.bf16.mxu0 %v6467
    %6499 = vmatpush1.bf16.msra.mxu0 %v6466
    %6500 = vmatprep.subr.bf16.mxu0 %v6469
    %6501 = vmatpush1.bf16.msra.mxu0 %v6468
    %6502 = vmatprep.subr.bf16.mxu0 %v6471
    %6503 = vmatpush1.bf16.msra.mxu0 %v6470
    %6504 = vmatprep.subr.bf16.mxu0 %v6473
    %6505 = vmatpush1.bf16.msra.mxu0 %v6472
    %6506 = vmatprep.subr.bf16.mxu0 %v6475
    %6507 = vmatpush1.bf16.msra.mxu0 %v6474
    %6508 = vmatprep.subr.bf16.mxu0 0
    %6509 = vmatpush1.bf16.msra.mxu0 0
    %6510 = vmatprep.subr.bf16.mxu0 0
    %6511 = vmatpush1.bf16.msra.mxu0 0
    %6512 = vmatprep.subr.bf16.mxu0 0
    %6513 = vmatpush1.bf16.msra.mxu0 0
    %6514 = vmatprep.subr.bf16.mxu0 0
    %6515 = vmatpush1.bf16.msra.mxu0 0
    %6516 = vmatprep.subr.bf16.mxu0 0
    %6517 = vmatpush1.bf16.msra.mxu0 0
    %6518 = vmatprep.subr.bf16.mxu0 0
    %6519 = vmatpush1.bf16.msra.mxu0 0
    %6520 = vmatprep.subr.bf16.mxu0 0
    %6521 = vmatpush1.bf16.msra.mxu0 0
    %6522 = vmatprep.subr.bf16.mxu0 0
    %6523 = vmatpush1.bf16.msra.mxu0 0
    %6524 = vmatprep.mubr.bf16.mxu0 0
    %6525 = vmatmul.mubr.bf16.gmra.mrb[0].mxu0 %v6398
    %v6526 = vpop.f32.mrb[0].mxu0
    %v6527 = vadd.f32 %v6405, %v6526
    %v6528 = vpop.f32.mrb[0].mxu0
    %v6529 = vadd.f32 %v6409, %v6528
    %v6530 = vpop.f32.mrb[0].mxu0
    %v6531 = vadd.f32 %v6405, %v6530
    %v6532 = vpop.f32.mrb[0].mxu0
    %v6533 = vadd.f32 %v6409, %v6532
    %6534 = vdwg.mxu0
    %v6535 = vmax.f32 %v6527, 0.0
    %v6536 = vmax.f32 %v6529, 0.0
    %v6537 = vmax.f32 %v6531, 0.0
    %v6538 = vmax.f32 %v6533, 0.0
    %s6539 = scalar_lea.vmem [#allocation7], 384
    %v6540 = vld [vmem:[%s6539] sm:$0xf]
    %v6541 = vld [vmem:[%s6539 + $0x4] sm:$0xf]
    %v6542 = vld [vmem:[%s6539 + $0x8] sm:$0xf]
    %v6543 = vld [vmem:[%s6539 + $0xc] sm:$0xf]
    %v6544 = vld [vmem:[%s6539 + $0x10] sm:$0xf]
    %v6545 = vld [vmem:[%s6539 + $0x14] sm:$0xf]
    %v6546 = vld [vmem:[%s6539 + $0x18] sm:$0xf]
    %v6547 = vld [vmem:[%s6539 + $0x1c] sm:$0xf]
    %v6548 = vld [vmem:[%s6539 + $0x20] sm:$0xf]
    %v6549 = vld [vmem:[%s6539 + $0x24] sm:$0xf]
    %v6550 = vld [vmem:[%s6539 + $0x28] sm:$0xf]
    %v6551 = vld [vmem:[%s6539 + $0x2c] sm:$0xf]
    %v6552 = vld [vmem:[%s6539 + $0x30] sm:$0xf]
    %v6553 = vld [vmem:[%s6539 + $0x34] sm:$0xf]
    %v6554 = vld [vmem:[%s6539 + $0x38] sm:$0xf]
    %v6555 = vld [vmem:[%s6539 + $0x3c] sm:$0xf]
    %v6556 = vld [vmem:[%s6539 + $0x40] sm:$0xf]
    %v6557 = vld [vmem:[%s6539 + $0x44] sm:$0xf]
    %v6558 = vld [vmem:[%s6539 + $0x48] sm:$0xf]
    %v6559 = vld [vmem:[%s6539 + $0x4c] sm:$0xf]
    %v6560 = vld [vmem:[%s6539 + $0x50] sm:$0xf]
    %v6561 = vld [vmem:[%s6539 + $0x54] sm:$0xf]
    %v6562 = vld [vmem:[%s6539 + $0x58] sm:$0xf]
    %v6563 = vld [vmem:[%s6539 + $0x5c] sm:$0xf]
    %v6564 = vld [vmem:[%s6539 + $0x60] sm:$0xf]
    %v6565 = vld [vmem:[%s6539 + $0x64] sm:$0xf]
    %v6566 = vld [vmem:[%s6539 + $0x68] sm:$0xf]
    %v6567 = vld [vmem:[%s6539 + $0x6c] sm:$0xf]
    %v6568 = vld [vmem:[%s6539 + $0x70] sm:$0xf]
    %v6569 = vld [vmem:[%s6539 + $0x74] sm:$0xf]
    %v6570 = vld [vmem:[%s6539 + $0x78] sm:$0xf]
    %v6571 = vld [vmem:[%s6539 + $0x7c] sm:$0xf]
    %v6572 = vpack.c.bf16 %v6537, %v6535
    %v6573 = vpack.c.bf16 %v6538, %v6536
    %v6574 = vlaneseq
    %v6575 = vshrl.u32 %v6574, 7
    %v6576 = vsub.s32 0, %v6575
    %v6577 = vrot.slane %v6380, %v6576
    %v6610 = vunpack.c.l.b16 %v6540
    %v6611 = vunpack.c.l.b16 %v6541
    %v6612 = vunpack.c.l.b16 %v6542
    %v6613 = vunpack.c.l.b16 %v6543
    %v6614 = vunpack.c.l.b16 %v6544
    %v6615 = vunpack.c.l.b16 %v6545
    %v6616 = vunpack.c.l.b16 %v6546
    %v6617 = vunpack.c.l.b16 %v6547
    %v6618 = vunpack.c.l.b16 %v6548
    %v6619 = vunpack.c.l.b16 %v6549
    %v6620 = vunpack.c.l.b16 %v6550
    %v6621 = vunpack.c.l.b16 %v6551
    %v6622 = vunpack.c.l.b16 %v6552
    %v6623 = vunpack.c.l.b16 %v6553
    %v6624 = vunpack.c.l.b16 %v6554
    %v6625 = vunpack.c.l.b16 %v6555
    %v6626 = vunpack.c.l.b16 %v6556
    %v6627 = vunpack.c.l.b16 %v6557
    %v6628 = vunpack.c.l.b16 %v6558
    %v6629 = vunpack.c.l.b16 %v6559
    %v6630 = vunpack.c.l.b16 %v6560
    %v6631 = vunpack.c.l.b16 %v6561
    %v6632 = vunpack.c.l.b16 %v6562
    %v6633 = vunpack.c.l.b16 %v6563
    %v6634 = vunpack.c.l.b16 %v6564
    %v6635 = vunpack.c.l.b16 %v6565
    %v6636 = vunpack.c.l.b16 %v6566
    %v6637 = vunpack.c.l.b16 %v6567
    %v6638 = vunpack.c.l.b16 %v6568
    %v6639 = vunpack.c.l.b16 %v6569
    %v6640 = vunpack.c.l.b16 %v6570
    %v6641 = vunpack.c.l.b16 %v6571
    %v6642 = vpack.c.b16 %v6611, %v6610
    %v6643 = vpack.c.b16 %v6613, %v6612
    %v6644 = vpack.c.b16 %v6615, %v6614
    %v6645 = vpack.c.b16 %v6617, %v6616
    %v6646 = vpack.c.b16 %v6619, %v6618
    %v6647 = vpack.c.b16 %v6621, %v6620
    %v6648 = vpack.c.b16 %v6623, %v6622
    %v6649 = vpack.c.b16 %v6625, %v6624
    %v6650 = vpack.c.b16 %v6627, %v6626
    %v6651 = vpack.c.b16 %v6629, %v6628
    %v6652 = vpack.c.b16 %v6631, %v6630
    %v6653 = vpack.c.b16 %v6633, %v6632
    %v6654 = vpack.c.b16 %v6635, %v6634
    %v6655 = vpack.c.b16 %v6637, %v6636
    %v6656 = vpack.c.b16 %v6639, %v6638
    %v6657 = vpack.c.b16 %v6641, %v6640
    %6674 = vmatprep.subr.bf16.mxu0 0
    %6675 = vmatpush1.bf16.msra.mxu0 %v6642
    %6676 = vmatprep.subr.bf16.mxu0 0
    %6677 = vmatpush1.bf16.msra.mxu0 %v6643
    %6678 = vmatprep.subr.bf16.mxu0 0
    %6679 = vmatpush1.bf16.msra.mxu0 %v6644
    %6680 = vmatprep.subr.bf16.mxu0 0
    %6681 = vmatpush1.bf16.msra.mxu0 %v6645
    %6682 = vmatprep.subr.bf16.mxu0 0
    %6683 = vmatpush1.bf16.msra.mxu0 %v6646
    %6684 = vmatprep.subr.bf16.mxu0 0
    %6685 = vmatpush1.bf16.msra.mxu0 %v6647
    %6686 = vmatprep.subr.bf16.mxu0 0
    %6687 = vmatpush1.bf16.msra.mxu0 %v6648
    %6688 = vmatprep.subr.bf16.mxu0 0
    %6689 = vmatpush1.bf16.msra.mxu0 %v6649
    %6690 = vmatprep.subr.bf16.mxu0 0
    %6691 = vmatpush1.bf16.msra.mxu0 %v6650
    %6692 = vmatprep.subr.bf16.mxu0 0
    %6693 = vmatpush1.bf16.msra.mxu0 %v6651
    %6694 = vmatprep.subr.bf16.mxu0 0
    %6695 = vmatpush1.bf16.msra.mxu0 %v6652
    %6696 = vmatprep.subr.bf16.mxu0 0
    %6697 = vmatpush1.bf16.msra.mxu0 %v6653
    %6698 = vmatprep.subr.bf16.mxu0 0
    %6699 = vmatpush1.bf16.msra.mxu0 %v6654
    %6700 = vmatprep.subr.bf16.mxu0 0
    %6701 = vmatpush1.bf16.msra.mxu0 %v6655
    %6702 = vmatprep.subr.bf16.mxu0 0
    %6703 = vmatpush1.bf16.msra.mxu0 %v6656
    %6704 = vmatprep.subr.bf16.mxu0 0
    %6705 = vmatpush1.bf16.msra.mxu0 %v6657
    %6706 = vmatprep.mubr.bf16.mxu0 %v6573
    %6707 = vmatmul.mubr.bf16.gmra.mrb[0].mxu0 %v6572
    %v6708 = vpop.f32.mrb[0].mxu0
    %v6709 = vadd.f32 %v6577, %v6708
    %v6710 = vpop.f32.mrb[0].mxu0
    %v6711 = vpop.f32.mrb[0].mxu0
    %v6712 = vadd.f32 %v6577, %v6711
    %v6713 = vpop.f32.mrb[0].mxu0
    %6714 = vdwg.mxu0
    %v6715 = vadd.f32 %v6378, %v6709
    %v6716 = vadd.f32 %v6379, %v6712
    %v6717 = vld [vmem:[%s6 + $0x2e] sm:$0x1]
    %v6718 = vld [vmem:[%s6 + $0x2f] sm:$0x1]
    %6719 = vadd.xlane.f32.xlu0 %v6715
    %v6720 = vpop.xlane.xlu0 %6719
    %6721 = vadd.xlane.f32.xlu0 %v6716
    %v6722 = vpop.xlane.xlu0 %6721
    %v6723 = vmul.f32 %v6720, 0.025
    %v6724 = vmul.f32 %v6722, 0.025
    %v6725 = vsub.f32 %v6715, %v6723
    %v6726 = vsub.f32 %v6716, %v6724
    %v6727 = vmul.f32 %v6725, %v79
    %v6728 = vmul.f32 %v6726, %v79
    %v6729 = vmul.f32 %v6727, %v6727
    %v6730 = vmul.f32 %v6728, %v6728
    %6731 = vadd.xlane.f32.xlu0 %v6729
    %v6732 = vpop.xlane.xlu0 %6731
    %6733 = vadd.xlane.f32.xlu0 %v6730
    %v6734 = vpop.xlane.xlu0 %6733
    %v6735 = vmul.f32 %v6732, 0.025
    %v6736 = vmul.f32 %v6734, 0.025
    %v6737 = vadd.f32 %v6735, 1e-05
    %v6738 = vadd.f32 %v6736, 1e-05
    %v6739 = vrsqrt.pop %v6737
    %v6740 = vrsqrt.pop %v6738
    %v6741 = vmul.f32 %v6727, %v6739
    %v6742 = vmul.f32 %v6728, %v6740
    %v6743 = vlaneseq
    %v6744 = vshrl.u32 %v6743, 7
    %v6745 = vsub.s32 0, %v6744
    %v6746 = vrot.slane %v6717, %v6745
    %v6747 = vmul.f32 %v6741, %v6746
    %v6748 = vmul.f32 %v6742, %v6746
    %v6749 = vlaneseq
    %v6750 = vshrl.u32 %v6749, 7
    %v6751 = vsub.s32 0, %v6750
    %v6752 = vrot.slane %v6718, %v6751
    %v6753 = vadd.f32 %v6747, %v6752
    %v6754 = vadd.f32 %v6748, %v6752
    %s6755 = scalar_lea.vmem [#allocation2], 1664
    %v6756 = vld [vmem:[%s6755] sm:$0xf]
    %v6757 = vld [vmem:[%s6755 + $0x4] sm:$0xf]
    %v6758 = vld [vmem:[%s6755 + $0x8] sm:$0xf]
    %v6759 = vld [vmem:[%s6755 + $0xc] sm:$0xf]
    %v6760 = vld [vmem:[%s6755 + $0x10] sm:$0xf]
    %v6761 = vld [vmem:[%s6755 + $0x14] sm:$0xf]
    %v6762 = vld [vmem:[%s6755 + $0x18] sm:$0xf]
    %v6763 = vld [vmem:[%s6755 + $0x1c] sm:$0xf]
    %v6764 = vld [vmem:[%s6755 + $0x20] sm:$0xf]
    %v6765 = vld [vmem:[%s6755 + $0x24] sm:$0xf]
    %v6766 = vld [vmem:[%s6755 + $0x28] sm:$0xf]
    %v6767 = vld [vmem:[%s6755 + $0x2c] sm:$0xf]
    %v6768 = vld [vmem:[%s6755 + $0x30] sm:$0xf]
    %v6769 = vld [vmem:[%s6755 + $0x34] sm:$0xf]
    %v6770 = vld [vmem:[%s6755 + $0x38] sm:$0xf]
    %v6771 = vld [vmem:[%s6755 + $0x3c] sm:$0xf]
    %v6772 = vpack.c.bf16 %v6754, %v6753
    %v6773 = vld [vmem:[%s6 + $0x32] sm:$0x1]
    %v6774 = vlaneseq
    %v6775 = vshrl.u32 %v6774, 7
    %v6776 = vsub.s32 0, %v6775
    %v6777 = vrot.slane %v6773, %v6776
    %v6794 = vunpack.c.l.b16 %v6756
    %v6795 = vunpack.c.l.b16 %v6757
    %v6796 = vunpack.c.l.b16 %v6758
    %v6797 = vunpack.c.l.b16 %v6759
    %v6798 = vunpack.c.l.b16 %v6760
    %v6799 = vunpack.c.l.b16 %v6761
    %v6800 = vunpack.c.l.b16 %v6762
    %v6801 = vunpack.c.l.b16 %v6763
    %v6802 = vunpack.c.l.b16 %v6764
    %v6803 = vunpack.c.l.b16 %v6765
    %v6804 = vunpack.c.l.b16 %v6766
    %v6805 = vunpack.c.l.b16 %v6767
    %v6806 = vunpack.c.l.b16 %v6768
    %v6807 = vunpack.c.l.b16 %v6769
    %v6808 = vunpack.c.l.b16 %v6770
    %v6809 = vunpack.c.l.b16 %v6771
    %v6810 = vpack.c.b16 %v6795, %v6794
    %v6811 = vpack.c.b16 %v6797, %v6796
    %v6812 = vpack.c.b16 %v6799, %v6798
    %v6813 = vpack.c.b16 %v6801, %v6800
    %v6814 = vpack.c.b16 %v6803, %v6802
    %v6815 = vpack.c.b16 %v6805, %v6804
    %v6816 = vpack.c.b16 %v6807, %v6806
    %v6817 = vpack.c.b16 %v6809, %v6808
    %6826 = vmatprep.subr.bf16.mxu0 0
    %6827 = vmatpush1.bf16.msra.mxu0 %v6810
    %6828 = vmatprep.subr.bf16.mxu0 0
    %6829 = vmatpush1.bf16.msra.mxu0 %v6811
    %6830 = vmatprep.subr.bf16.mxu0 0
    %6831 = vmatpush1.bf16.msra.mxu0 %v6812
    %6832 = vmatprep.subr.bf16.mxu0 0
    %6833 = vmatpush1.bf16.msra.mxu0 %v6813
    %6834 = vmatprep.subr.bf16.mxu0 0
    %6835 = vmatpush1.bf16.msra.mxu0 %v6814
    %6836 = vmatprep.subr.bf16.mxu0 0
    %6837 = vmatpush1.bf16.msra.mxu0 %v6815
    %6838 = vmatprep.subr.bf16.mxu0 0
    %6839 = vmatpush1.bf16.msra.mxu0 %v6816
    %6840 = vmatprep.subr.bf16.mxu0 0
    %6841 = vmatpush1.bf16.msra.mxu0 %v6817
    %6842 = vmatprep.subr.bf16.mxu0 0
    %6843 = vmatpush1.bf16.msra.mxu0 0
    %6844 = vmatprep.subr.bf16.mxu0 0
    %6845 = vmatpush1.bf16.msra.mxu0 0
    %6846 = vmatprep.subr.bf16.mxu0 0
    %6847 = vmatpush1.bf16.msra.mxu0 0
    %6848 = vmatprep.subr.bf16.mxu0 0
    %6849 = vmatpush1.bf16.msra.mxu0 0
    %6850 = vmatprep.subr.bf16.mxu0 0
    %6851 = vmatpush1.bf16.msra.mxu0 0
    %6852 = vmatprep.subr.bf16.mxu0 0
    %6853 = vmatpush1.bf16.msra.mxu0 0
    %6854 = vmatprep.subr.bf16.mxu0 0
    %6855 = vmatpush1.bf16.msra.mxu0 0
    %6856 = vmatprep.subr.bf16.mxu0 0
    %6857 = vmatpush1.bf16.msra.mxu0 0
    %6858 = vmatprep.mubr.bf16.mxu0 0
    %6859 = vmatmul.mubr.bf16.gmra.mrb[0].mxu0 %v6772
    %v6860 = vpop.f32.mrb[0].mxu0
    %v6861 = vadd.f32 %v6777, %v6860
    %v6862 = vpop.f32.mrb[0].mxu0
    %v6863 = vpop.f32.mrb[0].mxu0
    %v6864 = vadd.f32 %v6777, %v6863
    %v6865 = vpop.f32.mrb[0].mxu0
    %6866 = vdwg.mxu0
    %6867 = vst [vmem:[#allocation8] sm:$0xff] %v6861
    %6868 = vst [vmem:[#allocation8 + $0x8] sm:$0xff] %v6864
    // Predicated region
    $region42: #{transformer_vae_forward.1} parent=1 // pred_check
      _
    $region43: #{transformer_vae_forward.1} parent=1 // pred_check_branch
      %6870 = sbr.rel (0) target = $region45
    $region44: #{transformer_vae_forward.1} parent=1 // pred_region
      %s6872 = ssub.s32 256, 256
      %6873 = vsyncadd [#allocation4], %s6872
      %s6874 = sshll.u32 [#allocation8], 4
      %s6875 = int_to_ptr.vmem [resolvable:$true] %s6874
      %6880 = dma.vmem_to_hbm [thread:$0]  %s6875, 256, %s7, [#allocation4], 128, 128, 8
    $region45: #{transformer_vae_forward.1} parent=1 // pred_fallthru
      _
    // Predicated region
    $region46: #{transformer_vae_forward.1} parent=1 // pred_check
      _
    $region47: #{transformer_vae_forward.1} parent=1 // pred_check_branch
      %6882 = sbr.rel (0) target = $region49
    $region48: #{transformer_vae_forward.1} parent=1 // pred_region
      _
    $region49: #{transformer_vae_forward.1} parent=1 // pred_fallthru
      _
    // Predicated region
    $region50: #{transformer_vae_forward.1} parent=1 // pred_check
      _
    $region51: #{transformer_vae_forward.1} parent=1 // pred_check_branch
      %6884 = sbr.rel (0) target = $region53
    $region52: #{transformer_vae_forward.1} parent=1 // pred_region
      _
    $region53: #{transformer_vae_forward.1} parent=1 // pred_fallthru
      _
    // Predicated region
    $region54: #{transformer_vae_forward.1} parent=1 // pred_check
      _
    $region55: #{transformer_vae_forward.1} parent=1 // pred_check_branch
      %6886 = sbr.rel (0) target = $region57
    $region56: #{transformer_vae_forward.1} parent=1 // pred_region
      %6887 = dma.done [#allocation4], 256
    $region57: #{transformer_vae_forward.1} parent=1 // pred_fallthru
      _
    // Predicated region
    $region58: #{transformer_vae_forward.1} parent=1 // pred_check
      _
    $region59: #{transformer_vae_forward.1} parent=1 // pred_check_branch
      %6889 = sbr.rel (0) target = $region61
    $region60: #{transformer_vae_forward.1} parent=1 // pred_region
      _
    $region61: #{transformer_vae_forward.1} parent=1 // pred_fallthru
      _
    // Predicated region
    $region62: #{transformer_vae_forward.1} parent=1 // pred_check
      _
    $region63: #{transformer_vae_forward.1} parent=1 // pred_check_branch
      %6891 = sbr.rel (0) target = $region65
    $region64: #{transformer_vae_forward.1} parent=1 // pred_region
      _
    $region65: #{transformer_vae_forward.1} parent=1 // pred_fallthru
      _
    %6892 = vsyncpa [#allocation3], 1
    %6893 = vsyncpa [#allocation6], 1
    %6894 = vsyncpa [#allocation4], 1

</llo_original>
